<compile_context>
chip_gen: v5e
topology: v5e:2x2
jax: 0.10.0
libtpu: 0.0.40
codegen_flags: <defaults>
</compile_context>

<pallas_src>
import functools
import math

import jax
import jax.numpy as jnp
from jax.experimental import pallas as pl
from jax.experimental.pallas import tpu as pltpu


def _round_up(x, m):
    return ((x + m - 1) // m) * m


def _pick_vmem_limit():
    """Generation-dependent scoped-VMEM limit (3/4 of physical, <= 96 MiB)."""
    try:
        cap = int(pltpu.get_tpu_info().vmem_capacity_bytes)
        return int(min(cap * 3 // 4, 96 * 1024 * 1024))
    except Exception:
        return 48 * 1024 * 1024   # safe on every generation (v7x has 64 MiB)


def _boundary_kernel(D, DP,
                     x_ref,
                     w1, b1, w2, b2, w3, b3, w4, b4, w5, b5, w6, b6, w7, b7,
                     m_ref,
                     out_ref,
                     acc1_ref):
    """K-tiled layer-1 accumulate + 6 more bf16 MXU layers (f32 accumulate)
    + masked sigmoid-normalize + cumulative-sum matmul + cos/sin epilogue,
    written as one lane-dense f32 slab [theta | cos | sin]."""
    k = pl.program_id(1)

    @pl.when(k == 0)
    def _():
        acc1_ref[...] = jnp.zeros_like(acc1_ref)

    # Layer-1 partial product for this K tile (bf16 on the MXU, f32 accumulate).
    acc1_ref[...] += jnp.dot(x_ref[...], w1[...],
                             preferred_element_type=jnp.float32)

    @pl.when(k == pl.num_programs(1) - 1)
    def _():
        def lin(h, w_r, b_r):
            return jnp.dot(h.astype(jnp.bfloat16), w_r[...],
                           preferred_element_type=jnp.float32) + b_r[...]

        h = jnp.maximum(acc1_ref[...] + b1[...], 0.0)
        for w_r, b_r in ((w2, b2), (w3, b3), (w4, b4), (w5, b5), (w6, b6)):
            h = jnp.maximum(lin(h, w_r, b_r), 0.0)
        x7 = lin(h, w7, b7)                    # (TM, DP); lanes >= D are padding

        # sigmoid -> normalize over the true D lanes -> scale to angles.
        lane = jax.lax.broadcasted_iota(jnp.int32, x7.shape, 1)
        s = jnp.where(lane < D, jax.nn.sigmoid(x7), 0.0)
        inv = pl.reciprocal(jnp.sum(s, axis=1, keepdims=True), approx=False)
        theta = s * inv * (2.0 * math.pi)

        # p_theta = theta @ matrix (padded matrix rows/cols are zero -> exact)
        p_theta = jnp.dot(theta, m_ref[...], preferred_element_type=jnp.float32)

        out_ref[:, 0:DP] = theta
        out_ref[:, DP:2 * DP] = jnp.cos(p_theta)
        out_ref[:, 2 * DP:3 * DP] = jnp.sin(p_theta)


def make_matrix(output_dim):
    """Replicates the fixed (non-trainable) matrix from Boundary.__init__."""
    squre = jnp.triu(jnp.ones((output_dim - 1, output_dim - 1), jnp.float32))
    left = jnp.zeros((output_dim - 1, 1), jnp.float32)
    low = jnp.zeros((1, output_dim), jnp.float32)
    a = jnp.concatenate((left, squre), axis=1)
    return jnp.concatenate((a, low), axis=0)


def make_params(key, input_dim, output_dim):
    """nn.Linear-style init: U(-1/sqrt(fan_in), 1/sqrt(fan_in)).
    Weights stored transposed (in, out); biases (1, out); all f32."""
    dims = [input_dim, 400, 400, 500, 500, 400, 400, output_dim]
    params = []
    for i in range(7):
        key, kw, kb = jax.random.split(key, 3)
        bound = 1.0 / math.sqrt(dims[i])
        w = jax.random.uniform(kw, (dims[i], dims[i + 1]), jnp.float32,
                               minval=-bound, maxval=bound)
        b = jax.random.uniform(kb, (1, dims[i + 1]), jnp.float32,
                               minval=-bound, maxval=bound)
        params.extend([w, b])
    return params


def boundary_forward(x, params, matrix, *, tm=256, k_tile=None):
    N = x.shape[0]
    D = matrix.shape[0]
    x0 = x.reshape(N, -1)
    K = x0.shape[1]

    DP = _round_up(D, 128)
    dims = [params[0].shape[0]] + [params[2 * li].shape[1] for li in range(7)]
    dims_pad = [_round_up(d, 128) for d in dims]

    # --- K tiling of the first matmul: keep W1 resident while it is small;
    #     otherwise K-tile with an 'arbitrary' reduction axis + f32 accumulator.
    if k_tile is None:
        w1_resident_bytes = _round_up(K, 128) * dims_pad[1] * 2   # bf16
        TK = _round_up(K, 128) if w1_resident_bytes <= (8 << 20) else 2048
    else:
        assert k_tile % 128 == 0
        TK = k_tile
    K_pad = _round_up(K, TK)
    nk = K_pad // TK
    dims_pad[0] = K_pad

    # Batch tile: 256 amortizes the fixed per-step overhead on v5e/v6e/v7x;
    # multiple of 16 because x is shipped as bf16. For N > tm the grid has
    # >= 2 steps so megacore can split the parallel batch axis on v7x.
    TM = min(tm, max(16, _round_up(N, 16)))
    N_pad = _round_up(N, TM)
    nb = N_pad // TM

    # --- zero-pad activations / params (exactness preserved; bf16 x halves DMA)
    x_pad = jnp.pad(x0.astype(jnp.bfloat16), ((0, N_pad - N), (0, K_pad - K)))

    prepped = []
    for li in range(7):
        w, b = params[2 * li], params[2 * li + 1]
        wp = jnp.pad(w.astype(jnp.bfloat16),
                     ((0, dims_pad[li] - dims[li]),
                      (0, dims_pad[li + 1] - dims[li + 1])))
        bp = jnp.pad(b.astype(jnp.float32),
                     ((0, 0), (0, dims_pad[li + 1] - dims[li + 1])))
        prepped.extend([wp, bp])
    m_pad = jnp.pad(matrix.astype(jnp.float32), ((0, DP - D), (0, DP - D)))

    # --- BlockSpecs: batch tiles pipeline; W1 is K-tiled; all other params
    #     use a constant index_map so they are DMA'd once and stay resident.
    x_spec = pl.BlockSpec((TM, TK), lambda i, k: (i, k))
    param_specs = [
        pl.BlockSpec((TK, dims_pad[1]), lambda i, k: (k, 0)),      # W1 (K-tiled)
        pl.BlockSpec((1, dims_pad[1]), lambda i, k: (0, 0)),       # b1
    ]
    for li in range(1, 7):
        param_specs.append(
            pl.BlockSpec((dims_pad[li], dims_pad[li + 1]), lambda i, k: (0, 0)))
        param_specs.append(
            pl.BlockSpec((1, dims_pad[li + 1]), lambda i, k: (0, 0)))
    m_spec = pl.BlockSpec((DP, DP), lambda i, k: (0, 0))
    out_spec = pl.BlockSpec((TM, 3 * DP), lambda i, k: (i, 0))

    flops = (2 * N_pad * sum(dims_pad[j] * dims_pad[j + 1] for j in range(7))
             + 2 * N_pad * DP * DP)
    transcendentals = 4 * N_pad * DP            # sigmoid(exp), reciprocal, cos, sin
    param_bytes = 0
    for idx, p in enumerate(prepped):
        reads = nb if (nk > 1 and idx == 0) else 1   # W1 re-streamed per batch tile if K-tiled
        param_bytes += int(p.size) * p.dtype.itemsize * reads
    bytes_accessed = int(
        int(x_pad.size) * x_pad.dtype.itemsize
        + param_bytes
        + int(m_pad.size) * 4
        + N_pad * 3 * DP * 4)

    kernel = functools.partial(_boundary_kernel, D, DP)

    out = pl.pallas_call(
        kernel,
        out_shape=jax.ShapeDtypeStruct((N_pad, 3 * DP), jnp.float32),
        grid_spec=pltpu.PrefetchScalarGridSpec(
            num_scalar_prefetch=0,
            grid=(nb, nk),
            in_specs=[x_spec] + param_specs + [m_spec],
            out_specs=out_spec,
            scratch_shapes=[pltpu.VMEM((TM, dims_pad[1]), jnp.float32)]),
        compiler_params=pltpu.CompilerParams(
            dimension_semantics=("parallel", "arbitrary"),
            vmem_limit_bytes=_pick_vmem_limit()),
        cost_estimate=pl.CostEstimate(
            flops=flops,
            transcendentals=transcendentals,
            bytes_accessed=bytes_accessed),
    )(x_pad, *prepped, m_pad)

    theta = out[:N, 0:D]
    p_x = out[:N, DP:DP + D]
    p_y = out[:N, 2 * DP:2 * DP + D]
    bound = jnp.stack((p_x, p_y), axis=1)       # (N, 2, output_dim)
    return bound, theta


def boundary_forward_ref(x, params, matrix):
    """Pure-JAX reference mirroring the PyTorch forward (same bf16 weight
    quantization the kernel uses, f32 accumulation)."""
    N = x.shape[0]
    h = x.reshape(N, -1).astype(jnp.float32)

    def lin(h, w, b):
        return jnp.dot(h.astype(jnp.bfloat16), w.astype(jnp.bfloat16),
                       preferred_element_type=jnp.float32) + b

    for i in range(6):
        h = jnp.maximum(lin(h, params[2 * i], params[2 * i + 1]), 0.0)
    x7 = lin(h, params[12], params[13])
    s = jax.nn.sigmoid(x7)
    s = s / jnp.sum(s, axis=1, keepdims=True)
    theta = s * (2.0 * math.pi)
    p_theta = theta @ matrix
    bound = jnp.stack((jnp.cos(p_theta), jnp.sin(p_theta)), axis=1)
    return bound, theta


if __name__ == "__main__":
    key = jax.random.PRNGKey(0)
    k_x, k_p, k_x2 = jax.random.split(key, 3)

    # Small, module-consistent shapes: NCHW input flattened -> input_dim.
    N, C, H, W = 2, 4, 16, 16
    input_dim = C * H * W           # 1024
    output_dim = 16

    x = jax.random.normal(k_x, (N, C, H, W), dtype=jnp.float32)
    params = make_params(k_p, input_dim, output_dim)
    matrix = make_matrix(output_dim)

    # Default path: W1 resident, single K step.
    bound, theta = boundary_forward(x, params, matrix)
    jax.block_until_ready((bound, theta))
    bound_ref, theta_ref = boundary_forward_ref(x, params, matrix)
    assert bound.shape == (N, 2, output_dim)
    assert theta.shape == (N, output_dim)
    assert jnp.allclose(bound, bound_ref, rtol=5e-3, atol=5e-3)
    assert jnp.allclose(theta, theta_ref, rtol=5e-3, atol=5e-3)

    # Exercise the K-tiled reduction path (2 K steps) and batch padding (N=5).
    x2 = jax.random.normal(k_x2, (5, C, H, W), dtype=jnp.float32)
    bound2, theta2 = boundary_forward(x2, params, matrix, k_tile=512)
    jax.block_until_ready((bound2, theta2))
    bound2_ref, theta2_ref = boundary_forward_ref(x2, params, matrix)
    assert bound2.shape == (5, 2, output_dim)
    assert theta2.shape == (5, output_dim)
    assert jnp.allclose(bound2, bound2_ref, rtol=5e-3, atol=5e-3)
    assert jnp.allclose(theta2, theta2_ref, rtol=5e-3, atol=5e-3)

    print("KERNEL_OK")
</pallas_src>

<mosaic_0001>
module attributes {stable_mosaic.version = 11 : i64} {
  func.func @_boundary_kernel(%arg0: i32, %arg1: i32, %arg2: memref<16x1024xbf16, #tpu.memory_space<vmem>>, %arg3: memref<1024x512xbf16, #tpu.memory_space<vmem>>, %arg4: memref<1x512xf32, #tpu.memory_space<vmem>>, %arg5: memref<512x512xbf16, #tpu.memory_space<vmem>>, %arg6: memref<1x512xf32, #tpu.memory_space<vmem>>, %arg7: memref<512x512xbf16, #tpu.memory_space<vmem>>, %arg8: memref<1x512xf32, #tpu.memory_space<vmem>>, %arg9: memref<512x512xbf16, #tpu.memory_space<vmem>>, %arg10: memref<1x512xf32, #tpu.memory_space<vmem>>, %arg11: memref<512x512xbf16, #tpu.memory_space<vmem>>, %arg12: memref<1x512xf32, #tpu.memory_space<vmem>>, %arg13: memref<512x512xbf16, #tpu.memory_space<vmem>>, %arg14: memref<1x512xf32, #tpu.memory_space<vmem>>, %arg15: memref<512x128xbf16, #tpu.memory_space<vmem>>, %arg16: memref<1x128xf32, #tpu.memory_space<vmem>>, %arg17: memref<128x128xf32, #tpu.memory_space<vmem>>, %arg18: memref<16x384xf32, #tpu.memory_space<vmem>>, %arg19: memref<16x512xf32, #tpu.memory_space<vmem>>) attributes {dimension_semantics = [#tpu.dimension_semantics<parallel>, #tpu.dimension_semantics<arbitrary>], iteration_bounds = array<i64: 1, 1>, scalar_prefetch = 0 : i64, scratch_operands = 1 : i64, tpu.core_type = #tpu.core_type<tc>, window_params = [{transform_indices = @transform_0, window_bounds = array<i64: 16, 1024>}, {transform_indices = @transform_1, window_bounds = array<i64: 1024, 512>}, {pipeline_mode = #tpu.pipeline_mode<synchronous>, transform_indices = @transform_2, window_bounds = array<i64: 1, 512>}, {pipeline_mode = #tpu.pipeline_mode<synchronous>, transform_indices = @transform_3, window_bounds = array<i64: 512, 512>}, {pipeline_mode = #tpu.pipeline_mode<synchronous>, transform_indices = @transform_4, window_bounds = array<i64: 1, 512>}, {pipeline_mode = #tpu.pipeline_mode<synchronous>, transform_indices = @transform_5, window_bounds = array<i64: 512, 512>}, {pipeline_mode = #tpu.pipeline_mode<synchronous>, transform_indices = @transform_6, window_bounds = array<i64: 1, 512>}, {pipeline_mode = #tpu.pipeline_mode<synchronous>, transform_indices = @transform_7, window_bounds = array<i64: 512, 512>}, {pipeline_mode = #tpu.pipeline_mode<synchronous>, transform_indices = @transform_8, window_bounds = array<i64: 1, 512>}, {pipeline_mode = #tpu.pipeline_mode<synchronous>, transform_indices = @transform_9, window_bounds = array<i64: 512, 512>}, {pipeline_mode = #tpu.pipeline_mode<synchronous>, transform_indices = @transform_10, window_bounds = array<i64: 1, 512>}, {pipeline_mode = #tpu.pipeline_mode<synchronous>, transform_indices = @transform_11, window_bounds = array<i64: 512, 512>}, {pipeline_mode = #tpu.pipeline_mode<synchronous>, transform_indices = @transform_12, window_bounds = array<i64: 1, 512>}, {pipeline_mode = #tpu.pipeline_mode<synchronous>, transform_indices = @transform_13, window_bounds = array<i64: 512, 128>}, {pipeline_mode = #tpu.pipeline_mode<synchronous>, transform_indices = @transform_14, window_bounds = array<i64: 1, 128>}, {pipeline_mode = #tpu.pipeline_mode<synchronous>, transform_indices = @transform_15, window_bounds = array<i64: 128, 128>}, {transform_indices = @transform_16, window_bounds = array<i64: 16, 384>}]} {
    %c0_i32 = arith.constant 0 : i32
    %0 = arith.cmpi eq, %arg1, %c0_i32 : i32
    %1 = arith.extui %0 : i1 to i32
    %c0_i32_0 = arith.constant 0 : i32
    %2 = arith.cmpi ne, %1, %c0_i32_0 : i32
    scf.if %2 {
      %cst_10 = arith.constant 0.000000e+00 : f32
      %12 = vector.broadcast %cst_10 : f32 to vector<16x512xf32>
      %c0_11 = arith.constant 0 : index
      %c0_12 = arith.constant 0 : index
      %13 = vector.load %arg19[%c0_11, %c0_12] : memref<16x512xf32, #tpu.memory_space<vmem>>, vector<16x512xf32>
      tpu.vector_store %arg19[%c0_11, %c0_12], %12 {strides = array<i32>} : memref<16x512xf32, #tpu.memory_space<vmem>>, vector<16x512xf32>,
    } else {
    }
    %c0 = arith.constant 0 : index
    %c0_1 = arith.constant 0 : index
    %3 = vector.load %arg19[%c0, %c0_1] : memref<16x512xf32, #tpu.memory_space<vmem>>, vector<16x512xf32>
    %c0_2 = arith.constant 0 : index
    %c0_3 = arith.constant 0 : index
    %4 = vector.load %arg2[%c0_2, %c0_3] : memref<16x1024xbf16, #tpu.memory_space<vmem>>, vector<16x1024xbf16>
    %c0_4 = arith.constant 0 : index
    %c0_5 = arith.constant 0 : index
    %5 = vector.load %arg3[%c0_4, %c0_5] : memref<1024x512xbf16, #tpu.memory_space<vmem>>, vector<1024x512xbf16>
    %cst = arith.constant dense<0.000000e+00> : vector<16x512xf32>
    %6 = tpu.matmul %4, %5, %cst {dimension_numbers = #tpu.dot_dimension_numbers<[1], [0], [0], [1], [0, 0, 1, 1], [], []>} : vector<16x1024xbf16>, vector<1024x512xbf16>, vector<16x512xf32> -> vector<16x512xf32>
    %7 = arith.addf %3, %6 : vector<16x512xf32>
    %c0_6 = arith.constant 0 : index
    %c0_7 = arith.constant 0 : index
    %8 = vector.load %arg19[%c0_6, %c0_7] : memref<16x512xf32, #tpu.memory_space<vmem>>, vector<16x512xf32>
    tpu.vector_store %arg19[%c0_6, %c0_7], %7 {strides = array<i32>} : memref<16x512xf32, #tpu.memory_space<vmem>>, vector<16x512xf32>,
    %c0_i32_8 = arith.constant 0 : i32
    %9 = arith.cmpi eq, %arg1, %c0_i32_8 : i32
    %10 = arith.extui %9 : i1 to i32
    %c0_i32_9 = arith.constant 0 : i32
    %11 = arith.cmpi ne, %10, %c0_i32_9 : i32
    scf.if %11 {
      %c0_10 = arith.constant 0 : index
      %c0_11 = arith.constant 0 : index
      %12 = vector.load %arg19[%c0_10, %c0_11] : memref<16x512xf32, #tpu.memory_space<vmem>>, vector<16x512xf32>
      %c0_12 = arith.constant 0 : index
      %c0_13 = arith.constant 0 : index
      %13 = vector.load %arg4[%c0_12, %c0_13] : memref<1x512xf32, #tpu.memory_space<vmem>>, vector<1x512xf32>
      %14 = vector.broadcast %13 : vector<1x512xf32> to vector<16x512xf32>
      %15 = arith.addf %12, %14 : vector<16x512xf32>
      %cst_14 = arith.constant 0.000000e+00 : f32
      %16 = vector.broadcast %cst_14 : f32 to vector<16x512xf32>
      %17 = arith.maximumf %15, %16 : vector<16x512xf32>
      %18 = arith.truncf %17 : vector<16x512xf32> to vector<16x512xbf16>
      %c0_15 = arith.constant 0 : index
      %c0_16 = arith.constant 0 : index
      %19 = vector.load %arg5[%c0_15, %c0_16] : memref<512x512xbf16, #tpu.memory_space<vmem>>, vector<512x512xbf16>
      %cst_17 = arith.constant dense<0.000000e+00> : vector<16x512xf32>
      %20 = tpu.matmul %18, %19, %cst_17 {dimension_numbers = #tpu.dot_dimension_numbers<[1], [0], [0], [1], [0, 0, 1, 1], [], []>} : vector<16x512xbf16>, vector<512x512xbf16>, vector<16x512xf32> -> vector<16x512xf32>
      %c0_18 = arith.constant 0 : index
      %c0_19 = arith.constant 0 : index
      %21 = vector.load %arg6[%c0_18, %c0_19] : memref<1x512xf32, #tpu.memory_space<vmem>>, vector<1x512xf32>
      %22 = vector.broadcast %21 : vector<1x512xf32> to vector<16x512xf32>
      %23 = arith.addf %20, %22 : vector<16x512xf32>
      %cst_20 = arith.constant 0.000000e+00 : f32
      %24 = vector.broadcast %cst_20 : f32 to vector<16x512xf32>
      %25 = arith.maximumf %23, %24 : vector<16x512xf32>
      %26 = arith.truncf %25 : vector<16x512xf32> to vector<16x512xbf16>
      %c0_21 = arith.constant 0 : index
      %c0_22 = arith.constant 0 : index
      %27 = vector.load %arg7[%c0_21, %c0_22] : memref<512x512xbf16, #tpu.memory_space<vmem>>, vector<512x512xbf16>
      %cst_23 = arith.constant dense<0.000000e+00> : vector<16x512xf32>
      %28 = tpu.matmul %26, %27, %cst_23 {dimension_numbers = #tpu.dot_dimension_numbers<[1], [0], [0], [1], [0, 0, 1, 1], [], []>} : vector<16x512xbf16>, vector<512x512xbf16>, vector<16x512xf32> -> vector<16x512xf32>
      %c0_24 = arith.constant 0 : index
      %c0_25 = arith.constant 0 : index
      %29 = vector.load %arg8[%c0_24, %c0_25] : memref<1x512xf32, #tpu.memory_space<vmem>>, vector<1x512xf32>
      %30 = vector.broadcast %29 : vector<1x512xf32> to vector<16x512xf32>
      %31 = arith.addf %28, %30 : vector<16x512xf32>
      %cst_26 = arith.constant 0.000000e+00 : f32
      %32 = vector.broadcast %cst_26 : f32 to vector<16x512xf32>
      %33 = arith.maximumf %31, %32 : vector<16x512xf32>
      %34 = arith.truncf %33 : vector<16x512xf32> to vector<16x512xbf16>
      %c0_27 = arith.constant 0 : index
      %c0_28 = arith.constant 0 : index
      %35 = vector.load %arg9[%c0_27, %c0_28] : memref<512x512xbf16, #tpu.memory_space<vmem>>, vector<512x512xbf16>
      %cst_29 = arith.constant dense<0.000000e+00> : vector<16x512xf32>
      %36 = tpu.matmul %34, %35, %cst_29 {dimension_numbers = #tpu.dot_dimension_numbers<[1], [0], [0], [1], [0, 0, 1, 1], [], []>} : vector<16x512xbf16>, vector<512x512xbf16>, vector<16x512xf32> -> vector<16x512xf32>
      %c0_30 = arith.constant 0 : index
      %c0_31 = arith.constant 0 : index
      %37 = vector.load %arg10[%c0_30, %c0_31] : memref<1x512xf32, #tpu.memory_space<vmem>>, vector<1x512xf32>
      %38 = vector.broadcast %37 : vector<1x512xf32> to vector<16x512xf32>
      %39 = arith.addf %36, %38 : vector<16x512xf32>
      %cst_32 = arith.constant 0.000000e+00 : f32
      %40 = vector.broadcast %cst_32 : f32 to vector<16x512xf32>
      %41 = arith.maximumf %39, %40 : vector<16x512xf32>
      %42 = arith.truncf %41 : vector<16x512xf32> to vector<16x512xbf16>
      %c0_33 = arith.constant 0 : index
      %c0_34 = arith.constant 0 : index
      %43 = vector.load %arg11[%c0_33, %c0_34] : memref<512x512xbf16, #tpu.memory_space<vmem>>, vector<512x512xbf16>
      %cst_35 = arith.constant dense<0.000000e+00> : vector<16x512xf32>
      %44 = tpu.matmul %42, %43, %cst_35 {dimension_numbers = #tpu.dot_dimension_numbers<[1], [0], [0], [1], [0, 0, 1, 1], [], []>} : vector<16x512xbf16>, vector<512x512xbf16>, vector<16x512xf32> -> vector<16x512xf32>
      %c0_36 = arith.constant 0 : index
      %c0_37 = arith.constant 0 : index
      %45 = vector.load %arg12[%c0_36, %c0_37] : memref<1x512xf32, #tpu.memory_space<vmem>>, vector<1x512xf32>
      %46 = vector.broadcast %45 : vector<1x512xf32> to vector<16x512xf32>
      %47 = arith.addf %44, %46 : vector<16x512xf32>
      %cst_38 = arith.constant 0.000000e+00 : f32
      %48 = vector.broadcast %cst_38 : f32 to vector<16x512xf32>
      %49 = arith.maximumf %47, %48 : vector<16x512xf32>
      %50 = arith.truncf %49 : vector<16x512xf32> to vector<16x512xbf16>
      %c0_39 = arith.constant 0 : index
      %c0_40 = arith.constant 0 : index
      %51 = vector.load %arg13[%c0_39, %c0_40] : memref<512x512xbf16, #tpu.memory_space<vmem>>, vector<512x512xbf16>
      %cst_41 = arith.constant dense<0.000000e+00> : vector<16x512xf32>
      %52 = tpu.matmul %50, %51, %cst_41 {dimension_numbers = #tpu.dot_dimension_numbers<[1], [0], [0], [1], [0, 0, 1, 1], [], []>} : vector<16x512xbf16>, vector<512x512xbf16>, vector<16x512xf32> -> vector<16x512xf32>
      %c0_42 = arith.constant 0 : index
      %c0_43 = arith.constant 0 : index
      %53 = vector.load %arg14[%c0_42, %c0_43] : memref<1x512xf32, #tpu.memory_space<vmem>>, vector<1x512xf32>
      %54 = vector.broadcast %53 : vector<1x512xf32> to vector<16x512xf32>
      %55 = arith.addf %52, %54 : vector<16x512xf32>
      %cst_44 = arith.constant 0.000000e+00 : f32
      %56 = vector.broadcast %cst_44 : f32 to vector<16x512xf32>
      %57 = arith.maximumf %55, %56 : vector<16x512xf32>
      %58 = arith.truncf %57 : vector<16x512xf32> to vector<16x512xbf16>
      %c0_45 = arith.constant 0 : index
      %c0_46 = arith.constant 0 : index
      %59 = vector.load %arg15[%c0_45, %c0_46] : memref<512x128xbf16, #tpu.memory_space<vmem>>, vector<512x128xbf16>
      %cst_47 = arith.constant dense<0.000000e+00> : vector<16x128xf32>
      %60 = tpu.matmul %58, %59, %cst_47 {dimension_numbers = #tpu.dot_dimension_numbers<[1], [0], [0], [1], [0, 0, 1, 1], [], []>} : vector<16x512xbf16>, vector<512x128xbf16>, vector<16x128xf32> -> vector<16x128xf32>
      %c0_48 = arith.constant 0 : index
      %c0_49 = arith.constant 0 : index
      %61 = vector.load %arg16[%c0_48, %c0_49] : memref<1x128xf32, #tpu.memory_space<vmem>>, vector<1x128xf32>
      %62 = vector.broadcast %61 : vector<1x128xf32> to vector<16x128xf32>
      %63 = arith.addf %60, %62 : vector<16x128xf32>
      %64 = tpu.iota {dimensions = array<i32: 1>} : vector<16x128xi32>
      %c16_i32 = arith.constant 16 : i32
      %65 = vector.broadcast %c16_i32 : i32 to vector<16x128xi32>
      %66 = arith.cmpi slt, %64, %65 : vector<16x128xi32>
      %67 = arith.negf %63 : vector<16x128xf32>
      %68 = math.exp %67 : vector<16x128xf32>
      %cst_50 = arith.constant 1.000000e+00 : f32
      %69 = vector.broadcast %cst_50 : f32 to vector<16x128xf32>
      %70 = arith.addf %69, %68 : vector<16x128xf32>
      %71 = arith.divf %69, %70 : vector<16x128xf32>
      %cst_51 = arith.constant 0.000000e+00 : f32
      %72 = vector.broadcast %cst_51 : f32 to vector<16x128xf32>
      %73 = arith.select %66, %71, %72 : vector<16x128xi1>, vector<16x128xf32>
      %cst_52 = arith.constant dense<0.000000e+00> : vector<16xf32>
      %74 = vector.multi_reduction <add>, %73, %cst_52 [1] : vector<16x128xf32> to vector<16xf32>
      %75 = vector.shape_cast %74 : vector<16xf32> to vector<16x1xf32>
      %76 = tpu.reciprocal %75 : vector<16x1xf32> -> vector<16x1xf32>
      %77 = vector.broadcast %76 : vector<16x1xf32> to vector<16x128xf32>
      %78 = arith.mulf %73, %77 : vector<16x128xf32>
      %cst_53 = arith.constant 6.28318548 : f32
      %79 = vector.broadcast %cst_53 : f32 to vector<16x128xf32>
      %80 = arith.mulf %78, %79 : vector<16x128xf32>
      %c0_54 = arith.constant 0 : index
      %c0_55 = arith.constant 0 : index
      %81 = vector.load %arg17[%c0_54, %c0_55] : memref<128x128xf32, #tpu.memory_space<vmem>>, vector<128x128xf32>
      %cst_56 = arith.constant dense<0.000000e+00> : vector<16x128xf32>
      %82 = tpu.matmul %80, %81, %cst_56 {dimension_numbers = #tpu.dot_dimension_numbers<[1], [0], [0], [1], [0, 0, 1, 1], [], []>} : vector<16x128xf32>, vector<128x128xf32>, vector<16x128xf32> -> vector<16x128xf32>
      %c0_57 = arith.constant 0 : index
      %c0_58 = arith.constant 0 : index
      %83 = vector.load %arg18[%c0_57, %c0_58] : memref<16x384xf32, #tpu.memory_space<vmem>>, vector<16x128xf32>
      tpu.vector_store %arg18[%c0_57, %c0_58], %80 {strides = array<i32>} : memref<16x384xf32, #tpu.memory_space<vmem>>, vector<16x128xf32>,
      %84 = math.cos %82 : vector<16x128xf32>
      %c0_59 = arith.constant 0 : index
      %c128 = arith.constant 128 : index
      %85 = vector.load %arg18[%c0_59, %c128] : memref<16x384xf32, #tpu.memory_space<vmem>>, vector<16x128xf32>
      tpu.vector_store %arg18[%c0_59, %c128], %84 {strides = array<i32>} : memref<16x384xf32, #tpu.memory_space<vmem>>, vector<16x128xf32>,
      %86 = math.sin %82 : vector<16x128xf32>
      %c0_60 = arith.constant 0 : index
      %c256 = arith.constant 256 : index
      %87 = vector.load %arg18[%c0_60, %c256] : memref<16x384xf32, #tpu.memory_space<vmem>>, vector<16x128xf32>
      tpu.vector_store %arg18[%c0_60, %c256], %86 {strides = array<i32>} : memref<16x384xf32, #tpu.memory_space<vmem>>, vector<16x128xf32>,
    } else {
    }
    return
  }
  func.func @transform_0(%arg0: i32, %arg1: i32) -> (i32, i32) {
    %c0_i32 = arith.constant 0 : i32
    return %arg0, %arg1 : i32, i32
  }
  func.func @transform_1(%arg0: i32, %arg1: i32) -> (i32, i32) {
    %c0_i32 = arith.constant 0 : i32
    %c0_i32_0 = arith.constant 0 : i32
    return %arg1, %c0_i32 : i32, i32
  }
  func.func @transform_2(%arg0: i32, %arg1: i32) -> (i32, i32) {
    %c0_i32 = arith.constant 0 : i32
    %c0_i32_0 = arith.constant 0 : i32
    %c0_i32_1 = arith.constant 0 : i32
    return %c0_i32, %c0_i32_0 : i32, i32
  }
  func.func @transform_3(%arg0: i32, %arg1: i32) -> (i32, i32) {
    %c0_i32 = arith.constant 0 : i32
    %c0_i32_0 = arith.constant 0 : i32
    %c0_i32_1 = arith.constant 0 : i32
    return %c0_i32, %c0_i32_0 : i32, i32
  }
  func.func @transform_4(%arg0: i32, %arg1: i32) -> (i32, i32) {
    %c0_i32 = arith.constant 0 : i32
    %c0_i32_0 = arith.constant 0 : i32
    %c0_i32_1 = arith.constant 0 : i32
    return %c0_i32, %c0_i32_0 : i32, i32
  }
  func.func @transform_5(%arg0: i32, %arg1: i32) -> (i32, i32) {
    %c0_i32 = arith.constant 0 : i32
    %c0_i32_0 = arith.constant 0 : i32
    %c0_i32_1 = arith.constant 0 : i32
    return %c0_i32, %c0_i32_0 : i32, i32
  }
  func.func @transform_6(%arg0: i32, %arg1: i32) -> (i32, i32) {
    %c0_i32 = arith.constant 0 : i32
    %c0_i32_0 = arith.constant 0 : i32
    %c0_i32_1 = arith.constant 0 : i32
    return %c0_i32, %c0_i32_0 : i32, i32
  }
  func.func @transform_7(%arg0: i32, %arg1: i32) -> (i32, i32) {
    %c0_i32 = arith.constant 0 : i32
    %c0_i32_0 = arith.constant 0 : i32
    %c0_i32_1 = arith.constant 0 : i32
    return %c0_i32, %c0_i32_0 : i32, i32
  }
  func.func @transform_8(%arg0: i32, %arg1: i32) -> (i32, i32) {
    %c0_i32 = arith.constant 0 : i32
    %c0_i32_0 = arith.constant 0 : i32
    %c0_i32_1 = arith.constant 0 : i32
    return %c0_i32, %c0_i32_0 : i32, i32
  }
  func.func @transform_9(%arg0: i32, %arg1: i32) -> (i32, i32) {
    %c0_i32 = arith.constant 0 : i32
    %c0_i32_0 = arith.constant 0 : i32
    %c0_i32_1 = arith.constant 0 : i32
    return %c0_i32, %c0_i32_0 : i32, i32
  }
  func.func @transform_10(%arg0: i32, %arg1: i32) -> (i32, i32) {
    %c0_i32 = arith.constant 0 : i32
    %c0_i32_0 = arith.constant 0 : i32
    %c0_i32_1 = arith.constant 0 : i32
    return %c0_i32, %c0_i32_0 : i32, i32
  }
  func.func @transform_11(%arg0: i32, %arg1: i32) -> (i32, i32) {
    %c0_i32 = arith.constant 0 : i32
    %c0_i32_0 = arith.constant 0 : i32
    %c0_i32_1 = arith.constant 0 : i32
    return %c0_i32, %c0_i32_0 : i32, i32
  }
  func.func @transform_12(%arg0: i32, %arg1: i32) -> (i32, i32) {
    %c0_i32 = arith.constant 0 : i32
    %c0_i32_0 = arith.constant 0 : i32
    %c0_i32_1 = arith.constant 0 : i32
    return %c0_i32, %c0_i32_0 : i32, i32
  }
  func.func @transform_13(%arg0: i32, %arg1: i32) -> (i32, i32) {
    %c0_i32 = arith.constant 0 : i32
    %c0_i32_0 = arith.constant 0 : i32
    %c0_i32_1 = arith.constant 0 : i32
    return %c0_i32, %c0_i32_0 : i32, i32
  }
  func.func @transform_14(%arg0: i32, %arg1: i32) -> (i32, i32) {
    %c0_i32 = arith.constant 0 : i32
    %c0_i32_0 = arith.constant 0 : i32
    %c0_i32_1 = arith.constant 0 : i32
    return %c0_i32, %c0_i32_0 : i32, i32
  }
  func.func @transform_15(%arg0: i32, %arg1: i32) -> (i32, i32) {
    %c0_i32 = arith.constant 0 : i32
    %c0_i32_0 = arith.constant 0 : i32
    %c0_i32_1 = arith.constant 0 : i32
    return %c0_i32, %c0_i32_0 : i32, i32
  }
  func.func @transform_16(%arg0: i32, %arg1: i32) -> (i32, i32) {
    %c0_i32 = arith.constant 0 : i32
    %c0_i32_0 = arith.constant 0 : i32
    return %arg0, %c0_i32 : i32, i32
  }
}

</mosaic_0001>

<llo_original>
// kernel: tpu_custom_call.1
$region0: #{tpu_custom_call.1}
  #allocation0 [shape = 'u32[]', space=smem, size = 0x4, offset = 0x4, fixed_abs, tag = 'smem constant byte address 0x4 - core index']
  #allocation1 [shape = 'u32[72,128]{1,0:T(1,128)}', space=vmem, size = 0x9000, scoped, tag = 'internal scratch']
  #allocation2 [shape = 'f32[16,512]{1,0:T(8,128)}', space=vmem, size = 0x8000, scoped, tag = 'scratch operand']
  %s0 = inlined_call_operand.hbm [shape: bf16[16,1024], index: 0, kind: input, shape index: {}]
  %s1 = inlined_call_operand.hbm [shape: bf16[1024,512], index: 1, kind: input, shape index: {}]
  %s2 = inlined_call_operand.hbm [shape: f32[1,512], index: 2, kind: input, shape index: {}]
  %s3 = inlined_call_operand.hbm [shape: bf16[512,512], index: 3, kind: input, shape index: {}]
  %s4 = inlined_call_operand.hbm [shape: f32[1,512], index: 4, kind: input, shape index: {}]
  %s5 = inlined_call_operand.hbm [shape: bf16[512,512], index: 5, kind: input, shape index: {}]
  %s6 = inlined_call_operand.vmem [shape: f32[1,512], index: 6, kind: input, shape index: {}]
  %s7 = inlined_call_operand.hbm [shape: bf16[512,512], index: 7, kind: input, shape index: {}]
  %s8 = inlined_call_operand.hbm [shape: f32[1,512], index: 8, kind: input, shape index: {}]
  %s9 = inlined_call_operand.hbm [shape: bf16[512,512], index: 9, kind: input, shape index: {}]
  %s10 = inlined_call_operand.vmem [shape: f32[1,512], index: 10, kind: input, shape index: {}]
  %s11 = inlined_call_operand.hbm [shape: bf16[512,512], index: 11, kind: input, shape index: {}]
  %s12 = inlined_call_operand.hbm [shape: f32[1,512], index: 12, kind: input, shape index: {}]
  %s13 = inlined_call_operand.hbm [shape: bf16[512,128], index: 13, kind: input, shape index: {}]
  %s14 = inlined_call_operand.vmem [shape: f32[1,128], index: 14, kind: input, shape index: {}]
  %s15 = inlined_call_operand.hbm [shape: f32[128,128], index: 15, kind: input, shape index: {}]
  %s16 = inlined_call_operand.hbm [shape: f32[16,384], index: 16, kind: output, shape index: {}]
  %s17 = sld [smem:[#allocation0]]
  $region134: #{tpu_custom_call.1} parent=0
    _
  %s19 = ssub.s32 1, %s17
  %s20 = scalar_select 0, %s19, %s17
  $region1: #{tpu_custom_call.1} parent=0
    #allocation3 [shape = 'u8[32768]{0}', space=vmem, size = 0x8000, scoped, tag = 'input window, operand 0, single buffered']
    #allocation4 [shape = 's32[1]{0}', space=sflag, size = 0x4, scoped, tag = 'scoped memory for tpu_custom_call.1']
    #allocation5 [shape = 's32[1]{0}', space=sflag, size = 0x4, scoped, tag = 'scoped memory for tpu_custom_call.1']
    #allocation6 [shape = 'u8[1048576]{0}', space=vmem, size = 0x100000, scoped, tag = 'input window, operand 1, single buffered']
    #allocation7 [shape = 's32[1]{0}', space=sflag, size = 0x4, scoped, tag = 'scoped memory for tpu_custom_call.1']
    #allocation8 [shape = 'u8[2048]{0}', space=vmem, size = 0x800, scoped, tag = 'input window, operand 2, single buffered']
    #allocation9 [shape = 'u8[524288]{0}', space=vmem, size = 0x80000, scoped, tag = 'input window, operand 3, single buffered']
    #allocation10 [shape = 's32[1]{0}', space=sflag, size = 0x4, scoped, tag = 'scoped memory for tpu_custom_call.1']
    #allocation11 [shape = 'u8[2048]{0}', space=vmem, size = 0x800, scoped, tag = 'input window, operand 4, single buffered']
    #allocation12 [shape = 'u8[524288]{0}', space=vmem, size = 0x80000, scoped, tag = 'input window, operand 5, single buffered']
    #allocation13 [shape = 's32[1]{0}', space=sflag, size = 0x4, scoped, tag = 'scoped memory for tpu_custom_call.1']
    #allocation14 [shape = 'u8[524288]{0}', space=vmem, size = 0x80000, scoped, tag = 'input window, operand 7, single buffered']
    #allocation15 [shape = 'u8[2048]{0}', space=vmem, size = 0x800, scoped, tag = 'input window, operand 8, single buffered']
    #allocation16 [shape = 's32[1]{0}', space=sflag, size = 0x4, scoped, tag = 'scoped memory for tpu_custom_call.1']
    #allocation17 [shape = 'u8[524288]{0}', space=vmem, size = 0x80000, scoped, tag = 'input window, operand 9, single buffered']
    #allocation18 [shape = 'u8[524288]{0}', space=vmem, size = 0x80000, scoped, tag = 'input window, operand 11, single buffered']
    #allocation19 [shape = 's32[1]{0}', space=sflag, size = 0x4, scoped, tag = 'scoped memory for tpu_custom_call.1']
    #allocation20 [shape = 'u8[2048]{0}', space=vmem, size = 0x800, scoped, tag = 'input window, operand 12, single buffered']
    #allocation21 [shape = 'u8[131072]{0}', space=vmem, size = 0x20000, scoped, tag = 'input window, operand 13, single buffered']
    #allocation22 [shape = 's32[1]{0}', space=sflag, size = 0x4, scoped, tag = 'scoped memory for tpu_custom_call.1']
    #allocation23 [shape = 'u8[65536]{0}', space=vmem, size = 0x10000, scoped, tag = 'input window, operand 15, single buffered']
    #allocation24 [shape = 'u8[24576]{0}', space=vmem, size = 0x6000, scoped, tag = 'output window, operand 0, single buffered']
    %21 = vsyncpa [#allocation4], 0
    %22 = vsyncpa [#allocation7], 0
    %23 = vsyncpa [#allocation10], 0
    %24 = vsyncpa [#allocation13], 0
    %25 = vsyncpa [#allocation16], 0
    %26 = vsyncpa [#allocation19], 0
    %27 = vsyncpa [#allocation22], 0
    %28 = vsyncpa [#allocation5], 0
    // Predicated region
    $region2: #{tpu_custom_call.1} parent=1 // pred_check
      _
    $region3: #{tpu_custom_call.1} parent=1 // pred_check_branch
      %30 = sbr.rel (0) target = $region5
    $region4: #{tpu_custom_call.1} parent=1 // pred_region
      %32 = vsyncadd [#allocation4], 0
      %s33 = sshll.u32 %s0, 4
      %s34 = int_to_ptr.hbm [resolvable:$true] %s33
      %s35 = sshll.u32 [#allocation3], 4
      %s36 = int_to_ptr.vmem [resolvable:$true] %s35
      %41 = dma.hbm_to_vmem [thread:$0]  %s34, 1024, %s36, [#allocation4], 512, 512, 32
    $region5: #{tpu_custom_call.1} parent=1 // pred_fallthru
      _
    // Predicated region
    $region6: #{tpu_custom_call.1} parent=1 // pred_check
      _
    $region7: #{tpu_custom_call.1} parent=1 // pred_check_branch
      %43 = sbr.rel (0) target = $region9
    $region8: #{tpu_custom_call.1} parent=1 // pred_region
      %45 = vsyncadd [#allocation7], 0
      %s46 = sshll.u32 %s1, 4
      %s47 = int_to_ptr.hbm [resolvable:$true] %s46
      %s48 = sshll.u32 [#allocation6], 4
      %s49 = int_to_ptr.vmem [resolvable:$true] %s48
      %54 = dma.hbm_to_vmem [thread:$0]  %s47, 32768, %s49, [#allocation7], 256, 256, 16
    $region9: #{tpu_custom_call.1} parent=1 // pred_fallthru
      _
    // Predicated region
    $region10: #{tpu_custom_call.1} parent=1 // pred_check
      _
    $region11: #{tpu_custom_call.1} parent=1 // pred_check_branch
      %56 = sbr.rel (0) target = $region13
    $region12: #{tpu_custom_call.1} parent=1 // pred_region
      %58 = vsyncadd [#allocation7], 0
      %s60 = sshll.u32 %s2, 4
      %s61 = int_to_ptr.hbm [resolvable:$true] %s60
      %s62 = sshll.u32 [#allocation8], 4
      %s63 = int_to_ptr.vmem [resolvable:$true] %s62
      %65 = dma.hbm_to_vmem [thread:$0]  %s61, 64, %s63, [#allocation7]
    $region13: #{tpu_custom_call.1} parent=1 // pred_fallthru
      _
    // Predicated region
    $region14: #{tpu_custom_call.1} parent=1 // pred_check
      _
    $region15: #{tpu_custom_call.1} parent=1 // pred_check_branch
      %67 = sbr.rel (0) target = $region17
    $region16: #{tpu_custom_call.1} parent=1 // pred_region
      %69 = vsyncadd [#allocation10], 0
      %s70 = sshll.u32 %s3, 4
      %s71 = int_to_ptr.hbm [resolvable:$true] %s70
      %s72 = sshll.u32 [#allocation9], 4
      %s73 = int_to_ptr.vmem [resolvable:$true] %s72
      %78 = dma.hbm_to_vmem [thread:$0]  %s71, 16384, %s73, [#allocation10], 256, 256, 16
    $region17: #{tpu_custom_call.1} parent=1 // pred_fallthru
      _
    // Predicated region
    $region18: #{tpu_custom_call.1} parent=1 // pred_check
      _
    $region19: #{tpu_custom_call.1} parent=1 // pred_check_branch
      %80 = sbr.rel (0) target = $region21
    $region20: #{tpu_custom_call.1} parent=1 // pred_region
      %82 = vsyncadd [#allocation10], 0
      %s84 = sshll.u32 %s4, 4
      %s85 = int_to_ptr.hbm [resolvable:$true] %s84
      %s86 = sshll.u32 [#allocation11], 4
      %s87 = int_to_ptr.vmem [resolvable:$true] %s86
      %89 = dma.hbm_to_vmem [thread:$0]  %s85, 64, %s87, [#allocation10]
    $region21: #{tpu_custom_call.1} parent=1 // pred_fallthru
      _
    // Predicated region
    $region22: #{tpu_custom_call.1} parent=1 // pred_check
      _
    $region23: #{tpu_custom_call.1} parent=1 // pred_check_branch
      %91 = sbr.rel (0) target = $region25
    $region24: #{tpu_custom_call.1} parent=1 // pred_region
      %93 = vsyncadd [#allocation13], 0
      %s94 = sshll.u32 %s5, 4
      %s95 = int_to_ptr.hbm [resolvable:$true] %s94
      %s96 = sshll.u32 [#allocation12], 4
      %s97 = int_to_ptr.vmem [resolvable:$true] %s96
      %102 = dma.hbm_to_vmem [thread:$0]  %s95, 16384, %s97, [#allocation13], 256, 256, 16
    $region25: #{tpu_custom_call.1} parent=1 // pred_fallthru
      _
    // Predicated region
    $region26: #{tpu_custom_call.1} parent=1 // pred_check
      _
    $region27: #{tpu_custom_call.1} parent=1 // pred_check_branch
      %104 = sbr.rel (0) target = $region29
    $region28: #{tpu_custom_call.1} parent=1 // pred_region
      _
    $region29: #{tpu_custom_call.1} parent=1 // pred_fallthru
      _
    // Predicated region
    $region30: #{tpu_custom_call.1} parent=1 // pred_check
      _
    $region31: #{tpu_custom_call.1} parent=1 // pred_check_branch
      %106 = sbr.rel (0) target = $region33
    $region32: #{tpu_custom_call.1} parent=1 // pred_region
      %108 = vsyncadd [#allocation13], 0
      %s109 = sshll.u32 %s7, 4
      %s110 = int_to_ptr.hbm [resolvable:$true] %s109
      %s111 = sshll.u32 [#allocation14], 4
      %s112 = int_to_ptr.vmem [resolvable:$true] %s111
      %117 = dma.hbm_to_vmem [thread:$0]  %s110, 16384, %s112, [#allocation13], 256, 256, 16
    $region33: #{tpu_custom_call.1} parent=1 // pred_fallthru
      _
    // Predicated region
    $region34: #{tpu_custom_call.1} parent=1 // pred_check
      _
    $region35: #{tpu_custom_call.1} parent=1 // pred_check_branch
      %119 = sbr.rel (0) target = $region37
    $region36: #{tpu_custom_call.1} parent=1 // pred_region
      %121 = vsyncadd [#allocation16], 0
      %s123 = sshll.u32 %s8, 4
      %s124 = int_to_ptr.hbm [resolvable:$true] %s123
      %s125 = sshll.u32 [#allocation15], 4
      %s126 = int_to_ptr.vmem [resolvable:$true] %s125
      %128 = dma.hbm_to_vmem [thread:$0]  %s124, 64, %s126, [#allocation16]
    $region37: #{tpu_custom_call.1} parent=1 // pred_fallthru
      _
    // Predicated region
    $region38: #{tpu_custom_call.1} parent=1 // pred_check
      _
    $region39: #{tpu_custom_call.1} parent=1 // pred_check_branch
      %130 = sbr.rel (0) target = $region41
    $region40: #{tpu_custom_call.1} parent=1 // pred_region
      %132 = vsyncadd [#allocation16], 0
      %s133 = sshll.u32 %s9, 4
      %s134 = int_to_ptr.hbm [resolvable:$true] %s133
      %s135 = sshll.u32 [#allocation17], 4
      %s136 = int_to_ptr.vmem [resolvable:$true] %s135
      %141 = dma.hbm_to_vmem [thread:$0]  %s134, 16384, %s136, [#allocation16], 256, 256, 16
    $region41: #{tpu_custom_call.1} parent=1 // pred_fallthru
      _
    // Predicated region
    $region42: #{tpu_custom_call.1} parent=1 // pred_check
      _
    $region43: #{tpu_custom_call.1} parent=1 // pred_check_branch
      %143 = sbr.rel (0) target = $region45
    $region44: #{tpu_custom_call.1} parent=1 // pred_region
      _
    $region45: #{tpu_custom_call.1} parent=1 // pred_fallthru
      _
    // Predicated region
    $region46: #{tpu_custom_call.1} parent=1 // pred_check
      _
    $region47: #{tpu_custom_call.1} parent=1 // pred_check_branch
      %145 = sbr.rel (0) target = $region49
    $region48: #{tpu_custom_call.1} parent=1 // pred_region
      %147 = vsyncadd [#allocation19], 0
      %s148 = sshll.u32 %s11, 4
      %s149 = int_to_ptr.hbm [resolvable:$true] %s148
      %s150 = sshll.u32 [#allocation18], 4
      %s151 = int_to_ptr.vmem [resolvable:$true] %s150
      %156 = dma.hbm_to_vmem [thread:$0]  %s149, 16384, %s151, [#allocation19], 256, 256, 16
    $region49: #{tpu_custom_call.1} parent=1 // pred_fallthru
      _
    // Predicated region
    $region50: #{tpu_custom_call.1} parent=1 // pred_check
      _
    $region51: #{tpu_custom_call.1} parent=1 // pred_check_branch
      %158 = sbr.rel (0) target = $region53
    $region52: #{tpu_custom_call.1} parent=1 // pred_region
      %160 = vsyncadd [#allocation19], 0
      %s162 = sshll.u32 %s12, 4
      %s163 = int_to_ptr.hbm [resolvable:$true] %s162
      %s164 = sshll.u32 [#allocation20], 4
      %s165 = int_to_ptr.vmem [resolvable:$true] %s164
      %167 = dma.hbm_to_vmem [thread:$0]  %s163, 64, %s165, [#allocation19]
    $region53: #{tpu_custom_call.1} parent=1 // pred_fallthru
      _
    // Predicated region
    $region54: #{tpu_custom_call.1} parent=1 // pred_check
      _
    $region55: #{tpu_custom_call.1} parent=1 // pred_check_branch
      %169 = sbr.rel (0) target = $region57
    $region56: #{tpu_custom_call.1} parent=1 // pred_region
      %171 = vsyncadd [#allocation22], 0
      %s172 = sshll.u32 %s13, 4
      %s173 = int_to_ptr.hbm [resolvable:$true] %s172
      %s174 = sshll.u32 [#allocation21], 4
      %s175 = int_to_ptr.vmem [resolvable:$true] %s174
      %180 = dma.hbm_to_vmem [thread:$0]  %s173, 4096, %s175, [#allocation22], 64, 64, 4
    $region57: #{tpu_custom_call.1} parent=1 // pred_fallthru
      _
    // Predicated region
    $region58: #{tpu_custom_call.1} parent=1 // pred_check
      _
    $region59: #{tpu_custom_call.1} parent=1 // pred_check_branch
      %182 = sbr.rel (0) target = $region61
    $region60: #{tpu_custom_call.1} parent=1 // pred_region
      _
    $region61: #{tpu_custom_call.1} parent=1 // pred_fallthru
      _
    // Predicated region
    $region62: #{tpu_custom_call.1} parent=1 // pred_check
      _
    $region63: #{tpu_custom_call.1} parent=1 // pred_check_branch
      %184 = sbr.rel (0) target = $region65
    $region64: #{tpu_custom_call.1} parent=1 // pred_region
      %186 = vsyncadd [#allocation22], 0
      %s187 = sshll.u32 %s15, 4
      %s188 = int_to_ptr.hbm [resolvable:$true] %s187
      %s189 = sshll.u32 [#allocation23], 4
      %s190 = int_to_ptr.vmem [resolvable:$true] %s189
      %195 = dma.hbm_to_vmem [thread:$0]  %s188, 2048, %s190, [#allocation22], 128, 128, 8
    $region65: #{tpu_custom_call.1} parent=1 // pred_fallthru
      _
    // Predicated region
    $region66: #{tpu_custom_call.1} parent=1 // pred_check
      _
    $region67: #{tpu_custom_call.1} parent=1 // pred_check_branch
      %197 = sbr.rel (0) target = $region69
    $region68: #{tpu_custom_call.1} parent=1 // pred_region
      %199 = dma.done [#allocation4], 1024
    $region69: #{tpu_custom_call.1} parent=1 // pred_fallthru
      _
    // Predicated region
    $region70: #{tpu_custom_call.1} parent=1 // pred_check
      _
    $region71: #{tpu_custom_call.1} parent=1 // pred_check_branch
      %201 = sbr.rel (0) target = $region73
    $region72: #{tpu_custom_call.1} parent=1 // pred_region
      %203 = dma.done [#allocation7], 32768
    $region73: #{tpu_custom_call.1} parent=1 // pred_fallthru
      _
    // Predicated region
    $region74: #{tpu_custom_call.1} parent=1 // pred_check
      _
    $region75: #{tpu_custom_call.1} parent=1 // pred_check_branch
      %205 = sbr.rel (0) target = $region77
    $region76: #{tpu_custom_call.1} parent=1 // pred_region
      %207 = dma.done [#allocation7], 64
    $region77: #{tpu_custom_call.1} parent=1 // pred_fallthru
      _
    // Predicated region
    $region78: #{tpu_custom_call.1} parent=1 // pred_check
      _
    $region79: #{tpu_custom_call.1} parent=1 // pred_check_branch
      %209 = sbr.rel (0) target = $region81
    $region80: #{tpu_custom_call.1} parent=1 // pred_region
      %211 = dma.done [#allocation10], 16384
    $region81: #{tpu_custom_call.1} parent=1 // pred_fallthru
      _
    // Predicated region
    $region82: #{tpu_custom_call.1} parent=1 // pred_check
      _
    $region83: #{tpu_custom_call.1} parent=1 // pred_check_branch
      %213 = sbr.rel (0) target = $region85
    $region84: #{tpu_custom_call.1} parent=1 // pred_region
      %215 = dma.done [#allocation10], 64
    $region85: #{tpu_custom_call.1} parent=1 // pred_fallthru
      _
    // Predicated region
    $region86: #{tpu_custom_call.1} parent=1 // pred_check
      _
    $region87: #{tpu_custom_call.1} parent=1 // pred_check_branch
      %217 = sbr.rel (0) target = $region89
    $region88: #{tpu_custom_call.1} parent=1 // pred_region
      %219 = dma.done [#allocation13], 16384
    $region89: #{tpu_custom_call.1} parent=1 // pred_fallthru
      _
    // Predicated region
    $region90: #{tpu_custom_call.1} parent=1 // pred_check
      _
    $region91: #{tpu_custom_call.1} parent=1 // pred_check_branch
      %221 = sbr.rel (0) target = $region93
    $region92: #{tpu_custom_call.1} parent=1 // pred_region
      %223 = dma.done [#allocation13], 16384
    $region93: #{tpu_custom_call.1} parent=1 // pred_fallthru
      _
    // Predicated region
    $region94: #{tpu_custom_call.1} parent=1 // pred_check
      _
    $region95: #{tpu_custom_call.1} parent=1 // pred_check_branch
      %225 = sbr.rel (0) target = $region97
    $region96: #{tpu_custom_call.1} parent=1 // pred_region
      %227 = dma.done [#allocation16], 64
    $region97: #{tpu_custom_call.1} parent=1 // pred_fallthru
      _
    // Predicated region
    $region98: #{tpu_custom_call.1} parent=1 // pred_check
      _
    $region99: #{tpu_custom_call.1} parent=1 // pred_check_branch
      %229 = sbr.rel (0) target = $region101
    $region100: #{tpu_custom_call.1} parent=1 // pred_region
      %231 = dma.done [#allocation16], 16384
    $region101: #{tpu_custom_call.1} parent=1 // pred_fallthru
      _
    // Predicated region
    $region102: #{tpu_custom_call.1} parent=1 // pred_check
      _
    $region103: #{tpu_custom_call.1} parent=1 // pred_check_branch
      %233 = sbr.rel (0) target = $region105
    $region104: #{tpu_custom_call.1} parent=1 // pred_region
      %235 = dma.done [#allocation19], 16384
    $region105: #{tpu_custom_call.1} parent=1 // pred_fallthru
      _
    // Predicated region
    $region106: #{tpu_custom_call.1} parent=1 // pred_check
      _
    $region107: #{tpu_custom_call.1} parent=1 // pred_check_branch
      %237 = sbr.rel (0) target = $region109
    $region108: #{tpu_custom_call.1} parent=1 // pred_region
      %239 = dma.done [#allocation19], 64
    $region109: #{tpu_custom_call.1} parent=1 // pred_fallthru
      _
    // Predicated region
    $region110: #{tpu_custom_call.1} parent=1 // pred_check
      _
    $region111: #{tpu_custom_call.1} parent=1 // pred_check_branch
      %241 = sbr.rel (0) target = $region113
    $region112: #{tpu_custom_call.1} parent=1 // pred_region
      %243 = dma.done [#allocation22], 4096
    $region113: #{tpu_custom_call.1} parent=1 // pred_fallthru
      _
    // Predicated region
    $region114: #{tpu_custom_call.1} parent=1 // pred_check
      _
    $region115: #{tpu_custom_call.1} parent=1 // pred_check_branch
      %245 = sbr.rel (0) target = $region117
    $region116: #{tpu_custom_call.1} parent=1 // pred_region
      %247 = dma.done [#allocation22], 2048
    $region117: #{tpu_custom_call.1} parent=1 // pred_fallthru
      _
    %p248 = scmp.eq.s32.totalorder 0, 0
    // Predicated region
    $region118: #{tpu_custom_call.1} parent=1 // pred_check
      %p249 = pneg %p248
    $region119: #{tpu_custom_call.1} parent=1 // pred_check_branch
      %251 = sbr.rel (%p249) target = $region121
    $region120: #{tpu_custom_call.1} parent=1 // pred_region
      %252 = vst [vmem:[#allocation2] sm:$0xff] 0.0
      %253 = vst [vmem:[#allocation2 + $0x8] sm:$0xff] 0.0
      %254 = vst [vmem:[#allocation2 + $0x10] sm:$0xff] 0.0
      %255 = vst [vmem:[#allocation2 + $0x18] sm:$0xff] 0.0
      %256 = vst [vmem:[#allocation2 + $0x20] sm:$0xff] 0.0
      %257 = vst [vmem:[#allocation2 + $0x28] sm:$0xff] 0.0
      %258 = vst [vmem:[#allocation2 + $0x30] sm:$0xff] 0.0
      %259 = vst [vmem:[#allocation2 + $0x38] sm:$0xff] 0.0
    $region121: #{tpu_custom_call.1} parent=1 // pred_fallthru
      _
    %v260 = vld [vmem:[#allocation2] sm:$0xff]
    %v261 = vld [vmem:[#allocation2 + $0x8] sm:$0xff]
    %v262 = vld [vmem:[#allocation2 + $0x10] sm:$0xff]
    %v263 = vld [vmem:[#allocation2 + $0x18] sm:$0xff]
    %v264 = vld [vmem:[#allocation2 + $0x20] sm:$0xff]
    %v265 = vld [vmem:[#allocation2 + $0x28] sm:$0xff]
    %v266 = vld [vmem:[#allocation2 + $0x30] sm:$0xff]
    %v267 = vld [vmem:[#allocation2 + $0x38] sm:$0xff]
    %v268 = vld [vmem:[#allocation3] sm:$0xff]
    %v269 = vld [vmem:[#allocation3 + $0x8] sm:$0xff]
    %v270 = vld [vmem:[#allocation3 + $0x10] sm:$0xff]
    %v271 = vld [vmem:[#allocation3 + $0x18] sm:$0xff]
    %v272 = vld [vmem:[#allocation3 + $0x20] sm:$0xff]
    %v273 = vld [vmem:[#allocation3 + $0x28] sm:$0xff]
    %v274 = vld [vmem:[#allocation3 + $0x30] sm:$0xff]
    %v275 = vld [vmem:[#allocation3 + $0x38] sm:$0xff]
    %v276 = vld [vmem:[#allocation6] sm:$0xff]
    %v277 = vld [vmem:[#allocation6 + $0x8] sm:$0xff]
    %v278 = vld [vmem:[#allocation6 + $0x10] sm:$0xff]
    %v279 = vld [vmem:[#allocation6 + $0x18] sm:$0xff]
    %v280 = vld [vmem:[#allocation6 + $0x20] sm:$0xff]
    %v281 = vld [vmem:[#allocation6 + $0x28] sm:$0xff]
    %v282 = vld [vmem:[#allocation6 + $0x30] sm:$0xff]
    %v283 = vld [vmem:[#allocation6 + $0x38] sm:$0xff]
    %v284 = vld [vmem:[#allocation6 + $0x40] sm:$0xff]
    %v285 = vld [vmem:[#allocation6 + $0x48] sm:$0xff]
    %v286 = vld [vmem:[#allocation6 + $0x50] sm:$0xff]
    %v287 = vld [vmem:[#allocation6 + $0x58] sm:$0xff]
    %v288 = vld [vmem:[#allocation6 + $0x60] sm:$0xff]
    %v289 = vld [vmem:[#allocation6 + $0x68] sm:$0xff]
    %v290 = vld [vmem:[#allocation6 + $0x70] sm:$0xff]
    %v291 = vld [vmem:[#allocation6 + $0x78] sm:$0xff]
    %v292 = vld [vmem:[#allocation6 + $0x80] sm:$0xff]
    %v293 = vld [vmem:[#allocation6 + $0x88] sm:$0xff]
    %v294 = vld [vmem:[#allocation6 + $0x90] sm:$0xff]
    %v295 = vld [vmem:[#allocation6 + $0x98] sm:$0xff]
    %v296 = vld [vmem:[#allocation6 + $0xa0] sm:$0xff]
    %v297 = vld [vmem:[#allocation6 + $0xa8] sm:$0xff]
    %v298 = vld [vmem:[#allocation6 + $0xb0] sm:$0xff]
    %v299 = vld [vmem:[#allocation6 + $0xb8] sm:$0xff]
    %v300 = vld [vmem:[#allocation6 + $0xc0] sm:$0xff]
    %v301 = vld [vmem:[#allocation6 + $0xc8] sm:$0xff]
    %v302 = vld [vmem:[#allocation6 + $0xd0] sm:$0xff]
    %v303 = vld [vmem:[#allocation6 + $0xd8] sm:$0xff]
    %v304 = vld [vmem:[#allocation6 + $0xe0] sm:$0xff]
    %v305 = vld [vmem:[#allocation6 + $0xe8] sm:$0xff]
    %v306 = vld [vmem:[#allocation6 + $0xf0] sm:$0xff]
    %v307 = vld [vmem:[#allocation6 + $0xf8] sm:$0xff]
    %v308 = vld [vmem:[#allocation6 + $0x100] sm:$0xff]
    %v309 = vld [vmem:[#allocation6 + $0x108] sm:$0xff]
    %v310 = vld [vmem:[#allocation6 + $0x110] sm:$0xff]
    %v311 = vld [vmem:[#allocation6 + $0x118] sm:$0xff]
    %v312 = vld [vmem:[#allocation6 + $0x120] sm:$0xff]
    %v313 = vld [vmem:[#allocation6 + $0x128] sm:$0xff]
    %v314 = vld [vmem:[#allocation6 + $0x130] sm:$0xff]
    %v315 = vld [vmem:[#allocation6 + $0x138] sm:$0xff]
    %v316 = vld [vmem:[#allocation6 + $0x140] sm:$0xff]
    %v317 = vld [vmem:[#allocation6 + $0x148] sm:$0xff]
    %v318 = vld [vmem:[#allocation6 + $0x150] sm:$0xff]
    %v319 = vld [vmem:[#allocation6 + $0x158] sm:$0xff]
    %v320 = vld [vmem:[#allocation6 + $0x160] sm:$0xff]
    %v321 = vld [vmem:[#allocation6 + $0x168] sm:$0xff]
    %v322 = vld [vmem:[#allocation6 + $0x170] sm:$0xff]
    %v323 = vld [vmem:[#allocation6 + $0x178] sm:$0xff]
    %v324 = vld [vmem:[#allocation6 + $0x180] sm:$0xff]
    %v325 = vld [vmem:[#allocation6 + $0x188] sm:$0xff]
    %v326 = vld [vmem:[#allocation6 + $0x190] sm:$0xff]
    %v327 = vld [vmem:[#allocation6 + $0x198] sm:$0xff]
    %v328 = vld [vmem:[#allocation6 + $0x1a0] sm:$0xff]
    %v329 = vld [vmem:[#allocation6 + $0x1a8] sm:$0xff]
    %v330 = vld [vmem:[#allocation6 + $0x1b0] sm:$0xff]
    %v331 = vld [vmem:[#allocation6 + $0x1b8] sm:$0xff]
    %v332 = vld [vmem:[#allocation6 + $0x1c0] sm:$0xff]
    %v333 = vld [vmem:[#allocation6 + $0x1c8] sm:$0xff]
    %v334 = vld [vmem:[#allocation6 + $0x1d0] sm:$0xff]
    %v335 = vld [vmem:[#allocation6 + $0x1d8] sm:$0xff]
    %v336 = vld [vmem:[#allocation6 + $0x1e0] sm:$0xff]
    %v337 = vld [vmem:[#allocation6 + $0x1e8] sm:$0xff]
    %v338 = vld [vmem:[#allocation6 + $0x1f0] sm:$0xff]
    %v339 = vld [vmem:[#allocation6 + $0x1f8] sm:$0xff]
    %v340 = vld [vmem:[#allocation6 + $0x200] sm:$0xff]
    %v341 = vld [vmem:[#allocation6 + $0x208] sm:$0xff]
    %v342 = vld [vmem:[#allocation6 + $0x210] sm:$0xff]
    %v343 = vld [vmem:[#allocation6 + $0x218] sm:$0xff]
    %v344 = vld [vmem:[#allocation6 + $0x220] sm:$0xff]
    %v345 = vld [vmem:[#allocation6 + $0x228] sm:$0xff]
    %v346 = vld [vmem:[#allocation6 + $0x230] sm:$0xff]
    %v347 = vld [vmem:[#allocation6 + $0x238] sm:$0xff]
    %v348 = vld [vmem:[#allocation6 + $0x240] sm:$0xff]
    %v349 = vld [vmem:[#allocation6 + $0x248] sm:$0xff]
    %v350 = vld [vmem:[#allocation6 + $0x250] sm:$0xff]
    %v351 = vld [vmem:[#allocation6 + $0x258] sm:$0xff]
    %v352 = vld [vmem:[#allocation6 + $0x260] sm:$0xff]
    %v353 = vld [vmem:[#allocation6 + $0x268] sm:$0xff]
    %v354 = vld [vmem:[#allocation6 + $0x270] sm:$0xff]
    %v355 = vld [vmem:[#allocation6 + $0x278] sm:$0xff]
    %v356 = vld [vmem:[#allocation6 + $0x280] sm:$0xff]
    %v357 = vld [vmem:[#allocation6 + $0x288] sm:$0xff]
    %v358 = vld [vmem:[#allocation6 + $0x290] sm:$0xff]
    %v359 = vld [vmem:[#allocation6 + $0x298] sm:$0xff]
    %v360 = vld [vmem:[#allocation6 + $0x2a0] sm:$0xff]
    %v361 = vld [vmem:[#allocation6 + $0x2a8] sm:$0xff]
    %v362 = vld [vmem:[#allocation6 + $0x2b0] sm:$0xff]
    %v363 = vld [vmem:[#allocation6 + $0x2b8] sm:$0xff]
    %v364 = vld [vmem:[#allocation6 + $0x2c0] sm:$0xff]
    %v365 = vld [vmem:[#allocation6 + $0x2c8] sm:$0xff]
    %v366 = vld [vmem:[#allocation6 + $0x2d0] sm:$0xff]
    %v367 = vld [vmem:[#allocation6 + $0x2d8] sm:$0xff]
    %v368 = vld [vmem:[#allocation6 + $0x2e0] sm:$0xff]
    %v369 = vld [vmem:[#allocation6 + $0x2e8] sm:$0xff]
    %v370 = vld [vmem:[#allocation6 + $0x2f0] sm:$0xff]
    %v371 = vld [vmem:[#allocation6 + $0x2f8] sm:$0xff]
    %v372 = vld [vmem:[#allocation6 + $0x300] sm:$0xff]
    %v373 = vld [vmem:[#allocation6 + $0x308] sm:$0xff]
    %v374 = vld [vmem:[#allocation6 + $0x310] sm:$0xff]
    %v375 = vld [vmem:[#allocation6 + $0x318] sm:$0xff]
    %v376 = vld [vmem:[#allocation6 + $0x320] sm:$0xff]
    %v377 = vld [vmem:[#allocation6 + $0x328] sm:$0xff]
    %v378 = vld [vmem:[#allocation6 + $0x330] sm:$0xff]
    %v379 = vld [vmem:[#allocation6 + $0x338] sm:$0xff]
    %v380 = vld [vmem:[#allocation6 + $0x340] sm:$0xff]
    %v381 = vld [vmem:[#allocation6 + $0x348] sm:$0xff]
    %v382 = vld [vmem:[#allocation6 + $0x350] sm:$0xff]
    %v383 = vld [vmem:[#allocation6 + $0x358] sm:$0xff]
    %v384 = vld [vmem:[#allocation6 + $0x360] sm:$0xff]
    %v385 = vld [vmem:[#allocation6 + $0x368] sm:$0xff]
    %v386 = vld [vmem:[#allocation6 + $0x370] sm:$0xff]
    %v387 = vld [vmem:[#allocation6 + $0x378] sm:$0xff]
    %v388 = vld [vmem:[#allocation6 + $0x380] sm:$0xff]
    %v389 = vld [vmem:[#allocation6 + $0x388] sm:$0xff]
    %v390 = vld [vmem:[#allocation6 + $0x390] sm:$0xff]
    %v391 = vld [vmem:[#allocation6 + $0x398] sm:$0xff]
    %v392 = vld [vmem:[#allocation6 + $0x3a0] sm:$0xff]
    %v393 = vld [vmem:[#allocation6 + $0x3a8] sm:$0xff]
    %v394 = vld [vmem:[#allocation6 + $0x3b0] sm:$0xff]
    %v395 = vld [vmem:[#allocation6 + $0x3b8] sm:$0xff]
    %v396 = vld [vmem:[#allocation6 + $0x3c0] sm:$0xff]
    %v397 = vld [vmem:[#allocation6 + $0x3c8] sm:$0xff]
    %v398 = vld [vmem:[#allocation6 + $0x3d0] sm:$0xff]
    %v399 = vld [vmem:[#allocation6 + $0x3d8] sm:$0xff]
    %v400 = vld [vmem:[#allocation6 + $0x3e0] sm:$0xff]
    %v401 = vld [vmem:[#allocation6 + $0x3e8] sm:$0xff]
    %v402 = vld [vmem:[#allocation6 + $0x3f0] sm:$0xff]
    %v403 = vld [vmem:[#allocation6 + $0x3f8] sm:$0xff]
    %v404 = vld [vmem:[#allocation6 + $0x400] sm:$0xff]
    %v405 = vld [vmem:[#allocation6 + $0x408] sm:$0xff]
    %v406 = vld [vmem:[#allocation6 + $0x410] sm:$0xff]
    %v407 = vld [vmem:[#allocation6 + $0x418] sm:$0xff]
    %v408 = vld [vmem:[#allocation6 + $0x420] sm:$0xff]
    %v409 = vld [vmem:[#allocation6 + $0x428] sm:$0xff]
    %v410 = vld [vmem:[#allocation6 + $0x430] sm:$0xff]
    %v411 = vld [vmem:[#allocation6 + $0x438] sm:$0xff]
    %v412 = vld [vmem:[#allocation6 + $0x440] sm:$0xff]
    %v413 = vld [vmem:[#allocation6 + $0x448] sm:$0xff]
    %v414 = vld [vmem:[#allocation6 + $0x450] sm:$0xff]
    %v415 = vld [vmem:[#allocation6 + $0x458] sm:$0xff]
    %v416 = vld [vmem:[#allocation6 + $0x460] sm:$0xff]
    %v417 = vld [vmem:[#allocation6 + $0x468] sm:$0xff]
    %v418 = vld [vmem:[#allocation6 + $0x470] sm:$0xff]
    %v419 = vld [vmem:[#allocation6 + $0x478] sm:$0xff]
    %v420 = vld [vmem:[#allocation6 + $0x480] sm:$0xff]
    %v421 = vld [vmem:[#allocation6 + $0x488] sm:$0xff]
    %v422 = vld [vmem:[#allocation6 + $0x490] sm:$0xff]
    %v423 = vld [vmem:[#allocation6 + $0x498] sm:$0xff]
    %v424 = vld [vmem:[#allocation6 + $0x4a0] sm:$0xff]
    %v425 = vld [vmem:[#allocation6 + $0x4a8] sm:$0xff]
    %v426 = vld [vmem:[#allocation6 + $0x4b0] sm:$0xff]
    %v427 = vld [vmem:[#allocation6 + $0x4b8] sm:$0xff]
    %v428 = vld [vmem:[#allocation6 + $0x4c0] sm:$0xff]
    %v429 = vld [vmem:[#allocation6 + $0x4c8] sm:$0xff]
    %v430 = vld [vmem:[#allocation6 + $0x4d0] sm:$0xff]
    %v431 = vld [vmem:[#allocation6 + $0x4d8] sm:$0xff]
    %v432 = vld [vmem:[#allocation6 + $0x4e0] sm:$0xff]
    %v433 = vld [vmem:[#allocation6 + $0x4e8] sm:$0xff]
    %v434 = vld [vmem:[#allocation6 + $0x4f0] sm:$0xff]
    %v435 = vld [vmem:[#allocation6 + $0x4f8] sm:$0xff]
    %v436 = vld [vmem:[#allocation6 + $0x500] sm:$0xff]
    %v437 = vld [vmem:[#allocation6 + $0x508] sm:$0xff]
    %v438 = vld [vmem:[#allocation6 + $0x510] sm:$0xff]
    %v439 = vld [vmem:[#allocation6 + $0x518] sm:$0xff]
    %v440 = vld [vmem:[#allocation6 + $0x520] sm:$0xff]
    %v441 = vld [vmem:[#allocation6 + $0x528] sm:$0xff]
    %v442 = vld [vmem:[#allocation6 + $0x530] sm:$0xff]
    %v443 = vld [vmem:[#allocation6 + $0x538] sm:$0xff]
    %v444 = vld [vmem:[#allocation6 + $0x540] sm:$0xff]
    %v445 = vld [vmem:[#allocation6 + $0x548] sm:$0xff]
    %v446 = vld [vmem:[#allocation6 + $0x550] sm:$0xff]
    %v447 = vld [vmem:[#allocation6 + $0x558] sm:$0xff]
    %v448 = vld [vmem:[#allocation6 + $0x560] sm:$0xff]
    %v449 = vld [vmem:[#allocation6 + $0x568] sm:$0xff]
    %v450 = vld [vmem:[#allocation6 + $0x570] sm:$0xff]
    %v451 = vld [vmem:[#allocation6 + $0x578] sm:$0xff]
    %v452 = vld [vmem:[#allocation6 + $0x580] sm:$0xff]
    %v453 = vld [vmem:[#allocation6 + $0x588] sm:$0xff]
    %v454 = vld [vmem:[#allocation6 + $0x590] sm:$0xff]
    %v455 = vld [vmem:[#allocation6 + $0x598] sm:$0xff]
    %v456 = vld [vmem:[#allocation6 + $0x5a0] sm:$0xff]
    %v457 = vld [vmem:[#allocation6 + $0x5a8] sm:$0xff]
    %v458 = vld [vmem:[#allocation6 + $0x5b0] sm:$0xff]
    %v459 = vld [vmem:[#allocation6 + $0x5b8] sm:$0xff]
    %v460 = vld [vmem:[#allocation6 + $0x5c0] sm:$0xff]
    %v461 = vld [vmem:[#allocation6 + $0x5c8] sm:$0xff]
    %v462 = vld [vmem:[#allocation6 + $0x5d0] sm:$0xff]
    %v463 = vld [vmem:[#allocation6 + $0x5d8] sm:$0xff]
    %v464 = vld [vmem:[#allocation6 + $0x5e0] sm:$0xff]
    %v465 = vld [vmem:[#allocation6 + $0x5e8] sm:$0xff]
    %v466 = vld [vmem:[#allocation6 + $0x5f0] sm:$0xff]
    %v467 = vld [vmem:[#allocation6 + $0x5f8] sm:$0xff]
    %v468 = vld [vmem:[#allocation6 + $0x600] sm:$0xff]
    %v469 = vld [vmem:[#allocation6 + $0x608] sm:$0xff]
    %v470 = vld [vmem:[#allocation6 + $0x610] sm:$0xff]
    %v471 = vld [vmem:[#allocation6 + $0x618] sm:$0xff]
    %v472 = vld [vmem:[#allocation6 + $0x620] sm:$0xff]
    %v473 = vld [vmem:[#allocation6 + $0x628] sm:$0xff]
    %v474 = vld [vmem:[#allocation6 + $0x630] sm:$0xff]
    %v475 = vld [vmem:[#allocation6 + $0x638] sm:$0xff]
    %v476 = vld [vmem:[#allocation6 + $0x640] sm:$0xff]
    %v477 = vld [vmem:[#allocation6 + $0x648] sm:$0xff]
    %v478 = vld [vmem:[#allocation6 + $0x650] sm:$0xff]
    %v479 = vld [vmem:[#allocation6 + $0x658] sm:$0xff]
    %v480 = vld [vmem:[#allocation6 + $0x660] sm:$0xff]
    %v481 = vld [vmem:[#allocation6 + $0x668] sm:$0xff]
    %v482 = vld [vmem:[#allocation6 + $0x670] sm:$0xff]
    %v483 = vld [vmem:[#allocation6 + $0x678] sm:$0xff]
    %v484 = vld [vmem:[#allocation6 + $0x680] sm:$0xff]
    %v485 = vld [vmem:[#allocation6 + $0x688] sm:$0xff]
    %v486 = vld [vmem:[#allocation6 + $0x690] sm:$0xff]
    %v487 = vld [vmem:[#allocation6 + $0x698] sm:$0xff]
    %v488 = vld [vmem:[#allocation6 + $0x6a0] sm:$0xff]
    %v489 = vld [vmem:[#allocation6 + $0x6a8] sm:$0xff]
    %v490 = vld [vmem:[#allocation6 + $0x6b0] sm:$0xff]
    %v491 = vld [vmem:[#allocation6 + $0x6b8] sm:$0xff]
    %v492 = vld [vmem:[#allocation6 + $0x6c0] sm:$0xff]
    %v493 = vld [vmem:[#allocation6 + $0x6c8] sm:$0xff]
    %v494 = vld [vmem:[#allocation6 + $0x6d0] sm:$0xff]
    %v495 = vld [vmem:[#allocation6 + $0x6d8] sm:$0xff]
    %v496 = vld [vmem:[#allocation6 + $0x6e0] sm:$0xff]
    %v497 = vld [vmem:[#allocation6 + $0x6e8] sm:$0xff]
    %v498 = vld [vmem:[#allocation6 + $0x6f0] sm:$0xff]
    %v499 = vld [vmem:[#allocation6 + $0x6f8] sm:$0xff]
    %v500 = vld [vmem:[#allocation6 + $0x700] sm:$0xff]
    %v501 = vld [vmem:[#allocation6 + $0x708] sm:$0xff]
    %v502 = vld [vmem:[#allocation6 + $0x710] sm:$0xff]
    %v503 = vld [vmem:[#allocation6 + $0x718] sm:$0xff]
    %v504 = vld [vmem:[#allocation6 + $0x720] sm:$0xff]
    %v505 = vld [vmem:[#allocation6 + $0x728] sm:$0xff]
    %v506 = vld [vmem:[#allocation6 + $0x730] sm:$0xff]
    %v507 = vld [vmem:[#allocation6 + $0x738] sm:$0xff]
    %v508 = vld [vmem:[#allocation6 + $0x740] sm:$0xff]
    %v509 = vld [vmem:[#allocation6 + $0x748] sm:$0xff]
    %v510 = vld [vmem:[#allocation6 + $0x750] sm:$0xff]
    %v511 = vld [vmem:[#allocation6 + $0x758] sm:$0xff]
    %v512 = vld [vmem:[#allocation6 + $0x760] sm:$0xff]
    %v513 = vld [vmem:[#allocation6 + $0x768] sm:$0xff]
    %v514 = vld [vmem:[#allocation6 + $0x770] sm:$0xff]
    %v515 = vld [vmem:[#allocation6 + $0x778] sm:$0xff]
    %v516 = vld [vmem:[#allocation6 + $0x780] sm:$0xff]
    %v517 = vld [vmem:[#allocation6 + $0x788] sm:$0xff]
    %v518 = vld [vmem:[#allocation6 + $0x790] sm:$0xff]
    %v519 = vld [vmem:[#allocation6 + $0x798] sm:$0xff]
    %v520 = vld [vmem:[#allocation6 + $0x7a0] sm:$0xff]
    %v521 = vld [vmem:[#allocation6 + $0x7a8] sm:$0xff]
    %v522 = vld [vmem:[#allocation6 + $0x7b0] sm:$0xff]
    %v523 = vld [vmem:[#allocation6 + $0x7b8] sm:$0xff]
    %v524 = vld [vmem:[#allocation6 + $0x7c0] sm:$0xff]
    %v525 = vld [vmem:[#allocation6 + $0x7c8] sm:$0xff]
    %v526 = vld [vmem:[#allocation6 + $0x7d0] sm:$0xff]
    %v527 = vld [vmem:[#allocation6 + $0x7d8] sm:$0xff]
    %v528 = vld [vmem:[#allocation6 + $0x7e0] sm:$0xff]
    %v529 = vld [vmem:[#allocation6 + $0x7e8] sm:$0xff]
    %v530 = vld [vmem:[#allocation6 + $0x7f0] sm:$0xff]
    %v531 = vld [vmem:[#allocation6 + $0x7f8] sm:$0xff]
    %v540 = vunpack.c.l.b16 %v268
    %v541 = vunpack.c.h.b16 %v268
    %v542 = vunpack.c.l.b16 %v269
    %v543 = vunpack.c.h.b16 %v269
    %v544 = vunpack.c.l.b16 %v270
    %v545 = vunpack.c.h.b16 %v270
    %v546 = vunpack.c.l.b16 %v271
    %v547 = vunpack.c.h.b16 %v271
    %v548 = vunpack.c.l.b16 %v272
    %v549 = vunpack.c.h.b16 %v272
    %v550 = vunpack.c.l.b16 %v273
    %v551 = vunpack.c.h.b16 %v273
    %v552 = vunpack.c.l.b16 %v274
    %v553 = vunpack.c.h.b16 %v274
    %v554 = vunpack.c.l.b16 %v275
    %v555 = vunpack.c.h.b16 %v275
    %v556 = vpack.c.b16 %v548, %v540
    %v557 = vpack.c.b16 %v549, %v541
    %v558 = vpack.c.b16 %v550, %v542
    %v559 = vpack.c.b16 %v551, %v543
    %v560 = vpack.c.b16 %v552, %v544
    %v561 = vpack.c.b16 %v553, %v545
    %v562 = vpack.c.b16 %v554, %v546
    %v563 = vpack.c.b16 %v555, %v547
    %v828 = vunpack.c.l.b16 %v276
    %v829 = vunpack.c.h.b16 %v276
    %v830 = vunpack.c.l.b16 %v277
    %v831 = vunpack.c.h.b16 %v277
    %v832 = vunpack.c.l.b16 %v278
    %v833 = vunpack.c.h.b16 %v278
    %v834 = vunpack.c.l.b16 %v279
    %v835 = vunpack.c.h.b16 %v279
    %v836 = vunpack.c.l.b16 %v280
    %v837 = vunpack.c.h.b16 %v280
    %v838 = vunpack.c.l.b16 %v281
    %v839 = vunpack.c.h.b16 %v281
    %v840 = vunpack.c.l.b16 %v282
    %v841 = vunpack.c.h.b16 %v282
    %v842 = vunpack.c.l.b16 %v283
    %v843 = vunpack.c.h.b16 %v283
    %v844 = vunpack.c.l.b16 %v284
    %v845 = vunpack.c.h.b16 %v284
    %v846 = vunpack.c.l.b16 %v285
    %v847 = vunpack.c.h.b16 %v285
    %v848 = vunpack.c.l.b16 %v286
    %v849 = vunpack.c.h.b16 %v286
    %v850 = vunpack.c.l.b16 %v287
    %v851 = vunpack.c.h.b16 %v287
    %v852 = vunpack.c.l.b16 %v288
    %v853 = vunpack.c.h.b16 %v288
    %v854 = vunpack.c.l.b16 %v289
    %v855 = vunpack.c.h.b16 %v289
    %v856 = vunpack.c.l.b16 %v290
    %v857 = vunpack.c.h.b16 %v290
    %v858 = vunpack.c.l.b16 %v291
    %v859 = vunpack.c.h.b16 %v291
    %v860 = vunpack.c.l.b16 %v292
    %v861 = vunpack.c.h.b16 %v292
    %v862 = vunpack.c.l.b16 %v293
    %v863 = vunpack.c.h.b16 %v293
    %v864 = vunpack.c.l.b16 %v294
    %v865 = vunpack.c.h.b16 %v294
    %v866 = vunpack.c.l.b16 %v295
    %v867 = vunpack.c.h.b16 %v295
    %v868 = vunpack.c.l.b16 %v296
    %v869 = vunpack.c.h.b16 %v296
    %v870 = vunpack.c.l.b16 %v297
    %v871 = vunpack.c.h.b16 %v297
    %v872 = vunpack.c.l.b16 %v298
    %v873 = vunpack.c.h.b16 %v298
    %v874 = vunpack.c.l.b16 %v299
    %v875 = vunpack.c.h.b16 %v299
    %v876 = vunpack.c.l.b16 %v300
    %v877 = vunpack.c.h.b16 %v300
    %v878 = vunpack.c.l.b16 %v301
    %v879 = vunpack.c.h.b16 %v301
    %v880 = vunpack.c.l.b16 %v302
    %v881 = vunpack.c.h.b16 %v302
    %v882 = vunpack.c.l.b16 %v303
    %v883 = vunpack.c.h.b16 %v303
    %v884 = vunpack.c.l.b16 %v304
    %v885 = vunpack.c.h.b16 %v304
    %v886 = vunpack.c.l.b16 %v305
    %v887 = vunpack.c.h.b16 %v305
    %v888 = vunpack.c.l.b16 %v306
    %v889 = vunpack.c.h.b16 %v306
    %v890 = vunpack.c.l.b16 %v307
    %v891 = vunpack.c.h.b16 %v307
    %v892 = vunpack.c.l.b16 %v308
    %v893 = vunpack.c.h.b16 %v308
    %v894 = vunpack.c.l.b16 %v309
    %v895 = vunpack.c.h.b16 %v309
    %v896 = vunpack.c.l.b16 %v310
    %v897 = vunpack.c.h.b16 %v310
    %v898 = vunpack.c.l.b16 %v311
    %v899 = vunpack.c.h.b16 %v311
    %v900 = vunpack.c.l.b16 %v312
    %v901 = vunpack.c.h.b16 %v312
    %v902 = vunpack.c.l.b16 %v313
    %v903 = vunpack.c.h.b16 %v313
    %v904 = vunpack.c.l.b16 %v314
    %v905 = vunpack.c.h.b16 %v314
    %v906 = vunpack.c.l.b16 %v315
    %v907 = vunpack.c.h.b16 %v315
    %v908 = vunpack.c.l.b16 %v316
    %v909 = vunpack.c.h.b16 %v316
    %v910 = vunpack.c.l.b16 %v317
    %v911 = vunpack.c.h.b16 %v317
    %v912 = vunpack.c.l.b16 %v318
    %v913 = vunpack.c.h.b16 %v318
    %v914 = vunpack.c.l.b16 %v319
    %v915 = vunpack.c.h.b16 %v319
    %v916 = vunpack.c.l.b16 %v320
    %v917 = vunpack.c.h.b16 %v320
    %v918 = vunpack.c.l.b16 %v321
    %v919 = vunpack.c.h.b16 %v321
    %v920 = vunpack.c.l.b16 %v322
    %v921 = vunpack.c.h.b16 %v322
    %v922 = vunpack.c.l.b16 %v323
    %v923 = vunpack.c.h.b16 %v323
    %v924 = vunpack.c.l.b16 %v324
    %v925 = vunpack.c.h.b16 %v324
    %v926 = vunpack.c.l.b16 %v325
    %v927 = vunpack.c.h.b16 %v325
    %v928 = vunpack.c.l.b16 %v326
    %v929 = vunpack.c.h.b16 %v326
    %v930 = vunpack.c.l.b16 %v327
    %v931 = vunpack.c.h.b16 %v327
    %v932 = vunpack.c.l.b16 %v328
    %v933 = vunpack.c.h.b16 %v328
    %v934 = vunpack.c.l.b16 %v329
    %v935 = vunpack.c.h.b16 %v329
    %v936 = vunpack.c.l.b16 %v330
    %v937 = vunpack.c.h.b16 %v330
    %v938 = vunpack.c.l.b16 %v331
    %v939 = vunpack.c.h.b16 %v331
    %v940 = vunpack.c.l.b16 %v332
    %v941 = vunpack.c.h.b16 %v332
    %v942 = vunpack.c.l.b16 %v333
    %v943 = vunpack.c.h.b16 %v333
    %v944 = vunpack.c.l.b16 %v334
    %v945 = vunpack.c.h.b16 %v334
    %v946 = vunpack.c.l.b16 %v335
    %v947 = vunpack.c.h.b16 %v335
    %v948 = vunpack.c.l.b16 %v336
    %v949 = vunpack.c.h.b16 %v336
    %v950 = vunpack.c.l.b16 %v337
    %v951 = vunpack.c.h.b16 %v337
    %v952 = vunpack.c.l.b16 %v338
    %v953 = vunpack.c.h.b16 %v338
    %v954 = vunpack.c.l.b16 %v339
    %v955 = vunpack.c.h.b16 %v339
    %v956 = vunpack.c.l.b16 %v340
    %v957 = vunpack.c.h.b16 %v340
    %v958 = vunpack.c.l.b16 %v341
    %v959 = vunpack.c.h.b16 %v341
    %v960 = vunpack.c.l.b16 %v342
    %v961 = vunpack.c.h.b16 %v342
    %v962 = vunpack.c.l.b16 %v343
    %v963 = vunpack.c.h.b16 %v343
    %v964 = vunpack.c.l.b16 %v344
    %v965 = vunpack.c.h.b16 %v344
    %v966 = vunpack.c.l.b16 %v345
    %v967 = vunpack.c.h.b16 %v345
    %v968 = vunpack.c.l.b16 %v346
    %v969 = vunpack.c.h.b16 %v346
    %v970 = vunpack.c.l.b16 %v347
    %v971 = vunpack.c.h.b16 %v347
    %v972 = vunpack.c.l.b16 %v348
    %v973 = vunpack.c.h.b16 %v348
    %v974 = vunpack.c.l.b16 %v349
    %v975 = vunpack.c.h.b16 %v349
    %v976 = vunpack.c.l.b16 %v350
    %v977 = vunpack.c.h.b16 %v350
    %v978 = vunpack.c.l.b16 %v351
    %v979 = vunpack.c.h.b16 %v351
    %v980 = vunpack.c.l.b16 %v352
    %v981 = vunpack.c.h.b16 %v352
    %v982 = vunpack.c.l.b16 %v353
    %v983 = vunpack.c.h.b16 %v353
    %v984 = vunpack.c.l.b16 %v354
    %v985 = vunpack.c.h.b16 %v354
    %v986 = vunpack.c.l.b16 %v355
    %v987 = vunpack.c.h.b16 %v355
    %v988 = vunpack.c.l.b16 %v356
    %v989 = vunpack.c.h.b16 %v356
    %v990 = vunpack.c.l.b16 %v357
    %v991 = vunpack.c.h.b16 %v357
    %v992 = vunpack.c.l.b16 %v358
    %v993 = vunpack.c.h.b16 %v358
    %v994 = vunpack.c.l.b16 %v359
    %v995 = vunpack.c.h.b16 %v359
    %v996 = vunpack.c.l.b16 %v360
    %v997 = vunpack.c.h.b16 %v360
    %v998 = vunpack.c.l.b16 %v361
    %v999 = vunpack.c.h.b16 %v361
    %v1000 = vunpack.c.l.b16 %v362
    %v1001 = vunpack.c.h.b16 %v362
    %v1002 = vunpack.c.l.b16 %v363
    %v1003 = vunpack.c.h.b16 %v363
    %v1004 = vunpack.c.l.b16 %v364
    %v1005 = vunpack.c.h.b16 %v364
    %v1006 = vunpack.c.l.b16 %v365
    %v1007 = vunpack.c.h.b16 %v365
    %v1008 = vunpack.c.l.b16 %v366
    %v1009 = vunpack.c.h.b16 %v366
    %v1010 = vunpack.c.l.b16 %v367
    %v1011 = vunpack.c.h.b16 %v367
    %v1012 = vunpack.c.l.b16 %v368
    %v1013 = vunpack.c.h.b16 %v368
    %v1014 = vunpack.c.l.b16 %v369
    %v1015 = vunpack.c.h.b16 %v369
    %v1016 = vunpack.c.l.b16 %v370
    %v1017 = vunpack.c.h.b16 %v370
    %v1018 = vunpack.c.l.b16 %v371
    %v1019 = vunpack.c.h.b16 %v371
    %v1020 = vunpack.c.l.b16 %v372
    %v1021 = vunpack.c.h.b16 %v372
    %v1022 = vunpack.c.l.b16 %v373
    %v1023 = vunpack.c.h.b16 %v373
    %v1024 = vunpack.c.l.b16 %v374
    %v1025 = vunpack.c.h.b16 %v374
    %v1026 = vunpack.c.l.b16 %v375
    %v1027 = vunpack.c.h.b16 %v375
    %v1028 = vunpack.c.l.b16 %v376
    %v1029 = vunpack.c.h.b16 %v376
    %v1030 = vunpack.c.l.b16 %v377
    %v1031 = vunpack.c.h.b16 %v377
    %v1032 = vunpack.c.l.b16 %v378
    %v1033 = vunpack.c.h.b16 %v378
    %v1034 = vunpack.c.l.b16 %v379
    %v1035 = vunpack.c.h.b16 %v379
    %v1036 = vunpack.c.l.b16 %v380
    %v1037 = vunpack.c.h.b16 %v380
    %v1038 = vunpack.c.l.b16 %v381
    %v1039 = vunpack.c.h.b16 %v381
    %v1040 = vunpack.c.l.b16 %v382
    %v1041 = vunpack.c.h.b16 %v382
    %v1042 = vunpack.c.l.b16 %v383
    %v1043 = vunpack.c.h.b16 %v383
    %v1044 = vunpack.c.l.b16 %v384
    %v1045 = vunpack.c.h.b16 %v384
    %v1046 = vunpack.c.l.b16 %v385
    %v1047 = vunpack.c.h.b16 %v385
    %v1048 = vunpack.c.l.b16 %v386
    %v1049 = vunpack.c.h.b16 %v386
    %v1050 = vunpack.c.l.b16 %v387
    %v1051 = vunpack.c.h.b16 %v387
    %v1052 = vunpack.c.l.b16 %v388
    %v1053 = vunpack.c.h.b16 %v388
    %v1054 = vunpack.c.l.b16 %v389
    %v1055 = vunpack.c.h.b16 %v389
    %v1056 = vunpack.c.l.b16 %v390
    %v1057 = vunpack.c.h.b16 %v390
    %v1058 = vunpack.c.l.b16 %v391
    %v1059 = vunpack.c.h.b16 %v391
    %v1060 = vunpack.c.l.b16 %v392
    %v1061 = vunpack.c.h.b16 %v392
    %v1062 = vunpack.c.l.b16 %v393
    %v1063 = vunpack.c.h.b16 %v393
    %v1064 = vunpack.c.l.b16 %v394
    %v1065 = vunpack.c.h.b16 %v394
    %v1066 = vunpack.c.l.b16 %v395
    %v1067 = vunpack.c.h.b16 %v395
    %v1068 = vunpack.c.l.b16 %v396
    %v1069 = vunpack.c.h.b16 %v396
    %v1070 = vunpack.c.l.b16 %v397
    %v1071 = vunpack.c.h.b16 %v397
    %v1072 = vunpack.c.l.b16 %v398
    %v1073 = vunpack.c.h.b16 %v398
    %v1074 = vunpack.c.l.b16 %v399
    %v1075 = vunpack.c.h.b16 %v399
    %v1076 = vunpack.c.l.b16 %v400
    %v1077 = vunpack.c.h.b16 %v400
    %v1078 = vunpack.c.l.b16 %v401
    %v1079 = vunpack.c.h.b16 %v401
    %v1080 = vunpack.c.l.b16 %v402
    %v1081 = vunpack.c.h.b16 %v402
    %v1082 = vunpack.c.l.b16 %v403
    %v1083 = vunpack.c.h.b16 %v403
    %v1084 = vunpack.c.l.b16 %v404
    %v1085 = vunpack.c.h.b16 %v404
    %v1086 = vunpack.c.l.b16 %v405
    %v1087 = vunpack.c.h.b16 %v405
    %v1088 = vunpack.c.l.b16 %v406
    %v1089 = vunpack.c.h.b16 %v406
    %v1090 = vunpack.c.l.b16 %v407
    %v1091 = vunpack.c.h.b16 %v407
    %v1092 = vunpack.c.l.b16 %v408
    %v1093 = vunpack.c.h.b16 %v408
    %v1094 = vunpack.c.l.b16 %v409
    %v1095 = vunpack.c.h.b16 %v409
    %v1096 = vunpack.c.l.b16 %v410
    %v1097 = vunpack.c.h.b16 %v410
    %v1098 = vunpack.c.l.b16 %v411
    %v1099 = vunpack.c.h.b16 %v411
    %v1100 = vunpack.c.l.b16 %v412
    %v1101 = vunpack.c.h.b16 %v412
    %v1102 = vunpack.c.l.b16 %v413
    %v1103 = vunpack.c.h.b16 %v413
    %v1104 = vunpack.c.l.b16 %v414
    %v1105 = vunpack.c.h.b16 %v414
    %v1106 = vunpack.c.l.b16 %v415
    %v1107 = vunpack.c.h.b16 %v415
    %v1108 = vunpack.c.l.b16 %v416
    %v1109 = vunpack.c.h.b16 %v416
    %v1110 = vunpack.c.l.b16 %v417
    %v1111 = vunpack.c.h.b16 %v417
    %v1112 = vunpack.c.l.b16 %v418
    %v1113 = vunpack.c.h.b16 %v418
    %v1114 = vunpack.c.l.b16 %v419
    %v1115 = vunpack.c.h.b16 %v419
    %v1116 = vunpack.c.l.b16 %v420
    %v1117 = vunpack.c.h.b16 %v420
    %v1118 = vunpack.c.l.b16 %v421
    %v1119 = vunpack.c.h.b16 %v421
    %v1120 = vunpack.c.l.b16 %v422
    %v1121 = vunpack.c.h.b16 %v422
    %v1122 = vunpack.c.l.b16 %v423
    %v1123 = vunpack.c.h.b16 %v423
    %v1124 = vunpack.c.l.b16 %v424
    %v1125 = vunpack.c.h.b16 %v424
    %v1126 = vunpack.c.l.b16 %v425
    %v1127 = vunpack.c.h.b16 %v425
    %v1128 = vunpack.c.l.b16 %v426
    %v1129 = vunpack.c.h.b16 %v426
    %v1130 = vunpack.c.l.b16 %v427
    %v1131 = vunpack.c.h.b16 %v427
    %v1132 = vunpack.c.l.b16 %v428
    %v1133 = vunpack.c.h.b16 %v428
    %v1134 = vunpack.c.l.b16 %v429
    %v1135 = vunpack.c.h.b16 %v429
    %v1136 = vunpack.c.l.b16 %v430
    %v1137 = vunpack.c.h.b16 %v430
    %v1138 = vunpack.c.l.b16 %v431
    %v1139 = vunpack.c.h.b16 %v431
    %v1140 = vunpack.c.l.b16 %v432
    %v1141 = vunpack.c.h.b16 %v432
    %v1142 = vunpack.c.l.b16 %v433
    %v1143 = vunpack.c.h.b16 %v433
    %v1144 = vunpack.c.l.b16 %v434
    %v1145 = vunpack.c.h.b16 %v434
    %v1146 = vunpack.c.l.b16 %v435
    %v1147 = vunpack.c.h.b16 %v435
    %v1148 = vunpack.c.l.b16 %v436
    %v1149 = vunpack.c.h.b16 %v436
    %v1150 = vunpack.c.l.b16 %v437
    %v1151 = vunpack.c.h.b16 %v437
    %v1152 = vunpack.c.l.b16 %v438
    %v1153 = vunpack.c.h.b16 %v438
    %v1154 = vunpack.c.l.b16 %v439
    %v1155 = vunpack.c.h.b16 %v439
    %v1156 = vunpack.c.l.b16 %v440
    %v1157 = vunpack.c.h.b16 %v440
    %v1158 = vunpack.c.l.b16 %v441
    %v1159 = vunpack.c.h.b16 %v441
    %v1160 = vunpack.c.l.b16 %v442
    %v1161 = vunpack.c.h.b16 %v442
    %v1162 = vunpack.c.l.b16 %v443
    %v1163 = vunpack.c.h.b16 %v443
    %v1164 = vunpack.c.l.b16 %v444
    %v1165 = vunpack.c.h.b16 %v444
    %v1166 = vunpack.c.l.b16 %v445
    %v1167 = vunpack.c.h.b16 %v445
    %v1168 = vunpack.c.l.b16 %v446
    %v1169 = vunpack.c.h.b16 %v446
    %v1170 = vunpack.c.l.b16 %v447
    %v1171 = vunpack.c.h.b16 %v447
    %v1172 = vunpack.c.l.b16 %v448
    %v1173 = vunpack.c.h.b16 %v448
    %v1174 = vunpack.c.l.b16 %v449
    %v1175 = vunpack.c.h.b16 %v449
    %v1176 = vunpack.c.l.b16 %v450
    %v1177 = vunpack.c.h.b16 %v450
    %v1178 = vunpack.c.l.b16 %v451
    %v1179 = vunpack.c.h.b16 %v451
    %v1180 = vunpack.c.l.b16 %v452
    %v1181 = vunpack.c.h.b16 %v452
    %v1182 = vunpack.c.l.b16 %v453
    %v1183 = vunpack.c.h.b16 %v453
    %v1184 = vunpack.c.l.b16 %v454
    %v1185 = vunpack.c.h.b16 %v454
    %v1186 = vunpack.c.l.b16 %v455
    %v1187 = vunpack.c.h.b16 %v455
    %v1188 = vunpack.c.l.b16 %v456
    %v1189 = vunpack.c.h.b16 %v456
    %v1190 = vunpack.c.l.b16 %v457
    %v1191 = vunpack.c.h.b16 %v457
    %v1192 = vunpack.c.l.b16 %v458
    %v1193 = vunpack.c.h.b16 %v458
    %v1194 = vunpack.c.l.b16 %v459
    %v1195 = vunpack.c.h.b16 %v459
    %v1196 = vunpack.c.l.b16 %v460
    %v1197 = vunpack.c.h.b16 %v460
    %v1198 = vunpack.c.l.b16 %v461
    %v1199 = vunpack.c.h.b16 %v461
    %v1200 = vunpack.c.l.b16 %v462
    %v1201 = vunpack.c.h.b16 %v462
    %v1202 = vunpack.c.l.b16 %v463
    %v1203 = vunpack.c.h.b16 %v463
    %v1204 = vunpack.c.l.b16 %v464
    %v1205 = vunpack.c.h.b16 %v464
    %v1206 = vunpack.c.l.b16 %v465
    %v1207 = vunpack.c.h.b16 %v465
    %v1208 = vunpack.c.l.b16 %v466
    %v1209 = vunpack.c.h.b16 %v466
    %v1210 = vunpack.c.l.b16 %v467
    %v1211 = vunpack.c.h.b16 %v467
    %v1212 = vunpack.c.l.b16 %v468
    %v1213 = vunpack.c.h.b16 %v468
    %v1214 = vunpack.c.l.b16 %v469
    %v1215 = vunpack.c.h.b16 %v469
    %v1216 = vunpack.c.l.b16 %v470
    %v1217 = vunpack.c.h.b16 %v470
    %v1218 = vunpack.c.l.b16 %v471
    %v1219 = vunpack.c.h.b16 %v471
    %v1220 = vunpack.c.l.b16 %v472
    %v1221 = vunpack.c.h.b16 %v472
    %v1222 = vunpack.c.l.b16 %v473
    %v1223 = vunpack.c.h.b16 %v473
    %v1224 = vunpack.c.l.b16 %v474
    %v1225 = vunpack.c.h.b16 %v474
    %v1226 = vunpack.c.l.b16 %v475
    %v1227 = vunpack.c.h.b16 %v475
    %v1228 = vunpack.c.l.b16 %v476
    %v1229 = vunpack.c.h.b16 %v476
    %v1230 = vunpack.c.l.b16 %v477
    %v1231 = vunpack.c.h.b16 %v477
    %v1232 = vunpack.c.l.b16 %v478
    %v1233 = vunpack.c.h.b16 %v478
    %v1234 = vunpack.c.l.b16 %v479
    %v1235 = vunpack.c.h.b16 %v479
    %v1236 = vunpack.c.l.b16 %v480
    %v1237 = vunpack.c.h.b16 %v480
    %v1238 = vunpack.c.l.b16 %v481
    %v1239 = vunpack.c.h.b16 %v481
    %v1240 = vunpack.c.l.b16 %v482
    %v1241 = vunpack.c.h.b16 %v482
    %v1242 = vunpack.c.l.b16 %v483
    %v1243 = vunpack.c.h.b16 %v483
    %v1244 = vunpack.c.l.b16 %v484
    %v1245 = vunpack.c.h.b16 %v484
    %v1246 = vunpack.c.l.b16 %v485
    %v1247 = vunpack.c.h.b16 %v485
    %v1248 = vunpack.c.l.b16 %v486
    %v1249 = vunpack.c.h.b16 %v486
    %v1250 = vunpack.c.l.b16 %v487
    %v1251 = vunpack.c.h.b16 %v487
    %v1252 = vunpack.c.l.b16 %v488
    %v1253 = vunpack.c.h.b16 %v488
    %v1254 = vunpack.c.l.b16 %v489
    %v1255 = vunpack.c.h.b16 %v489
    %v1256 = vunpack.c.l.b16 %v490
    %v1257 = vunpack.c.h.b16 %v490
    %v1258 = vunpack.c.l.b16 %v491
    %v1259 = vunpack.c.h.b16 %v491
    %v1260 = vunpack.c.l.b16 %v492
    %v1261 = vunpack.c.h.b16 %v492
    %v1262 = vunpack.c.l.b16 %v493
    %v1263 = vunpack.c.h.b16 %v493
    %v1264 = vunpack.c.l.b16 %v494
    %v1265 = vunpack.c.h.b16 %v494
    %v1266 = vunpack.c.l.b16 %v495
    %v1267 = vunpack.c.h.b16 %v495
    %v1268 = vunpack.c.l.b16 %v496
    %v1269 = vunpack.c.h.b16 %v496
    %v1270 = vunpack.c.l.b16 %v497
    %v1271 = vunpack.c.h.b16 %v497
    %v1272 = vunpack.c.l.b16 %v498
    %v1273 = vunpack.c.h.b16 %v498
    %v1274 = vunpack.c.l.b16 %v499
    %v1275 = vunpack.c.h.b16 %v499
    %v1276 = vunpack.c.l.b16 %v500
    %v1277 = vunpack.c.h.b16 %v500
    %v1278 = vunpack.c.l.b16 %v501
    %v1279 = vunpack.c.h.b16 %v501
    %v1280 = vunpack.c.l.b16 %v502
    %v1281 = vunpack.c.h.b16 %v502
    %v1282 = vunpack.c.l.b16 %v503
    %v1283 = vunpack.c.h.b16 %v503
    %v1284 = vunpack.c.l.b16 %v504
    %v1285 = vunpack.c.h.b16 %v504
    %v1286 = vunpack.c.l.b16 %v505
    %v1287 = vunpack.c.h.b16 %v505
    %v1288 = vunpack.c.l.b16 %v506
    %v1289 = vunpack.c.h.b16 %v506
    %v1290 = vunpack.c.l.b16 %v507
    %v1291 = vunpack.c.h.b16 %v507
    %v1292 = vunpack.c.l.b16 %v508
    %v1293 = vunpack.c.h.b16 %v508
    %v1294 = vunpack.c.l.b16 %v509
    %v1295 = vunpack.c.h.b16 %v509
    %v1296 = vunpack.c.l.b16 %v510
    %v1297 = vunpack.c.h.b16 %v510
    %v1298 = vunpack.c.l.b16 %v511
    %v1299 = vunpack.c.h.b16 %v511
    %v1300 = vunpack.c.l.b16 %v512
    %v1301 = vunpack.c.h.b16 %v512
    %v1302 = vunpack.c.l.b16 %v513
    %v1303 = vunpack.c.h.b16 %v513
    %v1304 = vunpack.c.l.b16 %v514
    %v1305 = vunpack.c.h.b16 %v514
    %v1306 = vunpack.c.l.b16 %v515
    %v1307 = vunpack.c.h.b16 %v515
    %v1308 = vunpack.c.l.b16 %v516
    %v1309 = vunpack.c.h.b16 %v516
    %v1310 = vunpack.c.l.b16 %v517
    %v1311 = vunpack.c.h.b16 %v517
    %v1312 = vunpack.c.l.b16 %v518
    %v1313 = vunpack.c.h.b16 %v518
    %v1314 = vunpack.c.l.b16 %v519
    %v1315 = vunpack.c.h.b16 %v519
    %v1316 = vunpack.c.l.b16 %v520
    %v1317 = vunpack.c.h.b16 %v520
    %v1318 = vunpack.c.l.b16 %v521
    %v1319 = vunpack.c.h.b16 %v521
    %v1320 = vunpack.c.l.b16 %v522
    %v1321 = vunpack.c.h.b16 %v522
    %v1322 = vunpack.c.l.b16 %v523
    %v1323 = vunpack.c.h.b16 %v523
    %v1324 = vunpack.c.l.b16 %v524
    %v1325 = vunpack.c.h.b16 %v524
    %v1326 = vunpack.c.l.b16 %v525
    %v1327 = vunpack.c.h.b16 %v525
    %v1328 = vunpack.c.l.b16 %v526
    %v1329 = vunpack.c.h.b16 %v526
    %v1330 = vunpack.c.l.b16 %v527
    %v1331 = vunpack.c.h.b16 %v527
    %v1332 = vunpack.c.l.b16 %v528
    %v1333 = vunpack.c.h.b16 %v528
    %v1334 = vunpack.c.l.b16 %v529
    %v1335 = vunpack.c.h.b16 %v529
    %v1336 = vunpack.c.l.b16 %v530
    %v1337 = vunpack.c.h.b16 %v530
    %v1338 = vunpack.c.l.b16 %v531
    %v1339 = vunpack.c.h.b16 %v531
    %v1340 = vpack.c.b16 %v832, %v828
    %v1341 = vpack.c.b16 %v833, %v829
    %v1342 = vpack.c.b16 %v834, %v830
    %v1343 = vpack.c.b16 %v835, %v831
    %v1344 = vpack.c.b16 %v840, %v836
    %v1345 = vpack.c.b16 %v841, %v837
    %v1346 = vpack.c.b16 %v842, %v838
    %v1347 = vpack.c.b16 %v843, %v839
    %v1348 = vpack.c.b16 %v848, %v844
    %v1349 = vpack.c.b16 %v849, %v845
    %v1350 = vpack.c.b16 %v850, %v846
    %v1351 = vpack.c.b16 %v851, %v847
    %v1352 = vpack.c.b16 %v856, %v852
    %v1353 = vpack.c.b16 %v857, %v853
    %v1354 = vpack.c.b16 %v858, %v854
    %v1355 = vpack.c.b16 %v859, %v855
    %v1356 = vpack.c.b16 %v864, %v860
    %v1357 = vpack.c.b16 %v865, %v861
    %v1358 = vpack.c.b16 %v866, %v862
    %v1359 = vpack.c.b16 %v867, %v863
    %v1360 = vpack.c.b16 %v872, %v868
    %v1361 = vpack.c.b16 %v873, %v869
    %v1362 = vpack.c.b16 %v874, %v870
    %v1363 = vpack.c.b16 %v875, %v871
    %v1364 = vpack.c.b16 %v880, %v876
    %v1365 = vpack.c.b16 %v881, %v877
    %v1366 = vpack.c.b16 %v882, %v878
    %v1367 = vpack.c.b16 %v883, %v879
    %v1368 = vpack.c.b16 %v888, %v884
    %v1369 = vpack.c.b16 %v889, %v885
    %v1370 = vpack.c.b16 %v890, %v886
    %v1371 = vpack.c.b16 %v891, %v887
    %v1372 = vpack.c.b16 %v896, %v892
    %v1373 = vpack.c.b16 %v897, %v893
    %v1374 = vpack.c.b16 %v898, %v894
    %v1375 = vpack.c.b16 %v899, %v895
    %v1376 = vpack.c.b16 %v904, %v900
    %v1377 = vpack.c.b16 %v905, %v901
    %v1378 = vpack.c.b16 %v906, %v902
    %v1379 = vpack.c.b16 %v907, %v903
    %v1380 = vpack.c.b16 %v912, %v908
    %v1381 = vpack.c.b16 %v913, %v909
    %v1382 = vpack.c.b16 %v914, %v910
    %v1383 = vpack.c.b16 %v915, %v911
    %v1384 = vpack.c.b16 %v920, %v916
    %v1385 = vpack.c.b16 %v921, %v917
    %v1386 = vpack.c.b16 %v922, %v918
    %v1387 = vpack.c.b16 %v923, %v919
    %v1388 = vpack.c.b16 %v928, %v924
    %v1389 = vpack.c.b16 %v929, %v925
    %v1390 = vpack.c.b16 %v930, %v926
    %v1391 = vpack.c.b16 %v931, %v927
    %v1392 = vpack.c.b16 %v936, %v932
    %v1393 = vpack.c.b16 %v937, %v933
    %v1394 = vpack.c.b16 %v938, %v934
    %v1395 = vpack.c.b16 %v939, %v935
    %v1396 = vpack.c.b16 %v944, %v940
    %v1397 = vpack.c.b16 %v945, %v941
    %v1398 = vpack.c.b16 %v946, %v942
    %v1399 = vpack.c.b16 %v947, %v943
    %v1400 = vpack.c.b16 %v952, %v948
    %v1401 = vpack.c.b16 %v953, %v949
    %v1402 = vpack.c.b16 %v954, %v950
    %v1403 = vpack.c.b16 %v955, %v951
    %v1404 = vpack.c.b16 %v960, %v956
    %v1405 = vpack.c.b16 %v961, %v957
    %v1406 = vpack.c.b16 %v962, %v958
    %v1407 = vpack.c.b16 %v963, %v959
    %v1408 = vpack.c.b16 %v968, %v964
    %v1409 = vpack.c.b16 %v969, %v965
    %v1410 = vpack.c.b16 %v970, %v966
    %v1411 = vpack.c.b16 %v971, %v967
    %v1412 = vpack.c.b16 %v976, %v972
    %v1413 = vpack.c.b16 %v977, %v973
    %v1414 = vpack.c.b16 %v978, %v974
    %v1415 = vpack.c.b16 %v979, %v975
    %v1416 = vpack.c.b16 %v984, %v980
    %v1417 = vpack.c.b16 %v985, %v981
    %v1418 = vpack.c.b16 %v986, %v982
    %v1419 = vpack.c.b16 %v987, %v983
    %v1420 = vpack.c.b16 %v992, %v988
    %v1421 = vpack.c.b16 %v993, %v989
    %v1422 = vpack.c.b16 %v994, %v990
    %v1423 = vpack.c.b16 %v995, %v991
    %v1424 = vpack.c.b16 %v1000, %v996
    %v1425 = vpack.c.b16 %v1001, %v997
    %v1426 = vpack.c.b16 %v1002, %v998
    %v1427 = vpack.c.b16 %v1003, %v999
    %v1428 = vpack.c.b16 %v1008, %v1004
    %v1429 = vpack.c.b16 %v1009, %v1005
    %v1430 = vpack.c.b16 %v1010, %v1006
    %v1431 = vpack.c.b16 %v1011, %v1007
    %v1432 = vpack.c.b16 %v1016, %v1012
    %v1433 = vpack.c.b16 %v1017, %v1013
    %v1434 = vpack.c.b16 %v1018, %v1014
    %v1435 = vpack.c.b16 %v1019, %v1015
    %v1436 = vpack.c.b16 %v1024, %v1020
    %v1437 = vpack.c.b16 %v1025, %v1021
    %v1438 = vpack.c.b16 %v1026, %v1022
    %v1439 = vpack.c.b16 %v1027, %v1023
    %v1440 = vpack.c.b16 %v1032, %v1028
    %v1441 = vpack.c.b16 %v1033, %v1029
    %v1442 = vpack.c.b16 %v1034, %v1030
    %v1443 = vpack.c.b16 %v1035, %v1031
    %v1444 = vpack.c.b16 %v1040, %v1036
    %v1445 = vpack.c.b16 %v1041, %v1037
    %v1446 = vpack.c.b16 %v1042, %v1038
    %v1447 = vpack.c.b16 %v1043, %v1039
    %v1448 = vpack.c.b16 %v1048, %v1044
    %v1449 = vpack.c.b16 %v1049, %v1045
    %v1450 = vpack.c.b16 %v1050, %v1046
    %v1451 = vpack.c.b16 %v1051, %v1047
    %v1452 = vpack.c.b16 %v1056, %v1052
    %v1453 = vpack.c.b16 %v1057, %v1053
    %v1454 = vpack.c.b16 %v1058, %v1054
    %v1455 = vpack.c.b16 %v1059, %v1055
    %v1456 = vpack.c.b16 %v1064, %v1060
    %v1457 = vpack.c.b16 %v1065, %v1061
    %v1458 = vpack.c.b16 %v1066, %v1062
    %v1459 = vpack.c.b16 %v1067, %v1063
    %v1460 = vpack.c.b16 %v1072, %v1068
    %v1461 = vpack.c.b16 %v1073, %v1069
    %v1462 = vpack.c.b16 %v1074, %v1070
    %v1463 = vpack.c.b16 %v1075, %v1071
    %v1464 = vpack.c.b16 %v1080, %v1076
    %v1465 = vpack.c.b16 %v1081, %v1077
    %v1466 = vpack.c.b16 %v1082, %v1078
    %v1467 = vpack.c.b16 %v1083, %v1079
    %v1468 = vpack.c.b16 %v1088, %v1084
    %v1469 = vpack.c.b16 %v1089, %v1085
    %v1470 = vpack.c.b16 %v1090, %v1086
    %v1471 = vpack.c.b16 %v1091, %v1087
    %v1472 = vpack.c.b16 %v1096, %v1092
    %v1473 = vpack.c.b16 %v1097, %v1093
    %v1474 = vpack.c.b16 %v1098, %v1094
    %v1475 = vpack.c.b16 %v1099, %v1095
    %v1476 = vpack.c.b16 %v1104, %v1100
    %v1477 = vpack.c.b16 %v1105, %v1101
    %v1478 = vpack.c.b16 %v1106, %v1102
    %v1479 = vpack.c.b16 %v1107, %v1103
    %v1480 = vpack.c.b16 %v1112, %v1108
    %v1481 = vpack.c.b16 %v1113, %v1109
    %v1482 = vpack.c.b16 %v1114, %v1110
    %v1483 = vpack.c.b16 %v1115, %v1111
    %v1484 = vpack.c.b16 %v1120, %v1116
    %v1485 = vpack.c.b16 %v1121, %v1117
    %v1486 = vpack.c.b16 %v1122, %v1118
    %v1487 = vpack.c.b16 %v1123, %v1119
    %v1488 = vpack.c.b16 %v1128, %v1124
    %v1489 = vpack.c.b16 %v1129, %v1125
    %v1490 = vpack.c.b16 %v1130, %v1126
    %v1491 = vpack.c.b16 %v1131, %v1127
    %v1492 = vpack.c.b16 %v1136, %v1132
    %v1493 = vpack.c.b16 %v1137, %v1133
    %v1494 = vpack.c.b16 %v1138, %v1134
    %v1495 = vpack.c.b16 %v1139, %v1135
    %v1496 = vpack.c.b16 %v1144, %v1140
    %v1497 = vpack.c.b16 %v1145, %v1141
    %v1498 = vpack.c.b16 %v1146, %v1142
    %v1499 = vpack.c.b16 %v1147, %v1143
    %v1500 = vpack.c.b16 %v1152, %v1148
    %v1501 = vpack.c.b16 %v1153, %v1149
    %v1502 = vpack.c.b16 %v1154, %v1150
    %v1503 = vpack.c.b16 %v1155, %v1151
    %v1504 = vpack.c.b16 %v1160, %v1156
    %v1505 = vpack.c.b16 %v1161, %v1157
    %v1506 = vpack.c.b16 %v1162, %v1158
    %v1507 = vpack.c.b16 %v1163, %v1159
    %v1508 = vpack.c.b16 %v1168, %v1164
    %v1509 = vpack.c.b16 %v1169, %v1165
    %v1510 = vpack.c.b16 %v1170, %v1166
    %v1511 = vpack.c.b16 %v1171, %v1167
    %v1512 = vpack.c.b16 %v1176, %v1172
    %v1513 = vpack.c.b16 %v1177, %v1173
    %v1514 = vpack.c.b16 %v1178, %v1174
    %v1515 = vpack.c.b16 %v1179, %v1175
    %v1516 = vpack.c.b16 %v1184, %v1180
    %v1517 = vpack.c.b16 %v1185, %v1181
    %v1518 = vpack.c.b16 %v1186, %v1182
    %v1519 = vpack.c.b16 %v1187, %v1183
    %v1520 = vpack.c.b16 %v1192, %v1188
    %v1521 = vpack.c.b16 %v1193, %v1189
    %v1522 = vpack.c.b16 %v1194, %v1190
    %v1523 = vpack.c.b16 %v1195, %v1191
    %v1524 = vpack.c.b16 %v1200, %v1196
    %v1525 = vpack.c.b16 %v1201, %v1197
    %v1526 = vpack.c.b16 %v1202, %v1198
    %v1527 = vpack.c.b16 %v1203, %v1199
    %v1528 = vpack.c.b16 %v1208, %v1204
    %v1529 = vpack.c.b16 %v1209, %v1205
    %v1530 = vpack.c.b16 %v1210, %v1206
    %v1531 = vpack.c.b16 %v1211, %v1207
    %v1532 = vpack.c.b16 %v1216, %v1212
    %v1533 = vpack.c.b16 %v1217, %v1213
    %v1534 = vpack.c.b16 %v1218, %v1214
    %v1535 = vpack.c.b16 %v1219, %v1215
    %v1536 = vpack.c.b16 %v1224, %v1220
    %v1537 = vpack.c.b16 %v1225, %v1221
    %v1538 = vpack.c.b16 %v1226, %v1222
    %v1539 = vpack.c.b16 %v1227, %v1223
    %v1540 = vpack.c.b16 %v1232, %v1228
    %v1541 = vpack.c.b16 %v1233, %v1229
    %v1542 = vpack.c.b16 %v1234, %v1230
    %v1543 = vpack.c.b16 %v1235, %v1231
    %v1544 = vpack.c.b16 %v1240, %v1236
    %v1545 = vpack.c.b16 %v1241, %v1237
    %v1546 = vpack.c.b16 %v1242, %v1238
    %v1547 = vpack.c.b16 %v1243, %v1239
    %v1548 = vpack.c.b16 %v1248, %v1244
    %v1549 = vpack.c.b16 %v1249, %v1245
    %v1550 = vpack.c.b16 %v1250, %v1246
    %v1551 = vpack.c.b16 %v1251, %v1247
    %v1552 = vpack.c.b16 %v1256, %v1252
    %v1553 = vpack.c.b16 %v1257, %v1253
    %v1554 = vpack.c.b16 %v1258, %v1254
    %v1555 = vpack.c.b16 %v1259, %v1255
    %v1556 = vpack.c.b16 %v1264, %v1260
    %v1557 = vpack.c.b16 %v1265, %v1261
    %v1558 = vpack.c.b16 %v1266, %v1262
    %v1559 = vpack.c.b16 %v1267, %v1263
    %v1560 = vpack.c.b16 %v1272, %v1268
    %v1561 = vpack.c.b16 %v1273, %v1269
    %v1562 = vpack.c.b16 %v1274, %v1270
    %v1563 = vpack.c.b16 %v1275, %v1271
    %v1564 = vpack.c.b16 %v1280, %v1276
    %v1565 = vpack.c.b16 %v1281, %v1277
    %v1566 = vpack.c.b16 %v1282, %v1278
    %v1567 = vpack.c.b16 %v1283, %v1279
    %v1568 = vpack.c.b16 %v1288, %v1284
    %v1569 = vpack.c.b16 %v1289, %v1285
    %v1570 = vpack.c.b16 %v1290, %v1286
    %v1571 = vpack.c.b16 %v1291, %v1287
    %v1572 = vpack.c.b16 %v1296, %v1292
    %v1573 = vpack.c.b16 %v1297, %v1293
    %v1574 = vpack.c.b16 %v1298, %v1294
    %v1575 = vpack.c.b16 %v1299, %v1295
    %v1576 = vpack.c.b16 %v1304, %v1300
    %v1577 = vpack.c.b16 %v1305, %v1301
    %v1578 = vpack.c.b16 %v1306, %v1302
    %v1579 = vpack.c.b16 %v1307, %v1303
    %v1580 = vpack.c.b16 %v1312, %v1308
    %v1581 = vpack.c.b16 %v1313, %v1309
    %v1582 = vpack.c.b16 %v1314, %v1310
    %v1583 = vpack.c.b16 %v1315, %v1311
    %v1584 = vpack.c.b16 %v1320, %v1316
    %v1585 = vpack.c.b16 %v1321, %v1317
    %v1586 = vpack.c.b16 %v1322, %v1318
    %v1587 = vpack.c.b16 %v1323, %v1319
    %v1588 = vpack.c.b16 %v1328, %v1324
    %v1589 = vpack.c.b16 %v1329, %v1325
    %v1590 = vpack.c.b16 %v1330, %v1326
    %v1591 = vpack.c.b16 %v1331, %v1327
    %v1592 = vpack.c.b16 %v1336, %v1332
    %v1593 = vpack.c.b16 %v1337, %v1333
    %v1594 = vpack.c.b16 %v1338, %v1334
    %v1595 = vpack.c.b16 %v1339, %v1335
    %1852 = vmatpush.bf16.msra.mxu0 %v1368
    %1853 = vmatpush.bf16.msra.mxu0 %v1364
    %1854 = vmatpush.bf16.msra.mxu0 %v1360
    %1855 = vmatpush.bf16.msra.mxu0 %v1356
    %1856 = vmatpush.bf16.msra.mxu0 %v1352
    %1857 = vmatpush.bf16.msra.mxu0 %v1348
    %1858 = vmatpush.bf16.msra.mxu0 %v1344
    %1859 = vmatpush.bf16.msra.mxu0 %v1340
    %1860 = vmatmul.bf16.gmra.mxu0 %v556
    %v1861 = vpop.f32.mrf.mxu0
    %v1862 = vadd.f32 0.0, %v1861
    %v1863 = vpop.f32.mrf.mxu0
    %v1864 = vadd.f32 0.0, %v1863
    %1865 = vdwg.mxu0
    %1866 = vmatpush.bf16.msra.mxu0 %v1400
    %1867 = vmatpush.bf16.msra.mxu0 %v1396
    %1868 = vmatpush.bf16.msra.mxu0 %v1392
    %1869 = vmatpush.bf16.msra.mxu0 %v1388
    %1870 = vmatpush.bf16.msra.mxu0 %v1384
    %1871 = vmatpush.bf16.msra.mxu0 %v1380
    %1872 = vmatpush.bf16.msra.mxu0 %v1376
    %1873 = vmatpush.bf16.msra.mxu0 %v1372
    %1874 = vmatmul.bf16.gmra.mxu0 %v557
    %v1875 = vpop.f32.mrf.mxu0
    %v1876 = vadd.f32 %v1862, %v1875
    %v1877 = vpop.f32.mrf.mxu0
    %v1878 = vadd.f32 %v1864, %v1877
    %1879 = vdwg.mxu0
    %1880 = vmatpush.bf16.msra.mxu0 %v1432
    %1881 = vmatpush.bf16.msra.mxu0 %v1428
    %1882 = vmatpush.bf16.msra.mxu0 %v1424
    %1883 = vmatpush.bf16.msra.mxu0 %v1420
    %1884 = vmatpush.bf16.msra.mxu0 %v1416
    %1885 = vmatpush.bf16.msra.mxu0 %v1412
    %1886 = vmatpush.bf16.msra.mxu0 %v1408
    %1887 = vmatpush.bf16.msra.mxu0 %v1404
    %1888 = vmatmul.bf16.gmra.mxu0 %v558
    %v1889 = vpop.f32.mrf.mxu0
    %v1890 = vadd.f32 %v1876, %v1889
    %v1891 = vpop.f32.mrf.mxu0
    %v1892 = vadd.f32 %v1878, %v1891
    %1893 = vdwg.mxu0
    %1894 = vmatpush.bf16.msra.mxu0 %v1464
    %1895 = vmatpush.bf16.msra.mxu0 %v1460
    %1896 = vmatpush.bf16.msra.mxu0 %v1456
    %1897 = vmatpush.bf16.msra.mxu0 %v1452
    %1898 = vmatpush.bf16.msra.mxu0 %v1448
    %1899 = vmatpush.bf16.msra.mxu0 %v1444
    %1900 = vmatpush.bf16.msra.mxu0 %v1440
    %1901 = vmatpush.bf16.msra.mxu0 %v1436
    %1902 = vmatmul.bf16.gmra.mxu0 %v559
    %v1903 = vpop.f32.mrf.mxu0
    %v1904 = vadd.f32 %v1890, %v1903
    %v1905 = vpop.f32.mrf.mxu0
    %v1906 = vadd.f32 %v1892, %v1905
    %1907 = vdwg.mxu0
    %1908 = vmatpush.bf16.msra.mxu0 %v1496
    %1909 = vmatpush.bf16.msra.mxu0 %v1492
    %1910 = vmatpush.bf16.msra.mxu0 %v1488
    %1911 = vmatpush.bf16.msra.mxu0 %v1484
    %1912 = vmatpush.bf16.msra.mxu0 %v1480
    %1913 = vmatpush.bf16.msra.mxu0 %v1476
    %1914 = vmatpush.bf16.msra.mxu0 %v1472
    %1915 = vmatpush.bf16.msra.mxu0 %v1468
    %1916 = vmatmul.bf16.gmra.mxu0 %v560
    %v1917 = vpop.f32.mrf.mxu0
    %v1918 = vadd.f32 %v1904, %v1917
    %v1919 = vpop.f32.mrf.mxu0
    %v1920 = vadd.f32 %v1906, %v1919
    %1921 = vdwg.mxu0
    %1922 = vmatpush.bf16.msra.mxu0 %v1528
    %1923 = vmatpush.bf16.msra.mxu0 %v1524
    %1924 = vmatpush.bf16.msra.mxu0 %v1520
    %1925 = vmatpush.bf16.msra.mxu0 %v1516
    %1926 = vmatpush.bf16.msra.mxu0 %v1512
    %1927 = vmatpush.bf16.msra.mxu0 %v1508
    %1928 = vmatpush.bf16.msra.mxu0 %v1504
    %1929 = vmatpush.bf16.msra.mxu0 %v1500
    %1930 = vmatmul.bf16.gmra.mxu0 %v561
    %v1931 = vpop.f32.mrf.mxu0
    %v1932 = vadd.f32 %v1918, %v1931
    %v1933 = vpop.f32.mrf.mxu0
    %v1934 = vadd.f32 %v1920, %v1933
    %1935 = vdwg.mxu0
    %1936 = vmatpush.bf16.msra.mxu0 %v1560
    %1937 = vmatpush.bf16.msra.mxu0 %v1556
    %1938 = vmatpush.bf16.msra.mxu0 %v1552
    %1939 = vmatpush.bf16.msra.mxu0 %v1548
    %1940 = vmatpush.bf16.msra.mxu0 %v1544
    %1941 = vmatpush.bf16.msra.mxu0 %v1540
    %1942 = vmatpush.bf16.msra.mxu0 %v1536
    %1943 = vmatpush.bf16.msra.mxu0 %v1532
    %1944 = vmatmul.bf16.gmra.mxu0 %v562
    %v1945 = vpop.f32.mrf.mxu0
    %v1946 = vadd.f32 %v1932, %v1945
    %v1947 = vpop.f32.mrf.mxu0
    %v1948 = vadd.f32 %v1934, %v1947
    %1949 = vdwg.mxu0
    %1950 = vmatpush.bf16.msra.mxu0 %v1592
    %1951 = vmatpush.bf16.msra.mxu0 %v1588
    %1952 = vmatpush.bf16.msra.mxu0 %v1584
    %1953 = vmatpush.bf16.msra.mxu0 %v1580
    %1954 = vmatpush.bf16.msra.mxu0 %v1576
    %1955 = vmatpush.bf16.msra.mxu0 %v1572
    %1956 = vmatpush.bf16.msra.mxu0 %v1568
    %1957 = vmatpush.bf16.msra.mxu0 %v1564
    %1958 = vmatmul.bf16.gmra.mxu0 %v563
    %v1959 = vpop.f32.mrf.mxu0
    %v1960 = vadd.f32 %v1946, %v1959
    %v1961 = vpop.f32.mrf.mxu0
    %v1962 = vadd.f32 %v1948, %v1961
    %1963 = vdwg.mxu0
    %1964 = vmatpush.bf16.msra.mxu0 %v1369
    %1965 = vmatpush.bf16.msra.mxu0 %v1365
    %1966 = vmatpush.bf16.msra.mxu0 %v1361
    %1967 = vmatpush.bf16.msra.mxu0 %v1357
    %1968 = vmatpush.bf16.msra.mxu0 %v1353
    %1969 = vmatpush.bf16.msra.mxu0 %v1349
    %1970 = vmatpush.bf16.msra.mxu0 %v1345
    %1971 = vmatpush.bf16.msra.mxu0 %v1341
    %1972 = vmatmul.bf16.gmra.mxu0 %v556
    %v1973 = vpop.f32.mrf.mxu0
    %v1974 = vadd.f32 0.0, %v1973
    %v1975 = vpop.f32.mrf.mxu0
    %v1976 = vadd.f32 0.0, %v1975
    %1977 = vdwg.mxu0
    %1978 = vmatpush.bf16.msra.mxu0 %v1401
    %1979 = vmatpush.bf16.msra.mxu0 %v1397
    %1980 = vmatpush.bf16.msra.mxu0 %v1393
    %1981 = vmatpush.bf16.msra.mxu0 %v1389
    %1982 = vmatpush.bf16.msra.mxu0 %v1385
    %1983 = vmatpush.bf16.msra.mxu0 %v1381
    %1984 = vmatpush.bf16.msra.mxu0 %v1377
    %1985 = vmatpush.bf16.msra.mxu0 %v1373
    %1986 = vmatmul.bf16.gmra.mxu0 %v557
    %v1987 = vpop.f32.mrf.mxu0
    %v1988 = vadd.f32 %v1974, %v1987
    %v1989 = vpop.f32.mrf.mxu0
    %v1990 = vadd.f32 %v1976, %v1989
    %1991 = vdwg.mxu0
    %1992 = vmatpush.bf16.msra.mxu0 %v1433
    %1993 = vmatpush.bf16.msra.mxu0 %v1429
    %1994 = vmatpush.bf16.msra.mxu0 %v1425
    %1995 = vmatpush.bf16.msra.mxu0 %v1421
    %1996 = vmatpush.bf16.msra.mxu0 %v1417
    %1997 = vmatpush.bf16.msra.mxu0 %v1413
    %1998 = vmatpush.bf16.msra.mxu0 %v1409
    %1999 = vmatpush.bf16.msra.mxu0 %v1405
    %2000 = vmatmul.bf16.gmra.mxu0 %v558
    %v2001 = vpop.f32.mrf.mxu0
    %v2002 = vadd.f32 %v1988, %v2001
    %v2003 = vpop.f32.mrf.mxu0
    %v2004 = vadd.f32 %v1990, %v2003
    %2005 = vdwg.mxu0
    %2006 = vmatpush.bf16.msra.mxu0 %v1465
    %2007 = vmatpush.bf16.msra.mxu0 %v1461
    %2008 = vmatpush.bf16.msra.mxu0 %v1457
    %2009 = vmatpush.bf16.msra.mxu0 %v1453
    %2010 = vmatpush.bf16.msra.mxu0 %v1449
    %2011 = vmatpush.bf16.msra.mxu0 %v1445
    %2012 = vmatpush.bf16.msra.mxu0 %v1441
    %2013 = vmatpush.bf16.msra.mxu0 %v1437
    %2014 = vmatmul.bf16.gmra.mxu0 %v559
    %v2015 = vpop.f32.mrf.mxu0
    %v2016 = vadd.f32 %v2002, %v2015
    %v2017 = vpop.f32.mrf.mxu0
    %v2018 = vadd.f32 %v2004, %v2017
    %2019 = vdwg.mxu0
    %2020 = vmatpush.bf16.msra.mxu0 %v1497
    %2021 = vmatpush.bf16.msra.mxu0 %v1493
    %2022 = vmatpush.bf16.msra.mxu0 %v1489
    %2023 = vmatpush.bf16.msra.mxu0 %v1485
    %2024 = vmatpush.bf16.msra.mxu0 %v1481
    %2025 = vmatpush.bf16.msra.mxu0 %v1477
    %2026 = vmatpush.bf16.msra.mxu0 %v1473
    %2027 = vmatpush.bf16.msra.mxu0 %v1469
    %2028 = vmatmul.bf16.gmra.mxu0 %v560
    %v2029 = vpop.f32.mrf.mxu0
    %v2030 = vadd.f32 %v2016, %v2029
    %v2031 = vpop.f32.mrf.mxu0
    %v2032 = vadd.f32 %v2018, %v2031
    %2033 = vdwg.mxu0
    %2034 = vmatpush.bf16.msra.mxu0 %v1529
    %2035 = vmatpush.bf16.msra.mxu0 %v1525
    %2036 = vmatpush.bf16.msra.mxu0 %v1521
    %2037 = vmatpush.bf16.msra.mxu0 %v1517
    %2038 = vmatpush.bf16.msra.mxu0 %v1513
    %2039 = vmatpush.bf16.msra.mxu0 %v1509
    %2040 = vmatpush.bf16.msra.mxu0 %v1505
    %2041 = vmatpush.bf16.msra.mxu0 %v1501
    %2042 = vmatmul.bf16.gmra.mxu0 %v561
    %v2043 = vpop.f32.mrf.mxu0
    %v2044 = vadd.f32 %v2030, %v2043
    %v2045 = vpop.f32.mrf.mxu0
    %v2046 = vadd.f32 %v2032, %v2045
    %2047 = vdwg.mxu0
    %2048 = vmatpush.bf16.msra.mxu0 %v1561
    %2049 = vmatpush.bf16.msra.mxu0 %v1557
    %2050 = vmatpush.bf16.msra.mxu0 %v1553
    %2051 = vmatpush.bf16.msra.mxu0 %v1549
    %2052 = vmatpush.bf16.msra.mxu0 %v1545
    %2053 = vmatpush.bf16.msra.mxu0 %v1541
    %2054 = vmatpush.bf16.msra.mxu0 %v1537
    %2055 = vmatpush.bf16.msra.mxu0 %v1533
    %2056 = vmatmul.bf16.gmra.mxu0 %v562
    %v2057 = vpop.f32.mrf.mxu0
    %v2058 = vadd.f32 %v2044, %v2057
    %v2059 = vpop.f32.mrf.mxu0
    %v2060 = vadd.f32 %v2046, %v2059
    %2061 = vdwg.mxu0
    %2062 = vmatpush.bf16.msra.mxu0 %v1593
    %2063 = vmatpush.bf16.msra.mxu0 %v1589
    %2064 = vmatpush.bf16.msra.mxu0 %v1585
    %2065 = vmatpush.bf16.msra.mxu0 %v1581
    %2066 = vmatpush.bf16.msra.mxu0 %v1577
    %2067 = vmatpush.bf16.msra.mxu0 %v1573
    %2068 = vmatpush.bf16.msra.mxu0 %v1569
    %2069 = vmatpush.bf16.msra.mxu0 %v1565
    %2070 = vmatmul.bf16.gmra.mxu0 %v563
    %v2071 = vpop.f32.mrf.mxu0
    %v2072 = vadd.f32 %v2058, %v2071
    %v2073 = vpop.f32.mrf.mxu0
    %v2074 = vadd.f32 %v2060, %v2073
    %2075 = vdwg.mxu0
    %2076 = vmatpush.bf16.msra.mxu0 %v1370
    %2077 = vmatpush.bf16.msra.mxu0 %v1366
    %2078 = vmatpush.bf16.msra.mxu0 %v1362
    %2079 = vmatpush.bf16.msra.mxu0 %v1358
    %2080 = vmatpush.bf16.msra.mxu0 %v1354
    %2081 = vmatpush.bf16.msra.mxu0 %v1350
    %2082 = vmatpush.bf16.msra.mxu0 %v1346
    %2083 = vmatpush.bf16.msra.mxu0 %v1342
    %2084 = vmatmul.bf16.gmra.mxu0 %v556
    %v2085 = vpop.f32.mrf.mxu0
    %v2086 = vadd.f32 0.0, %v2085
    %v2087 = vpop.f32.mrf.mxu0
    %v2088 = vadd.f32 0.0, %v2087
    %2089 = vdwg.mxu0
    %2090 = vmatpush.bf16.msra.mxu0 %v1402
    %2091 = vmatpush.bf16.msra.mxu0 %v1398
    %2092 = vmatpush.bf16.msra.mxu0 %v1394
    %2093 = vmatpush.bf16.msra.mxu0 %v1390
    %2094 = vmatpush.bf16.msra.mxu0 %v1386
    %2095 = vmatpush.bf16.msra.mxu0 %v1382
    %2096 = vmatpush.bf16.msra.mxu0 %v1378
    %2097 = vmatpush.bf16.msra.mxu0 %v1374
    %2098 = vmatmul.bf16.gmra.mxu0 %v557
    %v2099 = vpop.f32.mrf.mxu0
    %v2100 = vadd.f32 %v2086, %v2099
    %v2101 = vpop.f32.mrf.mxu0
    %v2102 = vadd.f32 %v2088, %v2101
    %2103 = vdwg.mxu0
    %2104 = vmatpush.bf16.msra.mxu0 %v1434
    %2105 = vmatpush.bf16.msra.mxu0 %v1430
    %2106 = vmatpush.bf16.msra.mxu0 %v1426
    %2107 = vmatpush.bf16.msra.mxu0 %v1422
    %2108 = vmatpush.bf16.msra.mxu0 %v1418
    %2109 = vmatpush.bf16.msra.mxu0 %v1414
    %2110 = vmatpush.bf16.msra.mxu0 %v1410
    %2111 = vmatpush.bf16.msra.mxu0 %v1406
    %2112 = vmatmul.bf16.gmra.mxu0 %v558
    %v2113 = vpop.f32.mrf.mxu0
    %v2114 = vadd.f32 %v2100, %v2113
    %v2115 = vpop.f32.mrf.mxu0
    %v2116 = vadd.f32 %v2102, %v2115
    %2117 = vdwg.mxu0
    %2118 = vmatpush.bf16.msra.mxu0 %v1466
    %2119 = vmatpush.bf16.msra.mxu0 %v1462
    %2120 = vmatpush.bf16.msra.mxu0 %v1458
    %2121 = vmatpush.bf16.msra.mxu0 %v1454
    %2122 = vmatpush.bf16.msra.mxu0 %v1450
    %2123 = vmatpush.bf16.msra.mxu0 %v1446
    %2124 = vmatpush.bf16.msra.mxu0 %v1442
    %2125 = vmatpush.bf16.msra.mxu0 %v1438
    %2126 = vmatmul.bf16.gmra.mxu0 %v559
    %v2127 = vpop.f32.mrf.mxu0
    %v2128 = vadd.f32 %v2114, %v2127
    %v2129 = vpop.f32.mrf.mxu0
    %v2130 = vadd.f32 %v2116, %v2129
    %2131 = vdwg.mxu0
    %2132 = vmatpush.bf16.msra.mxu0 %v1498
    %2133 = vmatpush.bf16.msra.mxu0 %v1494
    %2134 = vmatpush.bf16.msra.mxu0 %v1490
    %2135 = vmatpush.bf16.msra.mxu0 %v1486
    %2136 = vmatpush.bf16.msra.mxu0 %v1482
    %2137 = vmatpush.bf16.msra.mxu0 %v1478
    %2138 = vmatpush.bf16.msra.mxu0 %v1474
    %2139 = vmatpush.bf16.msra.mxu0 %v1470
    %2140 = vmatmul.bf16.gmra.mxu0 %v560
    %v2141 = vpop.f32.mrf.mxu0
    %v2142 = vadd.f32 %v2128, %v2141
    %v2143 = vpop.f32.mrf.mxu0
    %v2144 = vadd.f32 %v2130, %v2143
    %2145 = vdwg.mxu0
    %2146 = vmatpush.bf16.msra.mxu0 %v1530
    %2147 = vmatpush.bf16.msra.mxu0 %v1526
    %2148 = vmatpush.bf16.msra.mxu0 %v1522
    %2149 = vmatpush.bf16.msra.mxu0 %v1518
    %2150 = vmatpush.bf16.msra.mxu0 %v1514
    %2151 = vmatpush.bf16.msra.mxu0 %v1510
    %2152 = vmatpush.bf16.msra.mxu0 %v1506
    %2153 = vmatpush.bf16.msra.mxu0 %v1502
    %2154 = vmatmul.bf16.gmra.mxu0 %v561
    %v2155 = vpop.f32.mrf.mxu0
    %v2156 = vadd.f32 %v2142, %v2155
    %v2157 = vpop.f32.mrf.mxu0
    %v2158 = vadd.f32 %v2144, %v2157
    %2159 = vdwg.mxu0
    %2160 = vmatpush.bf16.msra.mxu0 %v1562
    %2161 = vmatpush.bf16.msra.mxu0 %v1558
    %2162 = vmatpush.bf16.msra.mxu0 %v1554
    %2163 = vmatpush.bf16.msra.mxu0 %v1550
    %2164 = vmatpush.bf16.msra.mxu0 %v1546
    %2165 = vmatpush.bf16.msra.mxu0 %v1542
    %2166 = vmatpush.bf16.msra.mxu0 %v1538
    %2167 = vmatpush.bf16.msra.mxu0 %v1534
    %2168 = vmatmul.bf16.gmra.mxu0 %v562
    %v2169 = vpop.f32.mrf.mxu0
    %v2170 = vadd.f32 %v2156, %v2169
    %v2171 = vpop.f32.mrf.mxu0
    %v2172 = vadd.f32 %v2158, %v2171
    %2173 = vdwg.mxu0
    %2174 = vmatpush.bf16.msra.mxu0 %v1594
    %2175 = vmatpush.bf16.msra.mxu0 %v1590
    %2176 = vmatpush.bf16.msra.mxu0 %v1586
    %2177 = vmatpush.bf16.msra.mxu0 %v1582
    %2178 = vmatpush.bf16.msra.mxu0 %v1578
    %2179 = vmatpush.bf16.msra.mxu0 %v1574
    %2180 = vmatpush.bf16.msra.mxu0 %v1570
    %2181 = vmatpush.bf16.msra.mxu0 %v1566
    %2182 = vmatmul.bf16.gmra.mxu0 %v563
    %v2183 = vpop.f32.mrf.mxu0
    %v2184 = vadd.f32 %v2170, %v2183
    %v2185 = vpop.f32.mrf.mxu0
    %v2186 = vadd.f32 %v2172, %v2185
    %2187 = vdwg.mxu0
    %2188 = vmatpush.bf16.msra.mxu0 %v1371
    %2189 = vmatpush.bf16.msra.mxu0 %v1367
    %2190 = vmatpush.bf16.msra.mxu0 %v1363
    %2191 = vmatpush.bf16.msra.mxu0 %v1359
    %2192 = vmatpush.bf16.msra.mxu0 %v1355
    %2193 = vmatpush.bf16.msra.mxu0 %v1351
    %2194 = vmatpush.bf16.msra.mxu0 %v1347
    %2195 = vmatpush.bf16.msra.mxu0 %v1343
    %2196 = vmatmul.bf16.gmra.mxu0 %v556
    %v2197 = vpop.f32.mrf.mxu0
    %v2198 = vadd.f32 0.0, %v2197
    %v2199 = vpop.f32.mrf.mxu0
    %v2200 = vadd.f32 0.0, %v2199
    %2201 = vdwg.mxu0
    %2202 = vmatpush.bf16.msra.mxu0 %v1403
    %2203 = vmatpush.bf16.msra.mxu0 %v1399
    %2204 = vmatpush.bf16.msra.mxu0 %v1395
    %2205 = vmatpush.bf16.msra.mxu0 %v1391
    %2206 = vmatpush.bf16.msra.mxu0 %v1387
    %2207 = vmatpush.bf16.msra.mxu0 %v1383
    %2208 = vmatpush.bf16.msra.mxu0 %v1379
    %2209 = vmatpush.bf16.msra.mxu0 %v1375
    %2210 = vmatmul.bf16.gmra.mxu0 %v557
    %v2211 = vpop.f32.mrf.mxu0
    %v2212 = vadd.f32 %v2198, %v2211
    %v2213 = vpop.f32.mrf.mxu0
    %v2214 = vadd.f32 %v2200, %v2213
    %2215 = vdwg.mxu0
    %2216 = vmatpush.bf16.msra.mxu0 %v1435
    %2217 = vmatpush.bf16.msra.mxu0 %v1431
    %2218 = vmatpush.bf16.msra.mxu0 %v1427
    %2219 = vmatpush.bf16.msra.mxu0 %v1423
    %2220 = vmatpush.bf16.msra.mxu0 %v1419
    %2221 = vmatpush.bf16.msra.mxu0 %v1415
    %2222 = vmatpush.bf16.msra.mxu0 %v1411
    %2223 = vmatpush.bf16.msra.mxu0 %v1407
    %2224 = vmatmul.bf16.gmra.mxu0 %v558
    %v2225 = vpop.f32.mrf.mxu0
    %v2226 = vadd.f32 %v2212, %v2225
    %v2227 = vpop.f32.mrf.mxu0
    %v2228 = vadd.f32 %v2214, %v2227
    %2229 = vdwg.mxu0
    %2230 = vmatpush.bf16.msra.mxu0 %v1467
    %2231 = vmatpush.bf16.msra.mxu0 %v1463
    %2232 = vmatpush.bf16.msra.mxu0 %v1459
    %2233 = vmatpush.bf16.msra.mxu0 %v1455
    %2234 = vmatpush.bf16.msra.mxu0 %v1451
    %2235 = vmatpush.bf16.msra.mxu0 %v1447
    %2236 = vmatpush.bf16.msra.mxu0 %v1443
    %2237 = vmatpush.bf16.msra.mxu0 %v1439
    %2238 = vmatmul.bf16.gmra.mxu0 %v559
    %v2239 = vpop.f32.mrf.mxu0
    %v2240 = vadd.f32 %v2226, %v2239
    %v2241 = vpop.f32.mrf.mxu0
    %v2242 = vadd.f32 %v2228, %v2241
    %2243 = vdwg.mxu0
    %2244 = vmatpush.bf16.msra.mxu0 %v1499
    %2245 = vmatpush.bf16.msra.mxu0 %v1495
    %2246 = vmatpush.bf16.msra.mxu0 %v1491
    %2247 = vmatpush.bf16.msra.mxu0 %v1487
    %2248 = vmatpush.bf16.msra.mxu0 %v1483
    %2249 = vmatpush.bf16.msra.mxu0 %v1479
    %2250 = vmatpush.bf16.msra.mxu0 %v1475
    %2251 = vmatpush.bf16.msra.mxu0 %v1471
    %2252 = vmatmul.bf16.gmra.mxu0 %v560
    %v2253 = vpop.f32.mrf.mxu0
    %v2254 = vadd.f32 %v2240, %v2253
    %v2255 = vpop.f32.mrf.mxu0
    %v2256 = vadd.f32 %v2242, %v2255
    %2257 = vdwg.mxu0
    %2258 = vmatpush.bf16.msra.mxu0 %v1531
    %2259 = vmatpush.bf16.msra.mxu0 %v1527
    %2260 = vmatpush.bf16.msra.mxu0 %v1523
    %2261 = vmatpush.bf16.msra.mxu0 %v1519
    %2262 = vmatpush.bf16.msra.mxu0 %v1515
    %2263 = vmatpush.bf16.msra.mxu0 %v1511
    %2264 = vmatpush.bf16.msra.mxu0 %v1507
    %2265 = vmatpush.bf16.msra.mxu0 %v1503
    %2266 = vmatmul.bf16.gmra.mxu0 %v561
    %v2267 = vpop.f32.mrf.mxu0
    %v2268 = vadd.f32 %v2254, %v2267
    %v2269 = vpop.f32.mrf.mxu0
    %v2270 = vadd.f32 %v2256, %v2269
    %2271 = vdwg.mxu0
    %2272 = vmatpush.bf16.msra.mxu0 %v1563
    %2273 = vmatpush.bf16.msra.mxu0 %v1559
    %2274 = vmatpush.bf16.msra.mxu0 %v1555
    %2275 = vmatpush.bf16.msra.mxu0 %v1551
    %2276 = vmatpush.bf16.msra.mxu0 %v1547
    %2277 = vmatpush.bf16.msra.mxu0 %v1543
    %2278 = vmatpush.bf16.msra.mxu0 %v1539
    %2279 = vmatpush.bf16.msra.mxu0 %v1535
    %2280 = vmatmul.bf16.gmra.mxu0 %v562
    %v2281 = vpop.f32.mrf.mxu0
    %v2282 = vadd.f32 %v2268, %v2281
    %v2283 = vpop.f32.mrf.mxu0
    %v2284 = vadd.f32 %v2270, %v2283
    %2285 = vdwg.mxu0
    %2286 = vmatpush.bf16.msra.mxu0 %v1595
    %2287 = vmatpush.bf16.msra.mxu0 %v1591
    %2288 = vmatpush.bf16.msra.mxu0 %v1587
    %2289 = vmatpush.bf16.msra.mxu0 %v1583
    %2290 = vmatpush.bf16.msra.mxu0 %v1579
    %2291 = vmatpush.bf16.msra.mxu0 %v1575
    %2292 = vmatpush.bf16.msra.mxu0 %v1571
    %2293 = vmatpush.bf16.msra.mxu0 %v1567
    %2294 = vmatmul.bf16.gmra.mxu0 %v563
    %v2295 = vpop.f32.mrf.mxu0
    %v2296 = vadd.f32 %v2282, %v2295
    %v2297 = vpop.f32.mrf.mxu0
    %v2298 = vadd.f32 %v2284, %v2297
    %2299 = vdwg.mxu0
    %v2300 = vadd.f32 %v260, %v1960
    %v2301 = vadd.f32 %v261, %v2072
    %v2302 = vadd.f32 %v262, %v2184
    %v2303 = vadd.f32 %v263, %v2296
    %v2304 = vadd.f32 %v264, %v1962
    %v2305 = vadd.f32 %v265, %v2074
    %v2306 = vadd.f32 %v266, %v2186
    %v2307 = vadd.f32 %v267, %v2298
    %2308 = vst [vmem:[#allocation2] sm:$0xff] %v2300
    %2309 = vst [vmem:[#allocation2 + $0x8] sm:$0xff] %v2301
    %2310 = vst [vmem:[#allocation2 + $0x10] sm:$0xff] %v2302
    %2311 = vst [vmem:[#allocation2 + $0x18] sm:$0xff] %v2303
    %2312 = vst [vmem:[#allocation2 + $0x20] sm:$0xff] %v2304
    %2313 = vst [vmem:[#allocation2 + $0x28] sm:$0xff] %v2305
    %2314 = vst [vmem:[#allocation2 + $0x30] sm:$0xff] %v2306
    %2315 = vst [vmem:[#allocation2 + $0x38] sm:$0xff] %v2307
    // Predicated region
    $region122: #{tpu_custom_call.1} parent=1 // pred_check
      %p2316 = pneg %p248
    $region123: #{tpu_custom_call.1} parent=1 // pred_check_branch
      %2318 = sbr.rel (%p2316) target = $region125
    $region124: #{tpu_custom_call.1} parent=1 // pred_region
      %v2319 = vld [vmem:[#allocation2] sm:$0xff]
      %v2320 = vld [vmem:[#allocation2 + $0x8] sm:$0xff]
      %v2321 = vld [vmem:[#allocation2 + $0x10] sm:$0xff]
      %v2322 = vld [vmem:[#allocation2 + $0x18] sm:$0xff]
      %v2323 = vld [vmem:[#allocation2 + $0x20] sm:$0xff]
      %v2324 = vld [vmem:[#allocation2 + $0x28] sm:$0xff]
      %v2325 = vld [vmem:[#allocation2 + $0x30] sm:$0xff]
      %v2326 = vld [vmem:[#allocation2 + $0x38] sm:$0xff]
      %v2327 = vld [vmem:[#allocation8] sm:$0xf]
      %v2329 = vperm.slane %v2327, 0
      %v2330 = vperm.slane %v2327, 1
      %v2331 = vperm.slane %v2327, 2
      %v2332 = vperm.slane %v2327, 3
      %v2337 = vadd.f32 %v2319, %v2329
      %v2338 = vadd.f32 %v2320, %v2330
      %v2339 = vadd.f32 %v2321, %v2331
      %v2340 = vadd.f32 %v2322, %v2332
      %v2341 = vadd.f32 %v2323, %v2329
      %v2342 = vadd.f32 %v2324, %v2330
      %v2343 = vadd.f32 %v2325, %v2331
      %v2344 = vadd.f32 %v2326, %v2332
      %v2345 = vmax.f32 %v2337, 0.0
      %v2346 = vmax.f32 %v2338, 0.0
      %v2347 = vmax.f32 %v2339, 0.0
      %v2348 = vmax.f32 %v2340, 0.0
      %v2349 = vmax.f32 %v2341, 0.0
      %v2350 = vmax.f32 %v2342, 0.0
      %v2351 = vmax.f32 %v2343, 0.0
      %v2352 = vmax.f32 %v2344, 0.0
      %v2353 = vpack.c.bf16 %v2349, %v2345
      %v2354 = vpack.c.bf16 %v2350, %v2346
      %v2355 = vpack.c.bf16 %v2351, %v2347
      %v2356 = vpack.c.bf16 %v2352, %v2348
      %v2357 = vld [vmem:[#allocation9] sm:$0xff]
      %v2358 = vld [vmem:[#allocation9 + $0x8] sm:$0xff]
      %v2359 = vld [vmem:[#allocation9 + $0x10] sm:$0xff]
      %v2360 = vld [vmem:[#allocation9 + $0x18] sm:$0xff]
      %v2361 = vld [vmem:[#allocation9 + $0x20] sm:$0xff]
      %v2362 = vld [vmem:[#allocation9 + $0x28] sm:$0xff]
      %v2363 = vld [vmem:[#allocation9 + $0x30] sm:$0xff]
      %v2364 = vld [vmem:[#allocation9 + $0x38] sm:$0xff]
      %v2365 = vld [vmem:[#allocation9 + $0x40] sm:$0xff]
      %v2366 = vld [vmem:[#allocation9 + $0x48] sm:$0xff]
      %v2367 = vld [vmem:[#allocation9 + $0x50] sm:$0xff]
      %v2368 = vld [vmem:[#allocation9 + $0x58] sm:$0xff]
      %v2369 = vld [vmem:[#allocation9 + $0x60] sm:$0xff]
      %v2370 = vld [vmem:[#allocation9 + $0x68] sm:$0xff]
      %v2371 = vld [vmem:[#allocation9 + $0x70] sm:$0xff]
      %v2372 = vld [vmem:[#allocation9 + $0x78] sm:$0xff]
      %v2373 = vld [vmem:[#allocation9 + $0x80] sm:$0xff]
      %v2374 = vld [vmem:[#allocation9 + $0x88] sm:$0xff]
      %v2375 = vld [vmem:[#allocation9 + $0x90] sm:$0xff]
      %v2376 = vld [vmem:[#allocation9 + $0x98] sm:$0xff]
      %v2377 = vld [vmem:[#allocation9 + $0xa0] sm:$0xff]
      %v2378 = vld [vmem:[#allocation9 + $0xa8] sm:$0xff]
      %v2379 = vld [vmem:[#allocation9 + $0xb0] sm:$0xff]
      %v2380 = vld [vmem:[#allocation9 + $0xb8] sm:$0xff]
      %v2381 = vld [vmem:[#allocation9 + $0xc0] sm:$0xff]
      %v2382 = vld [vmem:[#allocation9 + $0xc8] sm:$0xff]
      %v2383 = vld [vmem:[#allocation9 + $0xd0] sm:$0xff]
      %v2384 = vld [vmem:[#allocation9 + $0xd8] sm:$0xff]
      %v2385 = vld [vmem:[#allocation9 + $0xe0] sm:$0xff]
      %v2386 = vld [vmem:[#allocation9 + $0xe8] sm:$0xff]
      %v2387 = vld [vmem:[#allocation9 + $0xf0] sm:$0xff]
      %v2388 = vld [vmem:[#allocation9 + $0xf8] sm:$0xff]
      %v2389 = vld [vmem:[#allocation9 + $0x100] sm:$0xff]
      %v2390 = vld [vmem:[#allocation9 + $0x108] sm:$0xff]
      %v2391 = vld [vmem:[#allocation9 + $0x110] sm:$0xff]
      %v2392 = vld [vmem:[#allocation9 + $0x118] sm:$0xff]
      %v2393 = vld [vmem:[#allocation9 + $0x120] sm:$0xff]
      %v2394 = vld [vmem:[#allocation9 + $0x128] sm:$0xff]
      %v2395 = vld [vmem:[#allocation9 + $0x130] sm:$0xff]
      %v2396 = vld [vmem:[#allocation9 + $0x138] sm:$0xff]
      %v2397 = vld [vmem:[#allocation9 + $0x140] sm:$0xff]
      %v2398 = vld [vmem:[#allocation9 + $0x148] sm:$0xff]
      %v2399 = vld [vmem:[#allocation9 + $0x150] sm:$0xff]
      %v2400 = vld [vmem:[#allocation9 + $0x158] sm:$0xff]
      %v2401 = vld [vmem:[#allocation9 + $0x160] sm:$0xff]
      %v2402 = vld [vmem:[#allocation9 + $0x168] sm:$0xff]
      %v2403 = vld [vmem:[#allocation9 + $0x170] sm:$0xff]
      %v2404 = vld [vmem:[#allocation9 + $0x178] sm:$0xff]
      %v2405 = vld [vmem:[#allocation9 + $0x180] sm:$0xff]
      %v2406 = vld [vmem:[#allocation9 + $0x188] sm:$0xff]
      %v2407 = vld [vmem:[#allocation9 + $0x190] sm:$0xff]
      %v2408 = vld [vmem:[#allocation9 + $0x198] sm:$0xff]
      %v2409 = vld [vmem:[#allocation9 + $0x1a0] sm:$0xff]
      %v2410 = vld [vmem:[#allocation9 + $0x1a8] sm:$0xff]
      %v2411 = vld [vmem:[#allocation9 + $0x1b0] sm:$0xff]
      %v2412 = vld [vmem:[#allocation9 + $0x1b8] sm:$0xff]
      %v2413 = vld [vmem:[#allocation9 + $0x1c0] sm:$0xff]
      %v2414 = vld [vmem:[#allocation9 + $0x1c8] sm:$0xff]
      %v2415 = vld [vmem:[#allocation9 + $0x1d0] sm:$0xff]
      %v2416 = vld [vmem:[#allocation9 + $0x1d8] sm:$0xff]
      %v2417 = vld [vmem:[#allocation9 + $0x1e0] sm:$0xff]
      %v2418 = vld [vmem:[#allocation9 + $0x1e8] sm:$0xff]
      %v2419 = vld [vmem:[#allocation9 + $0x1f0] sm:$0xff]
      %v2420 = vld [vmem:[#allocation9 + $0x1f8] sm:$0xff]
      %v2421 = vld [vmem:[#allocation9 + $0x200] sm:$0xff]
      %v2422 = vld [vmem:[#allocation9 + $0x208] sm:$0xff]
      %v2423 = vld [vmem:[#allocation9 + $0x210] sm:$0xff]
      %v2424 = vld [vmem:[#allocation9 + $0x218] sm:$0xff]
      %v2425 = vld [vmem:[#allocation9 + $0x220] sm:$0xff]
      %v2426 = vld [vmem:[#allocation9 + $0x228] sm:$0xff]
      %v2427 = vld [vmem:[#allocation9 + $0x230] sm:$0xff]
      %v2428 = vld [vmem:[#allocation9 + $0x238] sm:$0xff]
      %v2429 = vld [vmem:[#allocation9 + $0x240] sm:$0xff]
      %v2430 = vld [vmem:[#allocation9 + $0x248] sm:$0xff]
      %v2431 = vld [vmem:[#allocation9 + $0x250] sm:$0xff]
      %v2432 = vld [vmem:[#allocation9 + $0x258] sm:$0xff]
      %v2433 = vld [vmem:[#allocation9 + $0x260] sm:$0xff]
      %v2434 = vld [vmem:[#allocation9 + $0x268] sm:$0xff]
      %v2435 = vld [vmem:[#allocation9 + $0x270] sm:$0xff]
      %v2436 = vld [vmem:[#allocation9 + $0x278] sm:$0xff]
      %v2437 = vld [vmem:[#allocation9 + $0x280] sm:$0xff]
      %v2438 = vld [vmem:[#allocation9 + $0x288] sm:$0xff]
      %v2439 = vld [vmem:[#allocation9 + $0x290] sm:$0xff]
      %v2440 = vld [vmem:[#allocation9 + $0x298] sm:$0xff]
      %v2441 = vld [vmem:[#allocation9 + $0x2a0] sm:$0xff]
      %v2442 = vld [vmem:[#allocation9 + $0x2a8] sm:$0xff]
      %v2443 = vld [vmem:[#allocation9 + $0x2b0] sm:$0xff]
      %v2444 = vld [vmem:[#allocation9 + $0x2b8] sm:$0xff]
      %v2445 = vld [vmem:[#allocation9 + $0x2c0] sm:$0xff]
      %v2446 = vld [vmem:[#allocation9 + $0x2c8] sm:$0xff]
      %v2447 = vld [vmem:[#allocation9 + $0x2d0] sm:$0xff]
      %v2448 = vld [vmem:[#allocation9 + $0x2d8] sm:$0xff]
      %v2449 = vld [vmem:[#allocation9 + $0x2e0] sm:$0xff]
      %v2450 = vld [vmem:[#allocation9 + $0x2e8] sm:$0xff]
      %v2451 = vld [vmem:[#allocation9 + $0x2f0] sm:$0xff]
      %v2452 = vld [vmem:[#allocation9 + $0x2f8] sm:$0xff]
      %v2453 = vld [vmem:[#allocation9 + $0x300] sm:$0xff]
      %v2454 = vld [vmem:[#allocation9 + $0x308] sm:$0xff]
      %v2455 = vld [vmem:[#allocation9 + $0x310] sm:$0xff]
      %v2456 = vld [vmem:[#allocation9 + $0x318] sm:$0xff]
      %v2457 = vld [vmem:[#allocation9 + $0x320] sm:$0xff]
      %v2458 = vld [vmem:[#allocation9 + $0x328] sm:$0xff]
      %v2459 = vld [vmem:[#allocation9 + $0x330] sm:$0xff]
      %v2460 = vld [vmem:[#allocation9 + $0x338] sm:$0xff]
      %v2461 = vld [vmem:[#allocation9 + $0x340] sm:$0xff]
      %v2462 = vld [vmem:[#allocation9 + $0x348] sm:$0xff]
      %v2463 = vld [vmem:[#allocation9 + $0x350] sm:$0xff]
      %v2464 = vld [vmem:[#allocation9 + $0x358] sm:$0xff]
      %v2465 = vld [vmem:[#allocation9 + $0x360] sm:$0xff]
      %v2466 = vld [vmem:[#allocation9 + $0x368] sm:$0xff]
      %v2467 = vld [vmem:[#allocation9 + $0x370] sm:$0xff]
      %v2468 = vld [vmem:[#allocation9 + $0x378] sm:$0xff]
      %v2469 = vld [vmem:[#allocation9 + $0x380] sm:$0xff]
      %v2470 = vld [vmem:[#allocation9 + $0x388] sm:$0xff]
      %v2471 = vld [vmem:[#allocation9 + $0x390] sm:$0xff]
      %v2472 = vld [vmem:[#allocation9 + $0x398] sm:$0xff]
      %v2473 = vld [vmem:[#allocation9 + $0x3a0] sm:$0xff]
      %v2474 = vld [vmem:[#allocation9 + $0x3a8] sm:$0xff]
      %v2475 = vld [vmem:[#allocation9 + $0x3b0] sm:$0xff]
      %v2476 = vld [vmem:[#allocation9 + $0x3b8] sm:$0xff]
      %v2477 = vld [vmem:[#allocation9 + $0x3c0] sm:$0xff]
      %v2478 = vld [vmem:[#allocation9 + $0x3c8] sm:$0xff]
      %v2479 = vld [vmem:[#allocation9 + $0x3d0] sm:$0xff]
      %v2480 = vld [vmem:[#allocation9 + $0x3d8] sm:$0xff]
      %v2481 = vld [vmem:[#allocation9 + $0x3e0] sm:$0xff]
      %v2482 = vld [vmem:[#allocation9 + $0x3e8] sm:$0xff]
      %v2483 = vld [vmem:[#allocation9 + $0x3f0] sm:$0xff]
      %v2484 = vld [vmem:[#allocation9 + $0x3f8] sm:$0xff]
      %v2485 = vld [vmem:[#allocation11] sm:$0xf]
      %v2487 = vperm.slane %v2485, 0
      %v2488 = vperm.slane %v2485, 1
      %v2489 = vperm.slane %v2485, 2
      %v2490 = vperm.slane %v2485, 3
      %v2623 = vunpack.c.l.b16 %v2357
      %v2624 = vunpack.c.h.b16 %v2357
      %v2625 = vunpack.c.l.b16 %v2358
      %v2626 = vunpack.c.h.b16 %v2358
      %v2627 = vunpack.c.l.b16 %v2359
      %v2628 = vunpack.c.h.b16 %v2359
      %v2629 = vunpack.c.l.b16 %v2360
      %v2630 = vunpack.c.h.b16 %v2360
      %v2631 = vunpack.c.l.b16 %v2361
      %v2632 = vunpack.c.h.b16 %v2361
      %v2633 = vunpack.c.l.b16 %v2362
      %v2634 = vunpack.c.h.b16 %v2362
      %v2635 = vunpack.c.l.b16 %v2363
      %v2636 = vunpack.c.h.b16 %v2363
      %v2637 = vunpack.c.l.b16 %v2364
      %v2638 = vunpack.c.h.b16 %v2364
      %v2639 = vunpack.c.l.b16 %v2365
      %v2640 = vunpack.c.h.b16 %v2365
      %v2641 = vunpack.c.l.b16 %v2366
      %v2642 = vunpack.c.h.b16 %v2366
      %v2643 = vunpack.c.l.b16 %v2367
      %v2644 = vunpack.c.h.b16 %v2367
      %v2645 = vunpack.c.l.b16 %v2368
      %v2646 = vunpack.c.h.b16 %v2368
      %v2647 = vunpack.c.l.b16 %v2369
      %v2648 = vunpack.c.h.b16 %v2369
      %v2649 = vunpack.c.l.b16 %v2370
      %v2650 = vunpack.c.h.b16 %v2370
      %v2651 = vunpack.c.l.b16 %v2371
      %v2652 = vunpack.c.h.b16 %v2371
      %v2653 = vunpack.c.l.b16 %v2372
      %v2654 = vunpack.c.h.b16 %v2372
      %v2655 = vunpack.c.l.b16 %v2373
      %v2656 = vunpack.c.h.b16 %v2373
      %v2657 = vunpack.c.l.b16 %v2374
      %v2658 = vunpack.c.h.b16 %v2374
      %v2659 = vunpack.c.l.b16 %v2375
      %v2660 = vunpack.c.h.b16 %v2375
      %v2661 = vunpack.c.l.b16 %v2376
      %v2662 = vunpack.c.h.b16 %v2376
      %v2663 = vunpack.c.l.b16 %v2377
      %v2664 = vunpack.c.h.b16 %v2377
      %v2665 = vunpack.c.l.b16 %v2378
      %v2666 = vunpack.c.h.b16 %v2378
      %v2667 = vunpack.c.l.b16 %v2379
      %v2668 = vunpack.c.h.b16 %v2379
      %v2669 = vunpack.c.l.b16 %v2380
      %v2670 = vunpack.c.h.b16 %v2380
      %v2671 = vunpack.c.l.b16 %v2381
      %v2672 = vunpack.c.h.b16 %v2381
      %v2673 = vunpack.c.l.b16 %v2382
      %v2674 = vunpack.c.h.b16 %v2382
      %v2675 = vunpack.c.l.b16 %v2383
      %v2676 = vunpack.c.h.b16 %v2383
      %v2677 = vunpack.c.l.b16 %v2384
      %v2678 = vunpack.c.h.b16 %v2384
      %v2679 = vunpack.c.l.b16 %v2385
      %v2680 = vunpack.c.h.b16 %v2385
      %v2681 = vunpack.c.l.b16 %v2386
      %v2682 = vunpack.c.h.b16 %v2386
      %v2683 = vunpack.c.l.b16 %v2387
      %v2684 = vunpack.c.h.b16 %v2387
      %v2685 = vunpack.c.l.b16 %v2388
      %v2686 = vunpack.c.h.b16 %v2388
      %v2687 = vunpack.c.l.b16 %v2389
      %v2688 = vunpack.c.h.b16 %v2389
      %v2689 = vunpack.c.l.b16 %v2390
      %v2690 = vunpack.c.h.b16 %v2390
      %v2691 = vunpack.c.l.b16 %v2391
      %v2692 = vunpack.c.h.b16 %v2391
      %v2693 = vunpack.c.l.b16 %v2392
      %v2694 = vunpack.c.h.b16 %v2392
      %v2695 = vunpack.c.l.b16 %v2393
      %v2696 = vunpack.c.h.b16 %v2393
      %v2697 = vunpack.c.l.b16 %v2394
      %v2698 = vunpack.c.h.b16 %v2394
      %v2699 = vunpack.c.l.b16 %v2395
      %v2700 = vunpack.c.h.b16 %v2395
      %v2701 = vunpack.c.l.b16 %v2396
      %v2702 = vunpack.c.h.b16 %v2396
      %v2703 = vunpack.c.l.b16 %v2397
      %v2704 = vunpack.c.h.b16 %v2397
      %v2705 = vunpack.c.l.b16 %v2398
      %v2706 = vunpack.c.h.b16 %v2398
      %v2707 = vunpack.c.l.b16 %v2399
      %v2708 = vunpack.c.h.b16 %v2399
      %v2709 = vunpack.c.l.b16 %v2400
      %v2710 = vunpack.c.h.b16 %v2400
      %v2711 = vunpack.c.l.b16 %v2401
      %v2712 = vunpack.c.h.b16 %v2401
      %v2713 = vunpack.c.l.b16 %v2402
      %v2714 = vunpack.c.h.b16 %v2402
      %v2715 = vunpack.c.l.b16 %v2403
      %v2716 = vunpack.c.h.b16 %v2403
      %v2717 = vunpack.c.l.b16 %v2404
      %v2718 = vunpack.c.h.b16 %v2404
      %v2719 = vunpack.c.l.b16 %v2405
      %v2720 = vunpack.c.h.b16 %v2405
      %v2721 = vunpack.c.l.b16 %v2406
      %v2722 = vunpack.c.h.b16 %v2406
      %v2723 = vunpack.c.l.b16 %v2407
      %v2724 = vunpack.c.h.b16 %v2407
      %v2725 = vunpack.c.l.b16 %v2408
      %v2726 = vunpack.c.h.b16 %v2408
      %v2727 = vunpack.c.l.b16 %v2409
      %v2728 = vunpack.c.h.b16 %v2409
      %v2729 = vunpack.c.l.b16 %v2410
      %v2730 = vunpack.c.h.b16 %v2410
      %v2731 = vunpack.c.l.b16 %v2411
      %v2732 = vunpack.c.h.b16 %v2411
      %v2733 = vunpack.c.l.b16 %v2412
      %v2734 = vunpack.c.h.b16 %v2412
      %v2735 = vunpack.c.l.b16 %v2413
      %v2736 = vunpack.c.h.b16 %v2413
      %v2737 = vunpack.c.l.b16 %v2414
      %v2738 = vunpack.c.h.b16 %v2414
      %v2739 = vunpack.c.l.b16 %v2415
      %v2740 = vunpack.c.h.b16 %v2415
      %v2741 = vunpack.c.l.b16 %v2416
      %v2742 = vunpack.c.h.b16 %v2416
      %v2743 = vunpack.c.l.b16 %v2417
      %v2744 = vunpack.c.h.b16 %v2417
      %v2745 = vunpack.c.l.b16 %v2418
      %v2746 = vunpack.c.h.b16 %v2418
      %v2747 = vunpack.c.l.b16 %v2419
      %v2748 = vunpack.c.h.b16 %v2419
      %v2749 = vunpack.c.l.b16 %v2420
      %v2750 = vunpack.c.h.b16 %v2420
      %v2751 = vunpack.c.l.b16 %v2421
      %v2752 = vunpack.c.h.b16 %v2421
      %v2753 = vunpack.c.l.b16 %v2422
      %v2754 = vunpack.c.h.b16 %v2422
      %v2755 = vunpack.c.l.b16 %v2423
      %v2756 = vunpack.c.h.b16 %v2423
      %v2757 = vunpack.c.l.b16 %v2424
      %v2758 = vunpack.c.h.b16 %v2424
      %v2759 = vunpack.c.l.b16 %v2425
      %v2760 = vunpack.c.h.b16 %v2425
      %v2761 = vunpack.c.l.b16 %v2426
      %v2762 = vunpack.c.h.b16 %v2426
      %v2763 = vunpack.c.l.b16 %v2427
      %v2764 = vunpack.c.h.b16 %v2427
      %v2765 = vunpack.c.l.b16 %v2428
      %v2766 = vunpack.c.h.b16 %v2428
      %v2767 = vunpack.c.l.b16 %v2429
      %v2768 = vunpack.c.h.b16 %v2429
      %v2769 = vunpack.c.l.b16 %v2430
      %v2770 = vunpack.c.h.b16 %v2430
      %v2771 = vunpack.c.l.b16 %v2431
      %v2772 = vunpack.c.h.b16 %v2431
      %v2773 = vunpack.c.l.b16 %v2432
      %v2774 = vunpack.c.h.b16 %v2432
      %v2775 = vunpack.c.l.b16 %v2433
      %v2776 = vunpack.c.h.b16 %v2433
      %v2777 = vunpack.c.l.b16 %v2434
      %v2778 = vunpack.c.h.b16 %v2434
      %v2779 = vunpack.c.l.b16 %v2435
      %v2780 = vunpack.c.h.b16 %v2435
      %v2781 = vunpack.c.l.b16 %v2436
      %v2782 = vunpack.c.h.b16 %v2436
      %v2783 = vunpack.c.l.b16 %v2437
      %v2784 = vunpack.c.h.b16 %v2437
      %v2785 = vunpack.c.l.b16 %v2438
      %v2786 = vunpack.c.h.b16 %v2438
      %v2787 = vunpack.c.l.b16 %v2439
      %v2788 = vunpack.c.h.b16 %v2439
      %v2789 = vunpack.c.l.b16 %v2440
      %v2790 = vunpack.c.h.b16 %v2440
      %v2791 = vunpack.c.l.b16 %v2441
      %v2792 = vunpack.c.h.b16 %v2441
      %v2793 = vunpack.c.l.b16 %v2442
      %v2794 = vunpack.c.h.b16 %v2442
      %v2795 = vunpack.c.l.b16 %v2443
      %v2796 = vunpack.c.h.b16 %v2443
      %v2797 = vunpack.c.l.b16 %v2444
      %v2798 = vunpack.c.h.b16 %v2444
      %v2799 = vunpack.c.l.b16 %v2445
      %v2800 = vunpack.c.h.b16 %v2445
      %v2801 = vunpack.c.l.b16 %v2446
      %v2802 = vunpack.c.h.b16 %v2446
      %v2803 = vunpack.c.l.b16 %v2447
      %v2804 = vunpack.c.h.b16 %v2447
      %v2805 = vunpack.c.l.b16 %v2448
      %v2806 = vunpack.c.h.b16 %v2448
      %v2807 = vunpack.c.l.b16 %v2449
      %v2808 = vunpack.c.h.b16 %v2449
      %v2809 = vunpack.c.l.b16 %v2450
      %v2810 = vunpack.c.h.b16 %v2450
      %v2811 = vunpack.c.l.b16 %v2451
      %v2812 = vunpack.c.h.b16 %v2451
      %v2813 = vunpack.c.l.b16 %v2452
      %v2814 = vunpack.c.h.b16 %v2452
      %v2815 = vunpack.c.l.b16 %v2453
      %v2816 = vunpack.c.h.b16 %v2453
      %v2817 = vunpack.c.l.b16 %v2454
      %v2818 = vunpack.c.h.b16 %v2454
      %v2819 = vunpack.c.l.b16 %v2455
      %v2820 = vunpack.c.h.b16 %v2455
      %v2821 = vunpack.c.l.b16 %v2456
      %v2822 = vunpack.c.h.b16 %v2456
      %v2823 = vunpack.c.l.b16 %v2457
      %v2824 = vunpack.c.h.b16 %v2457
      %v2825 = vunpack.c.l.b16 %v2458
      %v2826 = vunpack.c.h.b16 %v2458
      %v2827 = vunpack.c.l.b16 %v2459
      %v2828 = vunpack.c.h.b16 %v2459
      %v2829 = vunpack.c.l.b16 %v2460
      %v2830 = vunpack.c.h.b16 %v2460
      %v2831 = vunpack.c.l.b16 %v2461
      %v2832 = vunpack.c.h.b16 %v2461
      %v2833 = vunpack.c.l.b16 %v2462
      %v2834 = vunpack.c.h.b16 %v2462
      %v2835 = vunpack.c.l.b16 %v2463
      %v2836 = vunpack.c.h.b16 %v2463
      %v2837 = vunpack.c.l.b16 %v2464
      %v2838 = vunpack.c.h.b16 %v2464
      %v2839 = vunpack.c.l.b16 %v2465
      %v2840 = vunpack.c.h.b16 %v2465
      %v2841 = vunpack.c.l.b16 %v2466
      %v2842 = vunpack.c.h.b16 %v2466
      %v2843 = vunpack.c.l.b16 %v2467
      %v2844 = vunpack.c.h.b16 %v2467
      %v2845 = vunpack.c.l.b16 %v2468
      %v2846 = vunpack.c.h.b16 %v2468
      %v2847 = vunpack.c.l.b16 %v2469
      %v2848 = vunpack.c.h.b16 %v2469
      %v2849 = vunpack.c.l.b16 %v2470
      %v2850 = vunpack.c.h.b16 %v2470
      %v2851 = vunpack.c.l.b16 %v2471
      %v2852 = vunpack.c.h.b16 %v2471
      %v2853 = vunpack.c.l.b16 %v2472
      %v2854 = vunpack.c.h.b16 %v2472
      %v2855 = vunpack.c.l.b16 %v2473
      %v2856 = vunpack.c.h.b16 %v2473
      %v2857 = vunpack.c.l.b16 %v2474
      %v2858 = vunpack.c.h.b16 %v2474
      %v2859 = vunpack.c.l.b16 %v2475
      %v2860 = vunpack.c.h.b16 %v2475
      %v2861 = vunpack.c.l.b16 %v2476
      %v2862 = vunpack.c.h.b16 %v2476
      %v2863 = vunpack.c.l.b16 %v2477
      %v2864 = vunpack.c.h.b16 %v2477
      %v2865 = vunpack.c.l.b16 %v2478
      %v2866 = vunpack.c.h.b16 %v2478
      %v2867 = vunpack.c.l.b16 %v2479
      %v2868 = vunpack.c.h.b16 %v2479
      %v2869 = vunpack.c.l.b16 %v2480
      %v2870 = vunpack.c.h.b16 %v2480
      %v2871 = vunpack.c.l.b16 %v2481
      %v2872 = vunpack.c.h.b16 %v2481
      %v2873 = vunpack.c.l.b16 %v2482
      %v2874 = vunpack.c.h.b16 %v2482
      %v2875 = vunpack.c.l.b16 %v2483
      %v2876 = vunpack.c.h.b16 %v2483
      %v2877 = vunpack.c.l.b16 %v2484
      %v2878 = vunpack.c.h.b16 %v2484
      %v2879 = vpack.c.b16 %v2627, %v2623
      %v2880 = vpack.c.b16 %v2628, %v2624
      %v2881 = vpack.c.b16 %v2629, %v2625
      %v2882 = vpack.c.b16 %v2630, %v2626
      %v2883 = vpack.c.b16 %v2635, %v2631
      %v2884 = vpack.c.b16 %v2636, %v2632
      %v2885 = vpack.c.b16 %v2637, %v2633
      %v2886 = vpack.c.b16 %v2638, %v2634
      %v2887 = vpack.c.b16 %v2643, %v2639
      %v2888 = vpack.c.b16 %v2644, %v2640
      %v2889 = vpack.c.b16 %v2645, %v2641
      %v2890 = vpack.c.b16 %v2646, %v2642
      %v2891 = vpack.c.b16 %v2651, %v2647
      %v2892 = vpack.c.b16 %v2652, %v2648
      %v2893 = vpack.c.b16 %v2653, %v2649
      %v2894 = vpack.c.b16 %v2654, %v2650
      %v2895 = vpack.c.b16 %v2659, %v2655
      %v2896 = vpack.c.b16 %v2660, %v2656
      %v2897 = vpack.c.b16 %v2661, %v2657
      %v2898 = vpack.c.b16 %v2662, %v2658
      %v2899 = vpack.c.b16 %v2667, %v2663
      %v2900 = vpack.c.b16 %v2668, %v2664
      %v2901 = vpack.c.b16 %v2669, %v2665
      %v2902 = vpack.c.b16 %v2670, %v2666
      %v2903 = vpack.c.b16 %v2675, %v2671
      %v2904 = vpack.c.b16 %v2676, %v2672
      %v2905 = vpack.c.b16 %v2677, %v2673
      %v2906 = vpack.c.b16 %v2678, %v2674
      %v2907 = vpack.c.b16 %v2683, %v2679
      %v2908 = vpack.c.b16 %v2684, %v2680
      %v2909 = vpack.c.b16 %v2685, %v2681
      %v2910 = vpack.c.b16 %v2686, %v2682
      %v2911 = vpack.c.b16 %v2691, %v2687
      %v2912 = vpack.c.b16 %v2692, %v2688
      %v2913 = vpack.c.b16 %v2693, %v2689
      %v2914 = vpack.c.b16 %v2694, %v2690
      %v2915 = vpack.c.b16 %v2699, %v2695
      %v2916 = vpack.c.b16 %v2700, %v2696
      %v2917 = vpack.c.b16 %v2701, %v2697
      %v2918 = vpack.c.b16 %v2702, %v2698
      %v2919 = vpack.c.b16 %v2707, %v2703
      %v2920 = vpack.c.b16 %v2708, %v2704
      %v2921 = vpack.c.b16 %v2709, %v2705
      %v2922 = vpack.c.b16 %v2710, %v2706
      %v2923 = vpack.c.b16 %v2715, %v2711
      %v2924 = vpack.c.b16 %v2716, %v2712
      %v2925 = vpack.c.b16 %v2717, %v2713
      %v2926 = vpack.c.b16 %v2718, %v2714
      %v2927 = vpack.c.b16 %v2723, %v2719
      %v2928 = vpack.c.b16 %v2724, %v2720
      %v2929 = vpack.c.b16 %v2725, %v2721
      %v2930 = vpack.c.b16 %v2726, %v2722
      %v2931 = vpack.c.b16 %v2731, %v2727
      %v2932 = vpack.c.b16 %v2732, %v2728
      %v2933 = vpack.c.b16 %v2733, %v2729
      %v2934 = vpack.c.b16 %v2734, %v2730
      %v2935 = vpack.c.b16 %v2739, %v2735
      %v2936 = vpack.c.b16 %v2740, %v2736
      %v2937 = vpack.c.b16 %v2741, %v2737
      %v2938 = vpack.c.b16 %v2742, %v2738
      %v2939 = vpack.c.b16 %v2747, %v2743
      %v2940 = vpack.c.b16 %v2748, %v2744
      %v2941 = vpack.c.b16 %v2749, %v2745
      %v2942 = vpack.c.b16 %v2750, %v2746
      %v2943 = vpack.c.b16 %v2755, %v2751
      %v2944 = vpack.c.b16 %v2756, %v2752
      %v2945 = vpack.c.b16 %v2757, %v2753
      %v2946 = vpack.c.b16 %v2758, %v2754
      %v2947 = vpack.c.b16 %v2763, %v2759
      %v2948 = vpack.c.b16 %v2764, %v2760
      %v2949 = vpack.c.b16 %v2765, %v2761
      %v2950 = vpack.c.b16 %v2766, %v2762
      %v2951 = vpack.c.b16 %v2771, %v2767
      %v2952 = vpack.c.b16 %v2772, %v2768
      %v2953 = vpack.c.b16 %v2773, %v2769
      %v2954 = vpack.c.b16 %v2774, %v2770
      %v2955 = vpack.c.b16 %v2779, %v2775
      %v2956 = vpack.c.b16 %v2780, %v2776
      %v2957 = vpack.c.b16 %v2781, %v2777
      %v2958 = vpack.c.b16 %v2782, %v2778
      %v2959 = vpack.c.b16 %v2787, %v2783
      %v2960 = vpack.c.b16 %v2788, %v2784
      %v2961 = vpack.c.b16 %v2789, %v2785
      %v2962 = vpack.c.b16 %v2790, %v2786
      %v2963 = vpack.c.b16 %v2795, %v2791
      %v2964 = vpack.c.b16 %v2796, %v2792
      %v2965 = vpack.c.b16 %v2797, %v2793
      %v2966 = vpack.c.b16 %v2798, %v2794
      %v2967 = vpack.c.b16 %v2803, %v2799
      %v2968 = vpack.c.b16 %v2804, %v2800
      %v2969 = vpack.c.b16 %v2805, %v2801
      %v2970 = vpack.c.b16 %v2806, %v2802
      %v2971 = vpack.c.b16 %v2811, %v2807
      %v2972 = vpack.c.b16 %v2812, %v2808
      %v2973 = vpack.c.b16 %v2813, %v2809
      %v2974 = vpack.c.b16 %v2814, %v2810
      %v2975 = vpack.c.b16 %v2819, %v2815
      %v2976 = vpack.c.b16 %v2820, %v2816
      %v2977 = vpack.c.b16 %v2821, %v2817
      %v2978 = vpack.c.b16 %v2822, %v2818
      %v2979 = vpack.c.b16 %v2827, %v2823
      %v2980 = vpack.c.b16 %v2828, %v2824
      %v2981 = vpack.c.b16 %v2829, %v2825
      %v2982 = vpack.c.b16 %v2830, %v2826
      %v2983 = vpack.c.b16 %v2835, %v2831
      %v2984 = vpack.c.b16 %v2836, %v2832
      %v2985 = vpack.c.b16 %v2837, %v2833
      %v2986 = vpack.c.b16 %v2838, %v2834
      %v2987 = vpack.c.b16 %v2843, %v2839
      %v2988 = vpack.c.b16 %v2844, %v2840
      %v2989 = vpack.c.b16 %v2845, %v2841
      %v2990 = vpack.c.b16 %v2846, %v2842
      %v2991 = vpack.c.b16 %v2851, %v2847
      %v2992 = vpack.c.b16 %v2852, %v2848
      %v2993 = vpack.c.b16 %v2853, %v2849
      %v2994 = vpack.c.b16 %v2854, %v2850
      %v2995 = vpack.c.b16 %v2859, %v2855
      %v2996 = vpack.c.b16 %v2860, %v2856
      %v2997 = vpack.c.b16 %v2861, %v2857
      %v2998 = vpack.c.b16 %v2862, %v2858
      %v2999 = vpack.c.b16 %v2867, %v2863
      %v3000 = vpack.c.b16 %v2868, %v2864
      %v3001 = vpack.c.b16 %v2869, %v2865
      %v3002 = vpack.c.b16 %v2870, %v2866
      %v3003 = vpack.c.b16 %v2875, %v2871
      %v3004 = vpack.c.b16 %v2876, %v2872
      %v3005 = vpack.c.b16 %v2877, %v2873
      %v3006 = vpack.c.b16 %v2878, %v2874
      %3135 = vmatpush.bf16.msra.mxu0 %v2907
      %3136 = vmatpush.bf16.msra.mxu0 %v2903
      %3137 = vmatpush.bf16.msra.mxu0 %v2899
      %3138 = vmatpush.bf16.msra.mxu0 %v2895
      %3139 = vmatpush.bf16.msra.mxu0 %v2891
      %3140 = vmatpush.bf16.msra.mxu0 %v2887
      %3141 = vmatpush.bf16.msra.mxu0 %v2883
      %3142 = vmatpush.bf16.msra.mxu0 %v2879
      %3143 = vmatmul.bf16.gmra.mxu0 %v2353
      %v3144 = vpop.f32.mrf.mxu0
      %v3145 = vadd.f32 %v2487, %v3144
      %v3146 = vpop.f32.mrf.mxu0
      %v3147 = vadd.f32 %v2487, %v3146
      %3148 = vdwg.mxu0
      %3149 = vmatpush.bf16.msra.mxu0 %v2939
      %3150 = vmatpush.bf16.msra.mxu0 %v2935
      %3151 = vmatpush.bf16.msra.mxu0 %v2931
      %3152 = vmatpush.bf16.msra.mxu0 %v2927
      %3153 = vmatpush.bf16.msra.mxu0 %v2923
      %3154 = vmatpush.bf16.msra.mxu0 %v2919
      %3155 = vmatpush.bf16.msra.mxu0 %v2915
      %3156 = vmatpush.bf16.msra.mxu0 %v2911
      %3157 = vmatmul.bf16.gmra.mxu0 %v2354
      %v3158 = vpop.f32.mrf.mxu0
      %v3159 = vadd.f32 %v3145, %v3158
      %v3160 = vpop.f32.mrf.mxu0
      %v3161 = vadd.f32 %v3147, %v3160
      %3162 = vdwg.mxu0
      %3163 = vmatpush.bf16.msra.mxu0 %v2971
      %3164 = vmatpush.bf16.msra.mxu0 %v2967
      %3165 = vmatpush.bf16.msra.mxu0 %v2963
      %3166 = vmatpush.bf16.msra.mxu0 %v2959
      %3167 = vmatpush.bf16.msra.mxu0 %v2955
      %3168 = vmatpush.bf16.msra.mxu0 %v2951
      %3169 = vmatpush.bf16.msra.mxu0 %v2947
      %3170 = vmatpush.bf16.msra.mxu0 %v2943
      %3171 = vmatmul.bf16.gmra.mxu0 %v2355
      %v3172 = vpop.f32.mrf.mxu0
      %v3173 = vadd.f32 %v3159, %v3172
      %v3174 = vpop.f32.mrf.mxu0
      %v3175 = vadd.f32 %v3161, %v3174
      %3176 = vdwg.mxu0
      %3177 = vmatpush.bf16.msra.mxu0 %v3003
      %3178 = vmatpush.bf16.msra.mxu0 %v2999
      %3179 = vmatpush.bf16.msra.mxu0 %v2995
      %3180 = vmatpush.bf16.msra.mxu0 %v2991
      %3181 = vmatpush.bf16.msra.mxu0 %v2987
      %3182 = vmatpush.bf16.msra.mxu0 %v2983
      %3183 = vmatpush.bf16.msra.mxu0 %v2979
      %3184 = vmatpush.bf16.msra.mxu0 %v2975
      %3185 = vmatmul.bf16.gmra.mxu0 %v2356
      %v3186 = vpop.f32.mrf.mxu0
      %v3187 = vadd.f32 %v3173, %v3186
      %v3188 = vpop.f32.mrf.mxu0
      %v3189 = vadd.f32 %v3175, %v3188
      %3190 = vdwg.mxu0
      %3191 = vmatpush.bf16.msra.mxu0 %v2908
      %3192 = vmatpush.bf16.msra.mxu0 %v2904
      %3193 = vmatpush.bf16.msra.mxu0 %v2900
      %3194 = vmatpush.bf16.msra.mxu0 %v2896
      %3195 = vmatpush.bf16.msra.mxu0 %v2892
      %3196 = vmatpush.bf16.msra.mxu0 %v2888
      %3197 = vmatpush.bf16.msra.mxu0 %v2884
      %3198 = vmatpush.bf16.msra.mxu0 %v2880
      %3199 = vmatmul.bf16.gmra.mxu0 %v2353
      %v3200 = vpop.f32.mrf.mxu0
      %v3201 = vadd.f32 %v2488, %v3200
      %v3202 = vpop.f32.mrf.mxu0
      %v3203 = vadd.f32 %v2488, %v3202
      %3204 = vdwg.mxu0
      %3205 = vmatpush.bf16.msra.mxu0 %v2940
      %3206 = vmatpush.bf16.msra.mxu0 %v2936
      %3207 = vmatpush.bf16.msra.mxu0 %v2932
      %3208 = vmatpush.bf16.msra.mxu0 %v2928
      %3209 = vmatpush.bf16.msra.mxu0 %v2924
      %3210 = vmatpush.bf16.msra.mxu0 %v2920
      %3211 = vmatpush.bf16.msra.mxu0 %v2916
      %3212 = vmatpush.bf16.msra.mxu0 %v2912
      %3213 = vmatmul.bf16.gmra.mxu0 %v2354
      %v3214 = vpop.f32.mrf.mxu0
      %v3215 = vadd.f32 %v3201, %v3214
      %v3216 = vpop.f32.mrf.mxu0
      %v3217 = vadd.f32 %v3203, %v3216
      %3218 = vdwg.mxu0
      %3219 = vmatpush.bf16.msra.mxu0 %v2972
      %3220 = vmatpush.bf16.msra.mxu0 %v2968
      %3221 = vmatpush.bf16.msra.mxu0 %v2964
      %3222 = vmatpush.bf16.msra.mxu0 %v2960
      %3223 = vmatpush.bf16.msra.mxu0 %v2956
      %3224 = vmatpush.bf16.msra.mxu0 %v2952
      %3225 = vmatpush.bf16.msra.mxu0 %v2948
      %3226 = vmatpush.bf16.msra.mxu0 %v2944
      %3227 = vmatmul.bf16.gmra.mxu0 %v2355
      %v3228 = vpop.f32.mrf.mxu0
      %v3229 = vadd.f32 %v3215, %v3228
      %v3230 = vpop.f32.mrf.mxu0
      %v3231 = vadd.f32 %v3217, %v3230
      %3232 = vdwg.mxu0
      %3233 = vmatpush.bf16.msra.mxu0 %v3004
      %3234 = vmatpush.bf16.msra.mxu0 %v3000
      %3235 = vmatpush.bf16.msra.mxu0 %v2996
      %3236 = vmatpush.bf16.msra.mxu0 %v2992
      %3237 = vmatpush.bf16.msra.mxu0 %v2988
      %3238 = vmatpush.bf16.msra.mxu0 %v2984
      %3239 = vmatpush.bf16.msra.mxu0 %v2980
      %3240 = vmatpush.bf16.msra.mxu0 %v2976
      %3241 = vmatmul.bf16.gmra.mxu0 %v2356
      %v3242 = vpop.f32.mrf.mxu0
      %v3243 = vadd.f32 %v3229, %v3242
      %v3244 = vpop.f32.mrf.mxu0
      %v3245 = vadd.f32 %v3231, %v3244
      %3246 = vdwg.mxu0
      %3247 = vmatpush.bf16.msra.mxu0 %v2909
      %3248 = vmatpush.bf16.msra.mxu0 %v2905
      %3249 = vmatpush.bf16.msra.mxu0 %v2901
      %3250 = vmatpush.bf16.msra.mxu0 %v2897
      %3251 = vmatpush.bf16.msra.mxu0 %v2893
      %3252 = vmatpush.bf16.msra.mxu0 %v2889
      %3253 = vmatpush.bf16.msra.mxu0 %v2885
      %3254 = vmatpush.bf16.msra.mxu0 %v2881
      %3255 = vmatmul.bf16.gmra.mxu0 %v2353
      %v3256 = vpop.f32.mrf.mxu0
      %v3257 = vadd.f32 %v2489, %v3256
      %v3258 = vpop.f32.mrf.mxu0
      %v3259 = vadd.f32 %v2489, %v3258
      %3260 = vdwg.mxu0
      %3261 = vmatpush.bf16.msra.mxu0 %v2941
      %3262 = vmatpush.bf16.msra.mxu0 %v2937
      %3263 = vmatpush.bf16.msra.mxu0 %v2933
      %3264 = vmatpush.bf16.msra.mxu0 %v2929
      %3265 = vmatpush.bf16.msra.mxu0 %v2925
      %3266 = vmatpush.bf16.msra.mxu0 %v2921
      %3267 = vmatpush.bf16.msra.mxu0 %v2917
      %3268 = vmatpush.bf16.msra.mxu0 %v2913
      %3269 = vmatmul.bf16.gmra.mxu0 %v2354
      %v3270 = vpop.f32.mrf.mxu0
      %v3271 = vadd.f32 %v3257, %v3270
      %v3272 = vpop.f32.mrf.mxu0
      %v3273 = vadd.f32 %v3259, %v3272
      %3274 = vdwg.mxu0
      %3275 = vmatpush.bf16.msra.mxu0 %v2973
      %3276 = vmatpush.bf16.msra.mxu0 %v2969
      %3277 = vmatpush.bf16.msra.mxu0 %v2965
      %3278 = vmatpush.bf16.msra.mxu0 %v2961
      %3279 = vmatpush.bf16.msra.mxu0 %v2957
      %3280 = vmatpush.bf16.msra.mxu0 %v2953
      %3281 = vmatpush.bf16.msra.mxu0 %v2949
      %3282 = vmatpush.bf16.msra.mxu0 %v2945
      %3283 = vmatmul.bf16.gmra.mxu0 %v2355
      %v3284 = vpop.f32.mrf.mxu0
      %v3285 = vadd.f32 %v3271, %v3284
      %v3286 = vpop.f32.mrf.mxu0
      %v3287 = vadd.f32 %v3273, %v3286
      %3288 = vdwg.mxu0
      %3289 = vmatpush.bf16.msra.mxu0 %v3005
      %3290 = vmatpush.bf16.msra.mxu0 %v3001
      %3291 = vmatpush.bf16.msra.mxu0 %v2997
      %3292 = vmatpush.bf16.msra.mxu0 %v2993
      %3293 = vmatpush.bf16.msra.mxu0 %v2989
      %3294 = vmatpush.bf16.msra.mxu0 %v2985
      %3295 = vmatpush.bf16.msra.mxu0 %v2981
      %3296 = vmatpush.bf16.msra.mxu0 %v2977
      %3297 = vmatmul.bf16.gmra.mxu0 %v2356
      %v3298 = vpop.f32.mrf.mxu0
      %v3299 = vadd.f32 %v3285, %v3298
      %v3300 = vpop.f32.mrf.mxu0
      %v3301 = vadd.f32 %v3287, %v3300
      %3302 = vdwg.mxu0
      %3303 = vmatpush.bf16.msra.mxu0 %v2910
      %3304 = vmatpush.bf16.msra.mxu0 %v2906
      %3305 = vmatpush.bf16.msra.mxu0 %v2902
      %3306 = vmatpush.bf16.msra.mxu0 %v2898
      %3307 = vmatpush.bf16.msra.mxu0 %v2894
      %3308 = vmatpush.bf16.msra.mxu0 %v2890
      %3309 = vmatpush.bf16.msra.mxu0 %v2886
      %3310 = vmatpush.bf16.msra.mxu0 %v2882
      %3311 = vmatmul.bf16.gmra.mxu0 %v2353
      %v3312 = vpop.f32.mrf.mxu0
      %v3313 = vadd.f32 %v2490, %v3312
      %v3314 = vpop.f32.mrf.mxu0
      %v3315 = vadd.f32 %v2490, %v3314
      %3316 = vdwg.mxu0
      %3317 = vmatpush.bf16.msra.mxu0 %v2942
      %3318 = vmatpush.bf16.msra.mxu0 %v2938
      %3319 = vmatpush.bf16.msra.mxu0 %v2934
      %3320 = vmatpush.bf16.msra.mxu0 %v2930
      %3321 = vmatpush.bf16.msra.mxu0 %v2926
      %3322 = vmatpush.bf16.msra.mxu0 %v2922
      %3323 = vmatpush.bf16.msra.mxu0 %v2918
      %3324 = vmatpush.bf16.msra.mxu0 %v2914
      %3325 = vmatmul.bf16.gmra.mxu0 %v2354
      %v3326 = vpop.f32.mrf.mxu0
      %v3327 = vadd.f32 %v3313, %v3326
      %v3328 = vpop.f32.mrf.mxu0
      %v3329 = vadd.f32 %v3315, %v3328
      %3330 = vdwg.mxu0
      %3331 = vmatpush.bf16.msra.mxu0 %v2974
      %3332 = vmatpush.bf16.msra.mxu0 %v2970
      %3333 = vmatpush.bf16.msra.mxu0 %v2966
      %3334 = vmatpush.bf16.msra.mxu0 %v2962
      %3335 = vmatpush.bf16.msra.mxu0 %v2958
      %3336 = vmatpush.bf16.msra.mxu0 %v2954
      %3337 = vmatpush.bf16.msra.mxu0 %v2950
      %3338 = vmatpush.bf16.msra.mxu0 %v2946
      %3339 = vmatmul.bf16.gmra.mxu0 %v2355
      %v3340 = vpop.f32.mrf.mxu0
      %v3341 = vadd.f32 %v3327, %v3340
      %v3342 = vpop.f32.mrf.mxu0
      %v3343 = vadd.f32 %v3329, %v3342
      %3344 = vdwg.mxu0
      %3345 = vmatpush.bf16.msra.mxu0 %v3006
      %3346 = vmatpush.bf16.msra.mxu0 %v3002
      %3347 = vmatpush.bf16.msra.mxu0 %v2998
      %3348 = vmatpush.bf16.msra.mxu0 %v2994
      %3349 = vmatpush.bf16.msra.mxu0 %v2990
      %3350 = vmatpush.bf16.msra.mxu0 %v2986
      %3351 = vmatpush.bf16.msra.mxu0 %v2982
      %3352 = vmatpush.bf16.msra.mxu0 %v2978
      %3353 = vmatmul.bf16.gmra.mxu0 %v2356
      %v3354 = vpop.f32.mrf.mxu0
      %v3355 = vadd.f32 %v3341, %v3354
      %v3356 = vpop.f32.mrf.mxu0
      %v3357 = vadd.f32 %v3343, %v3356
      %3358 = vdwg.mxu0
      %v3359 = vmax.f32 %v3187, 0.0
      %v3360 = vmax.f32 %v3243, 0.0
      %v3361 = vmax.f32 %v3299, 0.0
      %v3362 = vmax.f32 %v3355, 0.0
      %v3363 = vmax.f32 %v3189, 0.0
      %v3364 = vmax.f32 %v3245, 0.0
      %v3365 = vmax.f32 %v3301, 0.0
      %v3366 = vmax.f32 %v3357, 0.0
      %v3367 = vpack.c.bf16 %v3363, %v3359
      %v3368 = vpack.c.bf16 %v3364, %v3360
      %v3369 = vpack.c.bf16 %v3365, %v3361
      %v3370 = vpack.c.bf16 %v3366, %v3362
      %v3371 = vld [vmem:[#allocation12] sm:$0xff]
      %v3372 = vld [vmem:[#allocation12 + $0x8] sm:$0xff]
      %v3373 = vld [vmem:[#allocation12 + $0x10] sm:$0xff]
      %v3374 = vld [vmem:[#allocation12 + $0x18] sm:$0xff]
      %v3375 = vld [vmem:[#allocation12 + $0x20] sm:$0xff]
      %v3376 = vld [vmem:[#allocation12 + $0x28] sm:$0xff]
      %v3377 = vld [vmem:[#allocation12 + $0x30] sm:$0xff]
      %v3378 = vld [vmem:[#allocation12 + $0x38] sm:$0xff]
      %v3379 = vld [vmem:[#allocation12 + $0x40] sm:$0xff]
      %v3380 = vld [vmem:[#allocation12 + $0x48] sm:$0xff]
      %v3381 = vld [vmem:[#allocation12 + $0x50] sm:$0xff]
      %v3382 = vld [vmem:[#allocation12 + $0x58] sm:$0xff]
      %v3383 = vld [vmem:[#allocation12 + $0x60] sm:$0xff]
      %v3384 = vld [vmem:[#allocation12 + $0x68] sm:$0xff]
      %v3385 = vld [vmem:[#allocation12 + $0x70] sm:$0xff]
      %v3386 = vld [vmem:[#allocation12 + $0x78] sm:$0xff]
      %v3387 = vld [vmem:[#allocation12 + $0x80] sm:$0xff]
      %v3388 = vld [vmem:[#allocation12 + $0x88] sm:$0xff]
      %v3389 = vld [vmem:[#allocation12 + $0x90] sm:$0xff]
      %v3390 = vld [vmem:[#allocation12 + $0x98] sm:$0xff]
      %v3391 = vld [vmem:[#allocation12 + $0xa0] sm:$0xff]
      %v3392 = vld [vmem:[#allocation12 + $0xa8] sm:$0xff]
      %v3393 = vld [vmem:[#allocation12 + $0xb0] sm:$0xff]
      %v3394 = vld [vmem:[#allocation12 + $0xb8] sm:$0xff]
      %v3395 = vld [vmem:[#allocation12 + $0xc0] sm:$0xff]
      %v3396 = vld [vmem:[#allocation12 + $0xc8] sm:$0xff]
      %v3397 = vld [vmem:[#allocation12 + $0xd0] sm:$0xff]
      %v3398 = vld [vmem:[#allocation12 + $0xd8] sm:$0xff]
      %v3399 = vld [vmem:[#allocation12 + $0xe0] sm:$0xff]
      %v3400 = vld [vmem:[#allocation12 + $0xe8] sm:$0xff]
      %v3401 = vld [vmem:[#allocation12 + $0xf0] sm:$0xff]
      %v3402 = vld [vmem:[#allocation12 + $0xf8] sm:$0xff]
      %v3403 = vld [vmem:[#allocation12 + $0x100] sm:$0xff]
      %v3404 = vld [vmem:[#allocation12 + $0x108] sm:$0xff]
      %v3405 = vld [vmem:[#allocation12 + $0x110] sm:$0xff]
      %v3406 = vld [vmem:[#allocation12 + $0x118] sm:$0xff]
      %v3407 = vld [vmem:[#allocation12 + $0x120] sm:$0xff]
      %v3408 = vld [vmem:[#allocation12 + $0x128] sm:$0xff]
      %v3409 = vld [vmem:[#allocation12 + $0x130] sm:$0xff]
      %v3410 = vld [vmem:[#allocation12 + $0x138] sm:$0xff]
      %v3411 = vld [vmem:[#allocation12 + $0x140] sm:$0xff]
      %v3412 = vld [vmem:[#allocation12 + $0x148] sm:$0xff]
      %v3413 = vld [vmem:[#allocation12 + $0x150] sm:$0xff]
      %v3414 = vld [vmem:[#allocation12 + $0x158] sm:$0xff]
      %v3415 = vld [vmem:[#allocation12 + $0x160] sm:$0xff]
      %v3416 = vld [vmem:[#allocation12 + $0x168] sm:$0xff]
      %v3417 = vld [vmem:[#allocation12 + $0x170] sm:$0xff]
      %v3418 = vld [vmem:[#allocation12 + $0x178] sm:$0xff]
      %v3419 = vld [vmem:[#allocation12 + $0x180] sm:$0xff]
      %v3420 = vld [vmem:[#allocation12 + $0x188] sm:$0xff]
      %v3421 = vld [vmem:[#allocation12 + $0x190] sm:$0xff]
      %v3422 = vld [vmem:[#allocation12 + $0x198] sm:$0xff]
      %v3423 = vld [vmem:[#allocation12 + $0x1a0] sm:$0xff]
      %v3424 = vld [vmem:[#allocation12 + $0x1a8] sm:$0xff]
      %v3425 = vld [vmem:[#allocation12 + $0x1b0] sm:$0xff]
      %v3426 = vld [vmem:[#allocation12 + $0x1b8] sm:$0xff]
      %v3427 = vld [vmem:[#allocation12 + $0x1c0] sm:$0xff]
      %v3428 = vld [vmem:[#allocation12 + $0x1c8] sm:$0xff]
      %v3429 = vld [vmem:[#allocation12 + $0x1d0] sm:$0xff]
      %v3430 = vld [vmem:[#allocation12 + $0x1d8] sm:$0xff]
      %v3431 = vld [vmem:[#allocation12 + $0x1e0] sm:$0xff]
      %v3432 = vld [vmem:[#allocation12 + $0x1e8] sm:$0xff]
      %v3433 = vld [vmem:[#allocation12 + $0x1f0] sm:$0xff]
      %v3434 = vld [vmem:[#allocation12 + $0x1f8] sm:$0xff]
      %v3435 = vld [vmem:[#allocation12 + $0x200] sm:$0xff]
      %v3436 = vld [vmem:[#allocation12 + $0x208] sm:$0xff]
      %v3437 = vld [vmem:[#allocation12 + $0x210] sm:$0xff]
      %v3438 = vld [vmem:[#allocation12 + $0x218] sm:$0xff]
      %v3439 = vld [vmem:[#allocation12 + $0x220] sm:$0xff]
      %v3440 = vld [vmem:[#allocation12 + $0x228] sm:$0xff]
      %v3441 = vld [vmem:[#allocation12 + $0x230] sm:$0xff]
      %v3442 = vld [vmem:[#allocation12 + $0x238] sm:$0xff]
      %v3443 = vld [vmem:[#allocation12 + $0x240] sm:$0xff]
      %v3444 = vld [vmem:[#allocation12 + $0x248] sm:$0xff]
      %v3445 = vld [vmem:[#allocation12 + $0x250] sm:$0xff]
      %v3446 = vld [vmem:[#allocation12 + $0x258] sm:$0xff]
      %v3447 = vld [vmem:[#allocation12 + $0x260] sm:$0xff]
      %v3448 = vld [vmem:[#allocation12 + $0x268] sm:$0xff]
      %v3449 = vld [vmem:[#allocation12 + $0x270] sm:$0xff]
      %v3450 = vld [vmem:[#allocation12 + $0x278] sm:$0xff]
      %v3451 = vld [vmem:[#allocation12 + $0x280] sm:$0xff]
      %v3452 = vld [vmem:[#allocation12 + $0x288] sm:$0xff]
      %v3453 = vld [vmem:[#allocation12 + $0x290] sm:$0xff]
      %v3454 = vld [vmem:[#allocation12 + $0x298] sm:$0xff]
      %v3455 = vld [vmem:[#allocation12 + $0x2a0] sm:$0xff]
      %v3456 = vld [vmem:[#allocation12 + $0x2a8] sm:$0xff]
      %v3457 = vld [vmem:[#allocation12 + $0x2b0] sm:$0xff]
      %v3458 = vld [vmem:[#allocation12 + $0x2b8] sm:$0xff]
      %v3459 = vld [vmem:[#allocation12 + $0x2c0] sm:$0xff]
      %v3460 = vld [vmem:[#allocation12 + $0x2c8] sm:$0xff]
      %v3461 = vld [vmem:[#allocation12 + $0x2d0] sm:$0xff]
      %v3462 = vld [vmem:[#allocation12 + $0x2d8] sm:$0xff]
      %v3463 = vld [vmem:[#allocation12 + $0x2e0] sm:$0xff]
      %v3464 = vld [vmem:[#allocation12 + $0x2e8] sm:$0xff]
      %v3465 = vld [vmem:[#allocation12 + $0x2f0] sm:$0xff]
      %v3466 = vld [vmem:[#allocation12 + $0x2f8] sm:$0xff]
      %v3467 = vld [vmem:[#allocation12 + $0x300] sm:$0xff]
      %v3468 = vld [vmem:[#allocation12 + $0x308] sm:$0xff]
      %v3469 = vld [vmem:[#allocation12 + $0x310] sm:$0xff]
      %v3470 = vld [vmem:[#allocation12 + $0x318] sm:$0xff]
      %v3471 = vld [vmem:[#allocation12 + $0x320] sm:$0xff]
      %v3472 = vld [vmem:[#allocation12 + $0x328] sm:$0xff]
      %v3473 = vld [vmem:[#allocation12 + $0x330] sm:$0xff]
      %v3474 = vld [vmem:[#allocation12 + $0x338] sm:$0xff]
      %v3475 = vld [vmem:[#allocation12 + $0x340] sm:$0xff]
      %v3476 = vld [vmem:[#allocation12 + $0x348] sm:$0xff]
      %v3477 = vld [vmem:[#allocation12 + $0x350] sm:$0xff]
      %v3478 = vld [vmem:[#allocation12 + $0x358] sm:$0xff]
      %v3479 = vld [vmem:[#allocation12 + $0x360] sm:$0xff]
      %v3480 = vld [vmem:[#allocation12 + $0x368] sm:$0xff]
      %v3481 = vld [vmem:[#allocation12 + $0x370] sm:$0xff]
      %v3482 = vld [vmem:[#allocation12 + $0x378] sm:$0xff]
      %v3483 = vld [vmem:[#allocation12 + $0x380] sm:$0xff]
      %v3484 = vld [vmem:[#allocation12 + $0x388] sm:$0xff]
      %v3485 = vld [vmem:[#allocation12 + $0x390] sm:$0xff]
      %v3486 = vld [vmem:[#allocation12 + $0x398] sm:$0xff]
      %v3487 = vld [vmem:[#allocation12 + $0x3a0] sm:$0xff]
      %v3488 = vld [vmem:[#allocation12 + $0x3a8] sm:$0xff]
      %v3489 = vld [vmem:[#allocation12 + $0x3b0] sm:$0xff]
      %v3490 = vld [vmem:[#allocation12 + $0x3b8] sm:$0xff]
      %v3491 = vld [vmem:[#allocation12 + $0x3c0] sm:$0xff]
      %v3492 = vld [vmem:[#allocation12 + $0x3c8] sm:$0xff]
      %v3493 = vld [vmem:[#allocation12 + $0x3d0] sm:$0xff]
      %v3494 = vld [vmem:[#allocation12 + $0x3d8] sm:$0xff]
      %v3495 = vld [vmem:[#allocation12 + $0x3e0] sm:$0xff]
      %v3496 = vld [vmem:[#allocation12 + $0x3e8] sm:$0xff]
      %v3497 = vld [vmem:[#allocation12 + $0x3f0] sm:$0xff]
      %v3498 = vld [vmem:[#allocation12 + $0x3f8] sm:$0xff]
      %v3499 = vld [vmem:[%s6] sm:$0xf]
      %v3501 = vperm.slane %v3499, 0
      %v3502 = vperm.slane %v3499, 1
      %v3503 = vperm.slane %v3499, 2
      %v3504 = vperm.slane %v3499, 3
      %v3637 = vunpack.c.l.b16 %v3371
      %v3638 = vunpack.c.h.b16 %v3371
      %v3639 = vunpack.c.l.b16 %v3372
      %v3640 = vunpack.c.h.b16 %v3372
      %v3641 = vunpack.c.l.b16 %v3373
      %v3642 = vunpack.c.h.b16 %v3373
      %v3643 = vunpack.c.l.b16 %v3374
      %v3644 = vunpack.c.h.b16 %v3374
      %v3645 = vunpack.c.l.b16 %v3375
      %v3646 = vunpack.c.h.b16 %v3375
      %v3647 = vunpack.c.l.b16 %v3376
      %v3648 = vunpack.c.h.b16 %v3376
      %v3649 = vunpack.c.l.b16 %v3377
      %v3650 = vunpack.c.h.b16 %v3377
      %v3651 = vunpack.c.l.b16 %v3378
      %v3652 = vunpack.c.h.b16 %v3378
      %v3653 = vunpack.c.l.b16 %v3379
      %v3654 = vunpack.c.h.b16 %v3379
      %v3655 = vunpack.c.l.b16 %v3380
      %v3656 = vunpack.c.h.b16 %v3380
      %v3657 = vunpack.c.l.b16 %v3381
      %v3658 = vunpack.c.h.b16 %v3381
      %v3659 = vunpack.c.l.b16 %v3382
      %v3660 = vunpack.c.h.b16 %v3382
      %v3661 = vunpack.c.l.b16 %v3383
      %v3662 = vunpack.c.h.b16 %v3383
      %v3663 = vunpack.c.l.b16 %v3384
      %v3664 = vunpack.c.h.b16 %v3384
      %v3665 = vunpack.c.l.b16 %v3385
      %v3666 = vunpack.c.h.b16 %v3385
      %v3667 = vunpack.c.l.b16 %v3386
      %v3668 = vunpack.c.h.b16 %v3386
      %v3669 = vunpack.c.l.b16 %v3387
      %v3670 = vunpack.c.h.b16 %v3387
      %v3671 = vunpack.c.l.b16 %v3388
      %v3672 = vunpack.c.h.b16 %v3388
      %v3673 = vunpack.c.l.b16 %v3389
      %v3674 = vunpack.c.h.b16 %v3389
      %v3675 = vunpack.c.l.b16 %v3390
      %v3676 = vunpack.c.h.b16 %v3390
      %v3677 = vunpack.c.l.b16 %v3391
      %v3678 = vunpack.c.h.b16 %v3391
      %v3679 = vunpack.c.l.b16 %v3392
      %v3680 = vunpack.c.h.b16 %v3392
      %v3681 = vunpack.c.l.b16 %v3393
      %v3682 = vunpack.c.h.b16 %v3393
      %v3683 = vunpack.c.l.b16 %v3394
      %v3684 = vunpack.c.h.b16 %v3394
      %v3685 = vunpack.c.l.b16 %v3395
      %v3686 = vunpack.c.h.b16 %v3395
      %v3687 = vunpack.c.l.b16 %v3396
      %v3688 = vunpack.c.h.b16 %v3396
      %v3689 = vunpack.c.l.b16 %v3397
      %v3690 = vunpack.c.h.b16 %v3397
      %v3691 = vunpack.c.l.b16 %v3398
      %v3692 = vunpack.c.h.b16 %v3398
      %v3693 = vunpack.c.l.b16 %v3399
      %v3694 = vunpack.c.h.b16 %v3399
      %v3695 = vunpack.c.l.b16 %v3400
      %v3696 = vunpack.c.h.b16 %v3400
      %v3697 = vunpack.c.l.b16 %v3401
      %v3698 = vunpack.c.h.b16 %v3401
      %v3699 = vunpack.c.l.b16 %v3402
      %v3700 = vunpack.c.h.b16 %v3402
      %v3701 = vunpack.c.l.b16 %v3403
      %v3702 = vunpack.c.h.b16 %v3403
      %v3703 = vunpack.c.l.b16 %v3404
      %v3704 = vunpack.c.h.b16 %v3404
      %v3705 = vunpack.c.l.b16 %v3405
      %v3706 = vunpack.c.h.b16 %v3405
      %v3707 = vunpack.c.l.b16 %v3406
      %v3708 = vunpack.c.h.b16 %v3406
      %v3709 = vunpack.c.l.b16 %v3407
      %v3710 = vunpack.c.h.b16 %v3407
      %v3711 = vunpack.c.l.b16 %v3408
      %v3712 = vunpack.c.h.b16 %v3408
      %v3713 = vunpack.c.l.b16 %v3409
      %v3714 = vunpack.c.h.b16 %v3409
      %v3715 = vunpack.c.l.b16 %v3410
      %v3716 = vunpack.c.h.b16 %v3410
      %v3717 = vunpack.c.l.b16 %v3411
      %v3718 = vunpack.c.h.b16 %v3411
      %v3719 = vunpack.c.l.b16 %v3412
      %v3720 = vunpack.c.h.b16 %v3412
      %v3721 = vunpack.c.l.b16 %v3413
      %v3722 = vunpack.c.h.b16 %v3413
      %v3723 = vunpack.c.l.b16 %v3414
      %v3724 = vunpack.c.h.b16 %v3414
      %v3725 = vunpack.c.l.b16 %v3415
      %v3726 = vunpack.c.h.b16 %v3415
      %v3727 = vunpack.c.l.b16 %v3416
      %v3728 = vunpack.c.h.b16 %v3416
      %v3729 = vunpack.c.l.b16 %v3417
      %v3730 = vunpack.c.h.b16 %v3417
      %v3731 = vunpack.c.l.b16 %v3418
      %v3732 = vunpack.c.h.b16 %v3418
      %v3733 = vunpack.c.l.b16 %v3419
      %v3734 = vunpack.c.h.b16 %v3419
      %v3735 = vunpack.c.l.b16 %v3420
      %v3736 = vunpack.c.h.b16 %v3420
      %v3737 = vunpack.c.l.b16 %v3421
      %v3738 = vunpack.c.h.b16 %v3421
      %v3739 = vunpack.c.l.b16 %v3422
      %v3740 = vunpack.c.h.b16 %v3422
      %v3741 = vunpack.c.l.b16 %v3423
      %v3742 = vunpack.c.h.b16 %v3423
      %v3743 = vunpack.c.l.b16 %v3424
      %v3744 = vunpack.c.h.b16 %v3424
      %v3745 = vunpack.c.l.b16 %v3425
      %v3746 = vunpack.c.h.b16 %v3425
      %v3747 = vunpack.c.l.b16 %v3426
      %v3748 = vunpack.c.h.b16 %v3426
      %v3749 = vunpack.c.l.b16 %v3427
      %v3750 = vunpack.c.h.b16 %v3427
      %v3751 = vunpack.c.l.b16 %v3428
      %v3752 = vunpack.c.h.b16 %v3428
      %v3753 = vunpack.c.l.b16 %v3429
      %v3754 = vunpack.c.h.b16 %v3429
      %v3755 = vunpack.c.l.b16 %v3430
      %v3756 = vunpack.c.h.b16 %v3430
      %v3757 = vunpack.c.l.b16 %v3431
      %v3758 = vunpack.c.h.b16 %v3431
      %v3759 = vunpack.c.l.b16 %v3432
      %v3760 = vunpack.c.h.b16 %v3432
      %v3761 = vunpack.c.l.b16 %v3433
      %v3762 = vunpack.c.h.b16 %v3433
      %v3763 = vunpack.c.l.b16 %v3434
      %v3764 = vunpack.c.h.b16 %v3434
      %v3765 = vunpack.c.l.b16 %v3435
      %v3766 = vunpack.c.h.b16 %v3435
      %v3767 = vunpack.c.l.b16 %v3436
      %v3768 = vunpack.c.h.b16 %v3436
      %v3769 = vunpack.c.l.b16 %v3437
      %v3770 = vunpack.c.h.b16 %v3437
      %v3771 = vunpack.c.l.b16 %v3438
      %v3772 = vunpack.c.h.b16 %v3438
      %v3773 = vunpack.c.l.b16 %v3439
      %v3774 = vunpack.c.h.b16 %v3439
      %v3775 = vunpack.c.l.b16 %v3440
      %v3776 = vunpack.c.h.b16 %v3440
      %v3777 = vunpack.c.l.b16 %v3441
      %v3778 = vunpack.c.h.b16 %v3441
      %v3779 = vunpack.c.l.b16 %v3442
      %v3780 = vunpack.c.h.b16 %v3442
      %v3781 = vunpack.c.l.b16 %v3443
      %v3782 = vunpack.c.h.b16 %v3443
      %v3783 = vunpack.c.l.b16 %v3444
      %v3784 = vunpack.c.h.b16 %v3444
      %v3785 = vunpack.c.l.b16 %v3445
      %v3786 = vunpack.c.h.b16 %v3445
      %v3787 = vunpack.c.l.b16 %v3446
      %v3788 = vunpack.c.h.b16 %v3446
      %v3789 = vunpack.c.l.b16 %v3447
      %v3790 = vunpack.c.h.b16 %v3447
      %v3791 = vunpack.c.l.b16 %v3448
      %v3792 = vunpack.c.h.b16 %v3448
      %v3793 = vunpack.c.l.b16 %v3449
      %v3794 = vunpack.c.h.b16 %v3449
      %v3795 = vunpack.c.l.b16 %v3450
      %v3796 = vunpack.c.h.b16 %v3450
      %v3797 = vunpack.c.l.b16 %v3451
      %v3798 = vunpack.c.h.b16 %v3451
      %v3799 = vunpack.c.l.b16 %v3452
      %v3800 = vunpack.c.h.b16 %v3452
      %v3801 = vunpack.c.l.b16 %v3453
      %v3802 = vunpack.c.h.b16 %v3453
      %v3803 = vunpack.c.l.b16 %v3454
      %v3804 = vunpack.c.h.b16 %v3454
      %v3805 = vunpack.c.l.b16 %v3455
      %v3806 = vunpack.c.h.b16 %v3455
      %v3807 = vunpack.c.l.b16 %v3456
      %v3808 = vunpack.c.h.b16 %v3456
      %v3809 = vunpack.c.l.b16 %v3457
      %v3810 = vunpack.c.h.b16 %v3457
      %v3811 = vunpack.c.l.b16 %v3458
      %v3812 = vunpack.c.h.b16 %v3458
      %v3813 = vunpack.c.l.b16 %v3459
      %v3814 = vunpack.c.h.b16 %v3459
      %v3815 = vunpack.c.l.b16 %v3460
      %v3816 = vunpack.c.h.b16 %v3460
      %v3817 = vunpack.c.l.b16 %v3461
      %v3818 = vunpack.c.h.b16 %v3461
      %v3819 = vunpack.c.l.b16 %v3462
      %v3820 = vunpack.c.h.b16 %v3462
      %v3821 = vunpack.c.l.b16 %v3463
      %v3822 = vunpack.c.h.b16 %v3463
      %v3823 = vunpack.c.l.b16 %v3464
      %v3824 = vunpack.c.h.b16 %v3464
      %v3825 = vunpack.c.l.b16 %v3465
      %v3826 = vunpack.c.h.b16 %v3465
      %v3827 = vunpack.c.l.b16 %v3466
      %v3828 = vunpack.c.h.b16 %v3466
      %v3829 = vunpack.c.l.b16 %v3467
      %v3830 = vunpack.c.h.b16 %v3467
      %v3831 = vunpack.c.l.b16 %v3468
      %v3832 = vunpack.c.h.b16 %v3468
      %v3833 = vunpack.c.l.b16 %v3469
      %v3834 = vunpack.c.h.b16 %v3469
      %v3835 = vunpack.c.l.b16 %v3470
      %v3836 = vunpack.c.h.b16 %v3470
      %v3837 = vunpack.c.l.b16 %v3471
      %v3838 = vunpack.c.h.b16 %v3471
      %v3839 = vunpack.c.l.b16 %v3472
      %v3840 = vunpack.c.h.b16 %v3472
      %v3841 = vunpack.c.l.b16 %v3473
      %v3842 = vunpack.c.h.b16 %v3473
      %v3843 = vunpack.c.l.b16 %v3474
      %v3844 = vunpack.c.h.b16 %v3474
      %v3845 = vunpack.c.l.b16 %v3475
      %v3846 = vunpack.c.h.b16 %v3475
      %v3847 = vunpack.c.l.b16 %v3476
      %v3848 = vunpack.c.h.b16 %v3476
      %v3849 = vunpack.c.l.b16 %v3477
      %v3850 = vunpack.c.h.b16 %v3477
      %v3851 = vunpack.c.l.b16 %v3478
      %v3852 = vunpack.c.h.b16 %v3478
      %v3853 = vunpack.c.l.b16 %v3479
      %v3854 = vunpack.c.h.b16 %v3479
      %v3855 = vunpack.c.l.b16 %v3480
      %v3856 = vunpack.c.h.b16 %v3480
      %v3857 = vunpack.c.l.b16 %v3481
      %v3858 = vunpack.c.h.b16 %v3481
      %v3859 = vunpack.c.l.b16 %v3482
      %v3860 = vunpack.c.h.b16 %v3482
      %v3861 = vunpack.c.l.b16 %v3483
      %v3862 = vunpack.c.h.b16 %v3483
      %v3863 = vunpack.c.l.b16 %v3484
      %v3864 = vunpack.c.h.b16 %v3484
      %v3865 = vunpack.c.l.b16 %v3485
      %v3866 = vunpack.c.h.b16 %v3485
      %v3867 = vunpack.c.l.b16 %v3486
      %v3868 = vunpack.c.h.b16 %v3486
      %v3869 = vunpack.c.l.b16 %v3487
      %v3870 = vunpack.c.h.b16 %v3487
      %v3871 = vunpack.c.l.b16 %v3488
      %v3872 = vunpack.c.h.b16 %v3488
      %v3873 = vunpack.c.l.b16 %v3489
      %v3874 = vunpack.c.h.b16 %v3489
      %v3875 = vunpack.c.l.b16 %v3490
      %v3876 = vunpack.c.h.b16 %v3490
      %v3877 = vunpack.c.l.b16 %v3491
      %v3878 = vunpack.c.h.b16 %v3491
      %v3879 = vunpack.c.l.b16 %v3492
      %v3880 = vunpack.c.h.b16 %v3492
      %v3881 = vunpack.c.l.b16 %v3493
      %v3882 = vunpack.c.h.b16 %v3493
      %v3883 = vunpack.c.l.b16 %v3494
      %v3884 = vunpack.c.h.b16 %v3494
      %v3885 = vunpack.c.l.b16 %v3495
      %v3886 = vunpack.c.h.b16 %v3495
      %v3887 = vunpack.c.l.b16 %v3496
      %v3888 = vunpack.c.h.b16 %v3496
      %v3889 = vunpack.c.l.b16 %v3497
      %v3890 = vunpack.c.h.b16 %v3497
      %v3891 = vunpack.c.l.b16 %v3498
      %v3892 = vunpack.c.h.b16 %v3498
      %v3893 = vpack.c.b16 %v3641, %v3637
      %v3894 = vpack.c.b16 %v3642, %v3638
      %v3895 = vpack.c.b16 %v3643, %v3639
      %v3896 = vpack.c.b16 %v3644, %v3640
      %v3897 = vpack.c.b16 %v3649, %v3645
      %v3898 = vpack.c.b16 %v3650, %v3646
      %v3899 = vpack.c.b16 %v3651, %v3647
      %v3900 = vpack.c.b16 %v3652, %v3648
      %v3901 = vpack.c.b16 %v3657, %v3653
      %v3902 = vpack.c.b16 %v3658, %v3654
      %v3903 = vpack.c.b16 %v3659, %v3655
      %v3904 = vpack.c.b16 %v3660, %v3656
      %v3905 = vpack.c.b16 %v3665, %v3661
      %v3906 = vpack.c.b16 %v3666, %v3662
      %v3907 = vpack.c.b16 %v3667, %v3663
      %v3908 = vpack.c.b16 %v3668, %v3664
      %v3909 = vpack.c.b16 %v3673, %v3669
      %v3910 = vpack.c.b16 %v3674, %v3670
      %v3911 = vpack.c.b16 %v3675, %v3671
      %v3912 = vpack.c.b16 %v3676, %v3672
      %v3913 = vpack.c.b16 %v3681, %v3677
      %v3914 = vpack.c.b16 %v3682, %v3678
      %v3915 = vpack.c.b16 %v3683, %v3679
      %v3916 = vpack.c.b16 %v3684, %v3680
      %v3917 = vpack.c.b16 %v3689, %v3685
      %v3918 = vpack.c.b16 %v3690, %v3686
      %v3919 = vpack.c.b16 %v3691, %v3687
      %v3920 = vpack.c.b16 %v3692, %v3688
      %v3921 = vpack.c.b16 %v3697, %v3693
      %v3922 = vpack.c.b16 %v3698, %v3694
      %v3923 = vpack.c.b16 %v3699, %v3695
      %v3924 = vpack.c.b16 %v3700, %v3696
      %v3925 = vpack.c.b16 %v3705, %v3701
      %v3926 = vpack.c.b16 %v3706, %v3702
      %v3927 = vpack.c.b16 %v3707, %v3703
      %v3928 = vpack.c.b16 %v3708, %v3704
      %v3929 = vpack.c.b16 %v3713, %v3709
      %v3930 = vpack.c.b16 %v3714, %v3710
      %v3931 = vpack.c.b16 %v3715, %v3711
      %v3932 = vpack.c.b16 %v3716, %v3712
      %v3933 = vpack.c.b16 %v3721, %v3717
      %v3934 = vpack.c.b16 %v3722, %v3718
      %v3935 = vpack.c.b16 %v3723, %v3719
      %v3936 = vpack.c.b16 %v3724, %v3720
      %v3937 = vpack.c.b16 %v3729, %v3725
      %v3938 = vpack.c.b16 %v3730, %v3726
      %v3939 = vpack.c.b16 %v3731, %v3727
      %v3940 = vpack.c.b16 %v3732, %v3728
      %v3941 = vpack.c.b16 %v3737, %v3733
      %v3942 = vpack.c.b16 %v3738, %v3734
      %v3943 = vpack.c.b16 %v3739, %v3735
      %v3944 = vpack.c.b16 %v3740, %v3736
      %v3945 = vpack.c.b16 %v3745, %v3741
      %v3946 = vpack.c.b16 %v3746, %v3742
      %v3947 = vpack.c.b16 %v3747, %v3743
      %v3948 = vpack.c.b16 %v3748, %v3744
      %v3949 = vpack.c.b16 %v3753, %v3749
      %v3950 = vpack.c.b16 %v3754, %v3750
      %v3951 = vpack.c.b16 %v3755, %v3751
      %v3952 = vpack.c.b16 %v3756, %v3752
      %v3953 = vpack.c.b16 %v3761, %v3757
      %v3954 = vpack.c.b16 %v3762, %v3758
      %v3955 = vpack.c.b16 %v3763, %v3759
      %v3956 = vpack.c.b16 %v3764, %v3760
      %v3957 = vpack.c.b16 %v3769, %v3765
      %v3958 = vpack.c.b16 %v3770, %v3766
      %v3959 = vpack.c.b16 %v3771, %v3767
      %v3960 = vpack.c.b16 %v3772, %v3768
      %v3961 = vpack.c.b16 %v3777, %v3773
      %v3962 = vpack.c.b16 %v3778, %v3774
      %v3963 = vpack.c.b16 %v3779, %v3775
      %v3964 = vpack.c.b16 %v3780, %v3776
      %v3965 = vpack.c.b16 %v3785, %v3781
      %v3966 = vpack.c.b16 %v3786, %v3782
      %v3967 = vpack.c.b16 %v3787, %v3783
      %v3968 = vpack.c.b16 %v3788, %v3784
      %v3969 = vpack.c.b16 %v3793, %v3789
      %v3970 = vpack.c.b16 %v3794, %v3790
      %v3971 = vpack.c.b16 %v3795, %v3791
      %v3972 = vpack.c.b16 %v3796, %v3792
      %v3973 = vpack.c.b16 %v3801, %v3797
      %v3974 = vpack.c.b16 %v3802, %v3798
      %v3975 = vpack.c.b16 %v3803, %v3799
      %v3976 = vpack.c.b16 %v3804, %v3800
      %v3977 = vpack.c.b16 %v3809, %v3805
      %v3978 = vpack.c.b16 %v3810, %v3806
      %v3979 = vpack.c.b16 %v3811, %v3807
      %v3980 = vpack.c.b16 %v3812, %v3808
      %v3981 = vpack.c.b16 %v3817, %v3813
      %v3982 = vpack.c.b16 %v3818, %v3814
      %v3983 = vpack.c.b16 %v3819, %v3815
      %v3984 = vpack.c.b16 %v3820, %v3816
      %v3985 = vpack.c.b16 %v3825, %v3821
      %v3986 = vpack.c.b16 %v3826, %v3822
      %v3987 = vpack.c.b16 %v3827, %v3823
      %v3988 = vpack.c.b16 %v3828, %v3824
      %v3989 = vpack.c.b16 %v3833, %v3829
      %v3990 = vpack.c.b16 %v3834, %v3830
      %v3991 = vpack.c.b16 %v3835, %v3831
      %v3992 = vpack.c.b16 %v3836, %v3832
      %v3993 = vpack.c.b16 %v3841, %v3837
      %v3994 = vpack.c.b16 %v3842, %v3838
      %v3995 = vpack.c.b16 %v3843, %v3839
      %v3996 = vpack.c.b16 %v3844, %v3840
      %v3997 = vpack.c.b16 %v3849, %v3845
      %v3998 = vpack.c.b16 %v3850, %v3846
      %v3999 = vpack.c.b16 %v3851, %v3847
      %v4000 = vpack.c.b16 %v3852, %v3848
      %v4001 = vpack.c.b16 %v3857, %v3853
      %v4002 = vpack.c.b16 %v3858, %v3854
      %v4003 = vpack.c.b16 %v3859, %v3855
      %v4004 = vpack.c.b16 %v3860, %v3856
      %v4005 = vpack.c.b16 %v3865, %v3861
      %v4006 = vpack.c.b16 %v3866, %v3862
      %v4007 = vpack.c.b16 %v3867, %v3863
      %v4008 = vpack.c.b16 %v3868, %v3864
      %v4009 = vpack.c.b16 %v3873, %v3869
      %v4010 = vpack.c.b16 %v3874, %v3870
      %v4011 = vpack.c.b16 %v3875, %v3871
      %v4012 = vpack.c.b16 %v3876, %v3872
      %v4013 = vpack.c.b16 %v3881, %v3877
      %v4014 = vpack.c.b16 %v3882, %v3878
      %v4015 = vpack.c.b16 %v3883, %v3879
      %v4016 = vpack.c.b16 %v3884, %v3880
      %v4017 = vpack.c.b16 %v3889, %v3885
      %v4018 = vpack.c.b16 %v3890, %v3886
      %v4019 = vpack.c.b16 %v3891, %v3887
      %v4020 = vpack.c.b16 %v3892, %v3888
      %4149 = vmatpush.bf16.msra.mxu0 %v3921
      %4150 = vmatpush.bf16.msra.mxu0 %v3917
      %4151 = vmatpush.bf16.msra.mxu0 %v3913
      %4152 = vmatpush.bf16.msra.mxu0 %v3909
      %4153 = vmatpush.bf16.msra.mxu0 %v3905
      %4154 = vmatpush.bf16.msra.mxu0 %v3901
      %4155 = vmatpush.bf16.msra.mxu0 %v3897
      %4156 = vmatpush.bf16.msra.mxu0 %v3893
      %4157 = vmatmul.bf16.gmra.mxu0 %v3367
      %v4158 = vpop.f32.mrf.mxu0
      %v4159 = vadd.f32 %v3501, %v4158
      %v4160 = vpop.f32.mrf.mxu0
      %v4161 = vadd.f32 %v3501, %v4160
      %4162 = vdwg.mxu0
      %4163 = vmatpush.bf16.msra.mxu0 %v3953
      %4164 = vmatpush.bf16.msra.mxu0 %v3949
      %4165 = vmatpush.bf16.msra.mxu0 %v3945
      %4166 = vmatpush.bf16.msra.mxu0 %v3941
      %4167 = vmatpush.bf16.msra.mxu0 %v3937
      %4168 = vmatpush.bf16.msra.mxu0 %v3933
      %4169 = vmatpush.bf16.msra.mxu0 %v3929
      %4170 = vmatpush.bf16.msra.mxu0 %v3925
      %4171 = vmatmul.bf16.gmra.mxu0 %v3368
      %v4172 = vpop.f32.mrf.mxu0
      %v4173 = vadd.f32 %v4159, %v4172
      %v4174 = vpop.f32.mrf.mxu0
      %v4175 = vadd.f32 %v4161, %v4174
      %4176 = vdwg.mxu0
      %4177 = vmatpush.bf16.msra.mxu0 %v3985
      %4178 = vmatpush.bf16.msra.mxu0 %v3981
      %4179 = vmatpush.bf16.msra.mxu0 %v3977
      %4180 = vmatpush.bf16.msra.mxu0 %v3973
      %4181 = vmatpush.bf16.msra.mxu0 %v3969
      %4182 = vmatpush.bf16.msra.mxu0 %v3965
      %4183 = vmatpush.bf16.msra.mxu0 %v3961
      %4184 = vmatpush.bf16.msra.mxu0 %v3957
      %4185 = vmatmul.bf16.gmra.mxu0 %v3369
      %v4186 = vpop.f32.mrf.mxu0
      %v4187 = vadd.f32 %v4173, %v4186
      %v4188 = vpop.f32.mrf.mxu0
      %v4189 = vadd.f32 %v4175, %v4188
      %4190 = vdwg.mxu0
      %4191 = vmatpush.bf16.msra.mxu0 %v4017
      %4192 = vmatpush.bf16.msra.mxu0 %v4013
      %4193 = vmatpush.bf16.msra.mxu0 %v4009
      %4194 = vmatpush.bf16.msra.mxu0 %v4005
      %4195 = vmatpush.bf16.msra.mxu0 %v4001
      %4196 = vmatpush.bf16.msra.mxu0 %v3997
      %4197 = vmatpush.bf16.msra.mxu0 %v3993
      %4198 = vmatpush.bf16.msra.mxu0 %v3989
      %4199 = vmatmul.bf16.gmra.mxu0 %v3370
      %v4200 = vpop.f32.mrf.mxu0
      %v4201 = vadd.f32 %v4187, %v4200
      %v4202 = vpop.f32.mrf.mxu0
      %v4203 = vadd.f32 %v4189, %v4202
      %4204 = vdwg.mxu0
      %4205 = vmatpush.bf16.msra.mxu0 %v3922
      %4206 = vmatpush.bf16.msra.mxu0 %v3918
      %4207 = vmatpush.bf16.msra.mxu0 %v3914
      %4208 = vmatpush.bf16.msra.mxu0 %v3910
      %4209 = vmatpush.bf16.msra.mxu0 %v3906
      %4210 = vmatpush.bf16.msra.mxu0 %v3902
      %4211 = vmatpush.bf16.msra.mxu0 %v3898
      %4212 = vmatpush.bf16.msra.mxu0 %v3894
      %4213 = vmatmul.bf16.gmra.mxu0 %v3367
      %v4214 = vpop.f32.mrf.mxu0
      %v4215 = vadd.f32 %v3502, %v4214
      %v4216 = vpop.f32.mrf.mxu0
      %v4217 = vadd.f32 %v3502, %v4216
      %4218 = vdwg.mxu0
      %4219 = vmatpush.bf16.msra.mxu0 %v3954
      %4220 = vmatpush.bf16.msra.mxu0 %v3950
      %4221 = vmatpush.bf16.msra.mxu0 %v3946
      %4222 = vmatpush.bf16.msra.mxu0 %v3942
      %4223 = vmatpush.bf16.msra.mxu0 %v3938
      %4224 = vmatpush.bf16.msra.mxu0 %v3934
      %4225 = vmatpush.bf16.msra.mxu0 %v3930
      %4226 = vmatpush.bf16.msra.mxu0 %v3926
      %4227 = vmatmul.bf16.gmra.mxu0 %v3368
      %v4228 = vpop.f32.mrf.mxu0
      %v4229 = vadd.f32 %v4215, %v4228
      %v4230 = vpop.f32.mrf.mxu0
      %v4231 = vadd.f32 %v4217, %v4230
      %4232 = vdwg.mxu0
      %4233 = vmatpush.bf16.msra.mxu0 %v3986
      %4234 = vmatpush.bf16.msra.mxu0 %v3982
      %4235 = vmatpush.bf16.msra.mxu0 %v3978
      %4236 = vmatpush.bf16.msra.mxu0 %v3974
      %4237 = vmatpush.bf16.msra.mxu0 %v3970
      %4238 = vmatpush.bf16.msra.mxu0 %v3966
      %4239 = vmatpush.bf16.msra.mxu0 %v3962
      %4240 = vmatpush.bf16.msra.mxu0 %v3958
      %4241 = vmatmul.bf16.gmra.mxu0 %v3369
      %v4242 = vpop.f32.mrf.mxu0
      %v4243 = vadd.f32 %v4229, %v4242
      %v4244 = vpop.f32.mrf.mxu0
      %v4245 = vadd.f32 %v4231, %v4244
      %4246 = vdwg.mxu0
      %4247 = vmatpush.bf16.msra.mxu0 %v4018
      %4248 = vmatpush.bf16.msra.mxu0 %v4014
      %4249 = vmatpush.bf16.msra.mxu0 %v4010
      %4250 = vmatpush.bf16.msra.mxu0 %v4006
      %4251 = vmatpush.bf16.msra.mxu0 %v4002
      %4252 = vmatpush.bf16.msra.mxu0 %v3998
      %4253 = vmatpush.bf16.msra.mxu0 %v3994
      %4254 = vmatpush.bf16.msra.mxu0 %v3990
      %4255 = vmatmul.bf16.gmra.mxu0 %v3370
      %v4256 = vpop.f32.mrf.mxu0
      %v4257 = vadd.f32 %v4243, %v4256
      %v4258 = vpop.f32.mrf.mxu0
      %v4259 = vadd.f32 %v4245, %v4258
      %4260 = vdwg.mxu0
      %4261 = vmatpush.bf16.msra.mxu0 %v3923
      %4262 = vmatpush.bf16.msra.mxu0 %v3919
      %4263 = vmatpush.bf16.msra.mxu0 %v3915
      %4264 = vmatpush.bf16.msra.mxu0 %v3911
      %4265 = vmatpush.bf16.msra.mxu0 %v3907
      %4266 = vmatpush.bf16.msra.mxu0 %v3903
      %4267 = vmatpush.bf16.msra.mxu0 %v3899
      %4268 = vmatpush.bf16.msra.mxu0 %v3895
      %4269 = vmatmul.bf16.gmra.mxu0 %v3367
      %v4270 = vpop.f32.mrf.mxu0
      %v4271 = vadd.f32 %v3503, %v4270
      %v4272 = vpop.f32.mrf.mxu0
      %v4273 = vadd.f32 %v3503, %v4272
      %4274 = vdwg.mxu0
      %4275 = vmatpush.bf16.msra.mxu0 %v3955
      %4276 = vmatpush.bf16.msra.mxu0 %v3951
      %4277 = vmatpush.bf16.msra.mxu0 %v3947
      %4278 = vmatpush.bf16.msra.mxu0 %v3943
      %4279 = vmatpush.bf16.msra.mxu0 %v3939
      %4280 = vmatpush.bf16.msra.mxu0 %v3935
      %4281 = vmatpush.bf16.msra.mxu0 %v3931
      %4282 = vmatpush.bf16.msra.mxu0 %v3927
      %4283 = vmatmul.bf16.gmra.mxu0 %v3368
      %v4284 = vpop.f32.mrf.mxu0
      %v4285 = vadd.f32 %v4271, %v4284
      %v4286 = vpop.f32.mrf.mxu0
      %v4287 = vadd.f32 %v4273, %v4286
      %4288 = vdwg.mxu0
      %4289 = vmatpush.bf16.msra.mxu0 %v3987
      %4290 = vmatpush.bf16.msra.mxu0 %v3983
      %4291 = vmatpush.bf16.msra.mxu0 %v3979
      %4292 = vmatpush.bf16.msra.mxu0 %v3975
      %4293 = vmatpush.bf16.msra.mxu0 %v3971
      %4294 = vmatpush.bf16.msra.mxu0 %v3967
      %4295 = vmatpush.bf16.msra.mxu0 %v3963
      %4296 = vmatpush.bf16.msra.mxu0 %v3959
      %4297 = vmatmul.bf16.gmra.mxu0 %v3369
      %v4298 = vpop.f32.mrf.mxu0
      %v4299 = vadd.f32 %v4285, %v4298
      %v4300 = vpop.f32.mrf.mxu0
      %v4301 = vadd.f32 %v4287, %v4300
      %4302 = vdwg.mxu0
      %4303 = vmatpush.bf16.msra.mxu0 %v4019
      %4304 = vmatpush.bf16.msra.mxu0 %v4015
      %4305 = vmatpush.bf16.msra.mxu0 %v4011
      %4306 = vmatpush.bf16.msra.mxu0 %v4007
      %4307 = vmatpush.bf16.msra.mxu0 %v4003
      %4308 = vmatpush.bf16.msra.mxu0 %v3999
      %4309 = vmatpush.bf16.msra.mxu0 %v3995
      %4310 = vmatpush.bf16.msra.mxu0 %v3991
      %4311 = vmatmul.bf16.gmra.mxu0 %v3370
      %v4312 = vpop.f32.mrf.mxu0
      %v4313 = vadd.f32 %v4299, %v4312
      %v4314 = vpop.f32.mrf.mxu0
      %v4315 = vadd.f32 %v4301, %v4314
      %4316 = vdwg.mxu0
      %4317 = vmatpush.bf16.msra.mxu0 %v3924
      %4318 = vmatpush.bf16.msra.mxu0 %v3920
      %4319 = vmatpush.bf16.msra.mxu0 %v3916
      %4320 = vmatpush.bf16.msra.mxu0 %v3912
      %4321 = vmatpush.bf16.msra.mxu0 %v3908
      %4322 = vmatpush.bf16.msra.mxu0 %v3904
      %4323 = vmatpush.bf16.msra.mxu0 %v3900
      %4324 = vmatpush.bf16.msra.mxu0 %v3896
      %4325 = vmatmul.bf16.gmra.mxu0 %v3367
      %v4326 = vpop.f32.mrf.mxu0
      %v4327 = vadd.f32 %v3504, %v4326
      %v4328 = vpop.f32.mrf.mxu0
      %v4329 = vadd.f32 %v3504, %v4328
      %4330 = vdwg.mxu0
      %4331 = vmatpush.bf16.msra.mxu0 %v3956
      %4332 = vmatpush.bf16.msra.mxu0 %v3952
      %4333 = vmatpush.bf16.msra.mxu0 %v3948
      %4334 = vmatpush.bf16.msra.mxu0 %v3944
      %4335 = vmatpush.bf16.msra.mxu0 %v3940
      %4336 = vmatpush.bf16.msra.mxu0 %v3936
      %4337 = vmatpush.bf16.msra.mxu0 %v3932
      %4338 = vmatpush.bf16.msra.mxu0 %v3928
      %4339 = vmatmul.bf16.gmra.mxu0 %v3368
      %v4340 = vpop.f32.mrf.mxu0
      %v4341 = vadd.f32 %v4327, %v4340
      %v4342 = vpop.f32.mrf.mxu0
      %v4343 = vadd.f32 %v4329, %v4342
      %4344 = vdwg.mxu0
      %4345 = vmatpush.bf16.msra.mxu0 %v3988
      %4346 = vmatpush.bf16.msra.mxu0 %v3984
      %4347 = vmatpush.bf16.msra.mxu0 %v3980
      %4348 = vmatpush.bf16.msra.mxu0 %v3976
      %4349 = vmatpush.bf16.msra.mxu0 %v3972
      %4350 = vmatpush.bf16.msra.mxu0 %v3968
      %4351 = vmatpush.bf16.msra.mxu0 %v3964
      %4352 = vmatpush.bf16.msra.mxu0 %v3960
      %4353 = vmatmul.bf16.gmra.mxu0 %v3369
      %v4354 = vpop.f32.mrf.mxu0
      %v4355 = vadd.f32 %v4341, %v4354
      %v4356 = vpop.f32.mrf.mxu0
      %v4357 = vadd.f32 %v4343, %v4356
      %4358 = vdwg.mxu0
      %4359 = vmatpush.bf16.msra.mxu0 %v4020
      %4360 = vmatpush.bf16.msra.mxu0 %v4016
      %4361 = vmatpush.bf16.msra.mxu0 %v4012
      %4362 = vmatpush.bf16.msra.mxu0 %v4008
      %4363 = vmatpush.bf16.msra.mxu0 %v4004
      %4364 = vmatpush.bf16.msra.mxu0 %v4000
      %4365 = vmatpush.bf16.msra.mxu0 %v3996
      %4366 = vmatpush.bf16.msra.mxu0 %v3992
      %4367 = vmatmul.bf16.gmra.mxu0 %v3370
      %v4368 = vpop.f32.mrf.mxu0
      %v4369 = vadd.f32 %v4355, %v4368
      %v4370 = vpop.f32.mrf.mxu0
      %v4371 = vadd.f32 %v4357, %v4370
      %4372 = vdwg.mxu0
      %v4373 = vmax.f32 %v4201, 0.0
      %v4374 = vmax.f32 %v4257, 0.0
      %v4375 = vmax.f32 %v4313, 0.0
      %v4376 = vmax.f32 %v4369, 0.0
      %v4377 = vmax.f32 %v4203, 0.0
      %v4378 = vmax.f32 %v4259, 0.0
      %v4379 = vmax.f32 %v4315, 0.0
      %v4380 = vmax.f32 %v4371, 0.0
      %v4381 = vpack.c.bf16 %v4377, %v4373
      %v4382 = vpack.c.bf16 %v4378, %v4374
      %v4383 = vpack.c.bf16 %v4379, %v4375
      %v4384 = vpack.c.bf16 %v4380, %v4376
      %v4385 = vld [vmem:[#allocation14] sm:$0xff]
      %v4386 = vld [vmem:[#allocation14 + $0x8] sm:$0xff]
      %v4387 = vld [vmem:[#allocation14 + $0x10] sm:$0xff]
      %v4388 = vld [vmem:[#allocation14 + $0x18] sm:$0xff]
      %v4389 = vld [vmem:[#allocation14 + $0x20] sm:$0xff]
      %v4390 = vld [vmem:[#allocation14 + $0x28] sm:$0xff]
      %v4391 = vld [vmem:[#allocation14 + $0x30] sm:$0xff]
      %v4392 = vld [vmem:[#allocation14 + $0x38] sm:$0xff]
      %v4393 = vld [vmem:[#allocation14 + $0x40] sm:$0xff]
      %v4394 = vld [vmem:[#allocation14 + $0x48] sm:$0xff]
      %v4395 = vld [vmem:[#allocation14 + $0x50] sm:$0xff]
      %v4396 = vld [vmem:[#allocation14 + $0x58] sm:$0xff]
      %v4397 = vld [vmem:[#allocation14 + $0x60] sm:$0xff]
      %v4398 = vld [vmem:[#allocation14 + $0x68] sm:$0xff]
      %v4399 = vld [vmem:[#allocation14 + $0x70] sm:$0xff]
      %v4400 = vld [vmem:[#allocation14 + $0x78] sm:$0xff]
      %v4401 = vld [vmem:[#allocation14 + $0x80] sm:$0xff]
      %v4402 = vld [vmem:[#allocation14 + $0x88] sm:$0xff]
      %v4403 = vld [vmem:[#allocation14 + $0x90] sm:$0xff]
      %v4404 = vld [vmem:[#allocation14 + $0x98] sm:$0xff]
      %v4405 = vld [vmem:[#allocation14 + $0xa0] sm:$0xff]
      %v4406 = vld [vmem:[#allocation14 + $0xa8] sm:$0xff]
      %v4407 = vld [vmem:[#allocation14 + $0xb0] sm:$0xff]
      %v4408 = vld [vmem:[#allocation14 + $0xb8] sm:$0xff]
      %v4409 = vld [vmem:[#allocation14 + $0xc0] sm:$0xff]
      %v4410 = vld [vmem:[#allocation14 + $0xc8] sm:$0xff]
      %v4411 = vld [vmem:[#allocation14 + $0xd0] sm:$0xff]
      %v4412 = vld [vmem:[#allocation14 + $0xd8] sm:$0xff]
      %v4413 = vld [vmem:[#allocation14 + $0xe0] sm:$0xff]
      %v4414 = vld [vmem:[#allocation14 + $0xe8] sm:$0xff]
      %v4415 = vld [vmem:[#allocation14 + $0xf0] sm:$0xff]
      %v4416 = vld [vmem:[#allocation14 + $0xf8] sm:$0xff]
      %v4417 = vld [vmem:[#allocation14 + $0x100] sm:$0xff]
      %v4418 = vld [vmem:[#allocation14 + $0x108] sm:$0xff]
      %v4419 = vld [vmem:[#allocation14 + $0x110] sm:$0xff]
      %v4420 = vld [vmem:[#allocation14 + $0x118] sm:$0xff]
      %v4421 = vld [vmem:[#allocation14 + $0x120] sm:$0xff]
      %v4422 = vld [vmem:[#allocation14 + $0x128] sm:$0xff]
      %v4423 = vld [vmem:[#allocation14 + $0x130] sm:$0xff]
      %v4424 = vld [vmem:[#allocation14 + $0x138] sm:$0xff]
      %v4425 = vld [vmem:[#allocation14 + $0x140] sm:$0xff]
      %v4426 = vld [vmem:[#allocation14 + $0x148] sm:$0xff]
      %v4427 = vld [vmem:[#allocation14 + $0x150] sm:$0xff]
      %v4428 = vld [vmem:[#allocation14 + $0x158] sm:$0xff]
      %v4429 = vld [vmem:[#allocation14 + $0x160] sm:$0xff]
      %v4430 = vld [vmem:[#allocation14 + $0x168] sm:$0xff]
      %v4431 = vld [vmem:[#allocation14 + $0x170] sm:$0xff]
      %v4432 = vld [vmem:[#allocation14 + $0x178] sm:$0xff]
      %v4433 = vld [vmem:[#allocation14 + $0x180] sm:$0xff]
      %v4434 = vld [vmem:[#allocation14 + $0x188] sm:$0xff]
      %v4435 = vld [vmem:[#allocation14 + $0x190] sm:$0xff]
      %v4436 = vld [vmem:[#allocation14 + $0x198] sm:$0xff]
      %v4437 = vld [vmem:[#allocation14 + $0x1a0] sm:$0xff]
      %v4438 = vld [vmem:[#allocation14 + $0x1a8] sm:$0xff]
      %v4439 = vld [vmem:[#allocation14 + $0x1b0] sm:$0xff]
      %v4440 = vld [vmem:[#allocation14 + $0x1b8] sm:$0xff]
      %v4441 = vld [vmem:[#allocation14 + $0x1c0] sm:$0xff]
      %v4442 = vld [vmem:[#allocation14 + $0x1c8] sm:$0xff]
      %v4443 = vld [vmem:[#allocation14 + $0x1d0] sm:$0xff]
      %v4444 = vld [vmem:[#allocation14 + $0x1d8] sm:$0xff]
      %v4445 = vld [vmem:[#allocation14 + $0x1e0] sm:$0xff]
      %v4446 = vld [vmem:[#allocation14 + $0x1e8] sm:$0xff]
      %v4447 = vld [vmem:[#allocation14 + $0x1f0] sm:$0xff]
      %v4448 = vld [vmem:[#allocation14 + $0x1f8] sm:$0xff]
      %v4449 = vld [vmem:[#allocation14 + $0x200] sm:$0xff]
      %v4450 = vld [vmem:[#allocation14 + $0x208] sm:$0xff]
      %v4451 = vld [vmem:[#allocation14 + $0x210] sm:$0xff]
      %v4452 = vld [vmem:[#allocation14 + $0x218] sm:$0xff]
      %v4453 = vld [vmem:[#allocation14 + $0x220] sm:$0xff]
      %v4454 = vld [vmem:[#allocation14 + $0x228] sm:$0xff]
      %v4455 = vld [vmem:[#allocation14 + $0x230] sm:$0xff]
      %v4456 = vld [vmem:[#allocation14 + $0x238] sm:$0xff]
      %v4457 = vld [vmem:[#allocation14 + $0x240] sm:$0xff]
      %v4458 = vld [vmem:[#allocation14 + $0x248] sm:$0xff]
      %v4459 = vld [vmem:[#allocation14 + $0x250] sm:$0xff]
      %v4460 = vld [vmem:[#allocation14 + $0x258] sm:$0xff]
      %v4461 = vld [vmem:[#allocation14 + $0x260] sm:$0xff]
      %v4462 = vld [vmem:[#allocation14 + $0x268] sm:$0xff]
      %v4463 = vld [vmem:[#allocation14 + $0x270] sm:$0xff]
      %v4464 = vld [vmem:[#allocation14 + $0x278] sm:$0xff]
      %v4465 = vld [vmem:[#allocation14 + $0x280] sm:$0xff]
      %v4466 = vld [vmem:[#allocation14 + $0x288] sm:$0xff]
      %v4467 = vld [vmem:[#allocation14 + $0x290] sm:$0xff]
      %v4468 = vld [vmem:[#allocation14 + $0x298] sm:$0xff]
      %v4469 = vld [vmem:[#allocation14 + $0x2a0] sm:$0xff]
      %v4470 = vld [vmem:[#allocation14 + $0x2a8] sm:$0xff]
      %v4471 = vld [vmem:[#allocation14 + $0x2b0] sm:$0xff]
      %v4472 = vld [vmem:[#allocation14 + $0x2b8] sm:$0xff]
      %v4473 = vld [vmem:[#allocation14 + $0x2c0] sm:$0xff]
      %v4474 = vld [vmem:[#allocation14 + $0x2c8] sm:$0xff]
      %v4475 = vld [vmem:[#allocation14 + $0x2d0] sm:$0xff]
      %v4476 = vld [vmem:[#allocation14 + $0x2d8] sm:$0xff]
      %v4477 = vld [vmem:[#allocation14 + $0x2e0] sm:$0xff]
      %v4478 = vld [vmem:[#allocation14 + $0x2e8] sm:$0xff]
      %v4479 = vld [vmem:[#allocation14 + $0x2f0] sm:$0xff]
      %v4480 = vld [vmem:[#allocation14 + $0x2f8] sm:$0xff]
      %v4481 = vld [vmem:[#allocation14 + $0x300] sm:$0xff]
      %v4482 = vld [vmem:[#allocation14 + $0x308] sm:$0xff]
      %v4483 = vld [vmem:[#allocation14 + $0x310] sm:$0xff]
      %v4484 = vld [vmem:[#allocation14 + $0x318] sm:$0xff]
      %v4485 = vld [vmem:[#allocation14 + $0x320] sm:$0xff]
      %v4486 = vld [vmem:[#allocation14 + $0x328] sm:$0xff]
      %v4487 = vld [vmem:[#allocation14 + $0x330] sm:$0xff]
      %v4488 = vld [vmem:[#allocation14 + $0x338] sm:$0xff]
      %v4489 = vld [vmem:[#allocation14 + $0x340] sm:$0xff]
      %v4490 = vld [vmem:[#allocation14 + $0x348] sm:$0xff]
      %v4491 = vld [vmem:[#allocation14 + $0x350] sm:$0xff]
      %v4492 = vld [vmem:[#allocation14 + $0x358] sm:$0xff]
      %v4493 = vld [vmem:[#allocation14 + $0x360] sm:$0xff]
      %v4494 = vld [vmem:[#allocation14 + $0x368] sm:$0xff]
      %v4495 = vld [vmem:[#allocation14 + $0x370] sm:$0xff]
      %v4496 = vld [vmem:[#allocation14 + $0x378] sm:$0xff]
      %v4497 = vld [vmem:[#allocation14 + $0x380] sm:$0xff]
      %v4498 = vld [vmem:[#allocation14 + $0x388] sm:$0xff]
      %v4499 = vld [vmem:[#allocation14 + $0x390] sm:$0xff]
      %v4500 = vld [vmem:[#allocation14 + $0x398] sm:$0xff]
      %v4501 = vld [vmem:[#allocation14 + $0x3a0] sm:$0xff]
      %v4502 = vld [vmem:[#allocation14 + $0x3a8] sm:$0xff]
      %v4503 = vld [vmem:[#allocation14 + $0x3b0] sm:$0xff]
      %v4504 = vld [vmem:[#allocation14 + $0x3b8] sm:$0xff]
      %v4505 = vld [vmem:[#allocation14 + $0x3c0] sm:$0xff]
      %v4506 = vld [vmem:[#allocation14 + $0x3c8] sm:$0xff]
      %v4507 = vld [vmem:[#allocation14 + $0x3d0] sm:$0xff]
      %v4508 = vld [vmem:[#allocation14 + $0x3d8] sm:$0xff]
      %v4509 = vld [vmem:[#allocation14 + $0x3e0] sm:$0xff]
      %v4510 = vld [vmem:[#allocation14 + $0x3e8] sm:$0xff]
      %v4511 = vld [vmem:[#allocation14 + $0x3f0] sm:$0xff]
      %v4512 = vld [vmem:[#allocation14 + $0x3f8] sm:$0xff]
      %v4513 = vld [vmem:[#allocation15] sm:$0xf]
      %v4515 = vperm.slane %v4513, 0
      %v4516 = vperm.slane %v4513, 1
      %v4517 = vperm.slane %v4513, 2
      %v4518 = vperm.slane %v4513, 3
      %v4651 = vunpack.c.l.b16 %v4385
      %v4652 = vunpack.c.h.b16 %v4385
      %v4653 = vunpack.c.l.b16 %v4386
      %v4654 = vunpack.c.h.b16 %v4386
      %v4655 = vunpack.c.l.b16 %v4387
      %v4656 = vunpack.c.h.b16 %v4387
      %v4657 = vunpack.c.l.b16 %v4388
      %v4658 = vunpack.c.h.b16 %v4388
      %v4659 = vunpack.c.l.b16 %v4389
      %v4660 = vunpack.c.h.b16 %v4389
      %v4661 = vunpack.c.l.b16 %v4390
      %v4662 = vunpack.c.h.b16 %v4390
      %v4663 = vunpack.c.l.b16 %v4391
      %v4664 = vunpack.c.h.b16 %v4391
      %v4665 = vunpack.c.l.b16 %v4392
      %v4666 = vunpack.c.h.b16 %v4392
      %v4667 = vunpack.c.l.b16 %v4393
      %v4668 = vunpack.c.h.b16 %v4393
      %v4669 = vunpack.c.l.b16 %v4394
      %v4670 = vunpack.c.h.b16 %v4394
      %v4671 = vunpack.c.l.b16 %v4395
      %v4672 = vunpack.c.h.b16 %v4395
      %v4673 = vunpack.c.l.b16 %v4396
      %v4674 = vunpack.c.h.b16 %v4396
      %v4675 = vunpack.c.l.b16 %v4397
      %v4676 = vunpack.c.h.b16 %v4397
      %v4677 = vunpack.c.l.b16 %v4398
      %v4678 = vunpack.c.h.b16 %v4398
      %v4679 = vunpack.c.l.b16 %v4399
      %v4680 = vunpack.c.h.b16 %v4399
      %v4681 = vunpack.c.l.b16 %v4400
      %v4682 = vunpack.c.h.b16 %v4400
      %v4683 = vunpack.c.l.b16 %v4401
      %v4684 = vunpack.c.h.b16 %v4401
      %v4685 = vunpack.c.l.b16 %v4402
      %v4686 = vunpack.c.h.b16 %v4402
      %v4687 = vunpack.c.l.b16 %v4403
      %v4688 = vunpack.c.h.b16 %v4403
      %v4689 = vunpack.c.l.b16 %v4404
      %v4690 = vunpack.c.h.b16 %v4404
      %v4691 = vunpack.c.l.b16 %v4405
      %v4692 = vunpack.c.h.b16 %v4405
      %v4693 = vunpack.c.l.b16 %v4406
      %v4694 = vunpack.c.h.b16 %v4406
      %v4695 = vunpack.c.l.b16 %v4407
      %v4696 = vunpack.c.h.b16 %v4407
      %v4697 = vunpack.c.l.b16 %v4408
      %v4698 = vunpack.c.h.b16 %v4408
      %v4699 = vunpack.c.l.b16 %v4409
      %v4700 = vunpack.c.h.b16 %v4409
      %v4701 = vunpack.c.l.b16 %v4410
      %v4702 = vunpack.c.h.b16 %v4410
      %v4703 = vunpack.c.l.b16 %v4411
      %v4704 = vunpack.c.h.b16 %v4411
      %v4705 = vunpack.c.l.b16 %v4412
      %v4706 = vunpack.c.h.b16 %v4412
      %v4707 = vunpack.c.l.b16 %v4413
      %v4708 = vunpack.c.h.b16 %v4413
      %v4709 = vunpack.c.l.b16 %v4414
      %v4710 = vunpack.c.h.b16 %v4414
      %v4711 = vunpack.c.l.b16 %v4415
      %v4712 = vunpack.c.h.b16 %v4415
      %v4713 = vunpack.c.l.b16 %v4416
      %v4714 = vunpack.c.h.b16 %v4416
      %v4715 = vunpack.c.l.b16 %v4417
      %v4716 = vunpack.c.h.b16 %v4417
      %v4717 = vunpack.c.l.b16 %v4418
      %v4718 = vunpack.c.h.b16 %v4418
      %v4719 = vunpack.c.l.b16 %v4419
      %v4720 = vunpack.c.h.b16 %v4419
      %v4721 = vunpack.c.l.b16 %v4420
      %v4722 = vunpack.c.h.b16 %v4420
      %v4723 = vunpack.c.l.b16 %v4421
      %v4724 = vunpack.c.h.b16 %v4421
      %v4725 = vunpack.c.l.b16 %v4422
      %v4726 = vunpack.c.h.b16 %v4422
      %v4727 = vunpack.c.l.b16 %v4423
      %v4728 = vunpack.c.h.b16 %v4423
      %v4729 = vunpack.c.l.b16 %v4424
      %v4730 = vunpack.c.h.b16 %v4424
      %v4731 = vunpack.c.l.b16 %v4425
      %v4732 = vunpack.c.h.b16 %v4425
      %v4733 = vunpack.c.l.b16 %v4426
      %v4734 = vunpack.c.h.b16 %v4426
      %v4735 = vunpack.c.l.b16 %v4427
      %v4736 = vunpack.c.h.b16 %v4427
      %v4737 = vunpack.c.l.b16 %v4428
      %v4738 = vunpack.c.h.b16 %v4428
      %v4739 = vunpack.c.l.b16 %v4429
      %v4740 = vunpack.c.h.b16 %v4429
      %v4741 = vunpack.c.l.b16 %v4430
      %v4742 = vunpack.c.h.b16 %v4430
      %v4743 = vunpack.c.l.b16 %v4431
      %v4744 = vunpack.c.h.b16 %v4431
      %v4745 = vunpack.c.l.b16 %v4432
      %v4746 = vunpack.c.h.b16 %v4432
      %v4747 = vunpack.c.l.b16 %v4433
      %v4748 = vunpack.c.h.b16 %v4433
      %v4749 = vunpack.c.l.b16 %v4434
      %v4750 = vunpack.c.h.b16 %v4434
      %v4751 = vunpack.c.l.b16 %v4435
      %v4752 = vunpack.c.h.b16 %v4435
      %v4753 = vunpack.c.l.b16 %v4436
      %v4754 = vunpack.c.h.b16 %v4436
      %v4755 = vunpack.c.l.b16 %v4437
      %v4756 = vunpack.c.h.b16 %v4437
      %v4757 = vunpack.c.l.b16 %v4438
      %v4758 = vunpack.c.h.b16 %v4438
      %v4759 = vunpack.c.l.b16 %v4439
      %v4760 = vunpack.c.h.b16 %v4439
      %v4761 = vunpack.c.l.b16 %v4440
      %v4762 = vunpack.c.h.b16 %v4440
      %v4763 = vunpack.c.l.b16 %v4441
      %v4764 = vunpack.c.h.b16 %v4441
      %v4765 = vunpack.c.l.b16 %v4442
      %v4766 = vunpack.c.h.b16 %v4442
      %v4767 = vunpack.c.l.b16 %v4443
      %v4768 = vunpack.c.h.b16 %v4443
      %v4769 = vunpack.c.l.b16 %v4444
      %v4770 = vunpack.c.h.b16 %v4444
      %v4771 = vunpack.c.l.b16 %v4445
      %v4772 = vunpack.c.h.b16 %v4445
      %v4773 = vunpack.c.l.b16 %v4446
      %v4774 = vunpack.c.h.b16 %v4446
      %v4775 = vunpack.c.l.b16 %v4447
      %v4776 = vunpack.c.h.b16 %v4447
      %v4777 = vunpack.c.l.b16 %v4448
      %v4778 = vunpack.c.h.b16 %v4448
      %v4779 = vunpack.c.l.b16 %v4449
      %v4780 = vunpack.c.h.b16 %v4449
      %v4781 = vunpack.c.l.b16 %v4450
      %v4782 = vunpack.c.h.b16 %v4450
      %v4783 = vunpack.c.l.b16 %v4451
      %v4784 = vunpack.c.h.b16 %v4451
      %v4785 = vunpack.c.l.b16 %v4452
      %v4786 = vunpack.c.h.b16 %v4452
      %v4787 = vunpack.c.l.b16 %v4453
      %v4788 = vunpack.c.h.b16 %v4453
      %v4789 = vunpack.c.l.b16 %v4454
      %v4790 = vunpack.c.h.b16 %v4454
      %v4791 = vunpack.c.l.b16 %v4455
      %v4792 = vunpack.c.h.b16 %v4455
      %v4793 = vunpack.c.l.b16 %v4456
      %v4794 = vunpack.c.h.b16 %v4456
      %v4795 = vunpack.c.l.b16 %v4457
      %v4796 = vunpack.c.h.b16 %v4457
      %v4797 = vunpack.c.l.b16 %v4458
      %v4798 = vunpack.c.h.b16 %v4458
      %v4799 = vunpack.c.l.b16 %v4459
      %v4800 = vunpack.c.h.b16 %v4459
      %v4801 = vunpack.c.l.b16 %v4460
      %v4802 = vunpack.c.h.b16 %v4460
      %v4803 = vunpack.c.l.b16 %v4461
      %v4804 = vunpack.c.h.b16 %v4461
      %v4805 = vunpack.c.l.b16 %v4462
      %v4806 = vunpack.c.h.b16 %v4462
      %v4807 = vunpack.c.l.b16 %v4463
      %v4808 = vunpack.c.h.b16 %v4463
      %v4809 = vunpack.c.l.b16 %v4464
      %v4810 = vunpack.c.h.b16 %v4464
      %v4811 = vunpack.c.l.b16 %v4465
      %v4812 = vunpack.c.h.b16 %v4465
      %v4813 = vunpack.c.l.b16 %v4466
      %v4814 = vunpack.c.h.b16 %v4466
      %v4815 = vunpack.c.l.b16 %v4467
      %v4816 = vunpack.c.h.b16 %v4467
      %v4817 = vunpack.c.l.b16 %v4468
      %v4818 = vunpack.c.h.b16 %v4468
      %v4819 = vunpack.c.l.b16 %v4469
      %v4820 = vunpack.c.h.b16 %v4469
      %v4821 = vunpack.c.l.b16 %v4470
      %v4822 = vunpack.c.h.b16 %v4470
      %v4823 = vunpack.c.l.b16 %v4471
      %v4824 = vunpack.c.h.b16 %v4471
      %v4825 = vunpack.c.l.b16 %v4472
      %v4826 = vunpack.c.h.b16 %v4472
      %v4827 = vunpack.c.l.b16 %v4473
      %v4828 = vunpack.c.h.b16 %v4473
      %v4829 = vunpack.c.l.b16 %v4474
      %v4830 = vunpack.c.h.b16 %v4474
      %v4831 = vunpack.c.l.b16 %v4475
      %v4832 = vunpack.c.h.b16 %v4475
      %v4833 = vunpack.c.l.b16 %v4476
      %v4834 = vunpack.c.h.b16 %v4476
      %v4835 = vunpack.c.l.b16 %v4477
      %v4836 = vunpack.c.h.b16 %v4477
      %v4837 = vunpack.c.l.b16 %v4478
      %v4838 = vunpack.c.h.b16 %v4478
      %v4839 = vunpack.c.l.b16 %v4479
      %v4840 = vunpack.c.h.b16 %v4479
      %v4841 = vunpack.c.l.b16 %v4480
      %v4842 = vunpack.c.h.b16 %v4480
      %v4843 = vunpack.c.l.b16 %v4481
      %v4844 = vunpack.c.h.b16 %v4481
      %v4845 = vunpack.c.l.b16 %v4482
      %v4846 = vunpack.c.h.b16 %v4482
      %v4847 = vunpack.c.l.b16 %v4483
      %v4848 = vunpack.c.h.b16 %v4483
      %v4849 = vunpack.c.l.b16 %v4484
      %v4850 = vunpack.c.h.b16 %v4484
      %v4851 = vunpack.c.l.b16 %v4485
      %v4852 = vunpack.c.h.b16 %v4485
      %v4853 = vunpack.c.l.b16 %v4486
      %v4854 = vunpack.c.h.b16 %v4486
      %v4855 = vunpack.c.l.b16 %v4487
      %v4856 = vunpack.c.h.b16 %v4487
      %v4857 = vunpack.c.l.b16 %v4488
      %v4858 = vunpack.c.h.b16 %v4488
      %v4859 = vunpack.c.l.b16 %v4489
      %v4860 = vunpack.c.h.b16 %v4489
      %v4861 = vunpack.c.l.b16 %v4490
      %v4862 = vunpack.c.h.b16 %v4490
      %v4863 = vunpack.c.l.b16 %v4491
      %v4864 = vunpack.c.h.b16 %v4491
      %v4865 = vunpack.c.l.b16 %v4492
      %v4866 = vunpack.c.h.b16 %v4492
      %v4867 = vunpack.c.l.b16 %v4493
      %v4868 = vunpack.c.h.b16 %v4493
      %v4869 = vunpack.c.l.b16 %v4494
      %v4870 = vunpack.c.h.b16 %v4494
      %v4871 = vunpack.c.l.b16 %v4495
      %v4872 = vunpack.c.h.b16 %v4495
      %v4873 = vunpack.c.l.b16 %v4496
      %v4874 = vunpack.c.h.b16 %v4496
      %v4875 = vunpack.c.l.b16 %v4497
      %v4876 = vunpack.c.h.b16 %v4497
      %v4877 = vunpack.c.l.b16 %v4498
      %v4878 = vunpack.c.h.b16 %v4498
      %v4879 = vunpack.c.l.b16 %v4499
      %v4880 = vunpack.c.h.b16 %v4499
      %v4881 = vunpack.c.l.b16 %v4500
      %v4882 = vunpack.c.h.b16 %v4500
      %v4883 = vunpack.c.l.b16 %v4501
      %v4884 = vunpack.c.h.b16 %v4501
      %v4885 = vunpack.c.l.b16 %v4502
      %v4886 = vunpack.c.h.b16 %v4502
      %v4887 = vunpack.c.l.b16 %v4503
      %v4888 = vunpack.c.h.b16 %v4503
      %v4889 = vunpack.c.l.b16 %v4504
      %v4890 = vunpack.c.h.b16 %v4504
      %v4891 = vunpack.c.l.b16 %v4505
      %v4892 = vunpack.c.h.b16 %v4505
      %v4893 = vunpack.c.l.b16 %v4506
      %v4894 = vunpack.c.h.b16 %v4506
      %v4895 = vunpack.c.l.b16 %v4507
      %v4896 = vunpack.c.h.b16 %v4507
      %v4897 = vunpack.c.l.b16 %v4508
      %v4898 = vunpack.c.h.b16 %v4508
      %v4899 = vunpack.c.l.b16 %v4509
      %v4900 = vunpack.c.h.b16 %v4509
      %v4901 = vunpack.c.l.b16 %v4510
      %v4902 = vunpack.c.h.b16 %v4510
      %v4903 = vunpack.c.l.b16 %v4511
      %v4904 = vunpack.c.h.b16 %v4511
      %v4905 = vunpack.c.l.b16 %v4512
      %v4906 = vunpack.c.h.b16 %v4512
      %v4907 = vpack.c.b16 %v4655, %v4651
      %v4908 = vpack.c.b16 %v4656, %v4652
      %v4909 = vpack.c.b16 %v4657, %v4653
      %v4910 = vpack.c.b16 %v4658, %v4654
      %v4911 = vpack.c.b16 %v4663, %v4659
      %v4912 = vpack.c.b16 %v4664, %v4660
      %v4913 = vpack.c.b16 %v4665, %v4661
      %v4914 = vpack.c.b16 %v4666, %v4662
      %v4915 = vpack.c.b16 %v4671, %v4667
      %v4916 = vpack.c.b16 %v4672, %v4668
      %v4917 = vpack.c.b16 %v4673, %v4669
      %v4918 = vpack.c.b16 %v4674, %v4670
      %v4919 = vpack.c.b16 %v4679, %v4675
      %v4920 = vpack.c.b16 %v4680, %v4676
      %v4921 = vpack.c.b16 %v4681, %v4677
      %v4922 = vpack.c.b16 %v4682, %v4678
      %v4923 = vpack.c.b16 %v4687, %v4683
      %v4924 = vpack.c.b16 %v4688, %v4684
      %v4925 = vpack.c.b16 %v4689, %v4685
      %v4926 = vpack.c.b16 %v4690, %v4686
      %v4927 = vpack.c.b16 %v4695, %v4691
      %v4928 = vpack.c.b16 %v4696, %v4692
      %v4929 = vpack.c.b16 %v4697, %v4693
      %v4930 = vpack.c.b16 %v4698, %v4694
      %v4931 = vpack.c.b16 %v4703, %v4699
      %v4932 = vpack.c.b16 %v4704, %v4700
      %v4933 = vpack.c.b16 %v4705, %v4701
      %v4934 = vpack.c.b16 %v4706, %v4702
      %v4935 = vpack.c.b16 %v4711, %v4707
      %v4936 = vpack.c.b16 %v4712, %v4708
      %v4937 = vpack.c.b16 %v4713, %v4709
      %v4938 = vpack.c.b16 %v4714, %v4710
      %v4939 = vpack.c.b16 %v4719, %v4715
      %v4940 = vpack.c.b16 %v4720, %v4716
      %v4941 = vpack.c.b16 %v4721, %v4717
      %v4942 = vpack.c.b16 %v4722, %v4718
      %v4943 = vpack.c.b16 %v4727, %v4723
      %v4944 = vpack.c.b16 %v4728, %v4724
      %v4945 = vpack.c.b16 %v4729, %v4725
      %v4946 = vpack.c.b16 %v4730, %v4726
      %v4947 = vpack.c.b16 %v4735, %v4731
      %v4948 = vpack.c.b16 %v4736, %v4732
      %v4949 = vpack.c.b16 %v4737, %v4733
      %v4950 = vpack.c.b16 %v4738, %v4734
      %v4951 = vpack.c.b16 %v4743, %v4739
      %v4952 = vpack.c.b16 %v4744, %v4740
      %v4953 = vpack.c.b16 %v4745, %v4741
      %v4954 = vpack.c.b16 %v4746, %v4742
      %v4955 = vpack.c.b16 %v4751, %v4747
      %v4956 = vpack.c.b16 %v4752, %v4748
      %v4957 = vpack.c.b16 %v4753, %v4749
      %v4958 = vpack.c.b16 %v4754, %v4750
      %v4959 = vpack.c.b16 %v4759, %v4755
      %v4960 = vpack.c.b16 %v4760, %v4756
      %v4961 = vpack.c.b16 %v4761, %v4757
      %v4962 = vpack.c.b16 %v4762, %v4758
      %v4963 = vpack.c.b16 %v4767, %v4763
      %v4964 = vpack.c.b16 %v4768, %v4764
      %v4965 = vpack.c.b16 %v4769, %v4765
      %v4966 = vpack.c.b16 %v4770, %v4766
      %v4967 = vpack.c.b16 %v4775, %v4771
      %v4968 = vpack.c.b16 %v4776, %v4772
      %v4969 = vpack.c.b16 %v4777, %v4773
      %v4970 = vpack.c.b16 %v4778, %v4774
      %v4971 = vpack.c.b16 %v4783, %v4779
      %v4972 = vpack.c.b16 %v4784, %v4780
      %v4973 = vpack.c.b16 %v4785, %v4781
      %v4974 = vpack.c.b16 %v4786, %v4782
      %v4975 = vpack.c.b16 %v4791, %v4787
      %v4976 = vpack.c.b16 %v4792, %v4788
      %v4977 = vpack.c.b16 %v4793, %v4789
      %v4978 = vpack.c.b16 %v4794, %v4790
      %v4979 = vpack.c.b16 %v4799, %v4795
      %v4980 = vpack.c.b16 %v4800, %v4796
      %v4981 = vpack.c.b16 %v4801, %v4797
      %v4982 = vpack.c.b16 %v4802, %v4798
      %v4983 = vpack.c.b16 %v4807, %v4803
      %v4984 = vpack.c.b16 %v4808, %v4804
      %v4985 = vpack.c.b16 %v4809, %v4805
      %v4986 = vpack.c.b16 %v4810, %v4806
      %v4987 = vpack.c.b16 %v4815, %v4811
      %v4988 = vpack.c.b16 %v4816, %v4812
      %v4989 = vpack.c.b16 %v4817, %v4813
      %v4990 = vpack.c.b16 %v4818, %v4814
      %v4991 = vpack.c.b16 %v4823, %v4819
      %v4992 = vpack.c.b16 %v4824, %v4820
      %v4993 = vpack.c.b16 %v4825, %v4821
      %v4994 = vpack.c.b16 %v4826, %v4822
      %v4995 = vpack.c.b16 %v4831, %v4827
      %v4996 = vpack.c.b16 %v4832, %v4828
      %v4997 = vpack.c.b16 %v4833, %v4829
      %v4998 = vpack.c.b16 %v4834, %v4830
      %v4999 = vpack.c.b16 %v4839, %v4835
      %v5000 = vpack.c.b16 %v4840, %v4836
      %v5001 = vpack.c.b16 %v4841, %v4837
      %v5002 = vpack.c.b16 %v4842, %v4838
      %v5003 = vpack.c.b16 %v4847, %v4843
      %v5004 = vpack.c.b16 %v4848, %v4844
      %v5005 = vpack.c.b16 %v4849, %v4845
      %v5006 = vpack.c.b16 %v4850, %v4846
      %v5007 = vpack.c.b16 %v4855, %v4851
      %v5008 = vpack.c.b16 %v4856, %v4852
      %v5009 = vpack.c.b16 %v4857, %v4853
      %v5010 = vpack.c.b16 %v4858, %v4854
      %v5011 = vpack.c.b16 %v4863, %v4859
      %v5012 = vpack.c.b16 %v4864, %v4860
      %v5013 = vpack.c.b16 %v4865, %v4861
      %v5014 = vpack.c.b16 %v4866, %v4862
      %v5015 = vpack.c.b16 %v4871, %v4867
      %v5016 = vpack.c.b16 %v4872, %v4868
      %v5017 = vpack.c.b16 %v4873, %v4869
      %v5018 = vpack.c.b16 %v4874, %v4870
      %v5019 = vpack.c.b16 %v4879, %v4875
      %v5020 = vpack.c.b16 %v4880, %v4876
      %v5021 = vpack.c.b16 %v4881, %v4877
      %v5022 = vpack.c.b16 %v4882, %v4878
      %v5023 = vpack.c.b16 %v4887, %v4883
      %v5024 = vpack.c.b16 %v4888, %v4884
      %v5025 = vpack.c.b16 %v4889, %v4885
      %v5026 = vpack.c.b16 %v4890, %v4886
      %v5027 = vpack.c.b16 %v4895, %v4891
      %v5028 = vpack.c.b16 %v4896, %v4892
      %v5029 = vpack.c.b16 %v4897, %v4893
      %v5030 = vpack.c.b16 %v4898, %v4894
      %v5031 = vpack.c.b16 %v4903, %v4899
      %v5032 = vpack.c.b16 %v4904, %v4900
      %v5033 = vpack.c.b16 %v4905, %v4901
      %v5034 = vpack.c.b16 %v4906, %v4902
      %5163 = vmatpush.bf16.msra.mxu0 %v4935
      %5164 = vmatpush.bf16.msra.mxu0 %v4931
      %5165 = vmatpush.bf16.msra.mxu0 %v4927
      %5166 = vmatpush.bf16.msra.mxu0 %v4923
      %5167 = vmatpush.bf16.msra.mxu0 %v4919
      %5168 = vmatpush.bf16.msra.mxu0 %v4915
      %5169 = vmatpush.bf16.msra.mxu0 %v4911
      %5170 = vmatpush.bf16.msra.mxu0 %v4907
      %5171 = vmatmul.bf16.gmra.mxu0 %v4381
      %v5172 = vpop.f32.mrf.mxu0
      %v5173 = vadd.f32 %v4515, %v5172
      %v5174 = vpop.f32.mrf.mxu0
      %v5175 = vadd.f32 %v4515, %v5174
      %5176 = vdwg.mxu0
      %5177 = vmatpush.bf16.msra.mxu0 %v4967
      %5178 = vmatpush.bf16.msra.mxu0 %v4963
      %5179 = vmatpush.bf16.msra.mxu0 %v4959
      %5180 = vmatpush.bf16.msra.mxu0 %v4955
      %5181 = vmatpush.bf16.msra.mxu0 %v4951
      %5182 = vmatpush.bf16.msra.mxu0 %v4947
      %5183 = vmatpush.bf16.msra.mxu0 %v4943
      %5184 = vmatpush.bf16.msra.mxu0 %v4939
      %5185 = vmatmul.bf16.gmra.mxu0 %v4382
      %v5186 = vpop.f32.mrf.mxu0
      %v5187 = vadd.f32 %v5173, %v5186
      %v5188 = vpop.f32.mrf.mxu0
      %v5189 = vadd.f32 %v5175, %v5188
      %5190 = vdwg.mxu0
      %5191 = vmatpush.bf16.msra.mxu0 %v4999
      %5192 = vmatpush.bf16.msra.mxu0 %v4995
      %5193 = vmatpush.bf16.msra.mxu0 %v4991
      %5194 = vmatpush.bf16.msra.mxu0 %v4987
      %5195 = vmatpush.bf16.msra.mxu0 %v4983
      %5196 = vmatpush.bf16.msra.mxu0 %v4979
      %5197 = vmatpush.bf16.msra.mxu0 %v4975
      %5198 = vmatpush.bf16.msra.mxu0 %v4971
      %5199 = vmatmul.bf16.gmra.mxu0 %v4383
      %v5200 = vpop.f32.mrf.mxu0
      %v5201 = vadd.f32 %v5187, %v5200
      %v5202 = vpop.f32.mrf.mxu0
      %v5203 = vadd.f32 %v5189, %v5202
      %5204 = vdwg.mxu0
      %5205 = vmatpush.bf16.msra.mxu0 %v5031
      %5206 = vmatpush.bf16.msra.mxu0 %v5027
      %5207 = vmatpush.bf16.msra.mxu0 %v5023
      %5208 = vmatpush.bf16.msra.mxu0 %v5019
      %5209 = vmatpush.bf16.msra.mxu0 %v5015
      %5210 = vmatpush.bf16.msra.mxu0 %v5011
      %5211 = vmatpush.bf16.msra.mxu0 %v5007
      %5212 = vmatpush.bf16.msra.mxu0 %v5003
      %5213 = vmatmul.bf16.gmra.mxu0 %v4384
      %v5214 = vpop.f32.mrf.mxu0
      %v5215 = vadd.f32 %v5201, %v5214
      %v5216 = vpop.f32.mrf.mxu0
      %v5217 = vadd.f32 %v5203, %v5216
      %5218 = vdwg.mxu0
      %5219 = vmatpush.bf16.msra.mxu0 %v4936
      %5220 = vmatpush.bf16.msra.mxu0 %v4932
      %5221 = vmatpush.bf16.msra.mxu0 %v4928
      %5222 = vmatpush.bf16.msra.mxu0 %v4924
      %5223 = vmatpush.bf16.msra.mxu0 %v4920
      %5224 = vmatpush.bf16.msra.mxu0 %v4916
      %5225 = vmatpush.bf16.msra.mxu0 %v4912
      %5226 = vmatpush.bf16.msra.mxu0 %v4908
      %5227 = vmatmul.bf16.gmra.mxu0 %v4381
      %v5228 = vpop.f32.mrf.mxu0
      %v5229 = vadd.f32 %v4516, %v5228
      %v5230 = vpop.f32.mrf.mxu0
      %v5231 = vadd.f32 %v4516, %v5230
      %5232 = vdwg.mxu0
      %5233 = vmatpush.bf16.msra.mxu0 %v4968
      %5234 = vmatpush.bf16.msra.mxu0 %v4964
      %5235 = vmatpush.bf16.msra.mxu0 %v4960
      %5236 = vmatpush.bf16.msra.mxu0 %v4956
      %5237 = vmatpush.bf16.msra.mxu0 %v4952
      %5238 = vmatpush.bf16.msra.mxu0 %v4948
      %5239 = vmatpush.bf16.msra.mxu0 %v4944
      %5240 = vmatpush.bf16.msra.mxu0 %v4940
      %5241 = vmatmul.bf16.gmra.mxu0 %v4382
      %v5242 = vpop.f32.mrf.mxu0
      %v5243 = vadd.f32 %v5229, %v5242
      %v5244 = vpop.f32.mrf.mxu0
      %v5245 = vadd.f32 %v5231, %v5244
      %5246 = vdwg.mxu0
      %5247 = vmatpush.bf16.msra.mxu0 %v5000
      %5248 = vmatpush.bf16.msra.mxu0 %v4996
      %5249 = vmatpush.bf16.msra.mxu0 %v4992
      %5250 = vmatpush.bf16.msra.mxu0 %v4988
      %5251 = vmatpush.bf16.msra.mxu0 %v4984
      %5252 = vmatpush.bf16.msra.mxu0 %v4980
      %5253 = vmatpush.bf16.msra.mxu0 %v4976
      %5254 = vmatpush.bf16.msra.mxu0 %v4972
      %5255 = vmatmul.bf16.gmra.mxu0 %v4383
      %v5256 = vpop.f32.mrf.mxu0
      %v5257 = vadd.f32 %v5243, %v5256
      %v5258 = vpop.f32.mrf.mxu0
      %v5259 = vadd.f32 %v5245, %v5258
      %5260 = vdwg.mxu0
      %5261 = vmatpush.bf16.msra.mxu0 %v5032
      %5262 = vmatpush.bf16.msra.mxu0 %v5028
      %5263 = vmatpush.bf16.msra.mxu0 %v5024
      %5264 = vmatpush.bf16.msra.mxu0 %v5020
      %5265 = vmatpush.bf16.msra.mxu0 %v5016
      %5266 = vmatpush.bf16.msra.mxu0 %v5012
      %5267 = vmatpush.bf16.msra.mxu0 %v5008
      %5268 = vmatpush.bf16.msra.mxu0 %v5004
      %5269 = vmatmul.bf16.gmra.mxu0 %v4384
      %v5270 = vpop.f32.mrf.mxu0
      %v5271 = vadd.f32 %v5257, %v5270
      %v5272 = vpop.f32.mrf.mxu0
      %v5273 = vadd.f32 %v5259, %v5272
      %5274 = vdwg.mxu0
      %5275 = vmatpush.bf16.msra.mxu0 %v4937
      %5276 = vmatpush.bf16.msra.mxu0 %v4933
      %5277 = vmatpush.bf16.msra.mxu0 %v4929
      %5278 = vmatpush.bf16.msra.mxu0 %v4925
      %5279 = vmatpush.bf16.msra.mxu0 %v4921
      %5280 = vmatpush.bf16.msra.mxu0 %v4917
      %5281 = vmatpush.bf16.msra.mxu0 %v4913
      %5282 = vmatpush.bf16.msra.mxu0 %v4909
      %5283 = vmatmul.bf16.gmra.mxu0 %v4381
      %v5284 = vpop.f32.mrf.mxu0
      %v5285 = vadd.f32 %v4517, %v5284
      %v5286 = vpop.f32.mrf.mxu0
      %v5287 = vadd.f32 %v4517, %v5286
      %5288 = vdwg.mxu0
      %5289 = vmatpush.bf16.msra.mxu0 %v4969
      %5290 = vmatpush.bf16.msra.mxu0 %v4965
      %5291 = vmatpush.bf16.msra.mxu0 %v4961
      %5292 = vmatpush.bf16.msra.mxu0 %v4957
      %5293 = vmatpush.bf16.msra.mxu0 %v4953
      %5294 = vmatpush.bf16.msra.mxu0 %v4949
      %5295 = vmatpush.bf16.msra.mxu0 %v4945
      %5296 = vmatpush.bf16.msra.mxu0 %v4941
      %5297 = vmatmul.bf16.gmra.mxu0 %v4382
      %v5298 = vpop.f32.mrf.mxu0
      %v5299 = vadd.f32 %v5285, %v5298
      %v5300 = vpop.f32.mrf.mxu0
      %v5301 = vadd.f32 %v5287, %v5300
      %5302 = vdwg.mxu0
      %5303 = vmatpush.bf16.msra.mxu0 %v5001
      %5304 = vmatpush.bf16.msra.mxu0 %v4997
      %5305 = vmatpush.bf16.msra.mxu0 %v4993
      %5306 = vmatpush.bf16.msra.mxu0 %v4989
      %5307 = vmatpush.bf16.msra.mxu0 %v4985
      %5308 = vmatpush.bf16.msra.mxu0 %v4981
      %5309 = vmatpush.bf16.msra.mxu0 %v4977
      %5310 = vmatpush.bf16.msra.mxu0 %v4973
      %5311 = vmatmul.bf16.gmra.mxu0 %v4383
      %v5312 = vpop.f32.mrf.mxu0
      %v5313 = vadd.f32 %v5299, %v5312
      %v5314 = vpop.f32.mrf.mxu0
      %v5315 = vadd.f32 %v5301, %v5314
      %5316 = vdwg.mxu0
      %5317 = vmatpush.bf16.msra.mxu0 %v5033
      %5318 = vmatpush.bf16.msra.mxu0 %v5029
      %5319 = vmatpush.bf16.msra.mxu0 %v5025
      %5320 = vmatpush.bf16.msra.mxu0 %v5021
      %5321 = vmatpush.bf16.msra.mxu0 %v5017
      %5322 = vmatpush.bf16.msra.mxu0 %v5013
      %5323 = vmatpush.bf16.msra.mxu0 %v5009
      %5324 = vmatpush.bf16.msra.mxu0 %v5005
      %5325 = vmatmul.bf16.gmra.mxu0 %v4384
      %v5326 = vpop.f32.mrf.mxu0
      %v5327 = vadd.f32 %v5313, %v5326
      %v5328 = vpop.f32.mrf.mxu0
      %v5329 = vadd.f32 %v5315, %v5328
      %5330 = vdwg.mxu0
      %5331 = vmatpush.bf16.msra.mxu0 %v4938
      %5332 = vmatpush.bf16.msra.mxu0 %v4934
      %5333 = vmatpush.bf16.msra.mxu0 %v4930
      %5334 = vmatpush.bf16.msra.mxu0 %v4926
      %5335 = vmatpush.bf16.msra.mxu0 %v4922
      %5336 = vmatpush.bf16.msra.mxu0 %v4918
      %5337 = vmatpush.bf16.msra.mxu0 %v4914
      %5338 = vmatpush.bf16.msra.mxu0 %v4910
      %5339 = vmatmul.bf16.gmra.mxu0 %v4381
      %v5340 = vpop.f32.mrf.mxu0
      %v5341 = vadd.f32 %v4518, %v5340
      %v5342 = vpop.f32.mrf.mxu0
      %v5343 = vadd.f32 %v4518, %v5342
      %5344 = vdwg.mxu0
      %5345 = vmatpush.bf16.msra.mxu0 %v4970
      %5346 = vmatpush.bf16.msra.mxu0 %v4966
      %5347 = vmatpush.bf16.msra.mxu0 %v4962
      %5348 = vmatpush.bf16.msra.mxu0 %v4958
      %5349 = vmatpush.bf16.msra.mxu0 %v4954
      %5350 = vmatpush.bf16.msra.mxu0 %v4950
      %5351 = vmatpush.bf16.msra.mxu0 %v4946
      %5352 = vmatpush.bf16.msra.mxu0 %v4942
      %5353 = vmatmul.bf16.gmra.mxu0 %v4382
      %v5354 = vpop.f32.mrf.mxu0
      %v5355 = vadd.f32 %v5341, %v5354
      %v5356 = vpop.f32.mrf.mxu0
      %v5357 = vadd.f32 %v5343, %v5356
      %5358 = vdwg.mxu0
      %5359 = vmatpush.bf16.msra.mxu0 %v5002
      %5360 = vmatpush.bf16.msra.mxu0 %v4998
      %5361 = vmatpush.bf16.msra.mxu0 %v4994
      %5362 = vmatpush.bf16.msra.mxu0 %v4990
      %5363 = vmatpush.bf16.msra.mxu0 %v4986
      %5364 = vmatpush.bf16.msra.mxu0 %v4982
      %5365 = vmatpush.bf16.msra.mxu0 %v4978
      %5366 = vmatpush.bf16.msra.mxu0 %v4974
      %5367 = vmatmul.bf16.gmra.mxu0 %v4383
      %v5368 = vpop.f32.mrf.mxu0
      %v5369 = vadd.f32 %v5355, %v5368
      %v5370 = vpop.f32.mrf.mxu0
      %v5371 = vadd.f32 %v5357, %v5370
      %5372 = vdwg.mxu0
      %5373 = vmatpush.bf16.msra.mxu0 %v5034
      %5374 = vmatpush.bf16.msra.mxu0 %v5030
      %5375 = vmatpush.bf16.msra.mxu0 %v5026
      %5376 = vmatpush.bf16.msra.mxu0 %v5022
      %5377 = vmatpush.bf16.msra.mxu0 %v5018
      %5378 = vmatpush.bf16.msra.mxu0 %v5014
      %5379 = vmatpush.bf16.msra.mxu0 %v5010
      %5380 = vmatpush.bf16.msra.mxu0 %v5006
      %5381 = vmatmul.bf16.gmra.mxu0 %v4384
      %v5382 = vpop.f32.mrf.mxu0
      %v5383 = vadd.f32 %v5369, %v5382
      %v5384 = vpop.f32.mrf.mxu0
      %v5385 = vadd.f32 %v5371, %v5384
      %5386 = vdwg.mxu0
      %v5387 = vmax.f32 %v5215, 0.0
      %v5388 = vmax.f32 %v5271, 0.0
      %v5389 = vmax.f32 %v5327, 0.0
      %v5390 = vmax.f32 %v5383, 0.0
      %v5391 = vmax.f32 %v5217, 0.0
      %v5392 = vmax.f32 %v5273, 0.0
      %v5393 = vmax.f32 %v5329, 0.0
      %v5394 = vmax.f32 %v5385, 0.0
      %v5395 = vpack.c.bf16 %v5391, %v5387
      %v5396 = vpack.c.bf16 %v5392, %v5388
      %v5397 = vpack.c.bf16 %v5393, %v5389
      %v5398 = vpack.c.bf16 %v5394, %v5390
      %v5399 = vld [vmem:[#allocation17] sm:$0xff]
      %v5400 = vld [vmem:[#allocation17 + $0x8] sm:$0xff]
      %v5401 = vld [vmem:[#allocation17 + $0x10] sm:$0xff]
      %v5402 = vld [vmem:[#allocation17 + $0x18] sm:$0xff]
      %v5403 = vld [vmem:[#allocation17 + $0x20] sm:$0xff]
      %v5404 = vld [vmem:[#allocation17 + $0x28] sm:$0xff]
      %v5405 = vld [vmem:[#allocation17 + $0x30] sm:$0xff]
      %v5406 = vld [vmem:[#allocation17 + $0x38] sm:$0xff]
      %v5407 = vld [vmem:[#allocation17 + $0x40] sm:$0xff]
      %v5408 = vld [vmem:[#allocation17 + $0x48] sm:$0xff]
      %v5409 = vld [vmem:[#allocation17 + $0x50] sm:$0xff]
      %v5410 = vld [vmem:[#allocation17 + $0x58] sm:$0xff]
      %v5411 = vld [vmem:[#allocation17 + $0x60] sm:$0xff]
      %v5412 = vld [vmem:[#allocation17 + $0x68] sm:$0xff]
      %v5413 = vld [vmem:[#allocation17 + $0x70] sm:$0xff]
      %v5414 = vld [vmem:[#allocation17 + $0x78] sm:$0xff]
      %v5415 = vld [vmem:[#allocation17 + $0x80] sm:$0xff]
      %v5416 = vld [vmem:[#allocation17 + $0x88] sm:$0xff]
      %v5417 = vld [vmem:[#allocation17 + $0x90] sm:$0xff]
      %v5418 = vld [vmem:[#allocation17 + $0x98] sm:$0xff]
      %v5419 = vld [vmem:[#allocation17 + $0xa0] sm:$0xff]
      %v5420 = vld [vmem:[#allocation17 + $0xa8] sm:$0xff]
      %v5421 = vld [vmem:[#allocation17 + $0xb0] sm:$0xff]
      %v5422 = vld [vmem:[#allocation17 + $0xb8] sm:$0xff]
      %v5423 = vld [vmem:[#allocation17 + $0xc0] sm:$0xff]
      %v5424 = vld [vmem:[#allocation17 + $0xc8] sm:$0xff]
      %v5425 = vld [vmem:[#allocation17 + $0xd0] sm:$0xff]
      %v5426 = vld [vmem:[#allocation17 + $0xd8] sm:$0xff]
      %v5427 = vld [vmem:[#allocation17 + $0xe0] sm:$0xff]
      %v5428 = vld [vmem:[#allocation17 + $0xe8] sm:$0xff]
      %v5429 = vld [vmem:[#allocation17 + $0xf0] sm:$0xff]
      %v5430 = vld [vmem:[#allocation17 + $0xf8] sm:$0xff]
      %v5431 = vld [vmem:[#allocation17 + $0x100] sm:$0xff]
      %v5432 = vld [vmem:[#allocation17 + $0x108] sm:$0xff]
      %v5433 = vld [vmem:[#allocation17 + $0x110] sm:$0xff]
      %v5434 = vld [vmem:[#allocation17 + $0x118] sm:$0xff]
      %v5435 = vld [vmem:[#allocation17 + $0x120] sm:$0xff]
      %v5436 = vld [vmem:[#allocation17 + $0x128] sm:$0xff]
      %v5437 = vld [vmem:[#allocation17 + $0x130] sm:$0xff]
      %v5438 = vld [vmem:[#allocation17 + $0x138] sm:$0xff]
      %v5439 = vld [vmem:[#allocation17 + $0x140] sm:$0xff]
      %v5440 = vld [vmem:[#allocation17 + $0x148] sm:$0xff]
      %v5441 = vld [vmem:[#allocation17 + $0x150] sm:$0xff]
      %v5442 = vld [vmem:[#allocation17 + $0x158] sm:$0xff]
      %v5443 = vld [vmem:[#allocation17 + $0x160] sm:$0xff]
      %v5444 = vld [vmem:[#allocation17 + $0x168] sm:$0xff]
      %v5445 = vld [vmem:[#allocation17 + $0x170] sm:$0xff]
      %v5446 = vld [vmem:[#allocation17 + $0x178] sm:$0xff]
      %v5447 = vld [vmem:[#allocation17 + $0x180] sm:$0xff]
      %v5448 = vld [vmem:[#allocation17 + $0x188] sm:$0xff]
      %v5449 = vld [vmem:[#allocation17 + $0x190] sm:$0xff]
      %v5450 = vld [vmem:[#allocation17 + $0x198] sm:$0xff]
      %v5451 = vld [vmem:[#allocation17 + $0x1a0] sm:$0xff]
      %v5452 = vld [vmem:[#allocation17 + $0x1a8] sm:$0xff]
      %v5453 = vld [vmem:[#allocation17 + $0x1b0] sm:$0xff]
      %v5454 = vld [vmem:[#allocation17 + $0x1b8] sm:$0xff]
      %v5455 = vld [vmem:[#allocation17 + $0x1c0] sm:$0xff]
      %v5456 = vld [vmem:[#allocation17 + $0x1c8] sm:$0xff]
      %v5457 = vld [vmem:[#allocation17 + $0x1d0] sm:$0xff]
      %v5458 = vld [vmem:[#allocation17 + $0x1d8] sm:$0xff]
      %v5459 = vld [vmem:[#allocation17 + $0x1e0] sm:$0xff]
      %v5460 = vld [vmem:[#allocation17 + $0x1e8] sm:$0xff]
      %v5461 = vld [vmem:[#allocation17 + $0x1f0] sm:$0xff]
      %v5462 = vld [vmem:[#allocation17 + $0x1f8] sm:$0xff]
      %v5463 = vld [vmem:[#allocation17 + $0x200] sm:$0xff]
      %v5464 = vld [vmem:[#allocation17 + $0x208] sm:$0xff]
      %v5465 = vld [vmem:[#allocation17 + $0x210] sm:$0xff]
      %v5466 = vld [vmem:[#allocation17 + $0x218] sm:$0xff]
      %v5467 = vld [vmem:[#allocation17 + $0x220] sm:$0xff]
      %v5468 = vld [vmem:[#allocation17 + $0x228] sm:$0xff]
      %v5469 = vld [vmem:[#allocation17 + $0x230] sm:$0xff]
      %v5470 = vld [vmem:[#allocation17 + $0x238] sm:$0xff]
      %v5471 = vld [vmem:[#allocation17 + $0x240] sm:$0xff]
      %v5472 = vld [vmem:[#allocation17 + $0x248] sm:$0xff]
      %v5473 = vld [vmem:[#allocation17 + $0x250] sm:$0xff]
      %v5474 = vld [vmem:[#allocation17 + $0x258] sm:$0xff]
      %v5475 = vld [vmem:[#allocation17 + $0x260] sm:$0xff]
      %v5476 = vld [vmem:[#allocation17 + $0x268] sm:$0xff]
      %v5477 = vld [vmem:[#allocation17 + $0x270] sm:$0xff]
      %v5478 = vld [vmem:[#allocation17 + $0x278] sm:$0xff]
      %v5479 = vld [vmem:[#allocation17 + $0x280] sm:$0xff]
      %v5480 = vld [vmem:[#allocation17 + $0x288] sm:$0xff]
      %v5481 = vld [vmem:[#allocation17 + $0x290] sm:$0xff]
      %v5482 = vld [vmem:[#allocation17 + $0x298] sm:$0xff]
      %v5483 = vld [vmem:[#allocation17 + $0x2a0] sm:$0xff]
      %v5484 = vld [vmem:[#allocation17 + $0x2a8] sm:$0xff]
      %v5485 = vld [vmem:[#allocation17 + $0x2b0] sm:$0xff]
      %v5486 = vld [vmem:[#allocation17 + $0x2b8] sm:$0xff]
      %v5487 = vld [vmem:[#allocation17 + $0x2c0] sm:$0xff]
      %v5488 = vld [vmem:[#allocation17 + $0x2c8] sm:$0xff]
      %v5489 = vld [vmem:[#allocation17 + $0x2d0] sm:$0xff]
      %v5490 = vld [vmem:[#allocation17 + $0x2d8] sm:$0xff]
      %v5491 = vld [vmem:[#allocation17 + $0x2e0] sm:$0xff]
      %v5492 = vld [vmem:[#allocation17 + $0x2e8] sm:$0xff]
      %v5493 = vld [vmem:[#allocation17 + $0x2f0] sm:$0xff]
      %v5494 = vld [vmem:[#allocation17 + $0x2f8] sm:$0xff]
      %v5495 = vld [vmem:[#allocation17 + $0x300] sm:$0xff]
      %v5496 = vld [vmem:[#allocation17 + $0x308] sm:$0xff]
      %v5497 = vld [vmem:[#allocation17 + $0x310] sm:$0xff]
      %v5498 = vld [vmem:[#allocation17 + $0x318] sm:$0xff]
      %v5499 = vld [vmem:[#allocation17 + $0x320] sm:$0xff]
      %v5500 = vld [vmem:[#allocation17 + $0x328] sm:$0xff]
      %v5501 = vld [vmem:[#allocation17 + $0x330] sm:$0xff]
      %v5502 = vld [vmem:[#allocation17 + $0x338] sm:$0xff]
      %v5503 = vld [vmem:[#allocation17 + $0x340] sm:$0xff]
      %v5504 = vld [vmem:[#allocation17 + $0x348] sm:$0xff]
      %v5505 = vld [vmem:[#allocation17 + $0x350] sm:$0xff]
      %v5506 = vld [vmem:[#allocation17 + $0x358] sm:$0xff]
      %v5507 = vld [vmem:[#allocation17 + $0x360] sm:$0xff]
      %v5508 = vld [vmem:[#allocation17 + $0x368] sm:$0xff]
      %v5509 = vld [vmem:[#allocation17 + $0x370] sm:$0xff]
      %v5510 = vld [vmem:[#allocation17 + $0x378] sm:$0xff]
      %v5511 = vld [vmem:[#allocation17 + $0x380] sm:$0xff]
      %v5512 = vld [vmem:[#allocation17 + $0x388] sm:$0xff]
      %v5513 = vld [vmem:[#allocation17 + $0x390] sm:$0xff]
      %v5514 = vld [vmem:[#allocation17 + $0x398] sm:$0xff]
      %v5515 = vld [vmem:[#allocation17 + $0x3a0] sm:$0xff]
      %v5516 = vld [vmem:[#allocation17 + $0x3a8] sm:$0xff]
      %v5517 = vld [vmem:[#allocation17 + $0x3b0] sm:$0xff]
      %v5518 = vld [vmem:[#allocation17 + $0x3b8] sm:$0xff]
      %v5519 = vld [vmem:[#allocation17 + $0x3c0] sm:$0xff]
      %v5520 = vld [vmem:[#allocation17 + $0x3c8] sm:$0xff]
      %v5521 = vld [vmem:[#allocation17 + $0x3d0] sm:$0xff]
      %v5522 = vld [vmem:[#allocation17 + $0x3d8] sm:$0xff]
      %v5523 = vld [vmem:[#allocation17 + $0x3e0] sm:$0xff]
      %v5524 = vld [vmem:[#allocation17 + $0x3e8] sm:$0xff]
      %v5525 = vld [vmem:[#allocation17 + $0x3f0] sm:$0xff]
      %v5526 = vld [vmem:[#allocation17 + $0x3f8] sm:$0xff]
      %v5527 = vld [vmem:[%s10] sm:$0xf]
      %v5529 = vperm.slane %v5527, 0
      %v5530 = vperm.slane %v5527, 1
      %v5531 = vperm.slane %v5527, 2
      %v5532 = vperm.slane %v5527, 3
      %v5665 = vunpack.c.l.b16 %v5399
      %v5666 = vunpack.c.h.b16 %v5399
      %v5667 = vunpack.c.l.b16 %v5400
      %v5668 = vunpack.c.h.b16 %v5400
      %v5669 = vunpack.c.l.b16 %v5401
      %v5670 = vunpack.c.h.b16 %v5401
      %v5671 = vunpack.c.l.b16 %v5402
      %v5672 = vunpack.c.h.b16 %v5402
      %v5673 = vunpack.c.l.b16 %v5403
      %v5674 = vunpack.c.h.b16 %v5403
      %v5675 = vunpack.c.l.b16 %v5404
      %v5676 = vunpack.c.h.b16 %v5404
      %v5677 = vunpack.c.l.b16 %v5405
      %v5678 = vunpack.c.h.b16 %v5405
      %v5679 = vunpack.c.l.b16 %v5406
      %v5680 = vunpack.c.h.b16 %v5406
      %v5681 = vunpack.c.l.b16 %v5407
      %v5682 = vunpack.c.h.b16 %v5407
      %v5683 = vunpack.c.l.b16 %v5408
      %v5684 = vunpack.c.h.b16 %v5408
      %v5685 = vunpack.c.l.b16 %v5409
      %v5686 = vunpack.c.h.b16 %v5409
      %v5687 = vunpack.c.l.b16 %v5410
      %v5688 = vunpack.c.h.b16 %v5410
      %v5689 = vunpack.c.l.b16 %v5411
      %v5690 = vunpack.c.h.b16 %v5411
      %v5691 = vunpack.c.l.b16 %v5412
      %v5692 = vunpack.c.h.b16 %v5412
      %v5693 = vunpack.c.l.b16 %v5413
      %v5694 = vunpack.c.h.b16 %v5413
      %v5695 = vunpack.c.l.b16 %v5414
      %v5696 = vunpack.c.h.b16 %v5414
      %v5697 = vunpack.c.l.b16 %v5415
      %v5698 = vunpack.c.h.b16 %v5415
      %v5699 = vunpack.c.l.b16 %v5416
      %v5700 = vunpack.c.h.b16 %v5416
      %v5701 = vunpack.c.l.b16 %v5417
      %v5702 = vunpack.c.h.b16 %v5417
      %v5703 = vunpack.c.l.b16 %v5418
      %v5704 = vunpack.c.h.b16 %v5418
      %v5705 = vunpack.c.l.b16 %v5419
      %v5706 = vunpack.c.h.b16 %v5419
      %v5707 = vunpack.c.l.b16 %v5420
      %v5708 = vunpack.c.h.b16 %v5420
      %v5709 = vunpack.c.l.b16 %v5421
      %v5710 = vunpack.c.h.b16 %v5421
      %v5711 = vunpack.c.l.b16 %v5422
      %v5712 = vunpack.c.h.b16 %v5422
      %v5713 = vunpack.c.l.b16 %v5423
      %v5714 = vunpack.c.h.b16 %v5423
      %v5715 = vunpack.c.l.b16 %v5424
      %v5716 = vunpack.c.h.b16 %v5424
      %v5717 = vunpack.c.l.b16 %v5425
      %v5718 = vunpack.c.h.b16 %v5425
      %v5719 = vunpack.c.l.b16 %v5426
      %v5720 = vunpack.c.h.b16 %v5426
      %v5721 = vunpack.c.l.b16 %v5427
      %v5722 = vunpack.c.h.b16 %v5427
      %v5723 = vunpack.c.l.b16 %v5428
      %v5724 = vunpack.c.h.b16 %v5428
      %v5725 = vunpack.c.l.b16 %v5429
      %v5726 = vunpack.c.h.b16 %v5429
      %v5727 = vunpack.c.l.b16 %v5430
      %v5728 = vunpack.c.h.b16 %v5430
      %v5729 = vunpack.c.l.b16 %v5431
      %v5730 = vunpack.c.h.b16 %v5431
      %v5731 = vunpack.c.l.b16 %v5432
      %v5732 = vunpack.c.h.b16 %v5432
      %v5733 = vunpack.c.l.b16 %v5433
      %v5734 = vunpack.c.h.b16 %v5433
      %v5735 = vunpack.c.l.b16 %v5434
      %v5736 = vunpack.c.h.b16 %v5434
      %v5737 = vunpack.c.l.b16 %v5435
      %v5738 = vunpack.c.h.b16 %v5435
      %v5739 = vunpack.c.l.b16 %v5436
      %v5740 = vunpack.c.h.b16 %v5436
      %v5741 = vunpack.c.l.b16 %v5437
      %v5742 = vunpack.c.h.b16 %v5437
      %v5743 = vunpack.c.l.b16 %v5438
      %v5744 = vunpack.c.h.b16 %v5438
      %v5745 = vunpack.c.l.b16 %v5439
      %v5746 = vunpack.c.h.b16 %v5439
      %v5747 = vunpack.c.l.b16 %v5440
      %v5748 = vunpack.c.h.b16 %v5440
      %v5749 = vunpack.c.l.b16 %v5441
      %v5750 = vunpack.c.h.b16 %v5441
      %v5751 = vunpack.c.l.b16 %v5442
      %v5752 = vunpack.c.h.b16 %v5442
      %v5753 = vunpack.c.l.b16 %v5443
      %v5754 = vunpack.c.h.b16 %v5443
      %v5755 = vunpack.c.l.b16 %v5444
      %v5756 = vunpack.c.h.b16 %v5444
      %v5757 = vunpack.c.l.b16 %v5445
      %v5758 = vunpack.c.h.b16 %v5445
      %v5759 = vunpack.c.l.b16 %v5446
      %v5760 = vunpack.c.h.b16 %v5446
      %v5761 = vunpack.c.l.b16 %v5447
      %v5762 = vunpack.c.h.b16 %v5447
      %v5763 = vunpack.c.l.b16 %v5448
      %v5764 = vunpack.c.h.b16 %v5448
      %v5765 = vunpack.c.l.b16 %v5449
      %v5766 = vunpack.c.h.b16 %v5449
      %v5767 = vunpack.c.l.b16 %v5450
      %v5768 = vunpack.c.h.b16 %v5450
      %v5769 = vunpack.c.l.b16 %v5451
      %v5770 = vunpack.c.h.b16 %v5451
      %v5771 = vunpack.c.l.b16 %v5452
      %v5772 = vunpack.c.h.b16 %v5452
      %v5773 = vunpack.c.l.b16 %v5453
      %v5774 = vunpack.c.h.b16 %v5453
      %v5775 = vunpack.c.l.b16 %v5454
      %v5776 = vunpack.c.h.b16 %v5454
      %v5777 = vunpack.c.l.b16 %v5455
      %v5778 = vunpack.c.h.b16 %v5455
      %v5779 = vunpack.c.l.b16 %v5456
      %v5780 = vunpack.c.h.b16 %v5456
      %v5781 = vunpack.c.l.b16 %v5457
      %v5782 = vunpack.c.h.b16 %v5457
      %v5783 = vunpack.c.l.b16 %v5458
      %v5784 = vunpack.c.h.b16 %v5458
      %v5785 = vunpack.c.l.b16 %v5459
      %v5786 = vunpack.c.h.b16 %v5459
      %v5787 = vunpack.c.l.b16 %v5460
      %v5788 = vunpack.c.h.b16 %v5460
      %v5789 = vunpack.c.l.b16 %v5461
      %v5790 = vunpack.c.h.b16 %v5461
      %v5791 = vunpack.c.l.b16 %v5462
      %v5792 = vunpack.c.h.b16 %v5462
      %v5793 = vunpack.c.l.b16 %v5463
      %v5794 = vunpack.c.h.b16 %v5463
      %v5795 = vunpack.c.l.b16 %v5464
      %v5796 = vunpack.c.h.b16 %v5464
      %v5797 = vunpack.c.l.b16 %v5465
      %v5798 = vunpack.c.h.b16 %v5465
      %v5799 = vunpack.c.l.b16 %v5466
      %v5800 = vunpack.c.h.b16 %v5466
      %v5801 = vunpack.c.l.b16 %v5467
      %v5802 = vunpack.c.h.b16 %v5467
      %v5803 = vunpack.c.l.b16 %v5468
      %v5804 = vunpack.c.h.b16 %v5468
      %v5805 = vunpack.c.l.b16 %v5469
      %v5806 = vunpack.c.h.b16 %v5469
      %v5807 = vunpack.c.l.b16 %v5470
      %v5808 = vunpack.c.h.b16 %v5470
      %v5809 = vunpack.c.l.b16 %v5471
      %v5810 = vunpack.c.h.b16 %v5471
      %v5811 = vunpack.c.l.b16 %v5472
      %v5812 = vunpack.c.h.b16 %v5472
      %v5813 = vunpack.c.l.b16 %v5473
      %v5814 = vunpack.c.h.b16 %v5473
      %v5815 = vunpack.c.l.b16 %v5474
      %v5816 = vunpack.c.h.b16 %v5474
      %v5817 = vunpack.c.l.b16 %v5475
      %v5818 = vunpack.c.h.b16 %v5475
      %v5819 = vunpack.c.l.b16 %v5476
      %v5820 = vunpack.c.h.b16 %v5476
      %v5821 = vunpack.c.l.b16 %v5477
      %v5822 = vunpack.c.h.b16 %v5477
      %v5823 = vunpack.c.l.b16 %v5478
      %v5824 = vunpack.c.h.b16 %v5478
      %v5825 = vunpack.c.l.b16 %v5479
      %v5826 = vunpack.c.h.b16 %v5479
      %v5827 = vunpack.c.l.b16 %v5480
      %v5828 = vunpack.c.h.b16 %v5480
      %v5829 = vunpack.c.l.b16 %v5481
      %v5830 = vunpack.c.h.b16 %v5481
      %v5831 = vunpack.c.l.b16 %v5482
      %v5832 = vunpack.c.h.b16 %v5482
      %v5833 = vunpack.c.l.b16 %v5483
      %v5834 = vunpack.c.h.b16 %v5483
      %v5835 = vunpack.c.l.b16 %v5484
      %v5836 = vunpack.c.h.b16 %v5484
      %v5837 = vunpack.c.l.b16 %v5485
      %v5838 = vunpack.c.h.b16 %v5485
      %v5839 = vunpack.c.l.b16 %v5486
      %v5840 = vunpack.c.h.b16 %v5486
      %v5841 = vunpack.c.l.b16 %v5487
      %v5842 = vunpack.c.h.b16 %v5487
      %v5843 = vunpack.c.l.b16 %v5488
      %v5844 = vunpack.c.h.b16 %v5488
      %v5845 = vunpack.c.l.b16 %v5489
      %v5846 = vunpack.c.h.b16 %v5489
      %v5847 = vunpack.c.l.b16 %v5490
      %v5848 = vunpack.c.h.b16 %v5490
      %v5849 = vunpack.c.l.b16 %v5491
      %v5850 = vunpack.c.h.b16 %v5491
      %v5851 = vunpack.c.l.b16 %v5492
      %v5852 = vunpack.c.h.b16 %v5492
      %v5853 = vunpack.c.l.b16 %v5493
      %v5854 = vunpack.c.h.b16 %v5493
      %v5855 = vunpack.c.l.b16 %v5494
      %v5856 = vunpack.c.h.b16 %v5494
      %v5857 = vunpack.c.l.b16 %v5495
      %v5858 = vunpack.c.h.b16 %v5495
      %v5859 = vunpack.c.l.b16 %v5496
      %v5860 = vunpack.c.h.b16 %v5496
      %v5861 = vunpack.c.l.b16 %v5497
      %v5862 = vunpack.c.h.b16 %v5497
      %v5863 = vunpack.c.l.b16 %v5498
      %v5864 = vunpack.c.h.b16 %v5498
      %v5865 = vunpack.c.l.b16 %v5499
      %v5866 = vunpack.c.h.b16 %v5499
      %v5867 = vunpack.c.l.b16 %v5500
      %v5868 = vunpack.c.h.b16 %v5500
      %v5869 = vunpack.c.l.b16 %v5501
      %v5870 = vunpack.c.h.b16 %v5501
      %v5871 = vunpack.c.l.b16 %v5502
      %v5872 = vunpack.c.h.b16 %v5502
      %v5873 = vunpack.c.l.b16 %v5503
      %v5874 = vunpack.c.h.b16 %v5503
      %v5875 = vunpack.c.l.b16 %v5504
      %v5876 = vunpack.c.h.b16 %v5504
      %v5877 = vunpack.c.l.b16 %v5505
      %v5878 = vunpack.c.h.b16 %v5505
      %v5879 = vunpack.c.l.b16 %v5506
      %v5880 = vunpack.c.h.b16 %v5506
      %v5881 = vunpack.c.l.b16 %v5507
      %v5882 = vunpack.c.h.b16 %v5507
      %v5883 = vunpack.c.l.b16 %v5508
      %v5884 = vunpack.c.h.b16 %v5508
      %v5885 = vunpack.c.l.b16 %v5509
      %v5886 = vunpack.c.h.b16 %v5509
      %v5887 = vunpack.c.l.b16 %v5510
      %v5888 = vunpack.c.h.b16 %v5510
      %v5889 = vunpack.c.l.b16 %v5511
      %v5890 = vunpack.c.h.b16 %v5511
      %v5891 = vunpack.c.l.b16 %v5512
      %v5892 = vunpack.c.h.b16 %v5512
      %v5893 = vunpack.c.l.b16 %v5513
      %v5894 = vunpack.c.h.b16 %v5513
      %v5895 = vunpack.c.l.b16 %v5514
      %v5896 = vunpack.c.h.b16 %v5514
      %v5897 = vunpack.c.l.b16 %v5515
      %v5898 = vunpack.c.h.b16 %v5515
      %v5899 = vunpack.c.l.b16 %v5516
      %v5900 = vunpack.c.h.b16 %v5516
      %v5901 = vunpack.c.l.b16 %v5517
      %v5902 = vunpack.c.h.b16 %v5517
      %v5903 = vunpack.c.l.b16 %v5518
      %v5904 = vunpack.c.h.b16 %v5518
      %v5905 = vunpack.c.l.b16 %v5519
      %v5906 = vunpack.c.h.b16 %v5519
      %v5907 = vunpack.c.l.b16 %v5520
      %v5908 = vunpack.c.h.b16 %v5520
      %v5909 = vunpack.c.l.b16 %v5521
      %v5910 = vunpack.c.h.b16 %v5521
      %v5911 = vunpack.c.l.b16 %v5522
      %v5912 = vunpack.c.h.b16 %v5522
      %v5913 = vunpack.c.l.b16 %v5523
      %v5914 = vunpack.c.h.b16 %v5523
      %v5915 = vunpack.c.l.b16 %v5524
      %v5916 = vunpack.c.h.b16 %v5524
      %v5917 = vunpack.c.l.b16 %v5525
      %v5918 = vunpack.c.h.b16 %v5525
      %v5919 = vunpack.c.l.b16 %v5526
      %v5920 = vunpack.c.h.b16 %v5526
      %v5921 = vpack.c.b16 %v5669, %v5665
      %v5922 = vpack.c.b16 %v5670, %v5666
      %v5923 = vpack.c.b16 %v5671, %v5667
      %v5924 = vpack.c.b16 %v5672, %v5668
      %v5925 = vpack.c.b16 %v5677, %v5673
      %v5926 = vpack.c.b16 %v5678, %v5674
      %v5927 = vpack.c.b16 %v5679, %v5675
      %v5928 = vpack.c.b16 %v5680, %v5676
      %v5929 = vpack.c.b16 %v5685, %v5681
      %v5930 = vpack.c.b16 %v5686, %v5682
      %v5931 = vpack.c.b16 %v5687, %v5683
      %v5932 = vpack.c.b16 %v5688, %v5684
      %v5933 = vpack.c.b16 %v5693, %v5689
      %v5934 = vpack.c.b16 %v5694, %v5690
      %v5935 = vpack.c.b16 %v5695, %v5691
      %v5936 = vpack.c.b16 %v5696, %v5692
      %v5937 = vpack.c.b16 %v5701, %v5697
      %v5938 = vpack.c.b16 %v5702, %v5698
      %v5939 = vpack.c.b16 %v5703, %v5699
      %v5940 = vpack.c.b16 %v5704, %v5700
      %v5941 = vpack.c.b16 %v5709, %v5705
      %v5942 = vpack.c.b16 %v5710, %v5706
      %v5943 = vpack.c.b16 %v5711, %v5707
      %v5944 = vpack.c.b16 %v5712, %v5708
      %v5945 = vpack.c.b16 %v5717, %v5713
      %v5946 = vpack.c.b16 %v5718, %v5714
      %v5947 = vpack.c.b16 %v5719, %v5715
      %v5948 = vpack.c.b16 %v5720, %v5716
      %v5949 = vpack.c.b16 %v5725, %v5721
      %v5950 = vpack.c.b16 %v5726, %v5722
      %v5951 = vpack.c.b16 %v5727, %v5723
      %v5952 = vpack.c.b16 %v5728, %v5724
      %v5953 = vpack.c.b16 %v5733, %v5729
      %v5954 = vpack.c.b16 %v5734, %v5730
      %v5955 = vpack.c.b16 %v5735, %v5731
      %v5956 = vpack.c.b16 %v5736, %v5732
      %v5957 = vpack.c.b16 %v5741, %v5737
      %v5958 = vpack.c.b16 %v5742, %v5738
      %v5959 = vpack.c.b16 %v5743, %v5739
      %v5960 = vpack.c.b16 %v5744, %v5740
      %v5961 = vpack.c.b16 %v5749, %v5745
      %v5962 = vpack.c.b16 %v5750, %v5746
      %v5963 = vpack.c.b16 %v5751, %v5747
      %v5964 = vpack.c.b16 %v5752, %v5748
      %v5965 = vpack.c.b16 %v5757, %v5753
      %v5966 = vpack.c.b16 %v5758, %v5754
      %v5967 = vpack.c.b16 %v5759, %v5755
      %v5968 = vpack.c.b16 %v5760, %v5756
      %v5969 = vpack.c.b16 %v5765, %v5761
      %v5970 = vpack.c.b16 %v5766, %v5762
      %v5971 = vpack.c.b16 %v5767, %v5763
      %v5972 = vpack.c.b16 %v5768, %v5764
      %v5973 = vpack.c.b16 %v5773, %v5769
      %v5974 = vpack.c.b16 %v5774, %v5770
      %v5975 = vpack.c.b16 %v5775, %v5771
      %v5976 = vpack.c.b16 %v5776, %v5772
      %v5977 = vpack.c.b16 %v5781, %v5777
      %v5978 = vpack.c.b16 %v5782, %v5778
      %v5979 = vpack.c.b16 %v5783, %v5779
      %v5980 = vpack.c.b16 %v5784, %v5780
      %v5981 = vpack.c.b16 %v5789, %v5785
      %v5982 = vpack.c.b16 %v5790, %v5786
      %v5983 = vpack.c.b16 %v5791, %v5787
      %v5984 = vpack.c.b16 %v5792, %v5788
      %v5985 = vpack.c.b16 %v5797, %v5793
      %v5986 = vpack.c.b16 %v5798, %v5794
      %v5987 = vpack.c.b16 %v5799, %v5795
      %v5988 = vpack.c.b16 %v5800, %v5796
      %v5989 = vpack.c.b16 %v5805, %v5801
      %v5990 = vpack.c.b16 %v5806, %v5802
      %v5991 = vpack.c.b16 %v5807, %v5803
      %v5992 = vpack.c.b16 %v5808, %v5804
      %v5993 = vpack.c.b16 %v5813, %v5809
      %v5994 = vpack.c.b16 %v5814, %v5810
      %v5995 = vpack.c.b16 %v5815, %v5811
      %v5996 = vpack.c.b16 %v5816, %v5812
      %v5997 = vpack.c.b16 %v5821, %v5817
      %v5998 = vpack.c.b16 %v5822, %v5818
      %v5999 = vpack.c.b16 %v5823, %v5819
      %v6000 = vpack.c.b16 %v5824, %v5820
      %v6001 = vpack.c.b16 %v5829, %v5825
      %v6002 = vpack.c.b16 %v5830, %v5826
      %v6003 = vpack.c.b16 %v5831, %v5827
      %v6004 = vpack.c.b16 %v5832, %v5828
      %v6005 = vpack.c.b16 %v5837, %v5833
      %v6006 = vpack.c.b16 %v5838, %v5834
      %v6007 = vpack.c.b16 %v5839, %v5835
      %v6008 = vpack.c.b16 %v5840, %v5836
      %v6009 = vpack.c.b16 %v5845, %v5841
      %v6010 = vpack.c.b16 %v5846, %v5842
      %v6011 = vpack.c.b16 %v5847, %v5843
      %v6012 = vpack.c.b16 %v5848, %v5844
      %v6013 = vpack.c.b16 %v5853, %v5849
      %v6014 = vpack.c.b16 %v5854, %v5850
      %v6015 = vpack.c.b16 %v5855, %v5851
      %v6016 = vpack.c.b16 %v5856, %v5852
      %v6017 = vpack.c.b16 %v5861, %v5857
      %v6018 = vpack.c.b16 %v5862, %v5858
      %v6019 = vpack.c.b16 %v5863, %v5859
      %v6020 = vpack.c.b16 %v5864, %v5860
      %v6021 = vpack.c.b16 %v5869, %v5865
      %v6022 = vpack.c.b16 %v5870, %v5866
      %v6023 = vpack.c.b16 %v5871, %v5867
      %v6024 = vpack.c.b16 %v5872, %v5868
      %v6025 = vpack.c.b16 %v5877, %v5873
      %v6026 = vpack.c.b16 %v5878, %v5874
      %v6027 = vpack.c.b16 %v5879, %v5875
      %v6028 = vpack.c.b16 %v5880, %v5876
      %v6029 = vpack.c.b16 %v5885, %v5881
      %v6030 = vpack.c.b16 %v5886, %v5882
      %v6031 = vpack.c.b16 %v5887, %v5883
      %v6032 = vpack.c.b16 %v5888, %v5884
      %v6033 = vpack.c.b16 %v5893, %v5889
      %v6034 = vpack.c.b16 %v5894, %v5890
      %v6035 = vpack.c.b16 %v5895, %v5891
      %v6036 = vpack.c.b16 %v5896, %v5892
      %v6037 = vpack.c.b16 %v5901, %v5897
      %v6038 = vpack.c.b16 %v5902, %v5898
      %v6039 = vpack.c.b16 %v5903, %v5899
      %v6040 = vpack.c.b16 %v5904, %v5900
      %v6041 = vpack.c.b16 %v5909, %v5905
      %v6042 = vpack.c.b16 %v5910, %v5906
      %v6043 = vpack.c.b16 %v5911, %v5907
      %v6044 = vpack.c.b16 %v5912, %v5908
      %v6045 = vpack.c.b16 %v5917, %v5913
      %v6046 = vpack.c.b16 %v5918, %v5914
      %v6047 = vpack.c.b16 %v5919, %v5915
      %v6048 = vpack.c.b16 %v5920, %v5916
      %6177 = vmatpush.bf16.msra.mxu0 %v5949
      %6178 = vmatpush.bf16.msra.mxu0 %v5945
      %6179 = vmatpush.bf16.msra.mxu0 %v5941
      %6180 = vmatpush.bf16.msra.mxu0 %v5937
      %6181 = vmatpush.bf16.msra.mxu0 %v5933
      %6182 = vmatpush.bf16.msra.mxu0 %v5929
      %6183 = vmatpush.bf16.msra.mxu0 %v5925
      %6184 = vmatpush.bf16.msra.mxu0 %v5921
      %6185 = vmatmul.bf16.gmra.mxu0 %v5395
      %v6186 = vpop.f32.mrf.mxu0
      %v6187 = vadd.f32 %v5529, %v6186
      %v6188 = vpop.f32.mrf.mxu0
      %v6189 = vadd.f32 %v5529, %v6188
      %6190 = vdwg.mxu0
      %6191 = vmatpush.bf16.msra.mxu0 %v5981
      %6192 = vmatpush.bf16.msra.mxu0 %v5977
      %6193 = vmatpush.bf16.msra.mxu0 %v5973
      %6194 = vmatpush.bf16.msra.mxu0 %v5969
      %6195 = vmatpush.bf16.msra.mxu0 %v5965
      %6196 = vmatpush.bf16.msra.mxu0 %v5961
      %6197 = vmatpush.bf16.msra.mxu0 %v5957
      %6198 = vmatpush.bf16.msra.mxu0 %v5953
      %6199 = vmatmul.bf16.gmra.mxu0 %v5396
      %v6200 = vpop.f32.mrf.mxu0
      %v6201 = vadd.f32 %v6187, %v6200
      %v6202 = vpop.f32.mrf.mxu0
      %v6203 = vadd.f32 %v6189, %v6202
      %6204 = vdwg.mxu0
      %6205 = vmatpush.bf16.msra.mxu0 %v6013
      %6206 = vmatpush.bf16.msra.mxu0 %v6009
      %6207 = vmatpush.bf16.msra.mxu0 %v6005
      %6208 = vmatpush.bf16.msra.mxu0 %v6001
      %6209 = vmatpush.bf16.msra.mxu0 %v5997
      %6210 = vmatpush.bf16.msra.mxu0 %v5993
      %6211 = vmatpush.bf16.msra.mxu0 %v5989
      %6212 = vmatpush.bf16.msra.mxu0 %v5985
      %6213 = vmatmul.bf16.gmra.mxu0 %v5397
      %v6214 = vpop.f32.mrf.mxu0
      %v6215 = vadd.f32 %v6201, %v6214
      %v6216 = vpop.f32.mrf.mxu0
      %v6217 = vadd.f32 %v6203, %v6216
      %6218 = vdwg.mxu0
      %6219 = vmatpush.bf16.msra.mxu0 %v6045
      %6220 = vmatpush.bf16.msra.mxu0 %v6041
      %6221 = vmatpush.bf16.msra.mxu0 %v6037
      %6222 = vmatpush.bf16.msra.mxu0 %v6033
      %6223 = vmatpush.bf16.msra.mxu0 %v6029
      %6224 = vmatpush.bf16.msra.mxu0 %v6025
      %6225 = vmatpush.bf16.msra.mxu0 %v6021
      %6226 = vmatpush.bf16.msra.mxu0 %v6017
      %6227 = vmatmul.bf16.gmra.mxu0 %v5398
      %v6228 = vpop.f32.mrf.mxu0
      %v6229 = vadd.f32 %v6215, %v6228
      %v6230 = vpop.f32.mrf.mxu0
      %v6231 = vadd.f32 %v6217, %v6230
      %6232 = vdwg.mxu0
      %6233 = vmatpush.bf16.msra.mxu0 %v5950
      %6234 = vmatpush.bf16.msra.mxu0 %v5946
      %6235 = vmatpush.bf16.msra.mxu0 %v5942
      %6236 = vmatpush.bf16.msra.mxu0 %v5938
      %6237 = vmatpush.bf16.msra.mxu0 %v5934
      %6238 = vmatpush.bf16.msra.mxu0 %v5930
      %6239 = vmatpush.bf16.msra.mxu0 %v5926
      %6240 = vmatpush.bf16.msra.mxu0 %v5922
      %6241 = vmatmul.bf16.gmra.mxu0 %v5395
      %v6242 = vpop.f32.mrf.mxu0
      %v6243 = vadd.f32 %v5530, %v6242
      %v6244 = vpop.f32.mrf.mxu0
      %v6245 = vadd.f32 %v5530, %v6244
      %6246 = vdwg.mxu0
      %6247 = vmatpush.bf16.msra.mxu0 %v5982
      %6248 = vmatpush.bf16.msra.mxu0 %v5978
      %6249 = vmatpush.bf16.msra.mxu0 %v5974
      %6250 = vmatpush.bf16.msra.mxu0 %v5970
      %6251 = vmatpush.bf16.msra.mxu0 %v5966
      %6252 = vmatpush.bf16.msra.mxu0 %v5962
      %6253 = vmatpush.bf16.msra.mxu0 %v5958
      %6254 = vmatpush.bf16.msra.mxu0 %v5954
      %6255 = vmatmul.bf16.gmra.mxu0 %v5396
      %v6256 = vpop.f32.mrf.mxu0
      %v6257 = vadd.f32 %v6243, %v6256
      %v6258 = vpop.f32.mrf.mxu0
      %v6259 = vadd.f32 %v6245, %v6258
      %6260 = vdwg.mxu0
      %6261 = vmatpush.bf16.msra.mxu0 %v6014
      %6262 = vmatpush.bf16.msra.mxu0 %v6010
      %6263 = vmatpush.bf16.msra.mxu0 %v6006
      %6264 = vmatpush.bf16.msra.mxu0 %v6002
      %6265 = vmatpush.bf16.msra.mxu0 %v5998
      %6266 = vmatpush.bf16.msra.mxu0 %v5994
      %6267 = vmatpush.bf16.msra.mxu0 %v5990
      %6268 = vmatpush.bf16.msra.mxu0 %v5986
      %6269 = vmatmul.bf16.gmra.mxu0 %v5397
      %v6270 = vpop.f32.mrf.mxu0
      %v6271 = vadd.f32 %v6257, %v6270
      %v6272 = vpop.f32.mrf.mxu0
      %v6273 = vadd.f32 %v6259, %v6272
      %6274 = vdwg.mxu0
      %6275 = vmatpush.bf16.msra.mxu0 %v6046
      %6276 = vmatpush.bf16.msra.mxu0 %v6042
      %6277 = vmatpush.bf16.msra.mxu0 %v6038
      %6278 = vmatpush.bf16.msra.mxu0 %v6034
      %6279 = vmatpush.bf16.msra.mxu0 %v6030
      %6280 = vmatpush.bf16.msra.mxu0 %v6026
      %6281 = vmatpush.bf16.msra.mxu0 %v6022
      %6282 = vmatpush.bf16.msra.mxu0 %v6018
      %6283 = vmatmul.bf16.gmra.mxu0 %v5398
      %v6284 = vpop.f32.mrf.mxu0
      %v6285 = vadd.f32 %v6271, %v6284
      %v6286 = vpop.f32.mrf.mxu0
      %v6287 = vadd.f32 %v6273, %v6286
      %6288 = vdwg.mxu0
      %6289 = vmatpush.bf16.msra.mxu0 %v5951
      %6290 = vmatpush.bf16.msra.mxu0 %v5947
      %6291 = vmatpush.bf16.msra.mxu0 %v5943
      %6292 = vmatpush.bf16.msra.mxu0 %v5939
      %6293 = vmatpush.bf16.msra.mxu0 %v5935
      %6294 = vmatpush.bf16.msra.mxu0 %v5931
      %6295 = vmatpush.bf16.msra.mxu0 %v5927
      %6296 = vmatpush.bf16.msra.mxu0 %v5923
      %6297 = vmatmul.bf16.gmra.mxu0 %v5395
      %v6298 = vpop.f32.mrf.mxu0
      %v6299 = vadd.f32 %v5531, %v6298
      %v6300 = vpop.f32.mrf.mxu0
      %v6301 = vadd.f32 %v5531, %v6300
      %6302 = vdwg.mxu0
      %6303 = vmatpush.bf16.msra.mxu0 %v5983
      %6304 = vmatpush.bf16.msra.mxu0 %v5979
      %6305 = vmatpush.bf16.msra.mxu0 %v5975
      %6306 = vmatpush.bf16.msra.mxu0 %v5971
      %6307 = vmatpush.bf16.msra.mxu0 %v5967
      %6308 = vmatpush.bf16.msra.mxu0 %v5963
      %6309 = vmatpush.bf16.msra.mxu0 %v5959
      %6310 = vmatpush.bf16.msra.mxu0 %v5955
      %6311 = vmatmul.bf16.gmra.mxu0 %v5396
      %v6312 = vpop.f32.mrf.mxu0
      %v6313 = vadd.f32 %v6299, %v6312
      %v6314 = vpop.f32.mrf.mxu0
      %v6315 = vadd.f32 %v6301, %v6314
      %6316 = vdwg.mxu0
      %6317 = vmatpush.bf16.msra.mxu0 %v6015
      %6318 = vmatpush.bf16.msra.mxu0 %v6011
      %6319 = vmatpush.bf16.msra.mxu0 %v6007
      %6320 = vmatpush.bf16.msra.mxu0 %v6003
      %6321 = vmatpush.bf16.msra.mxu0 %v5999
      %6322 = vmatpush.bf16.msra.mxu0 %v5995
      %6323 = vmatpush.bf16.msra.mxu0 %v5991
      %6324 = vmatpush.bf16.msra.mxu0 %v5987
      %6325 = vmatmul.bf16.gmra.mxu0 %v5397
      %v6326 = vpop.f32.mrf.mxu0
      %v6327 = vadd.f32 %v6313, %v6326
      %v6328 = vpop.f32.mrf.mxu0
      %v6329 = vadd.f32 %v6315, %v6328
      %6330 = vdwg.mxu0
      %6331 = vmatpush.bf16.msra.mxu0 %v6047
      %6332 = vmatpush.bf16.msra.mxu0 %v6043
      %6333 = vmatpush.bf16.msra.mxu0 %v6039
      %6334 = vmatpush.bf16.msra.mxu0 %v6035
      %6335 = vmatpush.bf16.msra.mxu0 %v6031
      %6336 = vmatpush.bf16.msra.mxu0 %v6027
      %6337 = vmatpush.bf16.msra.mxu0 %v6023
      %6338 = vmatpush.bf16.msra.mxu0 %v6019
      %6339 = vmatmul.bf16.gmra.mxu0 %v5398
      %v6340 = vpop.f32.mrf.mxu0
      %v6341 = vadd.f32 %v6327, %v6340
      %v6342 = vpop.f32.mrf.mxu0
      %v6343 = vadd.f32 %v6329, %v6342
      %6344 = vdwg.mxu0
      %6345 = vmatpush.bf16.msra.mxu0 %v5952
      %6346 = vmatpush.bf16.msra.mxu0 %v5948
      %6347 = vmatpush.bf16.msra.mxu0 %v5944
      %6348 = vmatpush.bf16.msra.mxu0 %v5940
      %6349 = vmatpush.bf16.msra.mxu0 %v5936
      %6350 = vmatpush.bf16.msra.mxu0 %v5932
      %6351 = vmatpush.bf16.msra.mxu0 %v5928
      %6352 = vmatpush.bf16.msra.mxu0 %v5924
      %6353 = vmatmul.bf16.gmra.mxu0 %v5395
      %v6354 = vpop.f32.mrf.mxu0
      %v6355 = vadd.f32 %v5532, %v6354
      %v6356 = vpop.f32.mrf.mxu0
      %v6357 = vadd.f32 %v5532, %v6356
      %6358 = vdwg.mxu0
      %6359 = vmatpush.bf16.msra.mxu0 %v5984
      %6360 = vmatpush.bf16.msra.mxu0 %v5980
      %6361 = vmatpush.bf16.msra.mxu0 %v5976
      %6362 = vmatpush.bf16.msra.mxu0 %v5972
      %6363 = vmatpush.bf16.msra.mxu0 %v5968
      %6364 = vmatpush.bf16.msra.mxu0 %v5964
      %6365 = vmatpush.bf16.msra.mxu0 %v5960
      %6366 = vmatpush.bf16.msra.mxu0 %v5956
      %6367 = vmatmul.bf16.gmra.mxu0 %v5396
      %v6368 = vpop.f32.mrf.mxu0
      %v6369 = vadd.f32 %v6355, %v6368
      %v6370 = vpop.f32.mrf.mxu0
      %v6371 = vadd.f32 %v6357, %v6370
      %6372 = vdwg.mxu0
      %6373 = vmatpush.bf16.msra.mxu0 %v6016
      %6374 = vmatpush.bf16.msra.mxu0 %v6012
      %6375 = vmatpush.bf16.msra.mxu0 %v6008
      %6376 = vmatpush.bf16.msra.mxu0 %v6004
      %6377 = vmatpush.bf16.msra.mxu0 %v6000
      %6378 = vmatpush.bf16.msra.mxu0 %v5996
      %6379 = vmatpush.bf16.msra.mxu0 %v5992
      %6380 = vmatpush.bf16.msra.mxu0 %v5988
      %6381 = vmatmul.bf16.gmra.mxu0 %v5397
      %v6382 = vpop.f32.mrf.mxu0
      %v6383 = vadd.f32 %v6369, %v6382
      %v6384 = vpop.f32.mrf.mxu0
      %v6385 = vadd.f32 %v6371, %v6384
      %6386 = vdwg.mxu0
      %6387 = vmatpush.bf16.msra.mxu0 %v6048
      %6388 = vmatpush.bf16.msra.mxu0 %v6044
      %6389 = vmatpush.bf16.msra.mxu0 %v6040
      %6390 = vmatpush.bf16.msra.mxu0 %v6036
      %6391 = vmatpush.bf16.msra.mxu0 %v6032
      %6392 = vmatpush.bf16.msra.mxu0 %v6028
      %6393 = vmatpush.bf16.msra.mxu0 %v6024
      %6394 = vmatpush.bf16.msra.mxu0 %v6020
      %6395 = vmatmul.bf16.gmra.mxu0 %v5398
      %v6396 = vpop.f32.mrf.mxu0
      %v6397 = vadd.f32 %v6383, %v6396
      %v6398 = vpop.f32.mrf.mxu0
      %v6399 = vadd.f32 %v6385, %v6398
      %6400 = vdwg.mxu0
      %v6401 = vmax.f32 %v6229, 0.0
      %v6402 = vmax.f32 %v6285, 0.0
      %v6403 = vmax.f32 %v6341, 0.0
      %v6404 = vmax.f32 %v6397, 0.0
      %v6405 = vmax.f32 %v6231, 0.0
      %v6406 = vmax.f32 %v6287, 0.0
      %v6407 = vmax.f32 %v6343, 0.0
      %v6408 = vmax.f32 %v6399, 0.0
      %v6409 = vpack.c.bf16 %v6405, %v6401
      %v6410 = vpack.c.bf16 %v6406, %v6402
      %v6411 = vpack.c.bf16 %v6407, %v6403
      %v6412 = vpack.c.bf16 %v6408, %v6404
      %v6413 = vld [vmem:[#allocation18] sm:$0xff]
      %v6414 = vld [vmem:[#allocation18 + $0x8] sm:$0xff]
      %v6415 = vld [vmem:[#allocation18 + $0x10] sm:$0xff]
      %v6416 = vld [vmem:[#allocation18 + $0x18] sm:$0xff]
      %v6417 = vld [vmem:[#allocation18 + $0x20] sm:$0xff]
      %v6418 = vld [vmem:[#allocation18 + $0x28] sm:$0xff]
      %v6419 = vld [vmem:[#allocation18 + $0x30] sm:$0xff]
      %v6420 = vld [vmem:[#allocation18 + $0x38] sm:$0xff]
      %v6421 = vld [vmem:[#allocation18 + $0x40] sm:$0xff]
      %v6422 = vld [vmem:[#allocation18 + $0x48] sm:$0xff]
      %v6423 = vld [vmem:[#allocation18 + $0x50] sm:$0xff]
      %v6424 = vld [vmem:[#allocation18 + $0x58] sm:$0xff]
      %v6425 = vld [vmem:[#allocation18 + $0x60] sm:$0xff]
      %v6426 = vld [vmem:[#allocation18 + $0x68] sm:$0xff]
      %v6427 = vld [vmem:[#allocation18 + $0x70] sm:$0xff]
      %v6428 = vld [vmem:[#allocation18 + $0x78] sm:$0xff]
      %v6429 = vld [vmem:[#allocation18 + $0x80] sm:$0xff]
      %v6430 = vld [vmem:[#allocation18 + $0x88] sm:$0xff]
      %v6431 = vld [vmem:[#allocation18 + $0x90] sm:$0xff]
      %v6432 = vld [vmem:[#allocation18 + $0x98] sm:$0xff]
      %v6433 = vld [vmem:[#allocation18 + $0xa0] sm:$0xff]
      %v6434 = vld [vmem:[#allocation18 + $0xa8] sm:$0xff]
      %v6435 = vld [vmem:[#allocation18 + $0xb0] sm:$0xff]
      %v6436 = vld [vmem:[#allocation18 + $0xb8] sm:$0xff]
      %v6437 = vld [vmem:[#allocation18 + $0xc0] sm:$0xff]
      %v6438 = vld [vmem:[#allocation18 + $0xc8] sm:$0xff]
      %v6439 = vld [vmem:[#allocation18 + $0xd0] sm:$0xff]
      %v6440 = vld [vmem:[#allocation18 + $0xd8] sm:$0xff]
      %v6441 = vld [vmem:[#allocation18 + $0xe0] sm:$0xff]
      %v6442 = vld [vmem:[#allocation18 + $0xe8] sm:$0xff]
      %v6443 = vld [vmem:[#allocation18 + $0xf0] sm:$0xff]
      %v6444 = vld [vmem:[#allocation18 + $0xf8] sm:$0xff]
      %v6445 = vld [vmem:[#allocation18 + $0x100] sm:$0xff]
      %v6446 = vld [vmem:[#allocation18 + $0x108] sm:$0xff]
      %v6447 = vld [vmem:[#allocation18 + $0x110] sm:$0xff]
      %v6448 = vld [vmem:[#allocation18 + $0x118] sm:$0xff]
      %v6449 = vld [vmem:[#allocation18 + $0x120] sm:$0xff]
      %v6450 = vld [vmem:[#allocation18 + $0x128] sm:$0xff]
      %v6451 = vld [vmem:[#allocation18 + $0x130] sm:$0xff]
      %v6452 = vld [vmem:[#allocation18 + $0x138] sm:$0xff]
      %v6453 = vld [vmem:[#allocation18 + $0x140] sm:$0xff]
      %v6454 = vld [vmem:[#allocation18 + $0x148] sm:$0xff]
      %v6455 = vld [vmem:[#allocation18 + $0x150] sm:$0xff]
      %v6456 = vld [vmem:[#allocation18 + $0x158] sm:$0xff]
      %v6457 = vld [vmem:[#allocation18 + $0x160] sm:$0xff]
      %v6458 = vld [vmem:[#allocation18 + $0x168] sm:$0xff]
      %v6459 = vld [vmem:[#allocation18 + $0x170] sm:$0xff]
      %v6460 = vld [vmem:[#allocation18 + $0x178] sm:$0xff]
      %v6461 = vld [vmem:[#allocation18 + $0x180] sm:$0xff]
      %v6462 = vld [vmem:[#allocation18 + $0x188] sm:$0xff]
      %v6463 = vld [vmem:[#allocation18 + $0x190] sm:$0xff]
      %v6464 = vld [vmem:[#allocation18 + $0x198] sm:$0xff]
      %v6465 = vld [vmem:[#allocation18 + $0x1a0] sm:$0xff]
      %v6466 = vld [vmem:[#allocation18 + $0x1a8] sm:$0xff]
      %v6467 = vld [vmem:[#allocation18 + $0x1b0] sm:$0xff]
      %v6468 = vld [vmem:[#allocation18 + $0x1b8] sm:$0xff]
      %v6469 = vld [vmem:[#allocation18 + $0x1c0] sm:$0xff]
      %v6470 = vld [vmem:[#allocation18 + $0x1c8] sm:$0xff]
      %v6471 = vld [vmem:[#allocation18 + $0x1d0] sm:$0xff]
      %v6472 = vld [vmem:[#allocation18 + $0x1d8] sm:$0xff]
      %v6473 = vld [vmem:[#allocation18 + $0x1e0] sm:$0xff]
      %v6474 = vld [vmem:[#allocation18 + $0x1e8] sm:$0xff]
      %v6475 = vld [vmem:[#allocation18 + $0x1f0] sm:$0xff]
      %v6476 = vld [vmem:[#allocation18 + $0x1f8] sm:$0xff]
      %v6477 = vld [vmem:[#allocation18 + $0x200] sm:$0xff]
      %v6478 = vld [vmem:[#allocation18 + $0x208] sm:$0xff]
      %v6479 = vld [vmem:[#allocation18 + $0x210] sm:$0xff]
      %v6480 = vld [vmem:[#allocation18 + $0x218] sm:$0xff]
      %v6481 = vld [vmem:[#allocation18 + $0x220] sm:$0xff]
      %v6482 = vld [vmem:[#allocation18 + $0x228] sm:$0xff]
      %v6483 = vld [vmem:[#allocation18 + $0x230] sm:$0xff]
      %v6484 = vld [vmem:[#allocation18 + $0x238] sm:$0xff]
      %v6485 = vld [vmem:[#allocation18 + $0x240] sm:$0xff]
      %v6486 = vld [vmem:[#allocation18 + $0x248] sm:$0xff]
      %v6487 = vld [vmem:[#allocation18 + $0x250] sm:$0xff]
      %v6488 = vld [vmem:[#allocation18 + $0x258] sm:$0xff]
      %v6489 = vld [vmem:[#allocation18 + $0x260] sm:$0xff]
      %v6490 = vld [vmem:[#allocation18 + $0x268] sm:$0xff]
      %v6491 = vld [vmem:[#allocation18 + $0x270] sm:$0xff]
      %v6492 = vld [vmem:[#allocation18 + $0x278] sm:$0xff]
      %v6493 = vld [vmem:[#allocation18 + $0x280] sm:$0xff]
      %v6494 = vld [vmem:[#allocation18 + $0x288] sm:$0xff]
      %v6495 = vld [vmem:[#allocation18 + $0x290] sm:$0xff]
      %v6496 = vld [vmem:[#allocation18 + $0x298] sm:$0xff]
      %v6497 = vld [vmem:[#allocation18 + $0x2a0] sm:$0xff]
      %v6498 = vld [vmem:[#allocation18 + $0x2a8] sm:$0xff]
      %v6499 = vld [vmem:[#allocation18 + $0x2b0] sm:$0xff]
      %v6500 = vld [vmem:[#allocation18 + $0x2b8] sm:$0xff]
      %v6501 = vld [vmem:[#allocation18 + $0x2c0] sm:$0xff]
      %v6502 = vld [vmem:[#allocation18 + $0x2c8] sm:$0xff]
      %v6503 = vld [vmem:[#allocation18 + $0x2d0] sm:$0xff]
      %v6504 = vld [vmem:[#allocation18 + $0x2d8] sm:$0xff]
      %v6505 = vld [vmem:[#allocation18 + $0x2e0] sm:$0xff]
      %v6506 = vld [vmem:[#allocation18 + $0x2e8] sm:$0xff]
      %v6507 = vld [vmem:[#allocation18 + $0x2f0] sm:$0xff]
      %v6508 = vld [vmem:[#allocation18 + $0x2f8] sm:$0xff]
      %v6509 = vld [vmem:[#allocation18 + $0x300] sm:$0xff]
      %v6510 = vld [vmem:[#allocation18 + $0x308] sm:$0xff]
      %v6511 = vld [vmem:[#allocation18 + $0x310] sm:$0xff]
      %v6512 = vld [vmem:[#allocation18 + $0x318] sm:$0xff]
      %v6513 = vld [vmem:[#allocation18 + $0x320] sm:$0xff]
      %v6514 = vld [vmem:[#allocation18 + $0x328] sm:$0xff]
      %v6515 = vld [vmem:[#allocation18 + $0x330] sm:$0xff]
      %v6516 = vld [vmem:[#allocation18 + $0x338] sm:$0xff]
      %v6517 = vld [vmem:[#allocation18 + $0x340] sm:$0xff]
      %v6518 = vld [vmem:[#allocation18 + $0x348] sm:$0xff]
      %v6519 = vld [vmem:[#allocation18 + $0x350] sm:$0xff]
      %v6520 = vld [vmem:[#allocation18 + $0x358] sm:$0xff]
      %v6521 = vld [vmem:[#allocation18 + $0x360] sm:$0xff]
      %v6522 = vld [vmem:[#allocation18 + $0x368] sm:$0xff]
      %v6523 = vld [vmem:[#allocation18 + $0x370] sm:$0xff]
      %v6524 = vld [vmem:[#allocation18 + $0x378] sm:$0xff]
      %v6525 = vld [vmem:[#allocation18 + $0x380] sm:$0xff]
      %v6526 = vld [vmem:[#allocation18 + $0x388] sm:$0xff]
      %v6527 = vld [vmem:[#allocation18 + $0x390] sm:$0xff]
      %v6528 = vld [vmem:[#allocation18 + $0x398] sm:$0xff]
      %v6529 = vld [vmem:[#allocation18 + $0x3a0] sm:$0xff]
      %v6530 = vld [vmem:[#allocation18 + $0x3a8] sm:$0xff]
      %v6531 = vld [vmem:[#allocation18 + $0x3b0] sm:$0xff]
      %v6532 = vld [vmem:[#allocation18 + $0x3b8] sm:$0xff]
      %v6533 = vld [vmem:[#allocation18 + $0x3c0] sm:$0xff]
      %v6534 = vld [vmem:[#allocation18 + $0x3c8] sm:$0xff]
      %v6535 = vld [vmem:[#allocation18 + $0x3d0] sm:$0xff]
      %v6536 = vld [vmem:[#allocation18 + $0x3d8] sm:$0xff]
      %v6537 = vld [vmem:[#allocation18 + $0x3e0] sm:$0xff]
      %v6538 = vld [vmem:[#allocation18 + $0x3e8] sm:$0xff]
      %v6539 = vld [vmem:[#allocation18 + $0x3f0] sm:$0xff]
      %v6540 = vld [vmem:[#allocation18 + $0x3f8] sm:$0xff]
      %v6541 = vld [vmem:[#allocation20] sm:$0xf]
      %v6543 = vperm.slane %v6541, 0
      %v6544 = vperm.slane %v6541, 1
      %v6545 = vperm.slane %v6541, 2
      %v6546 = vperm.slane %v6541, 3
      %v6679 = vunpack.c.l.b16 %v6413
      %v6680 = vunpack.c.h.b16 %v6413
      %v6681 = vunpack.c.l.b16 %v6414
      %v6682 = vunpack.c.h.b16 %v6414
      %v6683 = vunpack.c.l.b16 %v6415
      %v6684 = vunpack.c.h.b16 %v6415
      %v6685 = vunpack.c.l.b16 %v6416
      %v6686 = vunpack.c.h.b16 %v6416
      %v6687 = vunpack.c.l.b16 %v6417
      %v6688 = vunpack.c.h.b16 %v6417
      %v6689 = vunpack.c.l.b16 %v6418
      %v6690 = vunpack.c.h.b16 %v6418
      %v6691 = vunpack.c.l.b16 %v6419
      %v6692 = vunpack.c.h.b16 %v6419
      %v6693 = vunpack.c.l.b16 %v6420
      %v6694 = vunpack.c.h.b16 %v6420
      %v6695 = vunpack.c.l.b16 %v6421
      %v6696 = vunpack.c.h.b16 %v6421
      %v6697 = vunpack.c.l.b16 %v6422
      %v6698 = vunpack.c.h.b16 %v6422
      %v6699 = vunpack.c.l.b16 %v6423
      %v6700 = vunpack.c.h.b16 %v6423
      %v6701 = vunpack.c.l.b16 %v6424
      %v6702 = vunpack.c.h.b16 %v6424
      %v6703 = vunpack.c.l.b16 %v6425
      %v6704 = vunpack.c.h.b16 %v6425
      %v6705 = vunpack.c.l.b16 %v6426
      %v6706 = vunpack.c.h.b16 %v6426
      %v6707 = vunpack.c.l.b16 %v6427
      %v6708 = vunpack.c.h.b16 %v6427
      %v6709 = vunpack.c.l.b16 %v6428
      %v6710 = vunpack.c.h.b16 %v6428
      %v6711 = vunpack.c.l.b16 %v6429
      %v6712 = vunpack.c.h.b16 %v6429
      %v6713 = vunpack.c.l.b16 %v6430
      %v6714 = vunpack.c.h.b16 %v6430
      %v6715 = vunpack.c.l.b16 %v6431
      %v6716 = vunpack.c.h.b16 %v6431
      %v6717 = vunpack.c.l.b16 %v6432
      %v6718 = vunpack.c.h.b16 %v6432
      %v6719 = vunpack.c.l.b16 %v6433
      %v6720 = vunpack.c.h.b16 %v6433
      %v6721 = vunpack.c.l.b16 %v6434
      %v6722 = vunpack.c.h.b16 %v6434
      %v6723 = vunpack.c.l.b16 %v6435
      %v6724 = vunpack.c.h.b16 %v6435
      %v6725 = vunpack.c.l.b16 %v6436
      %v6726 = vunpack.c.h.b16 %v6436
      %v6727 = vunpack.c.l.b16 %v6437
      %v6728 = vunpack.c.h.b16 %v6437
      %v6729 = vunpack.c.l.b16 %v6438
      %v6730 = vunpack.c.h.b16 %v6438
      %v6731 = vunpack.c.l.b16 %v6439
      %v6732 = vunpack.c.h.b16 %v6439
      %v6733 = vunpack.c.l.b16 %v6440
      %v6734 = vunpack.c.h.b16 %v6440
      %v6735 = vunpack.c.l.b16 %v6441
      %v6736 = vunpack.c.h.b16 %v6441
      %v6737 = vunpack.c.l.b16 %v6442
      %v6738 = vunpack.c.h.b16 %v6442
      %v6739 = vunpack.c.l.b16 %v6443
      %v6740 = vunpack.c.h.b16 %v6443
      %v6741 = vunpack.c.l.b16 %v6444
      %v6742 = vunpack.c.h.b16 %v6444
      %v6743 = vunpack.c.l.b16 %v6445
      %v6744 = vunpack.c.h.b16 %v6445
      %v6745 = vunpack.c.l.b16 %v6446
      %v6746 = vunpack.c.h.b16 %v6446
      %v6747 = vunpack.c.l.b16 %v6447
      %v6748 = vunpack.c.h.b16 %v6447
      %v6749 = vunpack.c.l.b16 %v6448
      %v6750 = vunpack.c.h.b16 %v6448
      %v6751 = vunpack.c.l.b16 %v6449
      %v6752 = vunpack.c.h.b16 %v6449
      %v6753 = vunpack.c.l.b16 %v6450
      %v6754 = vunpack.c.h.b16 %v6450
      %v6755 = vunpack.c.l.b16 %v6451
      %v6756 = vunpack.c.h.b16 %v6451
      %v6757 = vunpack.c.l.b16 %v6452
      %v6758 = vunpack.c.h.b16 %v6452
      %v6759 = vunpack.c.l.b16 %v6453
      %v6760 = vunpack.c.h.b16 %v6453
      %v6761 = vunpack.c.l.b16 %v6454
      %v6762 = vunpack.c.h.b16 %v6454
      %v6763 = vunpack.c.l.b16 %v6455
      %v6764 = vunpack.c.h.b16 %v6455
      %v6765 = vunpack.c.l.b16 %v6456
      %v6766 = vunpack.c.h.b16 %v6456
      %v6767 = vunpack.c.l.b16 %v6457
      %v6768 = vunpack.c.h.b16 %v6457
      %v6769 = vunpack.c.l.b16 %v6458
      %v6770 = vunpack.c.h.b16 %v6458
      %v6771 = vunpack.c.l.b16 %v6459
      %v6772 = vunpack.c.h.b16 %v6459
      %v6773 = vunpack.c.l.b16 %v6460
      %v6774 = vunpack.c.h.b16 %v6460
      %v6775 = vunpack.c.l.b16 %v6461
      %v6776 = vunpack.c.h.b16 %v6461
      %v6777 = vunpack.c.l.b16 %v6462
      %v6778 = vunpack.c.h.b16 %v6462
      %v6779 = vunpack.c.l.b16 %v6463
      %v6780 = vunpack.c.h.b16 %v6463
      %v6781 = vunpack.c.l.b16 %v6464
      %v6782 = vunpack.c.h.b16 %v6464
      %v6783 = vunpack.c.l.b16 %v6465
      %v6784 = vunpack.c.h.b16 %v6465
      %v6785 = vunpack.c.l.b16 %v6466
      %v6786 = vunpack.c.h.b16 %v6466
      %v6787 = vunpack.c.l.b16 %v6467
      %v6788 = vunpack.c.h.b16 %v6467
      %v6789 = vunpack.c.l.b16 %v6468
      %v6790 = vunpack.c.h.b16 %v6468
      %v6791 = vunpack.c.l.b16 %v6469
      %v6792 = vunpack.c.h.b16 %v6469
      %v6793 = vunpack.c.l.b16 %v6470
      %v6794 = vunpack.c.h.b16 %v6470
      %v6795 = vunpack.c.l.b16 %v6471
      %v6796 = vunpack.c.h.b16 %v6471
      %v6797 = vunpack.c.l.b16 %v6472
      %v6798 = vunpack.c.h.b16 %v6472
      %v6799 = vunpack.c.l.b16 %v6473
      %v6800 = vunpack.c.h.b16 %v6473
      %v6801 = vunpack.c.l.b16 %v6474
      %v6802 = vunpack.c.h.b16 %v6474
      %v6803 = vunpack.c.l.b16 %v6475
      %v6804 = vunpack.c.h.b16 %v6475
      %v6805 = vunpack.c.l.b16 %v6476
      %v6806 = vunpack.c.h.b16 %v6476
      %v6807 = vunpack.c.l.b16 %v6477
      %v6808 = vunpack.c.h.b16 %v6477
      %v6809 = vunpack.c.l.b16 %v6478
      %v6810 = vunpack.c.h.b16 %v6478
      %v6811 = vunpack.c.l.b16 %v6479
      %v6812 = vunpack.c.h.b16 %v6479
      %v6813 = vunpack.c.l.b16 %v6480
      %v6814 = vunpack.c.h.b16 %v6480
      %v6815 = vunpack.c.l.b16 %v6481
      %v6816 = vunpack.c.h.b16 %v6481
      %v6817 = vunpack.c.l.b16 %v6482
      %v6818 = vunpack.c.h.b16 %v6482
      %v6819 = vunpack.c.l.b16 %v6483
      %v6820 = vunpack.c.h.b16 %v6483
      %v6821 = vunpack.c.l.b16 %v6484
      %v6822 = vunpack.c.h.b16 %v6484
      %v6823 = vunpack.c.l.b16 %v6485
      %v6824 = vunpack.c.h.b16 %v6485
      %v6825 = vunpack.c.l.b16 %v6486
      %v6826 = vunpack.c.h.b16 %v6486
      %v6827 = vunpack.c.l.b16 %v6487
      %v6828 = vunpack.c.h.b16 %v6487
      %v6829 = vunpack.c.l.b16 %v6488
      %v6830 = vunpack.c.h.b16 %v6488
      %v6831 = vunpack.c.l.b16 %v6489
      %v6832 = vunpack.c.h.b16 %v6489
      %v6833 = vunpack.c.l.b16 %v6490
      %v6834 = vunpack.c.h.b16 %v6490
      %v6835 = vunpack.c.l.b16 %v6491
      %v6836 = vunpack.c.h.b16 %v6491
      %v6837 = vunpack.c.l.b16 %v6492
      %v6838 = vunpack.c.h.b16 %v6492
      %v6839 = vunpack.c.l.b16 %v6493
      %v6840 = vunpack.c.h.b16 %v6493
      %v6841 = vunpack.c.l.b16 %v6494
      %v6842 = vunpack.c.h.b16 %v6494
      %v6843 = vunpack.c.l.b16 %v6495
      %v6844 = vunpack.c.h.b16 %v6495
      %v6845 = vunpack.c.l.b16 %v6496
      %v6846 = vunpack.c.h.b16 %v6496
      %v6847 = vunpack.c.l.b16 %v6497
      %v6848 = vunpack.c.h.b16 %v6497
      %v6849 = vunpack.c.l.b16 %v6498
      %v6850 = vunpack.c.h.b16 %v6498
      %v6851 = vunpack.c.l.b16 %v6499
      %v6852 = vunpack.c.h.b16 %v6499
      %v6853 = vunpack.c.l.b16 %v6500
      %v6854 = vunpack.c.h.b16 %v6500
      %v6855 = vunpack.c.l.b16 %v6501
      %v6856 = vunpack.c.h.b16 %v6501
      %v6857 = vunpack.c.l.b16 %v6502
      %v6858 = vunpack.c.h.b16 %v6502
      %v6859 = vunpack.c.l.b16 %v6503
      %v6860 = vunpack.c.h.b16 %v6503
      %v6861 = vunpack.c.l.b16 %v6504
      %v6862 = vunpack.c.h.b16 %v6504
      %v6863 = vunpack.c.l.b16 %v6505
      %v6864 = vunpack.c.h.b16 %v6505
      %v6865 = vunpack.c.l.b16 %v6506
      %v6866 = vunpack.c.h.b16 %v6506
      %v6867 = vunpack.c.l.b16 %v6507
      %v6868 = vunpack.c.h.b16 %v6507
      %v6869 = vunpack.c.l.b16 %v6508
      %v6870 = vunpack.c.h.b16 %v6508
      %v6871 = vunpack.c.l.b16 %v6509
      %v6872 = vunpack.c.h.b16 %v6509
      %v6873 = vunpack.c.l.b16 %v6510
      %v6874 = vunpack.c.h.b16 %v6510
      %v6875 = vunpack.c.l.b16 %v6511
      %v6876 = vunpack.c.h.b16 %v6511
      %v6877 = vunpack.c.l.b16 %v6512
      %v6878 = vunpack.c.h.b16 %v6512
      %v6879 = vunpack.c.l.b16 %v6513
      %v6880 = vunpack.c.h.b16 %v6513
      %v6881 = vunpack.c.l.b16 %v6514
      %v6882 = vunpack.c.h.b16 %v6514
      %v6883 = vunpack.c.l.b16 %v6515
      %v6884 = vunpack.c.h.b16 %v6515
      %v6885 = vunpack.c.l.b16 %v6516
      %v6886 = vunpack.c.h.b16 %v6516
      %v6887 = vunpack.c.l.b16 %v6517
      %v6888 = vunpack.c.h.b16 %v6517
      %v6889 = vunpack.c.l.b16 %v6518
      %v6890 = vunpack.c.h.b16 %v6518
      %v6891 = vunpack.c.l.b16 %v6519
      %v6892 = vunpack.c.h.b16 %v6519
      %v6893 = vunpack.c.l.b16 %v6520
      %v6894 = vunpack.c.h.b16 %v6520
      %v6895 = vunpack.c.l.b16 %v6521
      %v6896 = vunpack.c.h.b16 %v6521
      %v6897 = vunpack.c.l.b16 %v6522
      %v6898 = vunpack.c.h.b16 %v6522
      %v6899 = vunpack.c.l.b16 %v6523
      %v6900 = vunpack.c.h.b16 %v6523
      %v6901 = vunpack.c.l.b16 %v6524
      %v6902 = vunpack.c.h.b16 %v6524
      %v6903 = vunpack.c.l.b16 %v6525
      %v6904 = vunpack.c.h.b16 %v6525
      %v6905 = vunpack.c.l.b16 %v6526
      %v6906 = vunpack.c.h.b16 %v6526
      %v6907 = vunpack.c.l.b16 %v6527
      %v6908 = vunpack.c.h.b16 %v6527
      %v6909 = vunpack.c.l.b16 %v6528
      %v6910 = vunpack.c.h.b16 %v6528
      %v6911 = vunpack.c.l.b16 %v6529
      %v6912 = vunpack.c.h.b16 %v6529
      %v6913 = vunpack.c.l.b16 %v6530
      %v6914 = vunpack.c.h.b16 %v6530
      %v6915 = vunpack.c.l.b16 %v6531
      %v6916 = vunpack.c.h.b16 %v6531
      %v6917 = vunpack.c.l.b16 %v6532
      %v6918 = vunpack.c.h.b16 %v6532
      %v6919 = vunpack.c.l.b16 %v6533
      %v6920 = vunpack.c.h.b16 %v6533
      %v6921 = vunpack.c.l.b16 %v6534
      %v6922 = vunpack.c.h.b16 %v6534
      %v6923 = vunpack.c.l.b16 %v6535
      %v6924 = vunpack.c.h.b16 %v6535
      %v6925 = vunpack.c.l.b16 %v6536
      %v6926 = vunpack.c.h.b16 %v6536
      %v6927 = vunpack.c.l.b16 %v6537
      %v6928 = vunpack.c.h.b16 %v6537
      %v6929 = vunpack.c.l.b16 %v6538
      %v6930 = vunpack.c.h.b16 %v6538
      %v6931 = vunpack.c.l.b16 %v6539
      %v6932 = vunpack.c.h.b16 %v6539
      %v6933 = vunpack.c.l.b16 %v6540
      %v6934 = vunpack.c.h.b16 %v6540
      %v6935 = vpack.c.b16 %v6683, %v6679
      %v6936 = vpack.c.b16 %v6684, %v6680
      %v6937 = vpack.c.b16 %v6685, %v6681
      %v6938 = vpack.c.b16 %v6686, %v6682
      %v6939 = vpack.c.b16 %v6691, %v6687
      %v6940 = vpack.c.b16 %v6692, %v6688
      %v6941 = vpack.c.b16 %v6693, %v6689
      %v6942 = vpack.c.b16 %v6694, %v6690
      %v6943 = vpack.c.b16 %v6699, %v6695
      %v6944 = vpack.c.b16 %v6700, %v6696
      %v6945 = vpack.c.b16 %v6701, %v6697
      %v6946 = vpack.c.b16 %v6702, %v6698
      %v6947 = vpack.c.b16 %v6707, %v6703
      %v6948 = vpack.c.b16 %v6708, %v6704
      %v6949 = vpack.c.b16 %v6709, %v6705
      %v6950 = vpack.c.b16 %v6710, %v6706
      %v6951 = vpack.c.b16 %v6715, %v6711
      %v6952 = vpack.c.b16 %v6716, %v6712
      %v6953 = vpack.c.b16 %v6717, %v6713
      %v6954 = vpack.c.b16 %v6718, %v6714
      %v6955 = vpack.c.b16 %v6723, %v6719
      %v6956 = vpack.c.b16 %v6724, %v6720
      %v6957 = vpack.c.b16 %v6725, %v6721
      %v6958 = vpack.c.b16 %v6726, %v6722
      %v6959 = vpack.c.b16 %v6731, %v6727
      %v6960 = vpack.c.b16 %v6732, %v6728
      %v6961 = vpack.c.b16 %v6733, %v6729
      %v6962 = vpack.c.b16 %v6734, %v6730
      %v6963 = vpack.c.b16 %v6739, %v6735
      %v6964 = vpack.c.b16 %v6740, %v6736
      %v6965 = vpack.c.b16 %v6741, %v6737
      %v6966 = vpack.c.b16 %v6742, %v6738
      %v6967 = vpack.c.b16 %v6747, %v6743
      %v6968 = vpack.c.b16 %v6748, %v6744
      %v6969 = vpack.c.b16 %v6749, %v6745
      %v6970 = vpack.c.b16 %v6750, %v6746
      %v6971 = vpack.c.b16 %v6755, %v6751
      %v6972 = vpack.c.b16 %v6756, %v6752
      %v6973 = vpack.c.b16 %v6757, %v6753
      %v6974 = vpack.c.b16 %v6758, %v6754
      %v6975 = vpack.c.b16 %v6763, %v6759
      %v6976 = vpack.c.b16 %v6764, %v6760
      %v6977 = vpack.c.b16 %v6765, %v6761
      %v6978 = vpack.c.b16 %v6766, %v6762
      %v6979 = vpack.c.b16 %v6771, %v6767
      %v6980 = vpack.c.b16 %v6772, %v6768
      %v6981 = vpack.c.b16 %v6773, %v6769
      %v6982 = vpack.c.b16 %v6774, %v6770
      %v6983 = vpack.c.b16 %v6779, %v6775
      %v6984 = vpack.c.b16 %v6780, %v6776
      %v6985 = vpack.c.b16 %v6781, %v6777
      %v6986 = vpack.c.b16 %v6782, %v6778
      %v6987 = vpack.c.b16 %v6787, %v6783
      %v6988 = vpack.c.b16 %v6788, %v6784
      %v6989 = vpack.c.b16 %v6789, %v6785
      %v6990 = vpack.c.b16 %v6790, %v6786
      %v6991 = vpack.c.b16 %v6795, %v6791
      %v6992 = vpack.c.b16 %v6796, %v6792
      %v6993 = vpack.c.b16 %v6797, %v6793
      %v6994 = vpack.c.b16 %v6798, %v6794
      %v6995 = vpack.c.b16 %v6803, %v6799
      %v6996 = vpack.c.b16 %v6804, %v6800
      %v6997 = vpack.c.b16 %v6805, %v6801
      %v6998 = vpack.c.b16 %v6806, %v6802
      %v6999 = vpack.c.b16 %v6811, %v6807
      %v7000 = vpack.c.b16 %v6812, %v6808
      %v7001 = vpack.c.b16 %v6813, %v6809
      %v7002 = vpack.c.b16 %v6814, %v6810
      %v7003 = vpack.c.b16 %v6819, %v6815
      %v7004 = vpack.c.b16 %v6820, %v6816
      %v7005 = vpack.c.b16 %v6821, %v6817
      %v7006 = vpack.c.b16 %v6822, %v6818
      %v7007 = vpack.c.b16 %v6827, %v6823
      %v7008 = vpack.c.b16 %v6828, %v6824
      %v7009 = vpack.c.b16 %v6829, %v6825
      %v7010 = vpack.c.b16 %v6830, %v6826
      %v7011 = vpack.c.b16 %v6835, %v6831
      %v7012 = vpack.c.b16 %v6836, %v6832
      %v7013 = vpack.c.b16 %v6837, %v6833
      %v7014 = vpack.c.b16 %v6838, %v6834
      %v7015 = vpack.c.b16 %v6843, %v6839
      %v7016 = vpack.c.b16 %v6844, %v6840
      %v7017 = vpack.c.b16 %v6845, %v6841
      %v7018 = vpack.c.b16 %v6846, %v6842
      %v7019 = vpack.c.b16 %v6851, %v6847
      %v7020 = vpack.c.b16 %v6852, %v6848
      %v7021 = vpack.c.b16 %v6853, %v6849
      %v7022 = vpack.c.b16 %v6854, %v6850
      %v7023 = vpack.c.b16 %v6859, %v6855
      %v7024 = vpack.c.b16 %v6860, %v6856
      %v7025 = vpack.c.b16 %v6861, %v6857
      %v7026 = vpack.c.b16 %v6862, %v6858
      %v7027 = vpack.c.b16 %v6867, %v6863
      %v7028 = vpack.c.b16 %v6868, %v6864
      %v7029 = vpack.c.b16 %v6869, %v6865
      %v7030 = vpack.c.b16 %v6870, %v6866
      %v7031 = vpack.c.b16 %v6875, %v6871
      %v7032 = vpack.c.b16 %v6876, %v6872
      %v7033 = vpack.c.b16 %v6877, %v6873
      %v7034 = vpack.c.b16 %v6878, %v6874
      %v7035 = vpack.c.b16 %v6883, %v6879
      %v7036 = vpack.c.b16 %v6884, %v6880
      %v7037 = vpack.c.b16 %v6885, %v6881
      %v7038 = vpack.c.b16 %v6886, %v6882
      %v7039 = vpack.c.b16 %v6891, %v6887
      %v7040 = vpack.c.b16 %v6892, %v6888
      %v7041 = vpack.c.b16 %v6893, %v6889
      %v7042 = vpack.c.b16 %v6894, %v6890
      %v7043 = vpack.c.b16 %v6899, %v6895
      %v7044 = vpack.c.b16 %v6900, %v6896
      %v7045 = vpack.c.b16 %v6901, %v6897
      %v7046 = vpack.c.b16 %v6902, %v6898
      %v7047 = vpack.c.b16 %v6907, %v6903
      %v7048 = vpack.c.b16 %v6908, %v6904
      %v7049 = vpack.c.b16 %v6909, %v6905
      %v7050 = vpack.c.b16 %v6910, %v6906
      %v7051 = vpack.c.b16 %v6915, %v6911
      %v7052 = vpack.c.b16 %v6916, %v6912
      %v7053 = vpack.c.b16 %v6917, %v6913
      %v7054 = vpack.c.b16 %v6918, %v6914
      %v7055 = vpack.c.b16 %v6923, %v6919
      %v7056 = vpack.c.b16 %v6924, %v6920
      %v7057 = vpack.c.b16 %v6925, %v6921
      %v7058 = vpack.c.b16 %v6926, %v6922
      %v7059 = vpack.c.b16 %v6931, %v6927
      %v7060 = vpack.c.b16 %v6932, %v6928
      %v7061 = vpack.c.b16 %v6933, %v6929
      %v7062 = vpack.c.b16 %v6934, %v6930
      %7191 = vmatpush.bf16.msra.mxu0 %v6963
      %7192 = vmatpush.bf16.msra.mxu0 %v6959
      %7193 = vmatpush.bf16.msra.mxu0 %v6955
      %7194 = vmatpush.bf16.msra.mxu0 %v6951
      %7195 = vmatpush.bf16.msra.mxu0 %v6947
      %7196 = vmatpush.bf16.msra.mxu0 %v6943
      %7197 = vmatpush.bf16.msra.mxu0 %v6939
      %7198 = vmatpush.bf16.msra.mxu0 %v6935
      %7199 = vmatmul.bf16.gmra.mxu0 %v6409
      %v7200 = vpop.f32.mrf.mxu0
      %v7201 = vadd.f32 %v6543, %v7200
      %v7202 = vpop.f32.mrf.mxu0
      %v7203 = vadd.f32 %v6543, %v7202
      %7204 = vdwg.mxu0
      %7205 = vmatpush.bf16.msra.mxu0 %v6995
      %7206 = vmatpush.bf16.msra.mxu0 %v6991
      %7207 = vmatpush.bf16.msra.mxu0 %v6987
      %7208 = vmatpush.bf16.msra.mxu0 %v6983
      %7209 = vmatpush.bf16.msra.mxu0 %v6979
      %7210 = vmatpush.bf16.msra.mxu0 %v6975
      %7211 = vmatpush.bf16.msra.mxu0 %v6971
      %7212 = vmatpush.bf16.msra.mxu0 %v6967
      %7213 = vmatmul.bf16.gmra.mxu0 %v6410
      %v7214 = vpop.f32.mrf.mxu0
      %v7215 = vadd.f32 %v7201, %v7214
      %v7216 = vpop.f32.mrf.mxu0
      %v7217 = vadd.f32 %v7203, %v7216
      %7218 = vdwg.mxu0
      %7219 = vmatpush.bf16.msra.mxu0 %v7027
      %7220 = vmatpush.bf16.msra.mxu0 %v7023
      %7221 = vmatpush.bf16.msra.mxu0 %v7019
      %7222 = vmatpush.bf16.msra.mxu0 %v7015
      %7223 = vmatpush.bf16.msra.mxu0 %v7011
      %7224 = vmatpush.bf16.msra.mxu0 %v7007
      %7225 = vmatpush.bf16.msra.mxu0 %v7003
      %7226 = vmatpush.bf16.msra.mxu0 %v6999
      %7227 = vmatmul.bf16.gmra.mxu0 %v6411
      %v7228 = vpop.f32.mrf.mxu0
      %v7229 = vadd.f32 %v7215, %v7228
      %v7230 = vpop.f32.mrf.mxu0
      %v7231 = vadd.f32 %v7217, %v7230
      %7232 = vdwg.mxu0
      %7233 = vmatpush.bf16.msra.mxu0 %v7059
      %7234 = vmatpush.bf16.msra.mxu0 %v7055
      %7235 = vmatpush.bf16.msra.mxu0 %v7051
      %7236 = vmatpush.bf16.msra.mxu0 %v7047
      %7237 = vmatpush.bf16.msra.mxu0 %v7043
      %7238 = vmatpush.bf16.msra.mxu0 %v7039
      %7239 = vmatpush.bf16.msra.mxu0 %v7035
      %7240 = vmatpush.bf16.msra.mxu0 %v7031
      %7241 = vmatmul.bf16.gmra.mxu0 %v6412
      %v7242 = vpop.f32.mrf.mxu0
      %v7243 = vadd.f32 %v7229, %v7242
      %v7244 = vpop.f32.mrf.mxu0
      %v7245 = vadd.f32 %v7231, %v7244
      %7246 = vdwg.mxu0
      %7247 = vmatpush.bf16.msra.mxu0 %v6964
      %7248 = vmatpush.bf16.msra.mxu0 %v6960
      %7249 = vmatpush.bf16.msra.mxu0 %v6956
      %7250 = vmatpush.bf16.msra.mxu0 %v6952
      %7251 = vmatpush.bf16.msra.mxu0 %v6948
      %7252 = vmatpush.bf16.msra.mxu0 %v6944
      %7253 = vmatpush.bf16.msra.mxu0 %v6940
      %7254 = vmatpush.bf16.msra.mxu0 %v6936
      %7255 = vmatmul.bf16.gmra.mxu0 %v6409
      %v7256 = vpop.f32.mrf.mxu0
      %v7257 = vadd.f32 %v6544, %v7256
      %v7258 = vpop.f32.mrf.mxu0
      %v7259 = vadd.f32 %v6544, %v7258
      %7260 = vdwg.mxu0
      %7261 = vmatpush.bf16.msra.mxu0 %v6996
      %7262 = vmatpush.bf16.msra.mxu0 %v6992
      %7263 = vmatpush.bf16.msra.mxu0 %v6988
      %7264 = vmatpush.bf16.msra.mxu0 %v6984
      %7265 = vmatpush.bf16.msra.mxu0 %v6980
      %7266 = vmatpush.bf16.msra.mxu0 %v6976
      %7267 = vmatpush.bf16.msra.mxu0 %v6972
      %7268 = vmatpush.bf16.msra.mxu0 %v6968
      %7269 = vmatmul.bf16.gmra.mxu0 %v6410
      %v7270 = vpop.f32.mrf.mxu0
      %v7271 = vadd.f32 %v7257, %v7270
      %v7272 = vpop.f32.mrf.mxu0
      %v7273 = vadd.f32 %v7259, %v7272
      %7274 = vdwg.mxu0
      %7275 = vmatpush.bf16.msra.mxu0 %v7028
      %7276 = vmatpush.bf16.msra.mxu0 %v7024
      %7277 = vmatpush.bf16.msra.mxu0 %v7020
      %7278 = vmatpush.bf16.msra.mxu0 %v7016
      %7279 = vmatpush.bf16.msra.mxu0 %v7012
      %7280 = vmatpush.bf16.msra.mxu0 %v7008
      %7281 = vmatpush.bf16.msra.mxu0 %v7004
      %7282 = vmatpush.bf16.msra.mxu0 %v7000
      %7283 = vmatmul.bf16.gmra.mxu0 %v6411
      %v7284 = vpop.f32.mrf.mxu0
      %v7285 = vadd.f32 %v7271, %v7284
      %v7286 = vpop.f32.mrf.mxu0
      %v7287 = vadd.f32 %v7273, %v7286
      %7288 = vdwg.mxu0
      %7289 = vmatpush.bf16.msra.mxu0 %v7060
      %7290 = vmatpush.bf16.msra.mxu0 %v7056
      %7291 = vmatpush.bf16.msra.mxu0 %v7052
      %7292 = vmatpush.bf16.msra.mxu0 %v7048
      %7293 = vmatpush.bf16.msra.mxu0 %v7044
      %7294 = vmatpush.bf16.msra.mxu0 %v7040
      %7295 = vmatpush.bf16.msra.mxu0 %v7036
      %7296 = vmatpush.bf16.msra.mxu0 %v7032
      %7297 = vmatmul.bf16.gmra.mxu0 %v6412
      %v7298 = vpop.f32.mrf.mxu0
      %v7299 = vadd.f32 %v7285, %v7298
      %v7300 = vpop.f32.mrf.mxu0
      %v7301 = vadd.f32 %v7287, %v7300
      %7302 = vdwg.mxu0
      %7303 = vmatpush.bf16.msra.mxu0 %v6965
      %7304 = vmatpush.bf16.msra.mxu0 %v6961
      %7305 = vmatpush.bf16.msra.mxu0 %v6957
      %7306 = vmatpush.bf16.msra.mxu0 %v6953
      %7307 = vmatpush.bf16.msra.mxu0 %v6949
      %7308 = vmatpush.bf16.msra.mxu0 %v6945
      %7309 = vmatpush.bf16.msra.mxu0 %v6941
      %7310 = vmatpush.bf16.msra.mxu0 %v6937
      %7311 = vmatmul.bf16.gmra.mxu0 %v6409
      %v7312 = vpop.f32.mrf.mxu0
      %v7313 = vadd.f32 %v6545, %v7312
      %v7314 = vpop.f32.mrf.mxu0
      %v7315 = vadd.f32 %v6545, %v7314
      %7316 = vdwg.mxu0
      %7317 = vmatpush.bf16.msra.mxu0 %v6997
      %7318 = vmatpush.bf16.msra.mxu0 %v6993
      %7319 = vmatpush.bf16.msra.mxu0 %v6989
      %7320 = vmatpush.bf16.msra.mxu0 %v6985
      %7321 = vmatpush.bf16.msra.mxu0 %v6981
      %7322 = vmatpush.bf16.msra.mxu0 %v6977
      %7323 = vmatpush.bf16.msra.mxu0 %v6973
      %7324 = vmatpush.bf16.msra.mxu0 %v6969
      %7325 = vmatmul.bf16.gmra.mxu0 %v6410
      %v7326 = vpop.f32.mrf.mxu0
      %v7327 = vadd.f32 %v7313, %v7326
      %v7328 = vpop.f32.mrf.mxu0
      %v7329 = vadd.f32 %v7315, %v7328
      %7330 = vdwg.mxu0
      %7331 = vmatpush.bf16.msra.mxu0 %v7029
      %7332 = vmatpush.bf16.msra.mxu0 %v7025
      %7333 = vmatpush.bf16.msra.mxu0 %v7021
      %7334 = vmatpush.bf16.msra.mxu0 %v7017
      %7335 = vmatpush.bf16.msra.mxu0 %v7013
      %7336 = vmatpush.bf16.msra.mxu0 %v7009
      %7337 = vmatpush.bf16.msra.mxu0 %v7005
      %7338 = vmatpush.bf16.msra.mxu0 %v7001
      %7339 = vmatmul.bf16.gmra.mxu0 %v6411
      %v7340 = vpop.f32.mrf.mxu0
      %v7341 = vadd.f32 %v7327, %v7340
      %v7342 = vpop.f32.mrf.mxu0
      %v7343 = vadd.f32 %v7329, %v7342
      %7344 = vdwg.mxu0
      %7345 = vmatpush.bf16.msra.mxu0 %v7061
      %7346 = vmatpush.bf16.msra.mxu0 %v7057
      %7347 = vmatpush.bf16.msra.mxu0 %v7053
      %7348 = vmatpush.bf16.msra.mxu0 %v7049
      %7349 = vmatpush.bf16.msra.mxu0 %v7045
      %7350 = vmatpush.bf16.msra.mxu0 %v7041
      %7351 = vmatpush.bf16.msra.mxu0 %v7037
      %7352 = vmatpush.bf16.msra.mxu0 %v7033
      %7353 = vmatmul.bf16.gmra.mxu0 %v6412
      %v7354 = vpop.f32.mrf.mxu0
      %v7355 = vadd.f32 %v7341, %v7354
      %v7356 = vpop.f32.mrf.mxu0
      %v7357 = vadd.f32 %v7343, %v7356
      %7358 = vdwg.mxu0
      %7359 = vmatpush.bf16.msra.mxu0 %v6966
      %7360 = vmatpush.bf16.msra.mxu0 %v6962
      %7361 = vmatpush.bf16.msra.mxu0 %v6958
      %7362 = vmatpush.bf16.msra.mxu0 %v6954
      %7363 = vmatpush.bf16.msra.mxu0 %v6950
      %7364 = vmatpush.bf16.msra.mxu0 %v6946
      %7365 = vmatpush.bf16.msra.mxu0 %v6942
      %7366 = vmatpush.bf16.msra.mxu0 %v6938
      %7367 = vmatmul.bf16.gmra.mxu0 %v6409
      %v7368 = vpop.f32.mrf.mxu0
      %v7369 = vadd.f32 %v6546, %v7368
      %v7370 = vpop.f32.mrf.mxu0
      %v7371 = vadd.f32 %v6546, %v7370
      %7372 = vdwg.mxu0
      %7373 = vmatpush.bf16.msra.mxu0 %v6998
      %7374 = vmatpush.bf16.msra.mxu0 %v6994
      %7375 = vmatpush.bf16.msra.mxu0 %v6990
      %7376 = vmatpush.bf16.msra.mxu0 %v6986
      %7377 = vmatpush.bf16.msra.mxu0 %v6982
      %7378 = vmatpush.bf16.msra.mxu0 %v6978
      %7379 = vmatpush.bf16.msra.mxu0 %v6974
      %7380 = vmatpush.bf16.msra.mxu0 %v6970
      %7381 = vmatmul.bf16.gmra.mxu0 %v6410
      %v7382 = vpop.f32.mrf.mxu0
      %v7383 = vadd.f32 %v7369, %v7382
      %v7384 = vpop.f32.mrf.mxu0
      %v7385 = vadd.f32 %v7371, %v7384
      %7386 = vdwg.mxu0
      %7387 = vmatpush.bf16.msra.mxu0 %v7030
      %7388 = vmatpush.bf16.msra.mxu0 %v7026
      %7389 = vmatpush.bf16.msra.mxu0 %v7022
      %7390 = vmatpush.bf16.msra.mxu0 %v7018
      %7391 = vmatpush.bf16.msra.mxu0 %v7014
      %7392 = vmatpush.bf16.msra.mxu0 %v7010
      %7393 = vmatpush.bf16.msra.mxu0 %v7006
      %7394 = vmatpush.bf16.msra.mxu0 %v7002
      %7395 = vmatmul.bf16.gmra.mxu0 %v6411
      %v7396 = vpop.f32.mrf.mxu0
      %v7397 = vadd.f32 %v7383, %v7396
      %v7398 = vpop.f32.mrf.mxu0
      %v7399 = vadd.f32 %v7385, %v7398
      %7400 = vdwg.mxu0
      %7401 = vmatpush.bf16.msra.mxu0 %v7062
      %7402 = vmatpush.bf16.msra.mxu0 %v7058
      %7403 = vmatpush.bf16.msra.mxu0 %v7054
      %7404 = vmatpush.bf16.msra.mxu0 %v7050
      %7405 = vmatpush.bf16.msra.mxu0 %v7046
      %7406 = vmatpush.bf16.msra.mxu0 %v7042
      %7407 = vmatpush.bf16.msra.mxu0 %v7038
      %7408 = vmatpush.bf16.msra.mxu0 %v7034
      %7409 = vmatmul.bf16.gmra.mxu0 %v6412
      %v7410 = vpop.f32.mrf.mxu0
      %v7411 = vadd.f32 %v7397, %v7410
      %v7412 = vpop.f32.mrf.mxu0
      %v7413 = vadd.f32 %v7399, %v7412
      %7414 = vdwg.mxu0
      %v7415 = vmax.f32 %v7243, 0.0
      %v7416 = vmax.f32 %v7299, 0.0
      %v7417 = vmax.f32 %v7355, 0.0
      %v7418 = vmax.f32 %v7411, 0.0
      %v7419 = vmax.f32 %v7245, 0.0
      %v7420 = vmax.f32 %v7301, 0.0
      %v7421 = vmax.f32 %v7357, 0.0
      %v7422 = vmax.f32 %v7413, 0.0
      %v7423 = vpack.c.bf16 %v7419, %v7415
      %v7424 = vpack.c.bf16 %v7420, %v7416
      %v7425 = vpack.c.bf16 %v7421, %v7417
      %v7426 = vpack.c.bf16 %v7422, %v7418
      %v7427 = vld [vmem:[#allocation21] sm:$0xf]
      %v7428 = vld [vmem:[#allocation21 + $0x4] sm:$0xf]
      %v7429 = vld [vmem:[#allocation21 + $0x8] sm:$0xf]
      %v7430 = vld [vmem:[#allocation21 + $0xc] sm:$0xf]
      %v7431 = vld [vmem:[#allocation21 + $0x10] sm:$0xf]
      %v7432 = vld [vmem:[#allocation21 + $0x14] sm:$0xf]
      %v7433 = vld [vmem:[#allocation21 + $0x18] sm:$0xf]
      %v7434 = vld [vmem:[#allocation21 + $0x1c] sm:$0xf]
      %v7435 = vld [vmem:[#allocation21 + $0x20] sm:$0xf]
      %v7436 = vld [vmem:[#allocation21 + $0x24] sm:$0xf]
      %v7437 = vld [vmem:[#allocation21 + $0x28] sm:$0xf]
      %v7438 = vld [vmem:[#allocation21 + $0x2c] sm:$0xf]
      %v7439 = vld [vmem:[#allocation21 + $0x30] sm:$0xf]
      %v7440 = vld [vmem:[#allocation21 + $0x34] sm:$0xf]
      %v7441 = vld [vmem:[#allocation21 + $0x38] sm:$0xf]
      %v7442 = vld [vmem:[#allocation21 + $0x3c] sm:$0xf]
      %v7443 = vld [vmem:[#allocation21 + $0x40] sm:$0xf]
      %v7444 = vld [vmem:[#allocation21 + $0x44] sm:$0xf]
      %v7445 = vld [vmem:[#allocation21 + $0x48] sm:$0xf]
      %v7446 = vld [vmem:[#allocation21 + $0x4c] sm:$0xf]
      %v7447 = vld [vmem:[#allocation21 + $0x50] sm:$0xf]
      %v7448 = vld [vmem:[#allocation21 + $0x54] sm:$0xf]
      %v7449 = vld [vmem:[#allocation21 + $0x58] sm:$0xf]
      %v7450 = vld [vmem:[#allocation21 + $0x5c] sm:$0xf]
      %v7451 = vld [vmem:[#allocation21 + $0x60] sm:$0xf]
      %v7452 = vld [vmem:[#allocation21 + $0x64] sm:$0xf]
      %v7453 = vld [vmem:[#allocation21 + $0x68] sm:$0xf]
      %v7454 = vld [vmem:[#allocation21 + $0x6c] sm:$0xf]
      %v7455 = vld [vmem:[#allocation21 + $0x70] sm:$0xf]
      %v7456 = vld [vmem:[#allocation21 + $0x74] sm:$0xf]
      %v7457 = vld [vmem:[#allocation21 + $0x78] sm:$0xf]
      %v7458 = vld [vmem:[#allocation21 + $0x7c] sm:$0xf]
      %v7459 = vld [vmem:[#allocation21 + $0x80] sm:$0xf]
      %v7460 = vld [vmem:[#allocation21 + $0x84] sm:$0xf]
      %v7461 = vld [vmem:[#allocation21 + $0x88] sm:$0xf]
      %v7462 = vld [vmem:[#allocation21 + $0x8c] sm:$0xf]
      %v7463 = vld [vmem:[#allocation21 + $0x90] sm:$0xf]
      %v7464 = vld [vmem:[#allocation21 + $0x94] sm:$0xf]
      %v7465 = vld [vmem:[#allocation21 + $0x98] sm:$0xf]
      %v7466 = vld [vmem:[#allocation21 + $0x9c] sm:$0xf]
      %v7467 = vld [vmem:[#allocation21 + $0xa0] sm:$0xf]
      %v7468 = vld [vmem:[#allocation21 + $0xa4] sm:$0xf]
      %v7469 = vld [vmem:[#allocation21 + $0xa8] sm:$0xf]
      %v7470 = vld [vmem:[#allocation21 + $0xac] sm:$0xf]
      %v7471 = vld [vmem:[#allocation21 + $0xb0] sm:$0xf]
      %v7472 = vld [vmem:[#allocation21 + $0xb4] sm:$0xf]
      %v7473 = vld [vmem:[#allocation21 + $0xb8] sm:$0xf]
      %v7474 = vld [vmem:[#allocation21 + $0xbc] sm:$0xf]
      %v7475 = vld [vmem:[#allocation21 + $0xc0] sm:$0xf]
      %v7476 = vld [vmem:[#allocation21 + $0xc4] sm:$0xf]
      %v7477 = vld [vmem:[#allocation21 + $0xc8] sm:$0xf]
      %v7478 = vld [vmem:[#allocation21 + $0xcc] sm:$0xf]
      %v7479 = vld [vmem:[#allocation21 + $0xd0] sm:$0xf]
      %v7480 = vld [vmem:[#allocation21 + $0xd4] sm:$0xf]
      %v7481 = vld [vmem:[#allocation21 + $0xd8] sm:$0xf]
      %v7482 = vld [vmem:[#allocation21 + $0xdc] sm:$0xf]
      %v7483 = vld [vmem:[#allocation21 + $0xe0] sm:$0xf]
      %v7484 = vld [vmem:[#allocation21 + $0xe4] sm:$0xf]
      %v7485 = vld [vmem:[#allocation21 + $0xe8] sm:$0xf]
      %v7486 = vld [vmem:[#allocation21 + $0xec] sm:$0xf]
      %v7487 = vld [vmem:[#allocation21 + $0xf0] sm:$0xf]
      %v7488 = vld [vmem:[#allocation21 + $0xf4] sm:$0xf]
      %v7489 = vld [vmem:[#allocation21 + $0xf8] sm:$0xf]
      %v7490 = vld [vmem:[#allocation21 + $0xfc] sm:$0xf]
      %v7491 = vld [vmem:[%s14] sm:$0x1]
      %v7493 = vperm.slane %v7491, 0
      %v7559 = vunpack.c.l.b16 %v7427
      %v7560 = vunpack.c.l.b16 %v7428
      %v7561 = vunpack.c.l.b16 %v7429
      %v7562 = vunpack.c.l.b16 %v7430
      %v7563 = vunpack.c.l.b16 %v7431
      %v7564 = vunpack.c.l.b16 %v7432
      %v7565 = vunpack.c.l.b16 %v7433
      %v7566 = vunpack.c.l.b16 %v7434
      %v7567 = vunpack.c.l.b16 %v7435
      %v7568 = vunpack.c.l.b16 %v7436
      %v7569 = vunpack.c.l.b16 %v7437
      %v7570 = vunpack.c.l.b16 %v7438
      %v7571 = vunpack.c.l.b16 %v7439
      %v7572 = vunpack.c.l.b16 %v7440
      %v7573 = vunpack.c.l.b16 %v7441
      %v7574 = vunpack.c.l.b16 %v7442
      %v7575 = vunpack.c.l.b16 %v7443
      %v7576 = vunpack.c.l.b16 %v7444
      %v7577 = vunpack.c.l.b16 %v7445
      %v7578 = vunpack.c.l.b16 %v7446
      %v7579 = vunpack.c.l.b16 %v7447
      %v7580 = vunpack.c.l.b16 %v7448
      %v7581 = vunpack.c.l.b16 %v7449
      %v7582 = vunpack.c.l.b16 %v7450
      %v7583 = vunpack.c.l.b16 %v7451
      %v7584 = vunpack.c.l.b16 %v7452
      %v7585 = vunpack.c.l.b16 %v7453
      %v7586 = vunpack.c.l.b16 %v7454
      %v7587 = vunpack.c.l.b16 %v7455
      %v7588 = vunpack.c.l.b16 %v7456
      %v7589 = vunpack.c.l.b16 %v7457
      %v7590 = vunpack.c.l.b16 %v7458
      %v7591 = vunpack.c.l.b16 %v7459
      %v7592 = vunpack.c.l.b16 %v7460
      %v7593 = vunpack.c.l.b16 %v7461
      %v7594 = vunpack.c.l.b16 %v7462
      %v7595 = vunpack.c.l.b16 %v7463
      %v7596 = vunpack.c.l.b16 %v7464
      %v7597 = vunpack.c.l.b16 %v7465
      %v7598 = vunpack.c.l.b16 %v7466
      %v7599 = vunpack.c.l.b16 %v7467
      %v7600 = vunpack.c.l.b16 %v7468
      %v7601 = vunpack.c.l.b16 %v7469
      %v7602 = vunpack.c.l.b16 %v7470
      %v7603 = vunpack.c.l.b16 %v7471
      %v7604 = vunpack.c.l.b16 %v7472
      %v7605 = vunpack.c.l.b16 %v7473
      %v7606 = vunpack.c.l.b16 %v7474
      %v7607 = vunpack.c.l.b16 %v7475
      %v7608 = vunpack.c.l.b16 %v7476
      %v7609 = vunpack.c.l.b16 %v7477
      %v7610 = vunpack.c.l.b16 %v7478
      %v7611 = vunpack.c.l.b16 %v7479
      %v7612 = vunpack.c.l.b16 %v7480
      %v7613 = vunpack.c.l.b16 %v7481
      %v7614 = vunpack.c.l.b16 %v7482
      %v7615 = vunpack.c.l.b16 %v7483
      %v7616 = vunpack.c.l.b16 %v7484
      %v7617 = vunpack.c.l.b16 %v7485
      %v7618 = vunpack.c.l.b16 %v7486
      %v7619 = vunpack.c.l.b16 %v7487
      %v7620 = vunpack.c.l.b16 %v7488
      %v7621 = vunpack.c.l.b16 %v7489
      %v7622 = vunpack.c.l.b16 %v7490
      %v7623 = vpack.c.b16 %v7560, %v7559
      %v7624 = vpack.c.b16 %v7562, %v7561
      %v7625 = vpack.c.b16 %v7564, %v7563
      %v7626 = vpack.c.b16 %v7566, %v7565
      %v7627 = vpack.c.b16 %v7568, %v7567
      %v7628 = vpack.c.b16 %v7570, %v7569
      %v7629 = vpack.c.b16 %v7572, %v7571
      %v7630 = vpack.c.b16 %v7574, %v7573
      %v7631 = vpack.c.b16 %v7576, %v7575
      %v7632 = vpack.c.b16 %v7578, %v7577
      %v7633 = vpack.c.b16 %v7580, %v7579
      %v7634 = vpack.c.b16 %v7582, %v7581
      %v7635 = vpack.c.b16 %v7584, %v7583
      %v7636 = vpack.c.b16 %v7586, %v7585
      %v7637 = vpack.c.b16 %v7588, %v7587
      %v7638 = vpack.c.b16 %v7590, %v7589
      %v7639 = vpack.c.b16 %v7592, %v7591
      %v7640 = vpack.c.b16 %v7594, %v7593
      %v7641 = vpack.c.b16 %v7596, %v7595
      %v7642 = vpack.c.b16 %v7598, %v7597
      %v7643 = vpack.c.b16 %v7600, %v7599
      %v7644 = vpack.c.b16 %v7602, %v7601
      %v7645 = vpack.c.b16 %v7604, %v7603
      %v7646 = vpack.c.b16 %v7606, %v7605
      %v7647 = vpack.c.b16 %v7608, %v7607
      %v7648 = vpack.c.b16 %v7610, %v7609
      %v7649 = vpack.c.b16 %v7612, %v7611
      %v7650 = vpack.c.b16 %v7614, %v7613
      %v7651 = vpack.c.b16 %v7616, %v7615
      %v7652 = vpack.c.b16 %v7618, %v7617
      %v7653 = vpack.c.b16 %v7620, %v7619
      %v7654 = vpack.c.b16 %v7622, %v7621
      %7687 = vmatpush.bf16.msra.mxu0 %v7630
      %7688 = vmatpush.bf16.msra.mxu0 %v7629
      %7689 = vmatpush.bf16.msra.mxu0 %v7628
      %7690 = vmatpush.bf16.msra.mxu0 %v7627
      %7691 = vmatpush.bf16.msra.mxu0 %v7626
      %7692 = vmatpush.bf16.msra.mxu0 %v7625
      %7693 = vmatpush.bf16.msra.mxu0 %v7624
      %7694 = vmatpush.bf16.msra.mxu0 %v7623
      %7695 = vmatmul.bf16.gmra.mxu0 %v7423
      %v7696 = vpop.f32.mrf.mxu0
      %v7697 = vadd.f32 %v7493, %v7696
      %v7698 = vpop.f32.mrf.mxu0
      %v7699 = vadd.f32 %v7493, %v7698
      %7700 = vdwg.mxu0
      %7701 = vmatpush.bf16.msra.mxu0 %v7638
      %7702 = vmatpush.bf16.msra.mxu0 %v7637
      %7703 = vmatpush.bf16.msra.mxu0 %v7636
      %7704 = vmatpush.bf16.msra.mxu0 %v7635
      %7705 = vmatpush.bf16.msra.mxu0 %v7634
      %7706 = vmatpush.bf16.msra.mxu0 %v7633
      %7707 = vmatpush.bf16.msra.mxu0 %v7632
      %7708 = vmatpush.bf16.msra.mxu0 %v7631
      %7709 = vmatmul.bf16.gmra.mxu0 %v7424
      %v7710 = vpop.f32.mrf.mxu0
      %v7711 = vadd.f32 %v7697, %v7710
      %v7712 = vpop.f32.mrf.mxu0
      %v7713 = vadd.f32 %v7699, %v7712
      %7714 = vdwg.mxu0
      %7715 = vmatpush.bf16.msra.mxu0 %v7646
      %7716 = vmatpush.bf16.msra.mxu0 %v7645
      %7717 = vmatpush.bf16.msra.mxu0 %v7644
      %7718 = vmatpush.bf16.msra.mxu0 %v7643
      %7719 = vmatpush.bf16.msra.mxu0 %v7642
      %7720 = vmatpush.bf16.msra.mxu0 %v7641
      %7721 = vmatpush.bf16.msra.mxu0 %v7640
      %7722 = vmatpush.bf16.msra.mxu0 %v7639
      %7723 = vmatmul.bf16.gmra.mxu0 %v7425
      %v7724 = vpop.f32.mrf.mxu0
      %v7725 = vadd.f32 %v7711, %v7724
      %v7726 = vpop.f32.mrf.mxu0
      %v7727 = vadd.f32 %v7713, %v7726
      %7728 = vdwg.mxu0
      %7729 = vmatpush.bf16.msra.mxu0 %v7654
      %7730 = vmatpush.bf16.msra.mxu0 %v7653
      %7731 = vmatpush.bf16.msra.mxu0 %v7652
      %7732 = vmatpush.bf16.msra.mxu0 %v7651
      %7733 = vmatpush.bf16.msra.mxu0 %v7650
      %7734 = vmatpush.bf16.msra.mxu0 %v7649
      %7735 = vmatpush.bf16.msra.mxu0 %v7648
      %7736 = vmatpush.bf16.msra.mxu0 %v7647
      %7737 = vmatmul.bf16.gmra.mxu0 %v7426
      %v7738 = vpop.f32.mrf.mxu0
      %v7739 = vadd.f32 %v7725, %v7738
      %v7740 = vpop.f32.mrf.mxu0
      %v7741 = vadd.f32 %v7727, %v7740
      %7742 = vdwg.mxu0
      %v7743 = vlaneseq
      %v7744 = vand.u32 %v7743, 127
      %vm7745 = vcmp.lt.s32.totalorder %v7744, 16
      %v7746 = vxor.u32 %v7739, 2147483648
      %v7747 = vxor.u32 %v7741, 2147483648
      %v7748 = vmul.f32 %v7746, 1.442695
      %v7749 = vpow.pop %v7748
      %v7750 = vmul.f32 %v7747, 1.442695
      %v7751 = vpow.pop %v7750
      %v7752 = vadd.f32 %v7749, 1.0
      %v7753 = vadd.f32 %v7751, 1.0
      %v7754 = vrcp.pop %v7752
      %v7755 = vmul.f32 %v7752, %v7754
      %v7756 = vsub.f32 1.0, %v7755
      %v7757 = vmul.f32 %v7754, %v7756
      %v7758 = vadd.f32 %v7754, %v7757
      %vm7759 = vweird.f32 %v7752
      %vm7760 = vweird.f32 %v7754
      %vm7761 = vmor %vm7759, %vm7760
      %v7762 = vsel %vm7761, %v7754, %v7758
      %v7763 = vand.u32 2147483647, %v7752
      %vm7764 = vcmp.eq.f32.partialorder %v7763, 8.507059e+37
      %v7765 = vand.u32 %v7752, 2147483648
      %v7766 = vor.u32 1.1754944e-38, %v7765
      %v7767 = vsel %vm7764, %v7766, %v7762
      %v7768 = vmul.f32 1.0, %v7767
      %v7769 = vrcp.pop %v7753
      %v7770 = vmul.f32 %v7753, %v7769
      %v7771 = vsub.f32 1.0, %v7770
      %v7772 = vmul.f32 %v7769, %v7771
      %v7773 = vadd.f32 %v7769, %v7772
      %vm7774 = vweird.f32 %v7753
      %vm7775 = vweird.f32 %v7769
      %vm7776 = vmor %vm7774, %vm7775
      %v7777 = vsel %vm7776, %v7769, %v7773
      %v7778 = vand.u32 2147483647, %v7753
      %vm7779 = vcmp.eq.f32.partialorder %v7778, 8.507059e+37
      %v7780 = vand.u32 %v7753, 2147483648
      %v7781 = vor.u32 1.1754944e-38, %v7780
      %v7782 = vsel %vm7779, %v7781, %v7777
      %v7783 = vmul.f32 1.0, %v7782
      %v7784 = vsel %vm7745, %v7768, 0.0
      %v7785 = vsel %vm7745, %v7783, 0.0
      %7786 = vadd.xlane.f32.xlu0 %v7784
      %v7787 = vpop.xlane.xlu0 %7786
      %7788 = vadd.xlane.f32.xlu0 %v7785
      %v7789 = vpop.xlane.xlu0 %7788
      %v7790 = vrcp.pop %v7787
      %v7791 = vmul.f32 %v7787, %v7790
      %v7792 = vsub.f32 1.0, %v7791
      %v7793 = vmul.f32 %v7790, %v7792
      %v7794 = vadd.f32 %v7790, %v7793
      %vm7795 = vweird.f32 %v7787
      %vm7796 = vweird.f32 %v7790
      %vm7797 = vmor %vm7795, %vm7796
      %v7798 = vsel %vm7797, %v7790, %v7794
      %v7799 = vand.u32 2147483647, %v7787
      %vm7800 = vcmp.eq.f32.partialorder %v7799, 8.507059e+37
      %v7801 = vand.u32 %v7787, 2147483648
      %v7802 = vor.u32 1.1754944e-38, %v7801
      %v7803 = vsel %vm7800, %v7802, %v7798
      %v7804 = vrcp.pop %v7789
      %v7805 = vmul.f32 %v7789, %v7804
      %v7806 = vsub.f32 1.0, %v7805
      %v7807 = vmul.f32 %v7804, %v7806
      %v7808 = vadd.f32 %v7804, %v7807
      %vm7809 = vweird.f32 %v7789
      %vm7810 = vweird.f32 %v7804
      %vm7811 = vmor %vm7809, %vm7810
      %v7812 = vsel %vm7811, %v7804, %v7808
      %v7813 = vand.u32 2147483647, %v7789
      %vm7814 = vcmp.eq.f32.partialorder %v7813, 8.507059e+37
      %v7815 = vand.u32 %v7789, 2147483648
      %v7816 = vor.u32 1.1754944e-38, %v7815
      %v7817 = vsel %vm7814, %v7816, %v7812
      %v7818 = vmul.f32 %v7784, %v7803
      %v7819 = vmul.f32 %v7785, %v7817
      %v7820 = vmul.f32 %v7818, 6.2831855
      %v7821 = vmul.f32 %v7819, 6.2831855
      %v7822 = vld [vmem:[#allocation23] sm:$0xff]
      %v7823 = vld [vmem:[#allocation23 + $0x8] sm:$0xff]
      %v7824 = vld [vmem:[#allocation23 + $0x10] sm:$0xff]
      %v7825 = vld [vmem:[#allocation23 + $0x18] sm:$0xff]
      %v7826 = vld [vmem:[#allocation23 + $0x20] sm:$0xff]
      %v7827 = vld [vmem:[#allocation23 + $0x28] sm:$0xff]
      %v7828 = vld [vmem:[#allocation23 + $0x30] sm:$0xff]
      %v7829 = vld [vmem:[#allocation23 + $0x38] sm:$0xff]
      %v7830 = vld [vmem:[#allocation23 + $0x40] sm:$0xff]
      %v7831 = vld [vmem:[#allocation23 + $0x48] sm:$0xff]
      %v7832 = vld [vmem:[#allocation23 + $0x50] sm:$0xff]
      %v7833 = vld [vmem:[#allocation23 + $0x58] sm:$0xff]
      %v7834 = vld [vmem:[#allocation23 + $0x60] sm:$0xff]
      %v7835 = vld [vmem:[#allocation23 + $0x68] sm:$0xff]
      %v7836 = vld [vmem:[#allocation23 + $0x70] sm:$0xff]
      %v7837 = vld [vmem:[#allocation23 + $0x78] sm:$0xff]
      %7838 = vmatpush.msra.mxu0 %v7837
      %7839 = vmatpush.msra.mxu0 %v7836
      %7840 = vmatpush.msra.mxu0 %v7835
      %7841 = vmatpush.msra.mxu0 %v7834
      %7842 = vmatpush.msra.mxu0 %v7833
      %7843 = vmatpush.msra.mxu0 %v7832
      %7844 = vmatpush.msra.mxu0 %v7831
      %7845 = vmatpush.msra.mxu0 %v7830
      %7846 = vmatpush.msra.mxu0 %v7829
      %7847 = vmatpush.msra.mxu0 %v7828
      %7848 = vmatpush.msra.mxu0 %v7827
      %7849 = vmatpush.msra.mxu0 %v7826
      %7850 = vmatpush.msra.mxu0 %v7825
      %7851 = vmatpush.msra.mxu0 %v7824
      %7852 = vmatpush.msra.mxu0 %v7823
      %7853 = vmatpush.msra.mxu0 %v7822
      %7854 = vmatmul.f32.gmra.mxu0 %v7820
      %v7855 = vpop.f32.mrf.mxu0
      %v7856 = vadd.f32 0.0, %v7855
      %7857 = vmatmul.f32.gmra.mxu0 %v7821
      %v7858 = vpop.f32.mrf.mxu0
      %v7859 = vadd.f32 0.0, %v7858
      %7860 = vdwg.mxu0
      %7861 = vst [vmem:[#allocation24] sm:$0xff] %v7820
      %7862 = vst [vmem:[#allocation24 + $0x18] sm:$0xff] %v7821
      %v7863 = vand.u32 2147483647, %v7856
      %vm7864 = vcmp.le.f32.partialorder %v7863, 0.7853982
      %vm7865 = vcmp.lt.s32.totalorder %v7856, 0
      %v7866 = vand.u32 %v7856, 2139095040
      %v7867 = vshrl.u32 %v7866, 23
      %v7868 = vsub.s32 %v7867, 127
      %v7869 = vand.u32 2147483647, %v7856
      %v7870 = vand.u32 %v7869, 8388607
      %v7871 = vor.u32 %v7870, 8388608
      %v7872 = vsub.s32 0, %v7871
      %v7873 = vadd.s32 %v7868, 1
      %vm7874 = vcmp.gt.s32.totalorder %v7873, 0
      %v7875 = vsel %vm7874, %v7873, 0
      %v7876 = vshrl.u32 %v7875, 5
      %v7877 = vand.u32 %v7875, 31
      %v7878 = vsub.s32 32, %v7877
      %v7879 = vshrl.u32 683565275, %v7878
      %v7880 = vshll.u32 683565275, %v7877
      %v7881 = vshrl.u32 2475754826, %v7878
      %v7882 = vor.u32 %v7880, %v7881
      %v7883 = vshll.u32 2475754826, %v7877
      %v7884 = vshrl.u32 2131351028, %v7878
      %v7885 = vor.u32 %v7883, %v7884
      %v7886 = vshll.u32 2131351028, %v7877
      %v7887 = vshrl.u32 2102212464, %v7878
      %v7888 = vor.u32 %v7886, %v7887
      %v7889 = vshll.u32 2102212464, %v7877
      %v7890 = vshrl.u32 920167782, %v7878
      %v7891 = vor.u32 %v7889, %v7890
      %v7892 = vshll.u32 920167782, %v7877
      %v7893 = vshrl.u32 1326507024, %v7878
      %v7894 = vor.u32 %v7892, %v7893
      %vm7895 = vcmp.lt.s32.totalorder %v7876, 1
      %vm7896 = vcmp.lt.s32.totalorder %v7876, 2
      %vm7897 = vcmp.lt.s32.totalorder %v7876, 3
      %vm7898 = vcmp.lt.s32.totalorder %v7876, 4
      %v7899 = vsel %vm7895, %v7879, %v7882
      %v7900 = vsel %vm7898, %v7888, 2102212464
      %v7901 = vsel %vm7897, %v7885, %v7900
      %v7902 = vsel %vm7896, %v7899, %v7901
      %v7903 = vsel %vm7895, %v7882, %v7885
      %v7904 = vsel %vm7898, %v7891, 920167782
      %v7905 = vsel %vm7897, %v7888, %v7904
      %v7906 = vsel %vm7896, %v7903, %v7905
      %v7907 = vsel %vm7895, %v7885, %v7888
      %v7908 = vsel %vm7898, %v7894, 1326507024
      %v7909 = vsel %vm7897, %v7891, %v7908
      %v7910 = vsel %vm7896, %v7907, %v7909
      %v7911 = vshll.u32 %v7871, 8
      %v7912 = vand.u32 %v7911, 65535
      %v7913 = vshrl.u32 %v7911, 16
      %v7914 = vand.u32 %v7910, 65535
      %v7915 = vshrl.u32 %v7910, 16
      %v7916 = vmul.u32 %v7912, %v7914
      %v7917 = vmul.u32 %v7912, %v7915
      %v7918 = vmul.u32 %v7913, %v7914
      %v7919 = vmul.u32 %v7913, %v7915
      %v7920 = vshll.u32 %v7917, 16
      %v7921 = vshrl.u32 %v7917, 16
      %v7922 = vshll.u32 %v7918, 16
      %v7923 = vshrl.u32 %v7918, 16
      %vm7924 = vc.u32 %v7916, %v7920
      %v7925 = vsel %vm7924, 1, 0
      %v7926 = vadd.s32 %v7916, %v7920
      %v7927 = vadd.s32 %v7919, %v7925
      %vm7928 = vc.u32 %v7926, %v7922
      %v7929 = vsel %vm7928, 1, 0
      %v7930 = vadd.s32 %v7926, %v7922
      %v7931 = vadd.s32 %v7927, %v7929
      %v7932 = vadd.s32 %v7931, %v7921
      %v7933 = vadd.s32 %v7932, %v7923
      %v7934 = vand.u32 %v7911, 65535
      %v7935 = vshrl.u32 %v7911, 16
      %v7936 = vand.u32 %v7906, 65535
      %v7937 = vshrl.u32 %v7906, 16
      %v7938 = vmul.u32 %v7934, %v7936
      %v7939 = vmul.u32 %v7934, %v7937
      %v7940 = vmul.u32 %v7935, %v7936
      %v7941 = vmul.u32 %v7935, %v7937
      %v7942 = vshll.u32 %v7939, 16
      %v7943 = vshrl.u32 %v7939, 16
      %v7944 = vshll.u32 %v7940, 16
      %v7945 = vshrl.u32 %v7940, 16
      %vm7946 = vc.u32 %v7938, %v7942
      %v7947 = vsel %vm7946, 1, 0
      %v7948 = vadd.s32 %v7938, %v7942
      %v7949 = vadd.s32 %v7941, %v7947
      %vm7950 = vc.u32 %v7948, %v7944
      %v7951 = vsel %vm7950, 1, 0
      %v7952 = vadd.s32 %v7948, %v7944
      %v7953 = vadd.s32 %v7949, %v7951
      %v7954 = vadd.s32 %v7953, %v7943
      %v7955 = vadd.s32 %v7954, %v7945
      %v7956 = vmul.u32 %v7911, %v7902
      %v7957 = vadd.s32 %v7933, %v7952
      %vm7958 = vc.u32 %v7933, %v7952
      %v7959 = vadd.s32 %v7955, 1
      %v7960 = vsel %vm7958, %v7959, %v7955
      %v7961 = vadd.s32 %v7956, %v7960
      %v7962 = vadd.s32 %v7961, 536870912
      %v7963 = vshrl.u32 %v7962, 30
      %v7964 = vshll.u32 %v7963, 30
      %v7965 = vsub.s32 %v7961, %v7964
      %vm7966 = vcmp.lt.s32.totalorder %v7965, 0
      %v7967 = vsub.s32 0, %v7965
      %v7968 = vsel %vm7966, %v7967, %v7965
      %v7969 = vclz %v7968
      %v7970 = vsub.s32 %v7969, 2
      %vm7971 = vcmp.gt.s32.totalorder 0, %v7970
      %v7972 = vsel %vm7971, 0, %v7970
      %v7973 = vsub.s32 32, %v7972
      %v7974 = vshll.u32 %v7965, %v7972
      %v7975 = vshrl.u32 %v7957, %v7973
      %v7976 = vor.u32 %v7974, %v7975
      %v7977 = vsub.s32 4294967266, %v7972
      %v7978 = vadd.s32 %v7977, 127
      %v7979 = vshll.u32 %v7978, 23
      %v7980 = vor.u32 4788187, %v7979
      %v7981 = vand.u32 2147483647, %v7980
      %v7983 = vcvt.s32.f32 %v7976
      %v7984 = vmul.f32 %v7983, %v7981
      %v7985 = vxor.u32 %v7984, 2147483648
      %v7986 = vsel %vm7865, %v7985, %v7984
      %v7987 = vsub.s32 4, %v7963
      %v7988 = vsel %vm7865, %v7987, %v7963
      %v7989 = vsel %vm7864, %v7856, %v7986
      %v7990 = vsel %vm7864, 0, %v7988
      %v7991 = vmul.f32 %v7989, %v7989
      %v7992 = vmul.f32 %v7991, -0.001358992
      %v7993 = vadd.f32 %v7992, 0.041655596
      %v7994 = vmul.f32 %v7991, %v7993
      %v7995 = vadd.f32 %v7994, -0.4999988
      %v7996 = vmul.f32 %v7991, %v7995
      %v7997 = vadd.f32 1.0, %v7996
      %v7998 = vmul.f32 %v7989, %v7989
      %v7999 = vmul.f32 %v7998, -0.00019511016
      %v8000 = vadd.f32 %v7999, 0.008332121
      %v8001 = vmul.f32 %v7998, %v8000
      %v8002 = vadd.f32 %v8001, -0.16666654
      %v8003 = vmul.f32 %v7998, %v8002
      %v8004 = vadd.f32 %v8003, 1.0
      %v8005 = vmul.f32 %v8004, %v7989
      %vm8006 = vweird.f32 %v7856
      %v8007 = vand.u32 %v7990, 3
      %vm8008 = vcmp.lt.s32.totalorder %v8007, 2
      %vm8009 = vcmp.eq.s32.totalorder %v8007, 0
      %v8010 = vxor.u32 %v8005, 2147483648
      %v8011 = vsel %vm8009, %v7997, %v8010
      %vm8012 = vcmp.eq.s32.totalorder %v8007, 2
      %v8013 = vxor.u32 %v7997, 2147483648
      %v8014 = vsel %vm8012, %v8013, %v8005
      %v8015 = vsel %vm8008, %v8011, %v8014
      %v8016 = vsel %vm8006, nan, %v8015
      %v8017 = vand.u32 2147483647, %v7859
      %vm8018 = vcmp.le.f32.partialorder %v8017, 0.7853982
      %vm8019 = vcmp.lt.s32.totalorder %v7859, 0
      %v8020 = vand.u32 %v7859, 2139095040
      %v8021 = vshrl.u32 %v8020, 23
      %v8022 = vsub.s32 %v8021, 127
      %v8023 = vand.u32 2147483647, %v7859
      %v8024 = vand.u32 %v8023, 8388607
      %v8025 = vor.u32 %v8024, 8388608
      %v8026 = vsub.s32 0, %v8025
      %v8027 = vadd.s32 %v8022, 1
      %vm8028 = vcmp.gt.s32.totalorder %v8027, 0
      %v8029 = vsel %vm8028, %v8027, 0
      %v8030 = vshrl.u32 %v8029, 5
      %v8031 = vand.u32 %v8029, 31
      %v8032 = vsub.s32 32, %v8031
      %v8033 = vshrl.u32 683565275, %v8032
      %v8034 = vshll.u32 683565275, %v8031
      %v8035 = vshrl.u32 2475754826, %v8032
      %v8036 = vor.u32 %v8034, %v8035
      %v8037 = vshll.u32 2475754826, %v8031
      %v8038 = vshrl.u32 2131351028, %v8032
      %v8039 = vor.u32 %v8037, %v8038
      %v8040 = vshll.u32 2131351028, %v8031
      %v8041 = vshrl.u32 2102212464, %v8032
      %v8042 = vor.u32 %v8040, %v8041
      %v8043 = vshll.u32 2102212464, %v8031
      %v8044 = vshrl.u32 920167782, %v8032
      %v8045 = vor.u32 %v8043, %v8044
      %v8046 = vshll.u32 920167782, %v8031
      %v8047 = vshrl.u32 1326507024, %v8032
      %v8048 = vor.u32 %v8046, %v8047
      %vm8049 = vcmp.lt.s32.totalorder %v8030, 1
      %vm8050 = vcmp.lt.s32.totalorder %v8030, 2
      %vm8051 = vcmp.lt.s32.totalorder %v8030, 3
      %vm8052 = vcmp.lt.s32.totalorder %v8030, 4
      %v8053 = vsel %vm8049, %v8033, %v8036
      %v8054 = vsel %vm8052, %v8042, 2102212464
      %v8055 = vsel %vm8051, %v8039, %v8054
      %v8056 = vsel %vm8050, %v8053, %v8055
      %v8057 = vsel %vm8049, %v8036, %v8039
      %v8058 = vsel %vm8052, %v8045, 920167782
      %v8059 = vsel %vm8051, %v8042, %v8058
      %v8060 = vsel %vm8050, %v8057, %v8059
      %v8061 = vsel %vm8049, %v8039, %v8042
      %v8062 = vsel %vm8052, %v8048, 1326507024
      %v8063 = vsel %vm8051, %v8045, %v8062
      %v8064 = vsel %vm8050, %v8061, %v8063
      %v8065 = vshll.u32 %v8025, 8
      %v8066 = vand.u32 %v8065, 65535
      %v8067 = vshrl.u32 %v8065, 16
      %v8068 = vand.u32 %v8064, 65535
      %v8069 = vshrl.u32 %v8064, 16
      %v8070 = vmul.u32 %v8066, %v8068
      %v8071 = vmul.u32 %v8066, %v8069
      %v8072 = vmul.u32 %v8067, %v8068
      %v8073 = vmul.u32 %v8067, %v8069
      %v8074 = vshll.u32 %v8071, 16
      %v8075 = vshrl.u32 %v8071, 16
      %v8076 = vshll.u32 %v8072, 16
      %v8077 = vshrl.u32 %v8072, 16
      %vm8078 = vc.u32 %v8070, %v8074
      %v8079 = vsel %vm8078, 1, 0
      %v8080 = vadd.s32 %v8070, %v8074
      %v8081 = vadd.s32 %v8073, %v8079
      %vm8082 = vc.u32 %v8080, %v8076
      %v8083 = vsel %vm8082, 1, 0
      %v8084 = vadd.s32 %v8080, %v8076
      %v8085 = vadd.s32 %v8081, %v8083
      %v8086 = vadd.s32 %v8085, %v8075
      %v8087 = vadd.s32 %v8086, %v8077
      %v8088 = vand.u32 %v8065, 65535
      %v8089 = vshrl.u32 %v8065, 16
      %v8090 = vand.u32 %v8060, 65535
      %v8091 = vshrl.u32 %v8060, 16
      %v8092 = vmul.u32 %v8088, %v8090
      %v8093 = vmul.u32 %v8088, %v8091
      %v8094 = vmul.u32 %v8089, %v8090
      %v8095 = vmul.u32 %v8089, %v8091
      %v8096 = vshll.u32 %v8093, 16
      %v8097 = vshrl.u32 %v8093, 16
      %v8098 = vshll.u32 %v8094, 16
      %v8099 = vshrl.u32 %v8094, 16
      %vm8100 = vc.u32 %v8092, %v8096
      %v8101 = vsel %vm8100, 1, 0
      %v8102 = vadd.s32 %v8092, %v8096
      %v8103 = vadd.s32 %v8095, %v8101
      %vm8104 = vc.u32 %v8102, %v8098
      %v8105 = vsel %vm8104, 1, 0
      %v8106 = vadd.s32 %v8102, %v8098
      %v8107 = vadd.s32 %v8103, %v8105
      %v8108 = vadd.s32 %v8107, %v8097
      %v8109 = vadd.s32 %v8108, %v8099
      %v8110 = vmul.u32 %v8065, %v8056
      %v8111 = vadd.s32 %v8087, %v8106
      %vm8112 = vc.u32 %v8087, %v8106
      %v8113 = vadd.s32 %v8109, 1
      %v8114 = vsel %vm8112, %v8113, %v8109
      %v8115 = vadd.s32 %v8110, %v8114
      %v8116 = vadd.s32 %v8115, 536870912
      %v8117 = vshrl.u32 %v8116, 30
      %v8118 = vshll.u32 %v8117, 30
      %v8119 = vsub.s32 %v8115, %v8118
      %vm8120 = vcmp.lt.s32.totalorder %v8119, 0
      %v8121 = vsub.s32 0, %v8119
      %v8122 = vsel %vm8120, %v8121, %v8119
      %v8123 = vclz %v8122
      %v8124 = vsub.s32 %v8123, 2
      %vm8125 = vcmp.gt.s32.totalorder 0, %v8124
      %v8126 = vsel %vm8125, 0, %v8124
      %v8127 = vsub.s32 32, %v8126
      %v8128 = vshll.u32 %v8119, %v8126
      %v8129 = vshrl.u32 %v8111, %v8127
      %v8130 = vor.u32 %v8128, %v8129
      %v8131 = vsub.s32 4294967266, %v8126
      %v8132 = vadd.s32 %v8131, 127
      %v8133 = vshll.u32 %v8132, 23
      %v8134 = vor.u32 4788187, %v8133
      %v8135 = vand.u32 2147483647, %v8134
      %v8137 = vcvt.s32.f32 %v8130
      %v8138 = vmul.f32 %v8137, %v8135
      %v8139 = vxor.u32 %v8138, 2147483648
      %v8140 = vsel %vm8019, %v8139, %v8138
      %v8141 = vsub.s32 4, %v8117
      %v8142 = vsel %vm8019, %v8141, %v8117
      %v8143 = vsel %vm8018, %v7859, %v8140
      %v8144 = vsel %vm8018, 0, %v8142
      %v8145 = vmul.f32 %v8143, %v8143
      %v8146 = vmul.f32 %v8145, -0.001358992
      %v8147 = vadd.f32 %v8146, 0.041655596
      %v8148 = vmul.f32 %v8145, %v8147
      %v8149 = vadd.f32 %v8148, -0.4999988
      %v8150 = vmul.f32 %v8145, %v8149
      %v8151 = vadd.f32 1.0, %v8150
      %v8152 = vmul.f32 %v8143, %v8143
      %v8153 = vmul.f32 %v8152, -0.00019511016
      %v8154 = vadd.f32 %v8153, 0.008332121
      %v8155 = vmul.f32 %v8152, %v8154
      %v8156 = vadd.f32 %v8155, -0.16666654
      %v8157 = vmul.f32 %v8152, %v8156
      %v8158 = vadd.f32 %v8157, 1.0
      %v8159 = vmul.f32 %v8158, %v8143
      %vm8160 = vweird.f32 %v7859
      %v8161 = vand.u32 %v8144, 3
      %vm8162 = vcmp.lt.s32.totalorder %v8161, 2
      %vm8163 = vcmp.eq.s32.totalorder %v8161, 0
      %v8164 = vxor.u32 %v8159, 2147483648
      %v8165 = vsel %vm8163, %v8151, %v8164
      %vm8166 = vcmp.eq.s32.totalorder %v8161, 2
      %v8167 = vxor.u32 %v8151, 2147483648
      %v8168 = vsel %vm8166, %v8167, %v8159
      %v8169 = vsel %vm8162, %v8165, %v8168
      %v8170 = vsel %vm8160, nan, %v8169
      %8171 = vst [vmem:[#allocation24 + $0x8] sm:$0xff] %v8016
      %8172 = vst [vmem:[#allocation24 + $0x20] sm:$0xff] %v8170
      %v8173 = vand.u32 2147483647, %v7856
      %vm8174 = vcmp.le.f32.partialorder %v8173, 0.7853982
      %vm8175 = vcmp.lt.s32.totalorder %v7856, 0
      %v8176 = vand.u32 %v7856, 2139095040
      %v8177 = vshrl.u32 %v8176, 23
      %v8178 = vsub.s32 %v8177, 127
      %v8179 = vand.u32 2147483647, %v7856
      %v8180 = vand.u32 %v8179, 8388607
      %v8181 = vor.u32 %v8180, 8388608
      %v8182 = vsub.s32 0, %v8181
      %v8183 = vadd.s32 %v8178, 1
      %vm8184 = vcmp.gt.s32.totalorder %v8183, 0
      %v8185 = vsel %vm8184, %v8183, 0
      %v8186 = vshrl.u32 %v8185, 5
      %v8187 = vand.u32 %v8185, 31
      %v8188 = vsub.s32 32, %v8187
      %v8189 = vshrl.u32 683565275, %v8188
      %v8190 = vshll.u32 683565275, %v8187
      %v8191 = vshrl.u32 2475754826, %v8188
      %v8192 = vor.u32 %v8190, %v8191
      %v8193 = vshll.u32 2475754826, %v8187
      %v8194 = vshrl.u32 2131351028, %v8188
      %v8195 = vor.u32 %v8193, %v8194
      %v8196 = vshll.u32 2131351028, %v8187
      %v8197 = vshrl.u32 2102212464, %v8188
      %v8198 = vor.u32 %v8196, %v8197
      %v8199 = vshll.u32 2102212464, %v8187
      %v8200 = vshrl.u32 920167782, %v8188
      %v8201 = vor.u32 %v8199, %v8200
      %v8202 = vshll.u32 920167782, %v8187
      %v8203 = vshrl.u32 1326507024, %v8188
      %v8204 = vor.u32 %v8202, %v8203
      %vm8205 = vcmp.lt.s32.totalorder %v8186, 1
      %vm8206 = vcmp.lt.s32.totalorder %v8186, 2
      %vm8207 = vcmp.lt.s32.totalorder %v8186, 3
      %vm8208 = vcmp.lt.s32.totalorder %v8186, 4
      %v8209 = vsel %vm8205, %v8189, %v8192
      %v8210 = vsel %vm8208, %v8198, 2102212464
      %v8211 = vsel %vm8207, %v8195, %v8210
      %v8212 = vsel %vm8206, %v8209, %v8211
      %v8213 = vsel %vm8205, %v8192, %v8195
      %v8214 = vsel %vm8208, %v8201, 920167782
      %v8215 = vsel %vm8207, %v8198, %v8214
      %v8216 = vsel %vm8206, %v8213, %v8215
      %v8217 = vsel %vm8205, %v8195, %v8198
      %v8218 = vsel %vm8208, %v8204, 1326507024
      %v8219 = vsel %vm8207, %v8201, %v8218
      %v8220 = vsel %vm8206, %v8217, %v8219
      %v8221 = vshll.u32 %v8181, 8
      %v8222 = vand.u32 %v8221, 65535
      %v8223 = vshrl.u32 %v8221, 16
      %v8224 = vand.u32 %v8220, 65535
      %v8225 = vshrl.u32 %v8220, 16
      %v8226 = vmul.u32 %v8222, %v8224
      %v8227 = vmul.u32 %v8222, %v8225
      %v8228 = vmul.u32 %v8223, %v8224
      %v8229 = vmul.u32 %v8223, %v8225
      %v8230 = vshll.u32 %v8227, 16
      %v8231 = vshrl.u32 %v8227, 16
      %v8232 = vshll.u32 %v8228, 16
      %v8233 = vshrl.u32 %v8228, 16
      %vm8234 = vc.u32 %v8226, %v8230
      %v8235 = vsel %vm8234, 1, 0
      %v8236 = vadd.s32 %v8226, %v8230
      %v8237 = vadd.s32 %v8229, %v8235
      %vm8238 = vc.u32 %v8236, %v8232
      %v8239 = vsel %vm8238, 1, 0
      %v8240 = vadd.s32 %v8236, %v8232
      %v8241 = vadd.s32 %v8237, %v8239
      %v8242 = vadd.s32 %v8241, %v8231
      %v8243 = vadd.s32 %v8242, %v8233
      %v8244 = vand.u32 %v8221, 65535
      %v8245 = vshrl.u32 %v8221, 16
      %v8246 = vand.u32 %v8216, 65535
      %v8247 = vshrl.u32 %v8216, 16
      %v8248 = vmul.u32 %v8244, %v8246
      %v8249 = vmul.u32 %v8244, %v8247
      %v8250 = vmul.u32 %v8245, %v8246
      %v8251 = vmul.u32 %v8245, %v8247
      %v8252 = vshll.u32 %v8249, 16
      %v8253 = vshrl.u32 %v8249, 16
      %v8254 = vshll.u32 %v8250, 16
      %v8255 = vshrl.u32 %v8250, 16
      %vm8256 = vc.u32 %v8248, %v8252
      %v8257 = vsel %vm8256, 1, 0
      %v8258 = vadd.s32 %v8248, %v8252
      %v8259 = vadd.s32 %v8251, %v8257
      %vm8260 = vc.u32 %v8258, %v8254
      %v8261 = vsel %vm8260, 1, 0
      %v8262 = vadd.s32 %v8258, %v8254
      %v8263 = vadd.s32 %v8259, %v8261
      %v8264 = vadd.s32 %v8263, %v8253
      %v8265 = vadd.s32 %v8264, %v8255
      %v8266 = vmul.u32 %v8221, %v8212
      %v8267 = vadd.s32 %v8243, %v8262
      %vm8268 = vc.u32 %v8243, %v8262
      %v8269 = vadd.s32 %v8265, 1
      %v8270 = vsel %vm8268, %v8269, %v8265
      %v8271 = vadd.s32 %v8266, %v8270
      %v8272 = vadd.s32 %v8271, 536870912
      %v8273 = vshrl.u32 %v8272, 30
      %v8274 = vshll.u32 %v8273, 30
      %v8275 = vsub.s32 %v8271, %v8274
      %vm8276 = vcmp.lt.s32.totalorder %v8275, 0
      %v8277 = vsub.s32 0, %v8275
      %v8278 = vsel %vm8276, %v8277, %v8275
      %v8279 = vclz %v8278
      %v8280 = vsub.s32 %v8279, 2
      %vm8281 = vcmp.gt.s32.totalorder 0, %v8280
      %v8282 = vsel %vm8281, 0, %v8280
      %v8283 = vsub.s32 32, %v8282
      %v8284 = vshll.u32 %v8275, %v8282
      %v8285 = vshrl.u32 %v8267, %v8283
      %v8286 = vor.u32 %v8284, %v8285
      %v8287 = vsub.s32 4294967266, %v8282
      %v8288 = vadd.s32 %v8287, 127
      %v8289 = vshll.u32 %v8288, 23
      %v8290 = vor.u32 4788187, %v8289
      %v8291 = vand.u32 2147483647, %v8290
      %v8293 = vcvt.s32.f32 %v8286
      %v8294 = vmul.f32 %v8293, %v8291
      %v8295 = vxor.u32 %v8294, 2147483648
      %v8296 = vsel %vm8175, %v8295, %v8294
      %v8297 = vsub.s32 4, %v8273
      %v8298 = vsel %vm8175, %v8297, %v8273
      %v8299 = vsel %vm8174, %v7856, %v8296
      %v8300 = vsel %vm8174, 0, %v8298
      %v8301 = vmul.f32 %v8299, %v8299
      %v8302 = vmul.f32 %v8301, -0.001358992
      %v8303 = vadd.f32 %v8302, 0.041655596
      %v8304 = vmul.f32 %v8301, %v8303
      %v8305 = vadd.f32 %v8304, -0.4999988
      %v8306 = vmul.f32 %v8301, %v8305
      %v8307 = vadd.f32 1.0, %v8306
      %v8308 = vmul.f32 %v8299, %v8299
      %v8309 = vmul.f32 %v8308, -0.00019511016
      %v8310 = vadd.f32 %v8309, 0.008332121
      %v8311 = vmul.f32 %v8308, %v8310
      %v8312 = vadd.f32 %v8311, -0.16666654
      %v8313 = vmul.f32 %v8308, %v8312
      %v8314 = vadd.f32 %v8313, 1.0
      %v8315 = vmul.f32 %v8314, %v8299
      %vm8316 = vweird.f32 %v7856
      %v8317 = vadd.s32 %v8300, 3
      %v8318 = vand.u32 %v8317, 3
      %vm8319 = vcmp.lt.s32.totalorder %v8318, 2
      %vm8320 = vcmp.eq.s32.totalorder %v8318, 0
      %v8321 = vxor.u32 %v8315, 2147483648
      %v8322 = vsel %vm8320, %v8307, %v8321
      %vm8323 = vcmp.eq.s32.totalorder %v8318, 2
      %v8324 = vxor.u32 %v8307, 2147483648
      %v8325 = vsel %vm8323, %v8324, %v8315
      %v8326 = vsel %vm8319, %v8322, %v8325
      %v8327 = vsel %vm8316, nan, %v8326
      %v8328 = vand.u32 2147483647, %v7859
      %vm8329 = vcmp.le.f32.partialorder %v8328, 0.7853982
      %vm8330 = vcmp.lt.s32.totalorder %v7859, 0
      %v8331 = vand.u32 %v7859, 2139095040
      %v8332 = vshrl.u32 %v8331, 23
      %v8333 = vsub.s32 %v8332, 127
      %v8334 = vand.u32 2147483647, %v7859
      %v8335 = vand.u32 %v8334, 8388607
      %v8336 = vor.u32 %v8335, 8388608
      %v8337 = vsub.s32 0, %v8336
      %v8338 = vadd.s32 %v8333, 1
      %vm8339 = vcmp.gt.s32.totalorder %v8338, 0
      %v8340 = vsel %vm8339, %v8338, 0
      %v8341 = vshrl.u32 %v8340, 5
      %v8342 = vand.u32 %v8340, 31
      %v8343 = vsub.s32 32, %v8342
      %v8344 = vshrl.u32 683565275, %v8343
      %v8345 = vshll.u32 683565275, %v8342
      %v8346 = vshrl.u32 2475754826, %v8343
      %v8347 = vor.u32 %v8345, %v8346
      %v8348 = vshll.u32 2475754826, %v8342
      %v8349 = vshrl.u32 2131351028, %v8343
      %v8350 = vor.u32 %v8348, %v8349
      %v8351 = vshll.u32 2131351028, %v8342
      %v8352 = vshrl.u32 2102212464, %v8343
      %v8353 = vor.u32 %v8351, %v8352
      %v8354 = vshll.u32 2102212464, %v8342
      %v8355 = vshrl.u32 920167782, %v8343
      %v8356 = vor.u32 %v8354, %v8355
      %v8357 = vshll.u32 920167782, %v8342
      %v8358 = vshrl.u32 1326507024, %v8343
      %v8359 = vor.u32 %v8357, %v8358
      %vm8360 = vcmp.lt.s32.totalorder %v8341, 1
      %vm8361 = vcmp.lt.s32.totalorder %v8341, 2
      %vm8362 = vcmp.lt.s32.totalorder %v8341, 3
      %vm8363 = vcmp.lt.s32.totalorder %v8341, 4
      %v8364 = vsel %vm8360, %v8344, %v8347
      %v8365 = vsel %vm8363, %v8353, 2102212464
      %v8366 = vsel %vm8362, %v8350, %v8365
      %v8367 = vsel %vm8361, %v8364, %v8366
      %v8368 = vsel %vm8360, %v8347, %v8350
      %v8369 = vsel %vm8363, %v8356, 920167782
      %v8370 = vsel %vm8362, %v8353, %v8369
      %v8371 = vsel %vm8361, %v8368, %v8370
      %v8372 = vsel %vm8360, %v8350, %v8353
      %v8373 = vsel %vm8363, %v8359, 1326507024
      %v8374 = vsel %vm8362, %v8356, %v8373
      %v8375 = vsel %vm8361, %v8372, %v8374
      %v8376 = vshll.u32 %v8336, 8
      %v8377 = vand.u32 %v8376, 65535
      %v8378 = vshrl.u32 %v8376, 16
      %v8379 = vand.u32 %v8375, 65535
      %v8380 = vshrl.u32 %v8375, 16
      %v8381 = vmul.u32 %v8377, %v8379
      %v8382 = vmul.u32 %v8377, %v8380
      %v8383 = vmul.u32 %v8378, %v8379
      %v8384 = vmul.u32 %v8378, %v8380
      %v8385 = vshll.u32 %v8382, 16
      %v8386 = vshrl.u32 %v8382, 16
      %v8387 = vshll.u32 %v8383, 16
      %v8388 = vshrl.u32 %v8383, 16
      %vm8389 = vc.u32 %v8381, %v8385
      %v8390 = vsel %vm8389, 1, 0
      %v8391 = vadd.s32 %v8381, %v8385
      %v8392 = vadd.s32 %v8384, %v8390
      %vm8393 = vc.u32 %v8391, %v8387
      %v8394 = vsel %vm8393, 1, 0
      %v8395 = vadd.s32 %v8391, %v8387
      %v8396 = vadd.s32 %v8392, %v8394
      %v8397 = vadd.s32 %v8396, %v8386
      %v8398 = vadd.s32 %v8397, %v8388
      %v8399 = vand.u32 %v8376, 65535
      %v8400 = vshrl.u32 %v8376, 16
      %v8401 = vand.u32 %v8371, 65535
      %v8402 = vshrl.u32 %v8371, 16
      %v8403 = vmul.u32 %v8399, %v8401
      %v8404 = vmul.u32 %v8399, %v8402
      %v8405 = vmul.u32 %v8400, %v8401
      %v8406 = vmul.u32 %v8400, %v8402
      %v8407 = vshll.u32 %v8404, 16
      %v8408 = vshrl.u32 %v8404, 16
      %v8409 = vshll.u32 %v8405, 16
      %v8410 = vshrl.u32 %v8405, 16
      %vm8411 = vc.u32 %v8403, %v8407
      %v8412 = vsel %vm8411, 1, 0
      %v8413 = vadd.s32 %v8403, %v8407
      %v8414 = vadd.s32 %v8406, %v8412
      %vm8415 = vc.u32 %v8413, %v8409
      %v8416 = vsel %vm8415, 1, 0
      %v8417 = vadd.s32 %v8413, %v8409
      %v8418 = vadd.s32 %v8414, %v8416
      %v8419 = vadd.s32 %v8418, %v8408
      %v8420 = vadd.s32 %v8419, %v8410
      %v8421 = vmul.u32 %v8376, %v8367
      %v8422 = vadd.s32 %v8398, %v8417
      %vm8423 = vc.u32 %v8398, %v8417
      %v8424 = vadd.s32 %v8420, 1
      %v8425 = vsel %vm8423, %v8424, %v8420
      %v8426 = vadd.s32 %v8421, %v8425
      %v8427 = vadd.s32 %v8426, 536870912
      %v8428 = vshrl.u32 %v8427, 30
      %v8429 = vshll.u32 %v8428, 30
      %v8430 = vsub.s32 %v8426, %v8429
      %vm8431 = vcmp.lt.s32.totalorder %v8430, 0
      %v8432 = vsub.s32 0, %v8430
      %v8433 = vsel %vm8431, %v8432, %v8430
      %v8434 = vclz %v8433
      %v8435 = vsub.s32 %v8434, 2
      %vm8436 = vcmp.gt.s32.totalorder 0, %v8435
      %v8437 = vsel %vm8436, 0, %v8435
      %v8438 = vsub.s32 32, %v8437
      %v8439 = vshll.u32 %v8430, %v8437
      %v8440 = vshrl.u32 %v8422, %v8438
      %v8441 = vor.u32 %v8439, %v8440
      %v8442 = vsub.s32 4294967266, %v8437
      %v8443 = vadd.s32 %v8442, 127
      %v8444 = vshll.u32 %v8443, 23
      %v8445 = vor.u32 4788187, %v8444
      %v8446 = vand.u32 2147483647, %v8445
      %v8448 = vcvt.s32.f32 %v8441
      %v8449 = vmul.f32 %v8448, %v8446
      %v8450 = vxor.u32 %v8449, 2147483648
      %v8451 = vsel %vm8330, %v8450, %v8449
      %v8452 = vsub.s32 4, %v8428
      %v8453 = vsel %vm8330, %v8452, %v8428
      %v8454 = vsel %vm8329, %v7859, %v8451
      %v8455 = vsel %vm8329, 0, %v8453
      %v8456 = vmul.f32 %v8454, %v8454
      %v8457 = vmul.f32 %v8456, -0.001358992
      %v8458 = vadd.f32 %v8457, 0.041655596
      %v8459 = vmul.f32 %v8456, %v8458
      %v8460 = vadd.f32 %v8459, -0.4999988
      %v8461 = vmul.f32 %v8456, %v8460
      %v8462 = vadd.f32 1.0, %v8461
      %v8463 = vmul.f32 %v8454, %v8454
      %v8464 = vmul.f32 %v8463, -0.00019511016
      %v8465 = vadd.f32 %v8464, 0.008332121
      %v8466 = vmul.f32 %v8463, %v8465
      %v8467 = vadd.f32 %v8466, -0.16666654
      %v8468 = vmul.f32 %v8463, %v8467
      %v8469 = vadd.f32 %v8468, 1.0
      %v8470 = vmul.f32 %v8469, %v8454
      %vm8471 = vweird.f32 %v7859
      %v8472 = vadd.s32 %v8455, 3
      %v8473 = vand.u32 %v8472, 3
      %vm8474 = vcmp.lt.s32.totalorder %v8473, 2
      %vm8475 = vcmp.eq.s32.totalorder %v8473, 0
      %v8476 = vxor.u32 %v8470, 2147483648
      %v8477 = vsel %vm8475, %v8462, %v8476
      %vm8478 = vcmp.eq.s32.totalorder %v8473, 2
      %v8479 = vxor.u32 %v8462, 2147483648
      %v8480 = vsel %vm8478, %v8479, %v8470
      %v8481 = vsel %vm8474, %v8477, %v8480
      %v8482 = vsel %vm8471, nan, %v8481
      %8483 = vst [vmem:[#allocation24 + $0x10] sm:$0xff] %v8327
      %8484 = vst [vmem:[#allocation24 + $0x28] sm:$0xff] %v8482
    $region125: #{tpu_custom_call.1} parent=1 // pred_fallthru
      _
    // Predicated region
    $region126: #{tpu_custom_call.1} parent=1 // pred_check
      _
    $region127: #{tpu_custom_call.1} parent=1 // pred_check_branch
      %8486 = sbr.rel (0) target = $region129
    $region128: #{tpu_custom_call.1} parent=1 // pred_region
      %8488 = vsyncadd [#allocation5], 0
      %s8489 = sshll.u32 [#allocation24], 4
      %s8490 = int_to_ptr.vmem [resolvable:$true] %s8489
      %s8491 = sshll.u32 %s16, 4
      %s8492 = int_to_ptr.hbm [resolvable:$true] %s8491
      %8497 = dma.vmem_to_hbm [thread:$0]  %s8490, 768, %s8492, [#allocation5], 384, 384, 24
    $region129: #{tpu_custom_call.1} parent=1 // pred_fallthru
      _
    // Predicated region
    $region130: #{tpu_custom_call.1} parent=1 // pred_check
      _
    $region131: #{tpu_custom_call.1} parent=1 // pred_check_branch
      %8499 = sbr.rel (0) target = $region133
    $region132: #{tpu_custom_call.1} parent=1 // pred_region
      %8501 = dma.done [#allocation5], 768
    $region133: #{tpu_custom_call.1} parent=1 // pred_fallthru
      _
    %8502 = vsyncpa [#allocation4], 1
    %8503 = vsyncpa [#allocation7], 1
    %8504 = vsyncpa [#allocation10], 1
    %8505 = vsyncpa [#allocation13], 1
    %8506 = vsyncpa [#allocation16], 1
    %8507 = vsyncpa [#allocation19], 1
    %8508 = vsyncpa [#allocation22], 1
    %8509 = vsyncpa [#allocation5], 1

</llo_original>
